<compile_context>
chip_gen: v7x
topology: tpu7x:2x2x1
jax: 0.10.0
libtpu: 0.0.40
codegen_flags: <defaults>
</compile_context>

<pallas_src>
import functools
import math

import jax
import jax.numpy as jnp
import numpy as np
from jax.experimental import pallas as pl
from jax.experimental.pallas import tpu as pltpu

_HIDDEN = 32   # conv width; also the channel-padded width used inside the kernel
_KSIZE = 3


def _lane_col(pidx, w):
    """p % w for the flattened pixel index (power-of-two fast path)."""
    if w & (w - 1) == 0:
        return jnp.bitwise_and(pidx, w - 1)
    return jax.lax.rem(pidx, w)


# ---------------------------------------------------------------------------
# Fused kernel: 5 convs + ReLUs + L1 accumulation + normalisation.
#   x_ref: (1, CH, P) f32   one image; channels on sublanes, pixels on lanes
#   w_ref: (L, 9, CH, CH)   per-layer, per-tap (Co, Ci) weight matrices
#   b_ref: (L, CH, 1)       per-layer bias columns
#   o_ref: (1, 1)           scalar accumulator, revisited across the batch grid
# ---------------------------------------------------------------------------
def _estimation_kernel(x_ref, w_ref, b_ref, o_ref, *, H, W, n_batch, inv_div):
    P = H * W
    batch = pl.program_id(0)

    @pl.when(batch == 0)
    def _init():
        o_ref[...] = jnp.zeros_like(o_ref)

    pidx = jax.lax.broadcasted_iota(jnp.int32, (1, P), 1)   # flattened pixel index
    col = _lane_col(pidx, W)                                # pixel column  (p % W)

    def conv3x3(act, layer, relu):
        """'same' 3x3 conv: 9 taps = lane-roll + border mask + MXU dot."""
        acc = None
        for t in range(9):
            di, dj = t // 3 - 1, t % 3 - 1        # spatial offset of this tap
            off = di * W + dj                     # offset in flattened pixels
            patch = act
            if off != 0:
                patch = pltpu.roll(patch, shift=(-off) % P, axis=1)
                conds = []
                if di > 0:
                    conds.append(pidx < (H - di) * W)   # row + di < H
                elif di < 0:
                    conds.append(pidx >= (-di) * W)     # row + di >= 0
                if dj > 0:
                    conds.append(col < W - dj)          # col + dj < W
                elif dj < 0:
                    conds.append(col >= -dj)            # col + dj >= 0
                mask = conds[0]
                for c in conds[1:]:
                    mask = mask & c
                patch = jnp.where(mask, patch, 0.0)
            d = jnp.dot(w_ref[layer, t], patch,
                        preferred_element_type=jnp.float32)
            acc = d if acc is None else acc + d
        y = acc + b_ref[layer]
        return jnp.maximum(y, 0.0) if relu else y

    a = x_ref[0]                                   # (CH, P)
    n_layers = w_ref.shape[0]
    for layer in range(n_layers - 1):
        a = conv3x3(a, layer, relu=True)
    es = conv3x3(a, n_layers - 1, relu=False)      # (CH, P); rows >= 3 are exactly 0

    part = jnp.sum(jnp.sum(jnp.abs(es), axis=1, keepdims=True),
                   axis=0, keepdims=True)          # (1, 1) partial L1 of this image
    o_ref[...] = o_ref[...] + part

    @pl.when(batch == n_batch - 1)
    def _finalize():
        o_ref[...] = o_ref[...] * inv_div          # / (C * H * W) of the input


# ---------------------------------------------------------------------------
# Parameter packing (torch OIHW conv weights -> tap-major, channel-padded stacks)
# ---------------------------------------------------------------------------
def pack_params(torch_weights):
    ws, bs = [], []
    for w, b in torch_weights:
        co, ci = w.shape[0], w.shape[1]
        w = jnp.pad(w, ((0, _HIDDEN - co), (0, _HIDDEN - ci), (0, 0), (0, 0)))
        b = jnp.pad(b, ((0, _HIDDEN - co),))
        # tap-major (9, Co, Ci): out[co, p] += W[co, ci, ki, kj] * patch_{ki,kj}[ci, p]
        ws.append(jnp.transpose(w, (2, 3, 0, 1)).reshape(9, _HIDDEN, _HIDDEN))
        bs.append(b.reshape(_HIDDEN, 1))
    return jnp.stack(ws), jnp.stack(bs)


@jax.jit
def estimation_forward(w_stack, b_stack, x_nchw):
    B, Cin, H, W = x_nchw.shape
    P = H * W
    n_layers = w_stack.shape[0]

    # input glue (tiny, once): NCHW -> (B, CH, P) with channels zero-padded to 32
    x = x_nchw.astype(jnp.float32).reshape(B, Cin, P)
    x = jnp.pad(x, ((0, 0), (0, _HIDDEN - Cin), (0, 0)))

    kern = functools.partial(_estimation_kernel, H=H, W=W, n_batch=B,
                             inv_div=1.0 / float(Cin * H * W))
    diff = pl.pallas_call(
        kern,
        out_shape=jax.ShapeDtypeStruct((1, 1), jnp.float32),
        grid=(B,),
        in_specs=[
            pl.BlockSpec((1, _HIDDEN, P), lambda b: (b, 0, 0)),
            pl.BlockSpec((n_layers, 9, _HIDDEN, _HIDDEN), lambda b: (0, 0, 0, 0)),
            pl.BlockSpec((n_layers, _HIDDEN, 1), lambda b: (0, 0, 0)),
        ],
        out_specs=pl.BlockSpec((1, 1), lambda b: (0, 0)),
        compiler_params=pltpu.CompilerParams(
            dimension_semantics=("arbitrary",)),   # batch axis accumulates into o_ref
    )(x, w_stack, b_stack)
    return diff[0, 0]


# ---------------------------------------------------------------------------
# Deterministic torch-Conv2d-like init and a pure-JAX reference for validation
# ---------------------------------------------------------------------------
def init_params(key):
    chans = [(3, _HIDDEN)] + [(_HIDDEN, _HIDDEN)] * 3 + [(_HIDDEN, 3)]
    keys = jax.random.split(key, 2 * len(chans))
    torch_weights = []
    for i, (ci, co) in enumerate(chans):
        bound = 1.0 / math.sqrt(ci * _KSIZE * _KSIZE)
        w = jax.random.uniform(keys[2 * i], (co, ci, _KSIZE, _KSIZE),
                               jnp.float32, -bound, bound)
        b = jax.random.uniform(keys[2 * i + 1], (co,), jnp.float32, -bound, bound)
        torch_weights.append((w, b))
    return torch_weights


def reference_forward(torch_weights, x):
    a = x.astype(jnp.float32)
    n = len(torch_weights)
    for i, (w, b) in enumerate(torch_weights):
        a = jax.lax.conv_general_dilated(
            a, w, window_strides=(1, 1), padding=((1, 1), (1, 1)),
            dimension_numbers=("NCHW", "OIHW", "NCHW"),
            precision=jax.lax.Precision.HIGHEST)
        a = a + b.reshape(1, -1, 1, 1)
        if i < n - 1:
            a = jnp.maximum(a, 0.0)
    return jnp.sum(jnp.abs(a)) / (x.shape[1] * x.shape[2] * x.shape[3])


if __name__ == "__main__":
    B, C, H, W = 2, 3, 16, 16
    key = jax.random.PRNGKey(0)
    kp, kx = jax.random.split(key)

    torch_weights = init_params(kp)
    w_stack, b_stack = pack_params(torch_weights)
    x = jax.random.uniform(kx, (B, C, H, W), jnp.float32)

    diff = estimation_forward(w_stack, b_stack, x)
    diff = jax.block_until_ready(diff)
    assert diff.shape == ()

    ref = jax.block_until_ready(reference_forward(torch_weights, x))
    np.testing.assert_allclose(np.asarray(diff), np.asarray(ref),
                               rtol=2e-2, atol=1e-3)
    print("KERNEL_OK")
</pallas_src>

<mosaic_0001>
module attributes {stable_mosaic.version = 11 : i64} {
  func.func @_estimation_kernel(%arg0: i32, %arg1: memref<1x32x256xf32, #tpu.memory_space<vmem>>, %arg2: memref<5x9x32x32xf32, #tpu.memory_space<vmem>>, %arg3: memref<5x32x1xf32, #tpu.memory_space<vmem>>, %arg4: memref<1x1xf32, #tpu.memory_space<vmem>>) attributes {dimension_semantics = [#tpu.dimension_semantics<arbitrary>], iteration_bounds = array<i64: 2>, scalar_prefetch = 0 : i64, scratch_operands = 0 : i64, tpu.core_type = #tpu.core_type<tc>, window_params = [{transform_indices = @transform_0, window_bounds = array<i64: 1, 32, 256>}, {pipeline_mode = #tpu.pipeline_mode<synchronous>, transform_indices = @transform_1, window_bounds = array<i64: 5, 9, 32, 32>}, {pipeline_mode = #tpu.pipeline_mode<synchronous>, transform_indices = @transform_2, window_bounds = array<i64: 5, 32, 1>}, {pipeline_mode = #tpu.pipeline_mode<synchronous>, transform_indices = @transform_3, window_bounds = array<i64: 1, 1>}]} {
    %c0_i32 = arith.constant 0 : i32
    %0 = arith.cmpi eq, %arg0, %c0_i32 : i32
    %1 = arith.extui %0 : i1 to i32
    %c0_i32_0 = arith.constant 0 : i32
    %2 = arith.cmpi ne, %1, %c0_i32_0 : i32
    scf.if %2 {
      %cst_379 = arith.constant 0.000000e+00 : f32
      %562 = vector.broadcast %cst_379 : f32 to vector<1x1xf32>
      %c0_380 = arith.constant 0 : index
      %c0_381 = arith.constant 0 : index
      %563 = vector.load %arg4[%c0_380, %c0_381] : memref<1x1xf32, #tpu.memory_space<vmem>>, vector<1x1xf32>
      tpu.vector_store %arg4[%c0_380, %c0_381], %562 {strides = array<i32>} : memref<1x1xf32, #tpu.memory_space<vmem>>, vector<1x1xf32>,
    } else {
    }
    %3 = tpu.iota {dimensions = array<i32: 1>} : vector<1x256xi32>
    %c15_i32 = arith.constant 15 : i32
    %4 = vector.broadcast %c15_i32 : i32 to vector<1x256xi32>
    %5 = arith.andi %3, %4 : vector<1x256xi32>
    %c0 = arith.constant 0 : index
    %c0_1 = arith.constant 0 : index
    %c0_2 = arith.constant 0 : index
    %6 = vector.load %arg1[%c0, %c0_1, %c0_2] : memref<1x32x256xf32, #tpu.memory_space<vmem>>, vector<1x32x256xf32>
    %7 = vector.shape_cast %6 : vector<1x32x256xf32> to vector<32x256xf32>
    %c17_i32 = arith.constant 17 : i32
    %8 = tpu.dynamic_rotate %7 by %c17_i32 dim 1 : vector<32x256xf32>, i32 -> vector<32x256xf32>
    %c16_i32 = arith.constant 16 : i32
    %9 = vector.broadcast %c16_i32 : i32 to vector<1x256xi32>
    %10 = arith.cmpi sge, %3, %9 : vector<1x256xi32>
    %c1_i32 = arith.constant 1 : i32
    %11 = vector.broadcast %c1_i32 : i32 to vector<1x256xi32>
    %12 = arith.cmpi sge, %5, %11 : vector<1x256xi32>
    %13 = arith.andi %10, %12 : vector<1x256xi1>
    %cst = arith.constant 0.000000e+00 : f32
    %14 = vector.shape_cast %13 : vector<1x256xi1> to vector<1x256xi1>
    %15 = vector.broadcast %14 : vector<1x256xi1> to vector<32x256xi1>
    %16 = vector.broadcast %cst : f32 to vector<32x256xf32>
    %17 = arith.select %15, %8, %16 : vector<32x256xi1>, vector<32x256xf32>
    %c0_3 = arith.constant 0 : index
    %c0_4 = arith.constant 0 : index
    %c0_5 = arith.constant 0 : index
    %c0_6 = arith.constant 0 : index
    %18 = vector.load %arg2[%c0_3, %c0_4, %c0_5, %c0_6] : memref<5x9x32x32xf32, #tpu.memory_space<vmem>>, vector<1x1x32x32xf32>
    %19 = vector.shape_cast %18 : vector<1x1x32x32xf32> to vector<32x32xf32>
    %cst_7 = arith.constant dense<0.000000e+00> : vector<32x256xf32>
    %20 = tpu.matmul %19, %17, %cst_7 {dimension_numbers = #tpu.dot_dimension_numbers<[1], [0], [0], [1], [0, 0, 1, 1], [], []>} : vector<32x32xf32>, vector<32x256xf32>, vector<32x256xf32> -> vector<32x256xf32>
    %c16_i32_8 = arith.constant 16 : i32
    %21 = tpu.dynamic_rotate %7 by %c16_i32_8 dim 1 : vector<32x256xf32>, i32 -> vector<32x256xf32>
    %c16_i32_9 = arith.constant 16 : i32
    %22 = vector.broadcast %c16_i32_9 : i32 to vector<1x256xi32>
    %23 = arith.cmpi sge, %3, %22 : vector<1x256xi32>
    %cst_10 = arith.constant 0.000000e+00 : f32
    %24 = vector.shape_cast %23 : vector<1x256xi1> to vector<1x256xi1>
    %25 = vector.broadcast %24 : vector<1x256xi1> to vector<32x256xi1>
    %26 = vector.broadcast %cst_10 : f32 to vector<32x256xf32>
    %27 = arith.select %25, %21, %26 : vector<32x256xi1>, vector<32x256xf32>
    %c0_11 = arith.constant 0 : index
    %c1 = arith.constant 1 : index
    %c0_12 = arith.constant 0 : index
    %c0_13 = arith.constant 0 : index
    %28 = vector.load %arg2[%c0_11, %c1, %c0_12, %c0_13] : memref<5x9x32x32xf32, #tpu.memory_space<vmem>>, vector<1x1x32x32xf32>
    %29 = vector.shape_cast %28 : vector<1x1x32x32xf32> to vector<32x32xf32>
    %cst_14 = arith.constant dense<0.000000e+00> : vector<32x256xf32>
    %30 = tpu.matmul %29, %27, %cst_14 {dimension_numbers = #tpu.dot_dimension_numbers<[1], [0], [0], [1], [0, 0, 1, 1], [], []>} : vector<32x32xf32>, vector<32x256xf32>, vector<32x256xf32> -> vector<32x256xf32>
    %31 = arith.addf %20, %30 : vector<32x256xf32>
    %c15_i32_15 = arith.constant 15 : i32
    %32 = tpu.dynamic_rotate %7 by %c15_i32_15 dim 1 : vector<32x256xf32>, i32 -> vector<32x256xf32>
    %c16_i32_16 = arith.constant 16 : i32
    %33 = vector.broadcast %c16_i32_16 : i32 to vector<1x256xi32>
    %34 = arith.cmpi sge, %3, %33 : vector<1x256xi32>
    %c15_i32_17 = arith.constant 15 : i32
    %35 = vector.broadcast %c15_i32_17 : i32 to vector<1x256xi32>
    %36 = arith.cmpi slt, %5, %35 : vector<1x256xi32>
    %37 = arith.andi %34, %36 : vector<1x256xi1>
    %cst_18 = arith.constant 0.000000e+00 : f32
    %38 = vector.shape_cast %37 : vector<1x256xi1> to vector<1x256xi1>
    %39 = vector.broadcast %38 : vector<1x256xi1> to vector<32x256xi1>
    %40 = vector.broadcast %cst_18 : f32 to vector<32x256xf32>
    %41 = arith.select %39, %32, %40 : vector<32x256xi1>, vector<32x256xf32>
    %c0_19 = arith.constant 0 : index
    %c2 = arith.constant 2 : index
    %c0_20 = arith.constant 0 : index
    %c0_21 = arith.constant 0 : index
    %42 = vector.load %arg2[%c0_19, %c2, %c0_20, %c0_21] : memref<5x9x32x32xf32, #tpu.memory_space<vmem>>, vector<1x1x32x32xf32>
    %43 = vector.shape_cast %42 : vector<1x1x32x32xf32> to vector<32x32xf32>
    %cst_22 = arith.constant dense<0.000000e+00> : vector<32x256xf32>
    %44 = tpu.matmul %43, %41, %cst_22 {dimension_numbers = #tpu.dot_dimension_numbers<[1], [0], [0], [1], [0, 0, 1, 1], [], []>} : vector<32x32xf32>, vector<32x256xf32>, vector<32x256xf32> -> vector<32x256xf32>
    %45 = arith.addf %31, %44 : vector<32x256xf32>
    %c1_i32_23 = arith.constant 1 : i32
    %46 = tpu.dynamic_rotate %7 by %c1_i32_23 dim 1 : vector<32x256xf32>, i32 -> vector<32x256xf32>
    %c1_i32_24 = arith.constant 1 : i32
    %47 = vector.broadcast %c1_i32_24 : i32 to vector<1x256xi32>
    %48 = arith.cmpi sge, %5, %47 : vector<1x256xi32>
    %cst_25 = arith.constant 0.000000e+00 : f32
    %49 = vector.shape_cast %48 : vector<1x256xi1> to vector<1x256xi1>
    %50 = vector.broadcast %49 : vector<1x256xi1> to vector<32x256xi1>
    %51 = vector.broadcast %cst_25 : f32 to vector<32x256xf32>
    %52 = arith.select %50, %46, %51 : vector<32x256xi1>, vector<32x256xf32>
    %c0_26 = arith.constant 0 : index
    %c3 = arith.constant 3 : index
    %c0_27 = arith.constant 0 : index
    %c0_28 = arith.constant 0 : index
    %53 = vector.load %arg2[%c0_26, %c3, %c0_27, %c0_28] : memref<5x9x32x32xf32, #tpu.memory_space<vmem>>, vector<1x1x32x32xf32>
    %54 = vector.shape_cast %53 : vector<1x1x32x32xf32> to vector<32x32xf32>
    %cst_29 = arith.constant dense<0.000000e+00> : vector<32x256xf32>
    %55 = tpu.matmul %54, %52, %cst_29 {dimension_numbers = #tpu.dot_dimension_numbers<[1], [0], [0], [1], [0, 0, 1, 1], [], []>} : vector<32x32xf32>, vector<32x256xf32>, vector<32x256xf32> -> vector<32x256xf32>
    %56 = arith.addf %45, %55 : vector<32x256xf32>
    %c0_30 = arith.constant 0 : index
    %c4 = arith.constant 4 : index
    %c0_31 = arith.constant 0 : index
    %c0_32 = arith.constant 0 : index
    %57 = vector.load %arg2[%c0_30, %c4, %c0_31, %c0_32] : memref<5x9x32x32xf32, #tpu.memory_space<vmem>>, vector<1x1x32x32xf32>
    %58 = vector.shape_cast %57 : vector<1x1x32x32xf32> to vector<32x32xf32>
    %cst_33 = arith.constant dense<0.000000e+00> : vector<32x256xf32>
    %59 = tpu.matmul %58, %7, %cst_33 {dimension_numbers = #tpu.dot_dimension_numbers<[1], [0], [0], [1], [0, 0, 1, 1], [], []>} : vector<32x32xf32>, vector<32x256xf32>, vector<32x256xf32> -> vector<32x256xf32>
    %60 = arith.addf %56, %59 : vector<32x256xf32>
    %c255_i32 = arith.constant 255 : i32
    %61 = tpu.dynamic_rotate %7 by %c255_i32 dim 1 : vector<32x256xf32>, i32 -> vector<32x256xf32>
    %c15_i32_34 = arith.constant 15 : i32
    %62 = vector.broadcast %c15_i32_34 : i32 to vector<1x256xi32>
    %63 = arith.cmpi slt, %5, %62 : vector<1x256xi32>
    %cst_35 = arith.constant 0.000000e+00 : f32
    %64 = vector.shape_cast %63 : vector<1x256xi1> to vector<1x256xi1>
    %65 = vector.broadcast %64 : vector<1x256xi1> to vector<32x256xi1>
    %66 = vector.broadcast %cst_35 : f32 to vector<32x256xf32>
    %67 = arith.select %65, %61, %66 : vector<32x256xi1>, vector<32x256xf32>
    %c0_36 = arith.constant 0 : index
    %c5 = arith.constant 5 : index
    %c0_37 = arith.constant 0 : index
    %c0_38 = arith.constant 0 : index
    %68 = vector.load %arg2[%c0_36, %c5, %c0_37, %c0_38] : memref<5x9x32x32xf32, #tpu.memory_space<vmem>>, vector<1x1x32x32xf32>
    %69 = vector.shape_cast %68 : vector<1x1x32x32xf32> to vector<32x32xf32>
    %cst_39 = arith.constant dense<0.000000e+00> : vector<32x256xf32>
    %70 = tpu.matmul %69, %67, %cst_39 {dimension_numbers = #tpu.dot_dimension_numbers<[1], [0], [0], [1], [0, 0, 1, 1], [], []>} : vector<32x32xf32>, vector<32x256xf32>, vector<32x256xf32> -> vector<32x256xf32>
    %71 = arith.addf %60, %70 : vector<32x256xf32>
    %c241_i32 = arith.constant 241 : i32
    %72 = tpu.dynamic_rotate %7 by %c241_i32 dim 1 : vector<32x256xf32>, i32 -> vector<32x256xf32>
    %c240_i32 = arith.constant 240 : i32
    %73 = vector.broadcast %c240_i32 : i32 to vector<1x256xi32>
    %74 = arith.cmpi slt, %3, %73 : vector<1x256xi32>
    %c1_i32_40 = arith.constant 1 : i32
    %75 = vector.broadcast %c1_i32_40 : i32 to vector<1x256xi32>
    %76 = arith.cmpi sge, %5, %75 : vector<1x256xi32>
    %77 = arith.andi %74, %76 : vector<1x256xi1>
    %cst_41 = arith.constant 0.000000e+00 : f32
    %78 = vector.shape_cast %77 : vector<1x256xi1> to vector<1x256xi1>
    %79 = vector.broadcast %78 : vector<1x256xi1> to vector<32x256xi1>
    %80 = vector.broadcast %cst_41 : f32 to vector<32x256xf32>
    %81 = arith.select %79, %72, %80 : vector<32x256xi1>, vector<32x256xf32>
    %c0_42 = arith.constant 0 : index
    %c6 = arith.constant 6 : index
    %c0_43 = arith.constant 0 : index
    %c0_44 = arith.constant 0 : index
    %82 = vector.load %arg2[%c0_42, %c6, %c0_43, %c0_44] : memref<5x9x32x32xf32, #tpu.memory_space<vmem>>, vector<1x1x32x32xf32>
    %83 = vector.shape_cast %82 : vector<1x1x32x32xf32> to vector<32x32xf32>
    %cst_45 = arith.constant dense<0.000000e+00> : vector<32x256xf32>
    %84 = tpu.matmul %83, %81, %cst_45 {dimension_numbers = #tpu.dot_dimension_numbers<[1], [0], [0], [1], [0, 0, 1, 1], [], []>} : vector<32x32xf32>, vector<32x256xf32>, vector<32x256xf32> -> vector<32x256xf32>
    %85 = arith.addf %71, %84 : vector<32x256xf32>
    %c240_i32_46 = arith.constant 240 : i32
    %86 = tpu.dynamic_rotate %7 by %c240_i32_46 dim 1 : vector<32x256xf32>, i32 -> vector<32x256xf32>
    %c240_i32_47 = arith.constant 240 : i32
    %87 = vector.broadcast %c240_i32_47 : i32 to vector<1x256xi32>
    %88 = arith.cmpi slt, %3, %87 : vector<1x256xi32>
    %cst_48 = arith.constant 0.000000e+00 : f32
    %89 = vector.shape_cast %88 : vector<1x256xi1> to vector<1x256xi1>
    %90 = vector.broadcast %89 : vector<1x256xi1> to vector<32x256xi1>
    %91 = vector.broadcast %cst_48 : f32 to vector<32x256xf32>
    %92 = arith.select %90, %86, %91 : vector<32x256xi1>, vector<32x256xf32>
    %c0_49 = arith.constant 0 : index
    %c7 = arith.constant 7 : index
    %c0_50 = arith.constant 0 : index
    %c0_51 = arith.constant 0 : index
    %93 = vector.load %arg2[%c0_49, %c7, %c0_50, %c0_51] : memref<5x9x32x32xf32, #tpu.memory_space<vmem>>, vector<1x1x32x32xf32>
    %94 = vector.shape_cast %93 : vector<1x1x32x32xf32> to vector<32x32xf32>
    %cst_52 = arith.constant dense<0.000000e+00> : vector<32x256xf32>
    %95 = tpu.matmul %94, %92, %cst_52 {dimension_numbers = #tpu.dot_dimension_numbers<[1], [0], [0], [1], [0, 0, 1, 1], [], []>} : vector<32x32xf32>, vector<32x256xf32>, vector<32x256xf32> -> vector<32x256xf32>
    %96 = arith.addf %85, %95 : vector<32x256xf32>
    %c239_i32 = arith.constant 239 : i32
    %97 = tpu.dynamic_rotate %7 by %c239_i32 dim 1 : vector<32x256xf32>, i32 -> vector<32x256xf32>
    %c240_i32_53 = arith.constant 240 : i32
    %98 = vector.broadcast %c240_i32_53 : i32 to vector<1x256xi32>
    %99 = arith.cmpi slt, %3, %98 : vector<1x256xi32>
    %c15_i32_54 = arith.constant 15 : i32
    %100 = vector.broadcast %c15_i32_54 : i32 to vector<1x256xi32>
    %101 = arith.cmpi slt, %5, %100 : vector<1x256xi32>
    %102 = arith.andi %99, %101 : vector<1x256xi1>
    %cst_55 = arith.constant 0.000000e+00 : f32
    %103 = vector.shape_cast %102 : vector<1x256xi1> to vector<1x256xi1>
    %104 = vector.broadcast %103 : vector<1x256xi1> to vector<32x256xi1>
    %105 = vector.broadcast %cst_55 : f32 to vector<32x256xf32>
    %106 = arith.select %104, %97, %105 : vector<32x256xi1>, vector<32x256xf32>
    %c0_56 = arith.constant 0 : index
    %c8 = arith.constant 8 : index
    %c0_57 = arith.constant 0 : index
    %c0_58 = arith.constant 0 : index
    %107 = vector.load %arg2[%c0_56, %c8, %c0_57, %c0_58] : memref<5x9x32x32xf32, #tpu.memory_space<vmem>>, vector<1x1x32x32xf32>
    %108 = vector.shape_cast %107 : vector<1x1x32x32xf32> to vector<32x32xf32>
    %cst_59 = arith.constant dense<0.000000e+00> : vector<32x256xf32>
    %109 = tpu.matmul %108, %106, %cst_59 {dimension_numbers = #tpu.dot_dimension_numbers<[1], [0], [0], [1], [0, 0, 1, 1], [], []>} : vector<32x32xf32>, vector<32x256xf32>, vector<32x256xf32> -> vector<32x256xf32>
    %110 = arith.addf %96, %109 : vector<32x256xf32>
    %c0_60 = arith.constant 0 : index
    %c0_61 = arith.constant 0 : index
    %c0_62 = arith.constant 0 : index
    %111 = vector.load %arg3[%c0_60, %c0_61, %c0_62] : memref<5x32x1xf32, #tpu.memory_space<vmem>>, vector<1x32x1xf32>
    %112 = vector.shape_cast %111 : vector<1x32x1xf32> to vector<32x1xf32>
    %113 = vector.broadcast %112 : vector<32x1xf32> to vector<32x256xf32>
    %114 = arith.addf %110, %113 : vector<32x256xf32>
    %cst_63 = arith.constant 0.000000e+00 : f32
    %115 = vector.broadcast %cst_63 : f32 to vector<32x256xf32>
    %116 = arith.maximumf %114, %115 : vector<32x256xf32>
    %c17_i32_64 = arith.constant 17 : i32
    %117 = tpu.dynamic_rotate %116 by %c17_i32_64 dim 1 : vector<32x256xf32>, i32 -> vector<32x256xf32>
    %c16_i32_65 = arith.constant 16 : i32
    %118 = vector.broadcast %c16_i32_65 : i32 to vector<1x256xi32>
    %119 = arith.cmpi sge, %3, %118 : vector<1x256xi32>
    %c1_i32_66 = arith.constant 1 : i32
    %120 = vector.broadcast %c1_i32_66 : i32 to vector<1x256xi32>
    %121 = arith.cmpi sge, %5, %120 : vector<1x256xi32>
    %122 = arith.andi %119, %121 : vector<1x256xi1>
    %cst_67 = arith.constant 0.000000e+00 : f32
    %123 = vector.shape_cast %122 : vector<1x256xi1> to vector<1x256xi1>
    %124 = vector.broadcast %123 : vector<1x256xi1> to vector<32x256xi1>
    %125 = vector.broadcast %cst_67 : f32 to vector<32x256xf32>
    %126 = arith.select %124, %117, %125 : vector<32x256xi1>, vector<32x256xf32>
    %c1_68 = arith.constant 1 : index
    %c0_69 = arith.constant 0 : index
    %c0_70 = arith.constant 0 : index
    %c0_71 = arith.constant 0 : index
    %127 = vector.load %arg2[%c1_68, %c0_69, %c0_70, %c0_71] : memref<5x9x32x32xf32, #tpu.memory_space<vmem>>, vector<1x1x32x32xf32>
    %128 = vector.shape_cast %127 : vector<1x1x32x32xf32> to vector<32x32xf32>
    %cst_72 = arith.constant dense<0.000000e+00> : vector<32x256xf32>
    %129 = tpu.matmul %128, %126, %cst_72 {dimension_numbers = #tpu.dot_dimension_numbers<[1], [0], [0], [1], [0, 0, 1, 1], [], []>} : vector<32x32xf32>, vector<32x256xf32>, vector<32x256xf32> -> vector<32x256xf32>
    %c16_i32_73 = arith.constant 16 : i32
    %130 = tpu.dynamic_rotate %116 by %c16_i32_73 dim 1 : vector<32x256xf32>, i32 -> vector<32x256xf32>
    %c16_i32_74 = arith.constant 16 : i32
    %131 = vector.broadcast %c16_i32_74 : i32 to vector<1x256xi32>
    %132 = arith.cmpi sge, %3, %131 : vector<1x256xi32>
    %cst_75 = arith.constant 0.000000e+00 : f32
    %133 = vector.shape_cast %132 : vector<1x256xi1> to vector<1x256xi1>
    %134 = vector.broadcast %133 : vector<1x256xi1> to vector<32x256xi1>
    %135 = vector.broadcast %cst_75 : f32 to vector<32x256xf32>
    %136 = arith.select %134, %130, %135 : vector<32x256xi1>, vector<32x256xf32>
    %c1_76 = arith.constant 1 : index
    %c1_77 = arith.constant 1 : index
    %c0_78 = arith.constant 0 : index
    %c0_79 = arith.constant 0 : index
    %137 = vector.load %arg2[%c1_76, %c1_77, %c0_78, %c0_79] : memref<5x9x32x32xf32, #tpu.memory_space<vmem>>, vector<1x1x32x32xf32>
    %138 = vector.shape_cast %137 : vector<1x1x32x32xf32> to vector<32x32xf32>
    %cst_80 = arith.constant dense<0.000000e+00> : vector<32x256xf32>
    %139 = tpu.matmul %138, %136, %cst_80 {dimension_numbers = #tpu.dot_dimension_numbers<[1], [0], [0], [1], [0, 0, 1, 1], [], []>} : vector<32x32xf32>, vector<32x256xf32>, vector<32x256xf32> -> vector<32x256xf32>
    %140 = arith.addf %129, %139 : vector<32x256xf32>
    %c15_i32_81 = arith.constant 15 : i32
    %141 = tpu.dynamic_rotate %116 by %c15_i32_81 dim 1 : vector<32x256xf32>, i32 -> vector<32x256xf32>
    %c16_i32_82 = arith.constant 16 : i32
    %142 = vector.broadcast %c16_i32_82 : i32 to vector<1x256xi32>
    %143 = arith.cmpi sge, %3, %142 : vector<1x256xi32>
    %c15_i32_83 = arith.constant 15 : i32
    %144 = vector.broadcast %c15_i32_83 : i32 to vector<1x256xi32>
    %145 = arith.cmpi slt, %5, %144 : vector<1x256xi32>
    %146 = arith.andi %143, %145 : vector<1x256xi1>
    %cst_84 = arith.constant 0.000000e+00 : f32
    %147 = vector.shape_cast %146 : vector<1x256xi1> to vector<1x256xi1>
    %148 = vector.broadcast %147 : vector<1x256xi1> to vector<32x256xi1>
    %149 = vector.broadcast %cst_84 : f32 to vector<32x256xf32>
    %150 = arith.select %148, %141, %149 : vector<32x256xi1>, vector<32x256xf32>
    %c1_85 = arith.constant 1 : index
    %c2_86 = arith.constant 2 : index
    %c0_87 = arith.constant 0 : index
    %c0_88 = arith.constant 0 : index
    %151 = vector.load %arg2[%c1_85, %c2_86, %c0_87, %c0_88] : memref<5x9x32x32xf32, #tpu.memory_space<vmem>>, vector<1x1x32x32xf32>
    %152 = vector.shape_cast %151 : vector<1x1x32x32xf32> to vector<32x32xf32>
    %cst_89 = arith.constant dense<0.000000e+00> : vector<32x256xf32>
    %153 = tpu.matmul %152, %150, %cst_89 {dimension_numbers = #tpu.dot_dimension_numbers<[1], [0], [0], [1], [0, 0, 1, 1], [], []>} : vector<32x32xf32>, vector<32x256xf32>, vector<32x256xf32> -> vector<32x256xf32>
    %154 = arith.addf %140, %153 : vector<32x256xf32>
    %c1_i32_90 = arith.constant 1 : i32
    %155 = tpu.dynamic_rotate %116 by %c1_i32_90 dim 1 : vector<32x256xf32>, i32 -> vector<32x256xf32>
    %c1_i32_91 = arith.constant 1 : i32
    %156 = vector.broadcast %c1_i32_91 : i32 to vector<1x256xi32>
    %157 = arith.cmpi sge, %5, %156 : vector<1x256xi32>
    %cst_92 = arith.constant 0.000000e+00 : f32
    %158 = vector.shape_cast %157 : vector<1x256xi1> to vector<1x256xi1>
    %159 = vector.broadcast %158 : vector<1x256xi1> to vector<32x256xi1>
    %160 = vector.broadcast %cst_92 : f32 to vector<32x256xf32>
    %161 = arith.select %159, %155, %160 : vector<32x256xi1>, vector<32x256xf32>
    %c1_93 = arith.constant 1 : index
    %c3_94 = arith.constant 3 : index
    %c0_95 = arith.constant 0 : index
    %c0_96 = arith.constant 0 : index
    %162 = vector.load %arg2[%c1_93, %c3_94, %c0_95, %c0_96] : memref<5x9x32x32xf32, #tpu.memory_space<vmem>>, vector<1x1x32x32xf32>
    %163 = vector.shape_cast %162 : vector<1x1x32x32xf32> to vector<32x32xf32>
    %cst_97 = arith.constant dense<0.000000e+00> : vector<32x256xf32>
    %164 = tpu.matmul %163, %161, %cst_97 {dimension_numbers = #tpu.dot_dimension_numbers<[1], [0], [0], [1], [0, 0, 1, 1], [], []>} : vector<32x32xf32>, vector<32x256xf32>, vector<32x256xf32> -> vector<32x256xf32>
    %165 = arith.addf %154, %164 : vector<32x256xf32>
    %c1_98 = arith.constant 1 : index
    %c4_99 = arith.constant 4 : index
    %c0_100 = arith.constant 0 : index
    %c0_101 = arith.constant 0 : index
    %166 = vector.load %arg2[%c1_98, %c4_99, %c0_100, %c0_101] : memref<5x9x32x32xf32, #tpu.memory_space<vmem>>, vector<1x1x32x32xf32>
    %167 = vector.shape_cast %166 : vector<1x1x32x32xf32> to vector<32x32xf32>
    %cst_102 = arith.constant dense<0.000000e+00> : vector<32x256xf32>
    %168 = tpu.matmul %167, %116, %cst_102 {dimension_numbers = #tpu.dot_dimension_numbers<[1], [0], [0], [1], [0, 0, 1, 1], [], []>} : vector<32x32xf32>, vector<32x256xf32>, vector<32x256xf32> -> vector<32x256xf32>
    %169 = arith.addf %165, %168 : vector<32x256xf32>
    %c255_i32_103 = arith.constant 255 : i32
    %170 = tpu.dynamic_rotate %116 by %c255_i32_103 dim 1 : vector<32x256xf32>, i32 -> vector<32x256xf32>
    %c15_i32_104 = arith.constant 15 : i32
    %171 = vector.broadcast %c15_i32_104 : i32 to vector<1x256xi32>
    %172 = arith.cmpi slt, %5, %171 : vector<1x256xi32>
    %cst_105 = arith.constant 0.000000e+00 : f32
    %173 = vector.shape_cast %172 : vector<1x256xi1> to vector<1x256xi1>
    %174 = vector.broadcast %173 : vector<1x256xi1> to vector<32x256xi1>
    %175 = vector.broadcast %cst_105 : f32 to vector<32x256xf32>
    %176 = arith.select %174, %170, %175 : vector<32x256xi1>, vector<32x256xf32>
    %c1_106 = arith.constant 1 : index
    %c5_107 = arith.constant 5 : index
    %c0_108 = arith.constant 0 : index
    %c0_109 = arith.constant 0 : index
    %177 = vector.load %arg2[%c1_106, %c5_107, %c0_108, %c0_109] : memref<5x9x32x32xf32, #tpu.memory_space<vmem>>, vector<1x1x32x32xf32>
    %178 = vector.shape_cast %177 : vector<1x1x32x32xf32> to vector<32x32xf32>
    %cst_110 = arith.constant dense<0.000000e+00> : vector<32x256xf32>
    %179 = tpu.matmul %178, %176, %cst_110 {dimension_numbers = #tpu.dot_dimension_numbers<[1], [0], [0], [1], [0, 0, 1, 1], [], []>} : vector<32x32xf32>, vector<32x256xf32>, vector<32x256xf32> -> vector<32x256xf32>
    %180 = arith.addf %169, %179 : vector<32x256xf32>
    %c241_i32_111 = arith.constant 241 : i32
    %181 = tpu.dynamic_rotate %116 by %c241_i32_111 dim 1 : vector<32x256xf32>, i32 -> vector<32x256xf32>
    %c240_i32_112 = arith.constant 240 : i32
    %182 = vector.broadcast %c240_i32_112 : i32 to vector<1x256xi32>
    %183 = arith.cmpi slt, %3, %182 : vector<1x256xi32>
    %c1_i32_113 = arith.constant 1 : i32
    %184 = vector.broadcast %c1_i32_113 : i32 to vector<1x256xi32>
    %185 = arith.cmpi sge, %5, %184 : vector<1x256xi32>
    %186 = arith.andi %183, %185 : vector<1x256xi1>
    %cst_114 = arith.constant 0.000000e+00 : f32
    %187 = vector.shape_cast %186 : vector<1x256xi1> to vector<1x256xi1>
    %188 = vector.broadcast %187 : vector<1x256xi1> to vector<32x256xi1>
    %189 = vector.broadcast %cst_114 : f32 to vector<32x256xf32>
    %190 = arith.select %188, %181, %189 : vector<32x256xi1>, vector<32x256xf32>
    %c1_115 = arith.constant 1 : index
    %c6_116 = arith.constant 6 : index
    %c0_117 = arith.constant 0 : index
    %c0_118 = arith.constant 0 : index
    %191 = vector.load %arg2[%c1_115, %c6_116, %c0_117, %c0_118] : memref<5x9x32x32xf32, #tpu.memory_space<vmem>>, vector<1x1x32x32xf32>
    %192 = vector.shape_cast %191 : vector<1x1x32x32xf32> to vector<32x32xf32>
    %cst_119 = arith.constant dense<0.000000e+00> : vector<32x256xf32>
    %193 = tpu.matmul %192, %190, %cst_119 {dimension_numbers = #tpu.dot_dimension_numbers<[1], [0], [0], [1], [0, 0, 1, 1], [], []>} : vector<32x32xf32>, vector<32x256xf32>, vector<32x256xf32> -> vector<32x256xf32>
    %194 = arith.addf %180, %193 : vector<32x256xf32>
    %c240_i32_120 = arith.constant 240 : i32
    %195 = tpu.dynamic_rotate %116 by %c240_i32_120 dim 1 : vector<32x256xf32>, i32 -> vector<32x256xf32>
    %c240_i32_121 = arith.constant 240 : i32
    %196 = vector.broadcast %c240_i32_121 : i32 to vector<1x256xi32>
    %197 = arith.cmpi slt, %3, %196 : vector<1x256xi32>
    %cst_122 = arith.constant 0.000000e+00 : f32
    %198 = vector.shape_cast %197 : vector<1x256xi1> to vector<1x256xi1>
    %199 = vector.broadcast %198 : vector<1x256xi1> to vector<32x256xi1>
    %200 = vector.broadcast %cst_122 : f32 to vector<32x256xf32>
    %201 = arith.select %199, %195, %200 : vector<32x256xi1>, vector<32x256xf32>
    %c1_123 = arith.constant 1 : index
    %c7_124 = arith.constant 7 : index
    %c0_125 = arith.constant 0 : index
    %c0_126 = arith.constant 0 : index
    %202 = vector.load %arg2[%c1_123, %c7_124, %c0_125, %c0_126] : memref<5x9x32x32xf32, #tpu.memory_space<vmem>>, vector<1x1x32x32xf32>
    %203 = vector.shape_cast %202 : vector<1x1x32x32xf32> to vector<32x32xf32>
    %cst_127 = arith.constant dense<0.000000e+00> : vector<32x256xf32>
    %204 = tpu.matmul %203, %201, %cst_127 {dimension_numbers = #tpu.dot_dimension_numbers<[1], [0], [0], [1], [0, 0, 1, 1], [], []>} : vector<32x32xf32>, vector<32x256xf32>, vector<32x256xf32> -> vector<32x256xf32>
    %205 = arith.addf %194, %204 : vector<32x256xf32>
    %c239_i32_128 = arith.constant 239 : i32
    %206 = tpu.dynamic_rotate %116 by %c239_i32_128 dim 1 : vector<32x256xf32>, i32 -> vector<32x256xf32>
    %c240_i32_129 = arith.constant 240 : i32
    %207 = vector.broadcast %c240_i32_129 : i32 to vector<1x256xi32>
    %208 = arith.cmpi slt, %3, %207 : vector<1x256xi32>
    %c15_i32_130 = arith.constant 15 : i32
    %209 = vector.broadcast %c15_i32_130 : i32 to vector<1x256xi32>
    %210 = arith.cmpi slt, %5, %209 : vector<1x256xi32>
    %211 = arith.andi %208, %210 : vector<1x256xi1>
    %cst_131 = arith.constant 0.000000e+00 : f32
    %212 = vector.shape_cast %211 : vector<1x256xi1> to vector<1x256xi1>
    %213 = vector.broadcast %212 : vector<1x256xi1> to vector<32x256xi1>
    %214 = vector.broadcast %cst_131 : f32 to vector<32x256xf32>
    %215 = arith.select %213, %206, %214 : vector<32x256xi1>, vector<32x256xf32>
    %c1_132 = arith.constant 1 : index
    %c8_133 = arith.constant 8 : index
    %c0_134 = arith.constant 0 : index
    %c0_135 = arith.constant 0 : index
    %216 = vector.load %arg2[%c1_132, %c8_133, %c0_134, %c0_135] : memref<5x9x32x32xf32, #tpu.memory_space<vmem>>, vector<1x1x32x32xf32>
    %217 = vector.shape_cast %216 : vector<1x1x32x32xf32> to vector<32x32xf32>
    %cst_136 = arith.constant dense<0.000000e+00> : vector<32x256xf32>
    %218 = tpu.matmul %217, %215, %cst_136 {dimension_numbers = #tpu.dot_dimension_numbers<[1], [0], [0], [1], [0, 0, 1, 1], [], []>} : vector<32x32xf32>, vector<32x256xf32>, vector<32x256xf32> -> vector<32x256xf32>
    %219 = arith.addf %205, %218 : vector<32x256xf32>
    %c1_137 = arith.constant 1 : index
    %c0_138 = arith.constant 0 : index
    %c0_139 = arith.constant 0 : index
    %220 = vector.load %arg3[%c1_137, %c0_138, %c0_139] : memref<5x32x1xf32, #tpu.memory_space<vmem>>, vector<1x32x1xf32>
    %221 = vector.shape_cast %220 : vector<1x32x1xf32> to vector<32x1xf32>
    %222 = vector.broadcast %221 : vector<32x1xf32> to vector<32x256xf32>
    %223 = arith.addf %219, %222 : vector<32x256xf32>
    %cst_140 = arith.constant 0.000000e+00 : f32
    %224 = vector.broadcast %cst_140 : f32 to vector<32x256xf32>
    %225 = arith.maximumf %223, %224 : vector<32x256xf32>
    %c17_i32_141 = arith.constant 17 : i32
    %226 = tpu.dynamic_rotate %225 by %c17_i32_141 dim 1 : vector<32x256xf32>, i32 -> vector<32x256xf32>
    %c16_i32_142 = arith.constant 16 : i32
    %227 = vector.broadcast %c16_i32_142 : i32 to vector<1x256xi32>
    %228 = arith.cmpi sge, %3, %227 : vector<1x256xi32>
    %c1_i32_143 = arith.constant 1 : i32
    %229 = vector.broadcast %c1_i32_143 : i32 to vector<1x256xi32>
    %230 = arith.cmpi sge, %5, %229 : vector<1x256xi32>
    %231 = arith.andi %228, %230 : vector<1x256xi1>
    %cst_144 = arith.constant 0.000000e+00 : f32
    %232 = vector.shape_cast %231 : vector<1x256xi1> to vector<1x256xi1>
    %233 = vector.broadcast %232 : vector<1x256xi1> to vector<32x256xi1>
    %234 = vector.broadcast %cst_144 : f32 to vector<32x256xf32>
    %235 = arith.select %233, %226, %234 : vector<32x256xi1>, vector<32x256xf32>
    %c2_145 = arith.constant 2 : index
    %c0_146 = arith.constant 0 : index
    %c0_147 = arith.constant 0 : index
    %c0_148 = arith.constant 0 : index
    %236 = vector.load %arg2[%c2_145, %c0_146, %c0_147, %c0_148] : memref<5x9x32x32xf32, #tpu.memory_space<vmem>>, vector<1x1x32x32xf32>
    %237 = vector.shape_cast %236 : vector<1x1x32x32xf32> to vector<32x32xf32>
    %cst_149 = arith.constant dense<0.000000e+00> : vector<32x256xf32>
    %238 = tpu.matmul %237, %235, %cst_149 {dimension_numbers = #tpu.dot_dimension_numbers<[1], [0], [0], [1], [0, 0, 1, 1], [], []>} : vector<32x32xf32>, vector<32x256xf32>, vector<32x256xf32> -> vector<32x256xf32>
    %c16_i32_150 = arith.constant 16 : i32
    %239 = tpu.dynamic_rotate %225 by %c16_i32_150 dim 1 : vector<32x256xf32>, i32 -> vector<32x256xf32>
    %c16_i32_151 = arith.constant 16 : i32
    %240 = vector.broadcast %c16_i32_151 : i32 to vector<1x256xi32>
    %241 = arith.cmpi sge, %3, %240 : vector<1x256xi32>
    %cst_152 = arith.constant 0.000000e+00 : f32
    %242 = vector.shape_cast %241 : vector<1x256xi1> to vector<1x256xi1>
    %243 = vector.broadcast %242 : vector<1x256xi1> to vector<32x256xi1>
    %244 = vector.broadcast %cst_152 : f32 to vector<32x256xf32>
    %245 = arith.select %243, %239, %244 : vector<32x256xi1>, vector<32x256xf32>
    %c2_153 = arith.constant 2 : index
    %c1_154 = arith.constant 1 : index
    %c0_155 = arith.constant 0 : index
    %c0_156 = arith.constant 0 : index
    %246 = vector.load %arg2[%c2_153, %c1_154, %c0_155, %c0_156] : memref<5x9x32x32xf32, #tpu.memory_space<vmem>>, vector<1x1x32x32xf32>
    %247 = vector.shape_cast %246 : vector<1x1x32x32xf32> to vector<32x32xf32>
    %cst_157 = arith.constant dense<0.000000e+00> : vector<32x256xf32>
    %248 = tpu.matmul %247, %245, %cst_157 {dimension_numbers = #tpu.dot_dimension_numbers<[1], [0], [0], [1], [0, 0, 1, 1], [], []>} : vector<32x32xf32>, vector<32x256xf32>, vector<32x256xf32> -> vector<32x256xf32>
    %249 = arith.addf %238, %248 : vector<32x256xf32>
    %c15_i32_158 = arith.constant 15 : i32
    %250 = tpu.dynamic_rotate %225 by %c15_i32_158 dim 1 : vector<32x256xf32>, i32 -> vector<32x256xf32>
    %c16_i32_159 = arith.constant 16 : i32
    %251 = vector.broadcast %c16_i32_159 : i32 to vector<1x256xi32>
    %252 = arith.cmpi sge, %3, %251 : vector<1x256xi32>
    %c15_i32_160 = arith.constant 15 : i32
    %253 = vector.broadcast %c15_i32_160 : i32 to vector<1x256xi32>
    %254 = arith.cmpi slt, %5, %253 : vector<1x256xi32>
    %255 = arith.andi %252, %254 : vector<1x256xi1>
    %cst_161 = arith.constant 0.000000e+00 : f32
    %256 = vector.shape_cast %255 : vector<1x256xi1> to vector<1x256xi1>
    %257 = vector.broadcast %256 : vector<1x256xi1> to vector<32x256xi1>
    %258 = vector.broadcast %cst_161 : f32 to vector<32x256xf32>
    %259 = arith.select %257, %250, %258 : vector<32x256xi1>, vector<32x256xf32>
    %c2_162 = arith.constant 2 : index
    %c2_163 = arith.constant 2 : index
    %c0_164 = arith.constant 0 : index
    %c0_165 = arith.constant 0 : index
    %260 = vector.load %arg2[%c2_162, %c2_163, %c0_164, %c0_165] : memref<5x9x32x32xf32, #tpu.memory_space<vmem>>, vector<1x1x32x32xf32>
    %261 = vector.shape_cast %260 : vector<1x1x32x32xf32> to vector<32x32xf32>
    %cst_166 = arith.constant dense<0.000000e+00> : vector<32x256xf32>
    %262 = tpu.matmul %261, %259, %cst_166 {dimension_numbers = #tpu.dot_dimension_numbers<[1], [0], [0], [1], [0, 0, 1, 1], [], []>} : vector<32x32xf32>, vector<32x256xf32>, vector<32x256xf32> -> vector<32x256xf32>
    %263 = arith.addf %249, %262 : vector<32x256xf32>
    %c1_i32_167 = arith.constant 1 : i32
    %264 = tpu.dynamic_rotate %225 by %c1_i32_167 dim 1 : vector<32x256xf32>, i32 -> vector<32x256xf32>
    %c1_i32_168 = arith.constant 1 : i32
    %265 = vector.broadcast %c1_i32_168 : i32 to vector<1x256xi32>
    %266 = arith.cmpi sge, %5, %265 : vector<1x256xi32>
    %cst_169 = arith.constant 0.000000e+00 : f32
    %267 = vector.shape_cast %266 : vector<1x256xi1> to vector<1x256xi1>
    %268 = vector.broadcast %267 : vector<1x256xi1> to vector<32x256xi1>
    %269 = vector.broadcast %cst_169 : f32 to vector<32x256xf32>
    %270 = arith.select %268, %264, %269 : vector<32x256xi1>, vector<32x256xf32>
    %c2_170 = arith.constant 2 : index
    %c3_171 = arith.constant 3 : index
    %c0_172 = arith.constant 0 : index
    %c0_173 = arith.constant 0 : index
    %271 = vector.load %arg2[%c2_170, %c3_171, %c0_172, %c0_173] : memref<5x9x32x32xf32, #tpu.memory_space<vmem>>, vector<1x1x32x32xf32>
    %272 = vector.shape_cast %271 : vector<1x1x32x32xf32> to vector<32x32xf32>
    %cst_174 = arith.constant dense<0.000000e+00> : vector<32x256xf32>
    %273 = tpu.matmul %272, %270, %cst_174 {dimension_numbers = #tpu.dot_dimension_numbers<[1], [0], [0], [1], [0, 0, 1, 1], [], []>} : vector<32x32xf32>, vector<32x256xf32>, vector<32x256xf32> -> vector<32x256xf32>
    %274 = arith.addf %263, %273 : vector<32x256xf32>
    %c2_175 = arith.constant 2 : index
    %c4_176 = arith.constant 4 : index
    %c0_177 = arith.constant 0 : index
    %c0_178 = arith.constant 0 : index
    %275 = vector.load %arg2[%c2_175, %c4_176, %c0_177, %c0_178] : memref<5x9x32x32xf32, #tpu.memory_space<vmem>>, vector<1x1x32x32xf32>
    %276 = vector.shape_cast %275 : vector<1x1x32x32xf32> to vector<32x32xf32>
    %cst_179 = arith.constant dense<0.000000e+00> : vector<32x256xf32>
    %277 = tpu.matmul %276, %225, %cst_179 {dimension_numbers = #tpu.dot_dimension_numbers<[1], [0], [0], [1], [0, 0, 1, 1], [], []>} : vector<32x32xf32>, vector<32x256xf32>, vector<32x256xf32> -> vector<32x256xf32>
    %278 = arith.addf %274, %277 : vector<32x256xf32>
    %c255_i32_180 = arith.constant 255 : i32
    %279 = tpu.dynamic_rotate %225 by %c255_i32_180 dim 1 : vector<32x256xf32>, i32 -> vector<32x256xf32>
    %c15_i32_181 = arith.constant 15 : i32
    %280 = vector.broadcast %c15_i32_181 : i32 to vector<1x256xi32>
    %281 = arith.cmpi slt, %5, %280 : vector<1x256xi32>
    %cst_182 = arith.constant 0.000000e+00 : f32
    %282 = vector.shape_cast %281 : vector<1x256xi1> to vector<1x256xi1>
    %283 = vector.broadcast %282 : vector<1x256xi1> to vector<32x256xi1>
    %284 = vector.broadcast %cst_182 : f32 to vector<32x256xf32>
    %285 = arith.select %283, %279, %284 : vector<32x256xi1>, vector<32x256xf32>
    %c2_183 = arith.constant 2 : index
    %c5_184 = arith.constant 5 : index
    %c0_185 = arith.constant 0 : index
    %c0_186 = arith.constant 0 : index
    %286 = vector.load %arg2[%c2_183, %c5_184, %c0_185, %c0_186] : memref<5x9x32x32xf32, #tpu.memory_space<vmem>>, vector<1x1x32x32xf32>
    %287 = vector.shape_cast %286 : vector<1x1x32x32xf32> to vector<32x32xf32>
    %cst_187 = arith.constant dense<0.000000e+00> : vector<32x256xf32>
    %288 = tpu.matmul %287, %285, %cst_187 {dimension_numbers = #tpu.dot_dimension_numbers<[1], [0], [0], [1], [0, 0, 1, 1], [], []>} : vector<32x32xf32>, vector<32x256xf32>, vector<32x256xf32> -> vector<32x256xf32>
    %289 = arith.addf %278, %288 : vector<32x256xf32>
    %c241_i32_188 = arith.constant 241 : i32
    %290 = tpu.dynamic_rotate %225 by %c241_i32_188 dim 1 : vector<32x256xf32>, i32 -> vector<32x256xf32>
    %c240_i32_189 = arith.constant 240 : i32
    %291 = vector.broadcast %c240_i32_189 : i32 to vector<1x256xi32>
    %292 = arith.cmpi slt, %3, %291 : vector<1x256xi32>
    %c1_i32_190 = arith.constant 1 : i32
    %293 = vector.broadcast %c1_i32_190 : i32 to vector<1x256xi32>
    %294 = arith.cmpi sge, %5, %293 : vector<1x256xi32>
    %295 = arith.andi %292, %294 : vector<1x256xi1>
    %cst_191 = arith.constant 0.000000e+00 : f32
    %296 = vector.shape_cast %295 : vector<1x256xi1> to vector<1x256xi1>
    %297 = vector.broadcast %296 : vector<1x256xi1> to vector<32x256xi1>
    %298 = vector.broadcast %cst_191 : f32 to vector<32x256xf32>
    %299 = arith.select %297, %290, %298 : vector<32x256xi1>, vector<32x256xf32>
    %c2_192 = arith.constant 2 : index
    %c6_193 = arith.constant 6 : index
    %c0_194 = arith.constant 0 : index
    %c0_195 = arith.constant 0 : index
    %300 = vector.load %arg2[%c2_192, %c6_193, %c0_194, %c0_195] : memref<5x9x32x32xf32, #tpu.memory_space<vmem>>, vector<1x1x32x32xf32>
    %301 = vector.shape_cast %300 : vector<1x1x32x32xf32> to vector<32x32xf32>
    %cst_196 = arith.constant dense<0.000000e+00> : vector<32x256xf32>
    %302 = tpu.matmul %301, %299, %cst_196 {dimension_numbers = #tpu.dot_dimension_numbers<[1], [0], [0], [1], [0, 0, 1, 1], [], []>} : vector<32x32xf32>, vector<32x256xf32>, vector<32x256xf32> -> vector<32x256xf32>
    %303 = arith.addf %289, %302 : vector<32x256xf32>
    %c240_i32_197 = arith.constant 240 : i32
    %304 = tpu.dynamic_rotate %225 by %c240_i32_197 dim 1 : vector<32x256xf32>, i32 -> vector<32x256xf32>
    %c240_i32_198 = arith.constant 240 : i32
    %305 = vector.broadcast %c240_i32_198 : i32 to vector<1x256xi32>
    %306 = arith.cmpi slt, %3, %305 : vector<1x256xi32>
    %cst_199 = arith.constant 0.000000e+00 : f32
    %307 = vector.shape_cast %306 : vector<1x256xi1> to vector<1x256xi1>
    %308 = vector.broadcast %307 : vector<1x256xi1> to vector<32x256xi1>
    %309 = vector.broadcast %cst_199 : f32 to vector<32x256xf32>
    %310 = arith.select %308, %304, %309 : vector<32x256xi1>, vector<32x256xf32>
    %c2_200 = arith.constant 2 : index
    %c7_201 = arith.constant 7 : index
    %c0_202 = arith.constant 0 : index
    %c0_203 = arith.constant 0 : index
    %311 = vector.load %arg2[%c2_200, %c7_201, %c0_202, %c0_203] : memref<5x9x32x32xf32, #tpu.memory_space<vmem>>, vector<1x1x32x32xf32>
    %312 = vector.shape_cast %311 : vector<1x1x32x32xf32> to vector<32x32xf32>
    %cst_204 = arith.constant dense<0.000000e+00> : vector<32x256xf32>
    %313 = tpu.matmul %312, %310, %cst_204 {dimension_numbers = #tpu.dot_dimension_numbers<[1], [0], [0], [1], [0, 0, 1, 1], [], []>} : vector<32x32xf32>, vector<32x256xf32>, vector<32x256xf32> -> vector<32x256xf32>
    %314 = arith.addf %303, %313 : vector<32x256xf32>
    %c239_i32_205 = arith.constant 239 : i32
    %315 = tpu.dynamic_rotate %225 by %c239_i32_205 dim 1 : vector<32x256xf32>, i32 -> vector<32x256xf32>
    %c240_i32_206 = arith.constant 240 : i32
    %316 = vector.broadcast %c240_i32_206 : i32 to vector<1x256xi32>
    %317 = arith.cmpi slt, %3, %316 : vector<1x256xi32>
    %c15_i32_207 = arith.constant 15 : i32
    %318 = vector.broadcast %c15_i32_207 : i32 to vector<1x256xi32>
    %319 = arith.cmpi slt, %5, %318 : vector<1x256xi32>
    %320 = arith.andi %317, %319 : vector<1x256xi1>
    %cst_208 = arith.constant 0.000000e+00 : f32
    %321 = vector.shape_cast %320 : vector<1x256xi1> to vector<1x256xi1>
    %322 = vector.broadcast %321 : vector<1x256xi1> to vector<32x256xi1>
    %323 = vector.broadcast %cst_208 : f32 to vector<32x256xf32>
    %324 = arith.select %322, %315, %323 : vector<32x256xi1>, vector<32x256xf32>
    %c2_209 = arith.constant 2 : index
    %c8_210 = arith.constant 8 : index
    %c0_211 = arith.constant 0 : index
    %c0_212 = arith.constant 0 : index
    %325 = vector.load %arg2[%c2_209, %c8_210, %c0_211, %c0_212] : memref<5x9x32x32xf32, #tpu.memory_space<vmem>>, vector<1x1x32x32xf32>
    %326 = vector.shape_cast %325 : vector<1x1x32x32xf32> to vector<32x32xf32>
    %cst_213 = arith.constant dense<0.000000e+00> : vector<32x256xf32>
    %327 = tpu.matmul %326, %324, %cst_213 {dimension_numbers = #tpu.dot_dimension_numbers<[1], [0], [0], [1], [0, 0, 1, 1], [], []>} : vector<32x32xf32>, vector<32x256xf32>, vector<32x256xf32> -> vector<32x256xf32>
    %328 = arith.addf %314, %327 : vector<32x256xf32>
    %c2_214 = arith.constant 2 : index
    %c0_215 = arith.constant 0 : index
    %c0_216 = arith.constant 0 : index
    %329 = vector.load %arg3[%c2_214, %c0_215, %c0_216] : memref<5x32x1xf32, #tpu.memory_space<vmem>>, vector<1x32x1xf32>
    %330 = vector.shape_cast %329 : vector<1x32x1xf32> to vector<32x1xf32>
    %331 = vector.broadcast %330 : vector<32x1xf32> to vector<32x256xf32>
    %332 = arith.addf %328, %331 : vector<32x256xf32>
    %cst_217 = arith.constant 0.000000e+00 : f32
    %333 = vector.broadcast %cst_217 : f32 to vector<32x256xf32>
    %334 = arith.maximumf %332, %333 : vector<32x256xf32>
    %c17_i32_218 = arith.constant 17 : i32
    %335 = tpu.dynamic_rotate %334 by %c17_i32_218 dim 1 : vector<32x256xf32>, i32 -> vector<32x256xf32>
    %c16_i32_219 = arith.constant 16 : i32
    %336 = vector.broadcast %c16_i32_219 : i32 to vector<1x256xi32>
    %337 = arith.cmpi sge, %3, %336 : vector<1x256xi32>
    %c1_i32_220 = arith.constant 1 : i32
    %338 = vector.broadcast %c1_i32_220 : i32 to vector<1x256xi32>
    %339 = arith.cmpi sge, %5, %338 : vector<1x256xi32>
    %340 = arith.andi %337, %339 : vector<1x256xi1>
    %cst_221 = arith.constant 0.000000e+00 : f32
    %341 = vector.shape_cast %340 : vector<1x256xi1> to vector<1x256xi1>
    %342 = vector.broadcast %341 : vector<1x256xi1> to vector<32x256xi1>
    %343 = vector.broadcast %cst_221 : f32 to vector<32x256xf32>
    %344 = arith.select %342, %335, %343 : vector<32x256xi1>, vector<32x256xf32>
    %c3_222 = arith.constant 3 : index
    %c0_223 = arith.constant 0 : index
    %c0_224 = arith.constant 0 : index
    %c0_225 = arith.constant 0 : index
    %345 = vector.load %arg2[%c3_222, %c0_223, %c0_224, %c0_225] : memref<5x9x32x32xf32, #tpu.memory_space<vmem>>, vector<1x1x32x32xf32>
    %346 = vector.shape_cast %345 : vector<1x1x32x32xf32> to vector<32x32xf32>
    %cst_226 = arith.constant dense<0.000000e+00> : vector<32x256xf32>
    %347 = tpu.matmul %346, %344, %cst_226 {dimension_numbers = #tpu.dot_dimension_numbers<[1], [0], [0], [1], [0, 0, 1, 1], [], []>} : vector<32x32xf32>, vector<32x256xf32>, vector<32x256xf32> -> vector<32x256xf32>
    %c16_i32_227 = arith.constant 16 : i32
    %348 = tpu.dynamic_rotate %334 by %c16_i32_227 dim 1 : vector<32x256xf32>, i32 -> vector<32x256xf32>
    %c16_i32_228 = arith.constant 16 : i32
    %349 = vector.broadcast %c16_i32_228 : i32 to vector<1x256xi32>
    %350 = arith.cmpi sge, %3, %349 : vector<1x256xi32>
    %cst_229 = arith.constant 0.000000e+00 : f32
    %351 = vector.shape_cast %350 : vector<1x256xi1> to vector<1x256xi1>
    %352 = vector.broadcast %351 : vector<1x256xi1> to vector<32x256xi1>
    %353 = vector.broadcast %cst_229 : f32 to vector<32x256xf32>
    %354 = arith.select %352, %348, %353 : vector<32x256xi1>, vector<32x256xf32>
    %c3_230 = arith.constant 3 : index
    %c1_231 = arith.constant 1 : index
    %c0_232 = arith.constant 0 : index
    %c0_233 = arith.constant 0 : index
    %355 = vector.load %arg2[%c3_230, %c1_231, %c0_232, %c0_233] : memref<5x9x32x32xf32, #tpu.memory_space<vmem>>, vector<1x1x32x32xf32>
    %356 = vector.shape_cast %355 : vector<1x1x32x32xf32> to vector<32x32xf32>
    %cst_234 = arith.constant dense<0.000000e+00> : vector<32x256xf32>
    %357 = tpu.matmul %356, %354, %cst_234 {dimension_numbers = #tpu.dot_dimension_numbers<[1], [0], [0], [1], [0, 0, 1, 1], [], []>} : vector<32x32xf32>, vector<32x256xf32>, vector<32x256xf32> -> vector<32x256xf32>
    %358 = arith.addf %347, %357 : vector<32x256xf32>
    %c15_i32_235 = arith.constant 15 : i32
    %359 = tpu.dynamic_rotate %334 by %c15_i32_235 dim 1 : vector<32x256xf32>, i32 -> vector<32x256xf32>
    %c16_i32_236 = arith.constant 16 : i32
    %360 = vector.broadcast %c16_i32_236 : i32 to vector<1x256xi32>
    %361 = arith.cmpi sge, %3, %360 : vector<1x256xi32>
    %c15_i32_237 = arith.constant 15 : i32
    %362 = vector.broadcast %c15_i32_237 : i32 to vector<1x256xi32>
    %363 = arith.cmpi slt, %5, %362 : vector<1x256xi32>
    %364 = arith.andi %361, %363 : vector<1x256xi1>
    %cst_238 = arith.constant 0.000000e+00 : f32
    %365 = vector.shape_cast %364 : vector<1x256xi1> to vector<1x256xi1>
    %366 = vector.broadcast %365 : vector<1x256xi1> to vector<32x256xi1>
    %367 = vector.broadcast %cst_238 : f32 to vector<32x256xf32>
    %368 = arith.select %366, %359, %367 : vector<32x256xi1>, vector<32x256xf32>
    %c3_239 = arith.constant 3 : index
    %c2_240 = arith.constant 2 : index
    %c0_241 = arith.constant 0 : index
    %c0_242 = arith.constant 0 : index
    %369 = vector.load %arg2[%c3_239, %c2_240, %c0_241, %c0_242] : memref<5x9x32x32xf32, #tpu.memory_space<vmem>>, vector<1x1x32x32xf32>
    %370 = vector.shape_cast %369 : vector<1x1x32x32xf32> to vector<32x32xf32>
    %cst_243 = arith.constant dense<0.000000e+00> : vector<32x256xf32>
    %371 = tpu.matmul %370, %368, %cst_243 {dimension_numbers = #tpu.dot_dimension_numbers<[1], [0], [0], [1], [0, 0, 1, 1], [], []>} : vector<32x32xf32>, vector<32x256xf32>, vector<32x256xf32> -> vector<32x256xf32>
    %372 = arith.addf %358, %371 : vector<32x256xf32>
    %c1_i32_244 = arith.constant 1 : i32
    %373 = tpu.dynamic_rotate %334 by %c1_i32_244 dim 1 : vector<32x256xf32>, i32 -> vector<32x256xf32>
    %c1_i32_245 = arith.constant 1 : i32
    %374 = vector.broadcast %c1_i32_245 : i32 to vector<1x256xi32>
    %375 = arith.cmpi sge, %5, %374 : vector<1x256xi32>
    %cst_246 = arith.constant 0.000000e+00 : f32
    %376 = vector.shape_cast %375 : vector<1x256xi1> to vector<1x256xi1>
    %377 = vector.broadcast %376 : vector<1x256xi1> to vector<32x256xi1>
    %378 = vector.broadcast %cst_246 : f32 to vector<32x256xf32>
    %379 = arith.select %377, %373, %378 : vector<32x256xi1>, vector<32x256xf32>
    %c3_247 = arith.constant 3 : index
    %c3_248 = arith.constant 3 : index
    %c0_249 = arith.constant 0 : index
    %c0_250 = arith.constant 0 : index
    %380 = vector.load %arg2[%c3_247, %c3_248, %c0_249, %c0_250] : memref<5x9x32x32xf32, #tpu.memory_space<vmem>>, vector<1x1x32x32xf32>
    %381 = vector.shape_cast %380 : vector<1x1x32x32xf32> to vector<32x32xf32>
    %cst_251 = arith.constant dense<0.000000e+00> : vector<32x256xf32>
    %382 = tpu.matmul %381, %379, %cst_251 {dimension_numbers = #tpu.dot_dimension_numbers<[1], [0], [0], [1], [0, 0, 1, 1], [], []>} : vector<32x32xf32>, vector<32x256xf32>, vector<32x256xf32> -> vector<32x256xf32>
    %383 = arith.addf %372, %382 : vector<32x256xf32>
    %c3_252 = arith.constant 3 : index
    %c4_253 = arith.constant 4 : index
    %c0_254 = arith.constant 0 : index
    %c0_255 = arith.constant 0 : index
    %384 = vector.load %arg2[%c3_252, %c4_253, %c0_254, %c0_255] : memref<5x9x32x32xf32, #tpu.memory_space<vmem>>, vector<1x1x32x32xf32>
    %385 = vector.shape_cast %384 : vector<1x1x32x32xf32> to vector<32x32xf32>
    %cst_256 = arith.constant dense<0.000000e+00> : vector<32x256xf32>
    %386 = tpu.matmul %385, %334, %cst_256 {dimension_numbers = #tpu.dot_dimension_numbers<[1], [0], [0], [1], [0, 0, 1, 1], [], []>} : vector<32x32xf32>, vector<32x256xf32>, vector<32x256xf32> -> vector<32x256xf32>
    %387 = arith.addf %383, %386 : vector<32x256xf32>
    %c255_i32_257 = arith.constant 255 : i32
    %388 = tpu.dynamic_rotate %334 by %c255_i32_257 dim 1 : vector<32x256xf32>, i32 -> vector<32x256xf32>
    %c15_i32_258 = arith.constant 15 : i32
    %389 = vector.broadcast %c15_i32_258 : i32 to vector<1x256xi32>
    %390 = arith.cmpi slt, %5, %389 : vector<1x256xi32>
    %cst_259 = arith.constant 0.000000e+00 : f32
    %391 = vector.shape_cast %390 : vector<1x256xi1> to vector<1x256xi1>
    %392 = vector.broadcast %391 : vector<1x256xi1> to vector<32x256xi1>
    %393 = vector.broadcast %cst_259 : f32 to vector<32x256xf32>
    %394 = arith.select %392, %388, %393 : vector<32x256xi1>, vector<32x256xf32>
    %c3_260 = arith.constant 3 : index
    %c5_261 = arith.constant 5 : index
    %c0_262 = arith.constant 0 : index
    %c0_263 = arith.constant 0 : index
    %395 = vector.load %arg2[%c3_260, %c5_261, %c0_262, %c0_263] : memref<5x9x32x32xf32, #tpu.memory_space<vmem>>, vector<1x1x32x32xf32>
    %396 = vector.shape_cast %395 : vector<1x1x32x32xf32> to vector<32x32xf32>
    %cst_264 = arith.constant dense<0.000000e+00> : vector<32x256xf32>
    %397 = tpu.matmul %396, %394, %cst_264 {dimension_numbers = #tpu.dot_dimension_numbers<[1], [0], [0], [1], [0, 0, 1, 1], [], []>} : vector<32x32xf32>, vector<32x256xf32>, vector<32x256xf32> -> vector<32x256xf32>
    %398 = arith.addf %387, %397 : vector<32x256xf32>
    %c241_i32_265 = arith.constant 241 : i32
    %399 = tpu.dynamic_rotate %334 by %c241_i32_265 dim 1 : vector<32x256xf32>, i32 -> vector<32x256xf32>
    %c240_i32_266 = arith.constant 240 : i32
    %400 = vector.broadcast %c240_i32_266 : i32 to vector<1x256xi32>
    %401 = arith.cmpi slt, %3, %400 : vector<1x256xi32>
    %c1_i32_267 = arith.constant 1 : i32
    %402 = vector.broadcast %c1_i32_267 : i32 to vector<1x256xi32>
    %403 = arith.cmpi sge, %5, %402 : vector<1x256xi32>
    %404 = arith.andi %401, %403 : vector<1x256xi1>
    %cst_268 = arith.constant 0.000000e+00 : f32
    %405 = vector.shape_cast %404 : vector<1x256xi1> to vector<1x256xi1>
    %406 = vector.broadcast %405 : vector<1x256xi1> to vector<32x256xi1>
    %407 = vector.broadcast %cst_268 : f32 to vector<32x256xf32>
    %408 = arith.select %406, %399, %407 : vector<32x256xi1>, vector<32x256xf32>
    %c3_269 = arith.constant 3 : index
    %c6_270 = arith.constant 6 : index
    %c0_271 = arith.constant 0 : index
    %c0_272 = arith.constant 0 : index
    %409 = vector.load %arg2[%c3_269, %c6_270, %c0_271, %c0_272] : memref<5x9x32x32xf32, #tpu.memory_space<vmem>>, vector<1x1x32x32xf32>
    %410 = vector.shape_cast %409 : vector<1x1x32x32xf32> to vector<32x32xf32>
    %cst_273 = arith.constant dense<0.000000e+00> : vector<32x256xf32>
    %411 = tpu.matmul %410, %408, %cst_273 {dimension_numbers = #tpu.dot_dimension_numbers<[1], [0], [0], [1], [0, 0, 1, 1], [], []>} : vector<32x32xf32>, vector<32x256xf32>, vector<32x256xf32> -> vector<32x256xf32>
    %412 = arith.addf %398, %411 : vector<32x256xf32>
    %c240_i32_274 = arith.constant 240 : i32
    %413 = tpu.dynamic_rotate %334 by %c240_i32_274 dim 1 : vector<32x256xf32>, i32 -> vector<32x256xf32>
    %c240_i32_275 = arith.constant 240 : i32
    %414 = vector.broadcast %c240_i32_275 : i32 to vector<1x256xi32>
    %415 = arith.cmpi slt, %3, %414 : vector<1x256xi32>
    %cst_276 = arith.constant 0.000000e+00 : f32
    %416 = vector.shape_cast %415 : vector<1x256xi1> to vector<1x256xi1>
    %417 = vector.broadcast %416 : vector<1x256xi1> to vector<32x256xi1>
    %418 = vector.broadcast %cst_276 : f32 to vector<32x256xf32>
    %419 = arith.select %417, %413, %418 : vector<32x256xi1>, vector<32x256xf32>
    %c3_277 = arith.constant 3 : index
    %c7_278 = arith.constant 7 : index
    %c0_279 = arith.constant 0 : index
    %c0_280 = arith.constant 0 : index
    %420 = vector.load %arg2[%c3_277, %c7_278, %c0_279, %c0_280] : memref<5x9x32x32xf32, #tpu.memory_space<vmem>>, vector<1x1x32x32xf32>
    %421 = vector.shape_cast %420 : vector<1x1x32x32xf32> to vector<32x32xf32>
    %cst_281 = arith.constant dense<0.000000e+00> : vector<32x256xf32>
    %422 = tpu.matmul %421, %419, %cst_281 {dimension_numbers = #tpu.dot_dimension_numbers<[1], [0], [0], [1], [0, 0, 1, 1], [], []>} : vector<32x32xf32>, vector<32x256xf32>, vector<32x256xf32> -> vector<32x256xf32>
    %423 = arith.addf %412, %422 : vector<32x256xf32>
    %c239_i32_282 = arith.constant 239 : i32
    %424 = tpu.dynamic_rotate %334 by %c239_i32_282 dim 1 : vector<32x256xf32>, i32 -> vector<32x256xf32>
    %c240_i32_283 = arith.constant 240 : i32
    %425 = vector.broadcast %c240_i32_283 : i32 to vector<1x256xi32>
    %426 = arith.cmpi slt, %3, %425 : vector<1x256xi32>
    %c15_i32_284 = arith.constant 15 : i32
    %427 = vector.broadcast %c15_i32_284 : i32 to vector<1x256xi32>
    %428 = arith.cmpi slt, %5, %427 : vector<1x256xi32>
    %429 = arith.andi %426, %428 : vector<1x256xi1>
    %cst_285 = arith.constant 0.000000e+00 : f32
    %430 = vector.shape_cast %429 : vector<1x256xi1> to vector<1x256xi1>
    %431 = vector.broadcast %430 : vector<1x256xi1> to vector<32x256xi1>
    %432 = vector.broadcast %cst_285 : f32 to vector<32x256xf32>
    %433 = arith.select %431, %424, %432 : vector<32x256xi1>, vector<32x256xf32>
    %c3_286 = arith.constant 3 : index
    %c8_287 = arith.constant 8 : index
    %c0_288 = arith.constant 0 : index
    %c0_289 = arith.constant 0 : index
    %434 = vector.load %arg2[%c3_286, %c8_287, %c0_288, %c0_289] : memref<5x9x32x32xf32, #tpu.memory_space<vmem>>, vector<1x1x32x32xf32>
    %435 = vector.shape_cast %434 : vector<1x1x32x32xf32> to vector<32x32xf32>
    %cst_290 = arith.constant dense<0.000000e+00> : vector<32x256xf32>
    %436 = tpu.matmul %435, %433, %cst_290 {dimension_numbers = #tpu.dot_dimension_numbers<[1], [0], [0], [1], [0, 0, 1, 1], [], []>} : vector<32x32xf32>, vector<32x256xf32>, vector<32x256xf32> -> vector<32x256xf32>
    %437 = arith.addf %423, %436 : vector<32x256xf32>
    %c3_291 = arith.constant 3 : index
    %c0_292 = arith.constant 0 : index
    %c0_293 = arith.constant 0 : index
    %438 = vector.load %arg3[%c3_291, %c0_292, %c0_293] : memref<5x32x1xf32, #tpu.memory_space<vmem>>, vector<1x32x1xf32>
    %439 = vector.shape_cast %438 : vector<1x32x1xf32> to vector<32x1xf32>
    %440 = vector.broadcast %439 : vector<32x1xf32> to vector<32x256xf32>
    %441 = arith.addf %437, %440 : vector<32x256xf32>
    %cst_294 = arith.constant 0.000000e+00 : f32
    %442 = vector.broadcast %cst_294 : f32 to vector<32x256xf32>
    %443 = arith.maximumf %441, %442 : vector<32x256xf32>
    %c17_i32_295 = arith.constant 17 : i32
    %444 = tpu.dynamic_rotate %443 by %c17_i32_295 dim 1 : vector<32x256xf32>, i32 -> vector<32x256xf32>
    %c16_i32_296 = arith.constant 16 : i32
    %445 = vector.broadcast %c16_i32_296 : i32 to vector<1x256xi32>
    %446 = arith.cmpi sge, %3, %445 : vector<1x256xi32>
    %c1_i32_297 = arith.constant 1 : i32
    %447 = vector.broadcast %c1_i32_297 : i32 to vector<1x256xi32>
    %448 = arith.cmpi sge, %5, %447 : vector<1x256xi32>
    %449 = arith.andi %446, %448 : vector<1x256xi1>
    %cst_298 = arith.constant 0.000000e+00 : f32
    %450 = vector.shape_cast %449 : vector<1x256xi1> to vector<1x256xi1>
    %451 = vector.broadcast %450 : vector<1x256xi1> to vector<32x256xi1>
    %452 = vector.broadcast %cst_298 : f32 to vector<32x256xf32>
    %453 = arith.select %451, %444, %452 : vector<32x256xi1>, vector<32x256xf32>
    %c4_299 = arith.constant 4 : index
    %c0_300 = arith.constant 0 : index
    %c0_301 = arith.constant 0 : index
    %c0_302 = arith.constant 0 : index
    %454 = vector.load %arg2[%c4_299, %c0_300, %c0_301, %c0_302] : memref<5x9x32x32xf32, #tpu.memory_space<vmem>>, vector<1x1x32x32xf32>
    %455 = vector.shape_cast %454 : vector<1x1x32x32xf32> to vector<32x32xf32>
    %cst_303 = arith.constant dense<0.000000e+00> : vector<32x256xf32>
    %456 = tpu.matmul %455, %453, %cst_303 {dimension_numbers = #tpu.dot_dimension_numbers<[1], [0], [0], [1], [0, 0, 1, 1], [], []>} : vector<32x32xf32>, vector<32x256xf32>, vector<32x256xf32> -> vector<32x256xf32>
    %c16_i32_304 = arith.constant 16 : i32
    %457 = tpu.dynamic_rotate %443 by %c16_i32_304 dim 1 : vector<32x256xf32>, i32 -> vector<32x256xf32>
    %c16_i32_305 = arith.constant 16 : i32
    %458 = vector.broadcast %c16_i32_305 : i32 to vector<1x256xi32>
    %459 = arith.cmpi sge, %3, %458 : vector<1x256xi32>
    %cst_306 = arith.constant 0.000000e+00 : f32
    %460 = vector.shape_cast %459 : vector<1x256xi1> to vector<1x256xi1>
    %461 = vector.broadcast %460 : vector<1x256xi1> to vector<32x256xi1>
    %462 = vector.broadcast %cst_306 : f32 to vector<32x256xf32>
    %463 = arith.select %461, %457, %462 : vector<32x256xi1>, vector<32x256xf32>
    %c4_307 = arith.constant 4 : index
    %c1_308 = arith.constant 1 : index
    %c0_309 = arith.constant 0 : index
    %c0_310 = arith.constant 0 : index
    %464 = vector.load %arg2[%c4_307, %c1_308, %c0_309, %c0_310] : memref<5x9x32x32xf32, #tpu.memory_space<vmem>>, vector<1x1x32x32xf32>
    %465 = vector.shape_cast %464 : vector<1x1x32x32xf32> to vector<32x32xf32>
    %cst_311 = arith.constant dense<0.000000e+00> : vector<32x256xf32>
    %466 = tpu.matmul %465, %463, %cst_311 {dimension_numbers = #tpu.dot_dimension_numbers<[1], [0], [0], [1], [0, 0, 1, 1], [], []>} : vector<32x32xf32>, vector<32x256xf32>, vector<32x256xf32> -> vector<32x256xf32>
    %467 = arith.addf %456, %466 : vector<32x256xf32>
    %c15_i32_312 = arith.constant 15 : i32
    %468 = tpu.dynamic_rotate %443 by %c15_i32_312 dim 1 : vector<32x256xf32>, i32 -> vector<32x256xf32>
    %c16_i32_313 = arith.constant 16 : i32
    %469 = vector.broadcast %c16_i32_313 : i32 to vector<1x256xi32>
    %470 = arith.cmpi sge, %3, %469 : vector<1x256xi32>
    %c15_i32_314 = arith.constant 15 : i32
    %471 = vector.broadcast %c15_i32_314 : i32 to vector<1x256xi32>
    %472 = arith.cmpi slt, %5, %471 : vector<1x256xi32>
    %473 = arith.andi %470, %472 : vector<1x256xi1>
    %cst_315 = arith.constant 0.000000e+00 : f32
    %474 = vector.shape_cast %473 : vector<1x256xi1> to vector<1x256xi1>
    %475 = vector.broadcast %474 : vector<1x256xi1> to vector<32x256xi1>
    %476 = vector.broadcast %cst_315 : f32 to vector<32x256xf32>
    %477 = arith.select %475, %468, %476 : vector<32x256xi1>, vector<32x256xf32>
    %c4_316 = arith.constant 4 : index
    %c2_317 = arith.constant 2 : index
    %c0_318 = arith.constant 0 : index
    %c0_319 = arith.constant 0 : index
    %478 = vector.load %arg2[%c4_316, %c2_317, %c0_318, %c0_319] : memref<5x9x32x32xf32, #tpu.memory_space<vmem>>, vector<1x1x32x32xf32>
    %479 = vector.shape_cast %478 : vector<1x1x32x32xf32> to vector<32x32xf32>
    %cst_320 = arith.constant dense<0.000000e+00> : vector<32x256xf32>
    %480 = tpu.matmul %479, %477, %cst_320 {dimension_numbers = #tpu.dot_dimension_numbers<[1], [0], [0], [1], [0, 0, 1, 1], [], []>} : vector<32x32xf32>, vector<32x256xf32>, vector<32x256xf32> -> vector<32x256xf32>
    %481 = arith.addf %467, %480 : vector<32x256xf32>
    %c1_i32_321 = arith.constant 1 : i32
    %482 = tpu.dynamic_rotate %443 by %c1_i32_321 dim 1 : vector<32x256xf32>, i32 -> vector<32x256xf32>
    %c1_i32_322 = arith.constant 1 : i32
    %483 = vector.broadcast %c1_i32_322 : i32 to vector<1x256xi32>
    %484 = arith.cmpi sge, %5, %483 : vector<1x256xi32>
    %cst_323 = arith.constant 0.000000e+00 : f32
    %485 = vector.shape_cast %484 : vector<1x256xi1> to vector<1x256xi1>
    %486 = vector.broadcast %485 : vector<1x256xi1> to vector<32x256xi1>
    %487 = vector.broadcast %cst_323 : f32 to vector<32x256xf32>
    %488 = arith.select %486, %482, %487 : vector<32x256xi1>, vector<32x256xf32>
    %c4_324 = arith.constant 4 : index
    %c3_325 = arith.constant 3 : index
    %c0_326 = arith.constant 0 : index
    %c0_327 = arith.constant 0 : index
    %489 = vector.load %arg2[%c4_324, %c3_325, %c0_326, %c0_327] : memref<5x9x32x32xf32, #tpu.memory_space<vmem>>, vector<1x1x32x32xf32>
    %490 = vector.shape_cast %489 : vector<1x1x32x32xf32> to vector<32x32xf32>
    %cst_328 = arith.constant dense<0.000000e+00> : vector<32x256xf32>
    %491 = tpu.matmul %490, %488, %cst_328 {dimension_numbers = #tpu.dot_dimension_numbers<[1], [0], [0], [1], [0, 0, 1, 1], [], []>} : vector<32x32xf32>, vector<32x256xf32>, vector<32x256xf32> -> vector<32x256xf32>
    %492 = arith.addf %481, %491 : vector<32x256xf32>
    %c4_329 = arith.constant 4 : index
    %c4_330 = arith.constant 4 : index
    %c0_331 = arith.constant 0 : index
    %c0_332 = arith.constant 0 : index
    %493 = vector.load %arg2[%c4_329, %c4_330, %c0_331, %c0_332] : memref<5x9x32x32xf32, #tpu.memory_space<vmem>>, vector<1x1x32x32xf32>
    %494 = vector.shape_cast %493 : vector<1x1x32x32xf32> to vector<32x32xf32>
    %cst_333 = arith.constant dense<0.000000e+00> : vector<32x256xf32>
    %495 = tpu.matmul %494, %443, %cst_333 {dimension_numbers = #tpu.dot_dimension_numbers<[1], [0], [0], [1], [0, 0, 1, 1], [], []>} : vector<32x32xf32>, vector<32x256xf32>, vector<32x256xf32> -> vector<32x256xf32>
    %496 = arith.addf %492, %495 : vector<32x256xf32>
    %c255_i32_334 = arith.constant 255 : i32
    %497 = tpu.dynamic_rotate %443 by %c255_i32_334 dim 1 : vector<32x256xf32>, i32 -> vector<32x256xf32>
    %c15_i32_335 = arith.constant 15 : i32
    %498 = vector.broadcast %c15_i32_335 : i32 to vector<1x256xi32>
    %499 = arith.cmpi slt, %5, %498 : vector<1x256xi32>
    %cst_336 = arith.constant 0.000000e+00 : f32
    %500 = vector.shape_cast %499 : vector<1x256xi1> to vector<1x256xi1>
    %501 = vector.broadcast %500 : vector<1x256xi1> to vector<32x256xi1>
    %502 = vector.broadcast %cst_336 : f32 to vector<32x256xf32>
    %503 = arith.select %501, %497, %502 : vector<32x256xi1>, vector<32x256xf32>
    %c4_337 = arith.constant 4 : index
    %c5_338 = arith.constant 5 : index
    %c0_339 = arith.constant 0 : index
    %c0_340 = arith.constant 0 : index
    %504 = vector.load %arg2[%c4_337, %c5_338, %c0_339, %c0_340] : memref<5x9x32x32xf32, #tpu.memory_space<vmem>>, vector<1x1x32x32xf32>
    %505 = vector.shape_cast %504 : vector<1x1x32x32xf32> to vector<32x32xf32>
    %cst_341 = arith.constant dense<0.000000e+00> : vector<32x256xf32>
    %506 = tpu.matmul %505, %503, %cst_341 {dimension_numbers = #tpu.dot_dimension_numbers<[1], [0], [0], [1], [0, 0, 1, 1], [], []>} : vector<32x32xf32>, vector<32x256xf32>, vector<32x256xf32> -> vector<32x256xf32>
    %507 = arith.addf %496, %506 : vector<32x256xf32>
    %c241_i32_342 = arith.constant 241 : i32
    %508 = tpu.dynamic_rotate %443 by %c241_i32_342 dim 1 : vector<32x256xf32>, i32 -> vector<32x256xf32>
    %c240_i32_343 = arith.constant 240 : i32
    %509 = vector.broadcast %c240_i32_343 : i32 to vector<1x256xi32>
    %510 = arith.cmpi slt, %3, %509 : vector<1x256xi32>
    %c1_i32_344 = arith.constant 1 : i32
    %511 = vector.broadcast %c1_i32_344 : i32 to vector<1x256xi32>
    %512 = arith.cmpi sge, %5, %511 : vector<1x256xi32>
    %513 = arith.andi %510, %512 : vector<1x256xi1>
    %cst_345 = arith.constant 0.000000e+00 : f32
    %514 = vector.shape_cast %513 : vector<1x256xi1> to vector<1x256xi1>
    %515 = vector.broadcast %514 : vector<1x256xi1> to vector<32x256xi1>
    %516 = vector.broadcast %cst_345 : f32 to vector<32x256xf32>
    %517 = arith.select %515, %508, %516 : vector<32x256xi1>, vector<32x256xf32>
    %c4_346 = arith.constant 4 : index
    %c6_347 = arith.constant 6 : index
    %c0_348 = arith.constant 0 : index
    %c0_349 = arith.constant 0 : index
    %518 = vector.load %arg2[%c4_346, %c6_347, %c0_348, %c0_349] : memref<5x9x32x32xf32, #tpu.memory_space<vmem>>, vector<1x1x32x32xf32>
    %519 = vector.shape_cast %518 : vector<1x1x32x32xf32> to vector<32x32xf32>
    %cst_350 = arith.constant dense<0.000000e+00> : vector<32x256xf32>
    %520 = tpu.matmul %519, %517, %cst_350 {dimension_numbers = #tpu.dot_dimension_numbers<[1], [0], [0], [1], [0, 0, 1, 1], [], []>} : vector<32x32xf32>, vector<32x256xf32>, vector<32x256xf32> -> vector<32x256xf32>
    %521 = arith.addf %507, %520 : vector<32x256xf32>
    %c240_i32_351 = arith.constant 240 : i32
    %522 = tpu.dynamic_rotate %443 by %c240_i32_351 dim 1 : vector<32x256xf32>, i32 -> vector<32x256xf32>
    %c240_i32_352 = arith.constant 240 : i32
    %523 = vector.broadcast %c240_i32_352 : i32 to vector<1x256xi32>
    %524 = arith.cmpi slt, %3, %523 : vector<1x256xi32>
    %cst_353 = arith.constant 0.000000e+00 : f32
    %525 = vector.shape_cast %524 : vector<1x256xi1> to vector<1x256xi1>
    %526 = vector.broadcast %525 : vector<1x256xi1> to vector<32x256xi1>
    %527 = vector.broadcast %cst_353 : f32 to vector<32x256xf32>
    %528 = arith.select %526, %522, %527 : vector<32x256xi1>, vector<32x256xf32>
    %c4_354 = arith.constant 4 : index
    %c7_355 = arith.constant 7 : index
    %c0_356 = arith.constant 0 : index
    %c0_357 = arith.constant 0 : index
    %529 = vector.load %arg2[%c4_354, %c7_355, %c0_356, %c0_357] : memref<5x9x32x32xf32, #tpu.memory_space<vmem>>, vector<1x1x32x32xf32>
    %530 = vector.shape_cast %529 : vector<1x1x32x32xf32> to vector<32x32xf32>
    %cst_358 = arith.constant dense<0.000000e+00> : vector<32x256xf32>
    %531 = tpu.matmul %530, %528, %cst_358 {dimension_numbers = #tpu.dot_dimension_numbers<[1], [0], [0], [1], [0, 0, 1, 1], [], []>} : vector<32x32xf32>, vector<32x256xf32>, vector<32x256xf32> -> vector<32x256xf32>
    %532 = arith.addf %521, %531 : vector<32x256xf32>
    %c239_i32_359 = arith.constant 239 : i32
    %533 = tpu.dynamic_rotate %443 by %c239_i32_359 dim 1 : vector<32x256xf32>, i32 -> vector<32x256xf32>
    %c240_i32_360 = arith.constant 240 : i32
    %534 = vector.broadcast %c240_i32_360 : i32 to vector<1x256xi32>
    %535 = arith.cmpi slt, %3, %534 : vector<1x256xi32>
    %c15_i32_361 = arith.constant 15 : i32
    %536 = vector.broadcast %c15_i32_361 : i32 to vector<1x256xi32>
    %537 = arith.cmpi slt, %5, %536 : vector<1x256xi32>
    %538 = arith.andi %535, %537 : vector<1x256xi1>
    %cst_362 = arith.constant 0.000000e+00 : f32
    %539 = vector.shape_cast %538 : vector<1x256xi1> to vector<1x256xi1>
    %540 = vector.broadcast %539 : vector<1x256xi1> to vector<32x256xi1>
    %541 = vector.broadcast %cst_362 : f32 to vector<32x256xf32>
    %542 = arith.select %540, %533, %541 : vector<32x256xi1>, vector<32x256xf32>
    %c4_363 = arith.constant 4 : index
    %c8_364 = arith.constant 8 : index
    %c0_365 = arith.constant 0 : index
    %c0_366 = arith.constant 0 : index
    %543 = vector.load %arg2[%c4_363, %c8_364, %c0_365, %c0_366] : memref<5x9x32x32xf32, #tpu.memory_space<vmem>>, vector<1x1x32x32xf32>
    %544 = vector.shape_cast %543 : vector<1x1x32x32xf32> to vector<32x32xf32>
    %cst_367 = arith.constant dense<0.000000e+00> : vector<32x256xf32>
    %545 = tpu.matmul %544, %542, %cst_367 {dimension_numbers = #tpu.dot_dimension_numbers<[1], [0], [0], [1], [0, 0, 1, 1], [], []>} : vector<32x32xf32>, vector<32x256xf32>, vector<32x256xf32> -> vector<32x256xf32>
    %546 = arith.addf %532, %545 : vector<32x256xf32>
    %c4_368 = arith.constant 4 : index
    %c0_369 = arith.constant 0 : index
    %c0_370 = arith.constant 0 : index
    %547 = vector.load %arg3[%c4_368, %c0_369, %c0_370] : memref<5x32x1xf32, #tpu.memory_space<vmem>>, vector<1x32x1xf32>
    %548 = vector.shape_cast %547 : vector<1x32x1xf32> to vector<32x1xf32>
    %549 = vector.broadcast %548 : vector<32x1xf32> to vector<32x256xf32>
    %550 = arith.addf %546, %549 : vector<32x256xf32>
    %551 = math.absf %550 : vector<32x256xf32>
    %cst_371 = arith.constant dense<0.000000e+00> : vector<32xf32>
    %552 = vector.multi_reduction <add>, %551, %cst_371 [1] : vector<32x256xf32> to vector<32xf32>
    %553 = vector.shape_cast %552 : vector<32xf32> to vector<32x1xf32>
    %cst_372 = arith.constant dense<0.000000e+00> : vector<1xf32>
    %554 = vector.multi_reduction <add>, %553, %cst_372 [0] : vector<32x1xf32> to vector<1xf32>
    %555 = vector.shape_cast %554 : vector<1xf32> to vector<1x1xf32>
    %c0_373 = arith.constant 0 : index
    %c0_374 = arith.constant 0 : index
    %556 = vector.load %arg4[%c0_373, %c0_374] : memref<1x1xf32, #tpu.memory_space<vmem>>, vector<1x1xf32>
    %557 = arith.addf %556, %555 : vector<1x1xf32>
    %c0_375 = arith.constant 0 : index
    %c0_376 = arith.constant 0 : index
    %558 = vector.load %arg4[%c0_375, %c0_376] : memref<1x1xf32, #tpu.memory_space<vmem>>, vector<1x1xf32>
    tpu.vector_store %arg4[%c0_375, %c0_376], %557 {strides = array<i32>} : memref<1x1xf32, #tpu.memory_space<vmem>>, vector<1x1xf32>,
    %c1_i32_377 = arith.constant 1 : i32
    %559 = arith.cmpi eq, %arg0, %c1_i32_377 : i32
    %560 = arith.extui %559 : i1 to i32
    %c0_i32_378 = arith.constant 0 : i32
    %561 = arith.cmpi ne, %560, %c0_i32_378 : i32
    scf.if %561 {
      %c0_379 = arith.constant 0 : index
      %c0_380 = arith.constant 0 : index
      %562 = vector.load %arg4[%c0_379, %c0_380] : memref<1x1xf32, #tpu.memory_space<vmem>>, vector<1x1xf32>
      %cst_381 = arith.constant 0.00130208337 : f32
      %563 = vector.broadcast %cst_381 : f32 to vector<1x1xf32>
      %564 = arith.mulf %562, %563 : vector<1x1xf32>
      %c0_382 = arith.constant 0 : index
      %c0_383 = arith.constant 0 : index
      %565 = vector.load %arg4[%c0_382, %c0_383] : memref<1x1xf32, #tpu.memory_space<vmem>>, vector<1x1xf32>
      tpu.vector_store %arg4[%c0_382, %c0_383], %564 {strides = array<i32>} : memref<1x1xf32, #tpu.memory_space<vmem>>, vector<1x1xf32>,
    } else {
    }
    return
  }
  func.func @transform_0(%arg0: i32) -> (i32, i32, i32) {
    %c0_i32 = arith.constant 0 : i32
    %c0_i32_0 = arith.constant 0 : i32
    %c0_i32_1 = arith.constant 0 : i32
    return %arg0, %c0_i32, %c0_i32_0 : i32, i32, i32
  }
  func.func @transform_1(%arg0: i32) -> (i32, i32, i32, i32) {
    %c0_i32 = arith.constant 0 : i32
    %c0_i32_0 = arith.constant 0 : i32
    %c0_i32_1 = arith.constant 0 : i32
    %c0_i32_2 = arith.constant 0 : i32
    %c0_i32_3 = arith.constant 0 : i32
    return %c0_i32, %c0_i32_0, %c0_i32_1, %c0_i32_2 : i32, i32, i32, i32
  }
  func.func @transform_2(%arg0: i32) -> (i32, i32, i32) {
    %c0_i32 = arith.constant 0 : i32
    %c0_i32_0 = arith.constant 0 : i32
    %c0_i32_1 = arith.constant 0 : i32
    %c0_i32_2 = arith.constant 0 : i32
    return %c0_i32, %c0_i32_0, %c0_i32_1 : i32, i32, i32
  }
  func.func @transform_3(%arg0: i32) -> (i32, i32) {
    %c0_i32 = arith.constant 0 : i32
    %c0_i32_0 = arith.constant 0 : i32
    %c0_i32_1 = arith.constant 0 : i32
    return %c0_i32, %c0_i32_0 : i32, i32
  }
}

</mosaic_0001>

<llo_original>
// kernel: estimation_forward.1
$region0: #{estimation_forward.1}
  #allocation0 [shape = 'u32[]', space=smem, size = 0x4, offset = 0x4, fixed_abs, tag = 'smem constant byte address 0x4 - core index']
  #allocation1 [shape = 'u32[144,128]{1,0:T(1,128)}', space=vmem, size = 0x12000, scoped, tag = 'internal scratch']
  %s0 = inlined_call_operand.vmem [shape: f32[2,32,256], index: 0, kind: input, shape index: {}]
  %s1 = inlined_call_operand.hbm [shape: f32[5,9,32,32], index: 1, kind: input, shape index: {}]
  %s2 = inlined_call_operand.vmem [shape: f32[5,32,1], index: 2, kind: input, shape index: {}]
  %s3 = inlined_call_operand.hbm [shape: f32[1,1], index: 3, kind: output, shape index: {}]
  %s4 = sld [smem:[#allocation0]]
  $region57: #{estimation_forward.1} parent=0
    _
  %s6 = ssub.s32 1, %s4
  %s7 = scalar_select 0, %s6, %s4
  $region1: #{estimation_forward.1} parent=0
    #allocation2 [shape = 'u8[737280]{0}', space=vmem, size = 0xb4000, scoped, tag = 'input window, operand 1, single buffered']
    #allocation3 [shape = 's32[2]{0}', space=sflag, size = 0x8, scoped, tag = 'scoped memory for estimation_forward.1']
    #allocation4 [shape = 's32[2]{0}', space=sflag, size = 0x8, scoped, tag = 'scoped memory for estimation_forward.1']
    #allocation5 [shape = 'u8[512]{0}', space=vmem, size = 0x400, scoped, tag = 'output window, operand 0, single buffered']
    %8 = vsyncpa [#allocation3], 0
    %9 = vsyncpa [#allocation4], 0
    loop: start=0, step=1, limit=4
    $region2: #{estimation_forward.1} parent=1 // loop_pre_header
      _
    $region3: #{estimation_forward.1} parent=1 // loop_header
      %s11 = sphi 0, %s15
      %p12 = scmp.ge.s32.totalorder %s11, 4
      %s21 = sphi 0, %s23
      %s24 = sphi 0, %s21
      %s25 = sphi 0, %s24
      %s41 = sphi 0, %s25
      %s45 = sphi 0, %s45
      %s47 = sphi 0, %s45
      %s48 = sphi 0, %s47
      %s62 = sphi 0, %s48
      %s66 = sphi 0, %s66
      %s68 = sphi 0, %s66
      %s69 = sphi 0, %s68
      %s83 = sphi 0, %s69
      %s87 = sphi 0, %s87
      %s89 = sphi 0, %s87
      %s90 = sphi 0, %s89
      %s104 = sphi 0, %s90
    $region4: #{estimation_forward.1} parent=1 // loop_header_branch
      %14 = sbr.rel (%p12) target = $region8
    $region5: #{estimation_forward.1} parent=1 // loop_body
      %s16 = ssub.s32 %s11, 1
      %s17 = ssub.s32 %s11, 2
      %s18 = sadd.s32 %s11, 1
      %s19 = ssub.s32 %s11, %s18
      %p20 = scmp.eq.s32.totalorder %s19, 0
      %s22 = sadd.s32 %s21, 1
      %s23 = scalar_select %p20, %s21, %s22
      %p26 = pneg %p20
      %p27 = scmp.eq.s32.totalorder %s11, 1
      %p28 = por %p26, %p27
      %p29 = scmp.ne.s32.totalorder %s21, %s24
      %p30 = scmp.eq.s32.totalorder %s11, 0
      %p31 = por %p29, %p30
      %p32 = scmp.ne.s32.totalorder %s21, %s24
      %p33 = scmp.eq.s32.totalorder %s16, 1
      %p34 = por %p32, %p33
      %p35 = scmp.ne.s32.totalorder %s24, %s25
      %p36 = scmp.eq.s32.totalorder %s16, 0
      %p37 = por %p35, %p36
      %p38 = scmp.ne.s32.totalorder %s24, %s25
      %p39 = scmp.eq.s32.totalorder %s17, 1
      %p40 = por %p38, %p39
      %p42 = scmp.ne.s32.totalorder %s25, %s41
      %p43 = scmp.eq.s32.totalorder %s17, 0
      %p44 = por %p42, %p43
      %s46 = sadd.s32 %s45, 1
      %p49 = scmp.eq.s32.totalorder %s11, 1
      %p50 = scmp.ne.s32.totalorder %s45, %s47
      %p51 = scmp.eq.s32.totalorder %s11, 0
      %p52 = por %p50, %p51
      %p53 = scmp.ne.s32.totalorder %s45, %s47
      %p54 = scmp.eq.s32.totalorder %s16, 1
      %p55 = por %p53, %p54
      %p56 = scmp.ne.s32.totalorder %s47, %s48
      %p57 = scmp.eq.s32.totalorder %s16, 0
      %p58 = por %p56, %p57
      %p59 = scmp.ne.s32.totalorder %s47, %s48
      %p60 = scmp.eq.s32.totalorder %s17, 1
      %p61 = por %p59, %p60
      %p63 = scmp.ne.s32.totalorder %s48, %s62
      %p64 = scmp.eq.s32.totalorder %s17, 0
      %p65 = por %p63, %p64
      %s67 = sadd.s32 %s66, 1
      %p70 = scmp.eq.s32.totalorder %s11, 1
      %p71 = scmp.ne.s32.totalorder %s66, %s68
      %p72 = scmp.eq.s32.totalorder %s11, 0
      %p73 = por %p71, %p72
      %p74 = scmp.ne.s32.totalorder %s66, %s68
      %p75 = scmp.eq.s32.totalorder %s16, 1
      %p76 = por %p74, %p75
      %p77 = scmp.ne.s32.totalorder %s68, %s69
      %p78 = scmp.eq.s32.totalorder %s16, 0
      %p79 = por %p77, %p78
      %p80 = scmp.ne.s32.totalorder %s68, %s69
      %p81 = scmp.eq.s32.totalorder %s17, 1
      %p82 = por %p80, %p81
      %p84 = scmp.ne.s32.totalorder %s69, %s83
      %p85 = scmp.eq.s32.totalorder %s17, 0
      %p86 = por %p84, %p85
      %s88 = sadd.s32 %s87, 1
      %p91 = scmp.eq.s32.totalorder %s11, 1
      %p92 = scmp.ne.s32.totalorder %s87, %s89
      %p93 = scmp.eq.s32.totalorder %s11, 0
      %p94 = por %p92, %p93
      %p95 = scmp.ne.s32.totalorder %s87, %s89
      %p96 = scmp.eq.s32.totalorder %s16, 1
      %p97 = por %p95, %p96
      %p98 = scmp.ne.s32.totalorder %s89, %s90
      %p99 = scmp.eq.s32.totalorder %s16, 0
      %p100 = por %p98, %p99
      %p101 = scmp.ne.s32.totalorder %s89, %s90
      %p102 = scmp.eq.s32.totalorder %s17, 1
      %p103 = por %p101, %p102
      %p105 = scmp.ne.s32.totalorder %s90, %s104
      %p106 = scmp.eq.s32.totalorder %s17, 0
      %p107 = por %p105, %p106
      %p108 = scmp.le.s32.totalorder 1, %s11
      %p109 = scmp.lt.s32.totalorder %s11, 3
      %p110 = pnand %p108, %p109
      %p111 = pneg %p110
      // Predicated region
      $region9: #{estimation_forward.1} parent=5 // pred_check
        _
      $region10: #{estimation_forward.1} parent=5 // pred_check_branch
        %113 = sbr.rel (%p110) target = $region12
      $region11: #{estimation_forward.1} parent=5 // pred_region
        %s114 = ssub.s32 %s11, 1
        // Predicated region
        $region13: #{estimation_forward.1} parent=11 // pred_check
          %p115 = pneg %p58
        $region14: #{estimation_forward.1} parent=11 // pred_check_branch
          %117 = sbr.rel (%p115) target = $region16
        $region15: #{estimation_forward.1} parent=11 // pred_region
          %s119 = ssub.s32 23040, 23040
          %120 = vsyncadd [#allocation3], %s119
          %s121 = sshll.u32 [#allocation2], 4
          %s122 = int_to_ptr.vmem [resolvable:$true] %s121
          %127 = dma.hbm_to_vmem [thread:$0]  %s1, 23040, %s122, [#allocation3], 128, 128, 8
        $region16: #{estimation_forward.1} parent=11 // pred_fallthru
          _
        // Predicated region
        $region17: #{estimation_forward.1} parent=11 // pred_check
          %p128 = pneg %p79
        $region18: #{estimation_forward.1} parent=11 // pred_check_branch
          %130 = sbr.rel (%p128) target = $region20
        $region19: #{estimation_forward.1} parent=11 // pred_region
          _
        $region20: #{estimation_forward.1} parent=11 // pred_fallthru
          _
      $region12: #{estimation_forward.1} parent=5 // pred_fallthru
        _
      %p131 = scmp.lt.s32.totalorder %s11, 2
      // Predicated region
      $region21: #{estimation_forward.1} parent=5 // pred_check
        %p132 = pneg %p131
      $region22: #{estimation_forward.1} parent=5 // pred_check_branch
        %134 = sbr.rel (%p132) target = $region24
      $region23: #{estimation_forward.1} parent=5 // pred_region
        // Predicated region
        $region25: #{estimation_forward.1} parent=23 // pred_check
          %p135 = pneg %p31
        $region26: #{estimation_forward.1} parent=23 // pred_check_branch
          %137 = sbr.rel (%p135) target = $region28
        $region27: #{estimation_forward.1} parent=23 // pred_region
          %p138 = scmp.lt.s32.totalorder %s11, 1
          %s139 = scalar_select %p138, %s11, 1
          %s140 = smul.addr %s139, 8
          %s141 = smul.addr %s140, 8
          %s142 = scalar_lea.vmem %s0, %s141
        $region28: #{estimation_forward.1} parent=23 // pred_fallthru
          _
      $region24: #{estimation_forward.1} parent=5 // pred_fallthru
        _
      %p143 = scmp.le.s32.totalorder 1, %s11
      %p144 = scmp.lt.s32.totalorder %s11, 3
      %p145 = pnand %p143, %p144
      %p146 = pneg %p145
      // Predicated region
      $region29: #{estimation_forward.1} parent=5 // pred_check
        _
      $region30: #{estimation_forward.1} parent=5 // pred_check_branch
        %148 = sbr.rel (%p145) target = $region32
      $region31: #{estimation_forward.1} parent=5 // pred_region
        %s149 = ssub.s32 %s11, 1
        // Predicated region
        $region33: #{estimation_forward.1} parent=31 // pred_check
          %p150 = pneg %p58
        $region34: #{estimation_forward.1} parent=31 // pred_check_branch
          %152 = sbr.rel (%p150) target = $region36
        $region35: #{estimation_forward.1} parent=31 // pred_region
          %153 = dma.done [#allocation3], 23040
        $region36: #{estimation_forward.1} parent=31 // pred_fallthru
          _
        %p154 = scmp.lt.s32.totalorder %s16, 1
        %s155 = scalar_select %p154, %s16, 1
        %s156 = smul.addr %s155, 8
        %s157 = smul.addr %s156, 8
        %s158 = scalar_lea.vmem %s0, %s157
        %p159 = pneg %p37
        %p160 = pneg %p34
        %p161 = pneg %p58
        %p162 = pneg %p55
        %p163 = pneg %p79
        %p164 = pneg %p76
        %p165 = pneg %p100
        %p166 = pneg %p97
        %p167 = scmp.lt.s32.totalorder %s16, 1
        %s168 = scalar_select %p167, %s16, 1
        %s169 = smul.addr %s168, 8
        %s170 = smul.addr %s169, 8
        %s171 = scalar_lea.vmem %s0, %s170
        %p172 = scmp.eq.s32.totalorder %s16, 0
        // Predicated region
        $region37: #{estimation_forward.1} parent=31 // pred_check
          %p173 = pneg %p172
        $region38: #{estimation_forward.1} parent=31 // pred_check_branch
          %175 = sbr.rel (%p173) target = $region40
        $region39: #{estimation_forward.1} parent=31 // pred_region
          %vm176 = vcmask 0
          %177 = vst.msk [vmem:[#allocation5] sm:$0x1] %vm176, 0.0
        $region40: #{estimation_forward.1} parent=31 // pred_fallthru
          _
        %v178 = vlaneseq
        %v179 = vand.u32 %v178, 127
        %v180 = vadd.s32 %v179, 128
        %v181 = vand.u32 %v179, 15
        %v182 = vand.u32 %v180, 15
        %v183 = vld [vmem:[%s171] sm:$0xff]
        %v184 = vld [vmem:[%s171 + $0x8] sm:$0xff]
        %v185 = vld [vmem:[%s171 + $0x10] sm:$0xff]
        %v186 = vld [vmem:[%s171 + $0x18] sm:$0xff]
        %v187 = vld [vmem:[%s171 + $0x20] sm:$0xff]
        %v188 = vld [vmem:[%s171 + $0x28] sm:$0xff]
        %v189 = vld [vmem:[%s171 + $0x30] sm:$0xff]
        %v190 = vld [vmem:[%s171 + $0x38] sm:$0xff]
        %191 = vrot.lane.b32.xlu0 %v183, 17
        %v192 = vpop.permute.xlu0 %191
        %193 = vrot.lane.b32.xlu0 %v185, 17
        %v194 = vpop.permute.xlu0 %193
        %195 = vrot.lane.b32.xlu0 %v187, 17
        %v196 = vpop.permute.xlu0 %195
        %197 = vrot.lane.b32.xlu0 %v189, 17
        %v198 = vpop.permute.xlu0 %197
        %199 = vrot.lane.b32.xlu0 %v184, 17
        %v200 = vpop.permute.xlu0 %199
        %201 = vrot.lane.b32.xlu0 %v186, 17
        %v202 = vpop.permute.xlu0 %201
        %203 = vrot.lane.b32.xlu0 %v188, 17
        %v204 = vpop.permute.xlu0 %203
        %205 = vrot.lane.b32.xlu0 %v190, 17
        %v206 = vpop.permute.xlu0 %205
        %vm207 = vcmp.lt.s32.totalorder %v179, 17
        %v208 = vsel %vm207, %v192, %v200
        %v209 = vsel %vm207, %v194, %v202
        %v210 = vsel %vm207, %v196, %v204
        %v211 = vsel %vm207, %v198, %v206
        %v212 = vsel %vm207, %v200, %v192
        %v213 = vsel %vm207, %v202, %v194
        %v214 = vsel %vm207, %v204, %v196
        %v215 = vsel %vm207, %v206, %v198
        %vm216 = vcmp.ge.s32.totalorder %v179, 16
        %vm217 = vcmp.ge.s32.totalorder %v180, 16
        %vm218 = vcmp.ge.s32.totalorder %v181, 1
        %vm219 = vcmp.ge.s32.totalorder %v182, 1
        %vm220 = vmand %vm216, %vm218
        %vm221 = vmand %vm217, %vm219
        %v222 = vsel %vm220, 1, 0
        %v223 = vsel %vm221, 1, 0
        %vm224 = vcmp.eq.s32.totalorder %v222, 1
        %vm225 = vcmp.eq.s32.totalorder %v223, 1
        %v226 = vsel %vm224, %v212, 0.0
        %v227 = vsel %vm225, %v208, 0.0
        %v228 = vsel %vm224, %v213, 0.0
        %v229 = vsel %vm225, %v209, 0.0
        %v230 = vsel %vm224, %v214, 0.0
        %v231 = vsel %vm225, %v210, 0.0
        %v232 = vsel %vm224, %v215, 0.0
        %v233 = vsel %vm225, %v211, 0.0
        %v234 = vld [vmem:[#allocation2] sm:$0xff]
        %v235 = vld [vmem:[#allocation2 + $0x8] sm:$0xff]
        %v236 = vld [vmem:[#allocation2 + $0x10] sm:$0xff]
        %v237 = vld [vmem:[#allocation2 + $0x18] sm:$0xff]
        %238 = vrot.lane.b32.xlu0 %v183, 16
        %v239 = vpop.permute.xlu0 %238
        %240 = vrot.lane.b32.xlu0 %v185, 16
        %v241 = vpop.permute.xlu0 %240
        %242 = vrot.lane.b32.xlu0 %v187, 16
        %v243 = vpop.permute.xlu0 %242
        %244 = vrot.lane.b32.xlu0 %v189, 16
        %v245 = vpop.permute.xlu0 %244
        %246 = vrot.lane.b32.xlu0 %v184, 16
        %v247 = vpop.permute.xlu0 %246
        %248 = vrot.lane.b32.xlu0 %v186, 16
        %v249 = vpop.permute.xlu0 %248
        %250 = vrot.lane.b32.xlu0 %v188, 16
        %v251 = vpop.permute.xlu0 %250
        %252 = vrot.lane.b32.xlu0 %v190, 16
        %v253 = vpop.permute.xlu0 %252
        %vm254 = vcmp.lt.s32.totalorder %v179, 16
        %v255 = vsel %vm254, %v239, %v247
        %v256 = vsel %vm254, %v241, %v249
        %v257 = vsel %vm254, %v243, %v251
        %v258 = vsel %vm254, %v245, %v253
        %v259 = vsel %vm254, %v247, %v239
        %v260 = vsel %vm254, %v249, %v241
        %v261 = vsel %vm254, %v251, %v243
        %v262 = vsel %vm254, %v253, %v245
        %v263 = vsel %vm216, 1, 0
        %v264 = vsel %vm217, 1, 0
        %vm265 = vcmp.eq.s32.totalorder %v263, 1
        %vm266 = vcmp.eq.s32.totalorder %v264, 1
        %v267 = vsel %vm265, %v259, 0.0
        %v268 = vsel %vm266, %v255, 0.0
        %v269 = vsel %vm265, %v260, 0.0
        %v270 = vsel %vm266, %v256, 0.0
        %v271 = vsel %vm265, %v261, 0.0
        %v272 = vsel %vm266, %v257, 0.0
        %v273 = vsel %vm265, %v262, 0.0
        %v274 = vsel %vm266, %v258, 0.0
        %s275 = scalar_lea.vmem [#allocation2], 32
        %v276 = vld [vmem:[%s275] sm:$0xff]
        %v277 = vld [vmem:[%s275 + $0x8] sm:$0xff]
        %v278 = vld [vmem:[%s275 + $0x10] sm:$0xff]
        %v279 = vld [vmem:[%s275 + $0x18] sm:$0xff]
        %vm280 = vcmask 261120
        %v282 = vsel %vm280, %v276, 0
        %v285 = vsel %vm280, %v277, 0
        %v288 = vsel %vm280, %v278, 0
        %v291 = vsel %vm280, %v279, 0
        %293 = vmatprep.subr.mxu0 %v268
        %294 = vmatpush1.msra.mxu0 %v267
        %295 = vmatprep.subr.mxu0 %v270
        %296 = vmatpush1.msra.mxu0 %v269
        %297 = vmatprep.subr.mxu0 %v272
        %298 = vmatpush1.msra.mxu0 %v271
        %299 = vmatprep.subr.mxu0 %v274
        %300 = vmatpush1.msra.mxu0 %v273
        %301 = vmatprep.subr.mxu0 0.0
        %302 = vmatpush1.msra.mxu0 0.0
        %303 = vmatprep.subr.mxu0 0.0
        %304 = vmatpush1.msra.mxu0 0.0
        %305 = vmatprep.subr.mxu0 0.0
        %306 = vmatpush1.msra.mxu0 0.0
        %307 = vmatprep.subr.mxu0 0.0
        %308 = vmatpush1.msra.mxu0 0.0
        %309 = vmatprep.subr.mxu0 0.0
        %310 = vmatpush1.msra.mxu0 0.0
        %311 = vmatprep.subr.mxu0 0.0
        %312 = vmatpush1.msra.mxu0 0.0
        %313 = vmatprep.subr.mxu0 0.0
        %314 = vmatpush1.msra.mxu0 0.0
        %315 = vmatprep.subr.mxu0 0.0
        %316 = vmatpush1.msra.mxu0 0.0
        %317 = vmatprep.subr.mxu0 0.0
        %318 = vmatpush1.msra.mxu0 0.0
        %319 = vmatprep.subr.mxu0 0.0
        %320 = vmatpush1.msra.mxu0 0.0
        %321 = vmatprep.subr.mxu0 0.0
        %322 = vmatpush1.msra.mxu0 0.0
        %323 = vmatprep.subr.mxu0 0.0
        %324 = vmatpush1.msra.mxu0 0.0
        %325 = vmatprep.subr.mxu0 0.0
        %326 = vmatpush1.msra.mxu0 0.0
        %327 = vmatprep.subr.mxu0 0.0
        %328 = vmatpush1.msra.mxu0 0.0
        %329 = vmatprep.subr.mxu0 0.0
        %330 = vmatpush1.msra.mxu0 0.0
        %331 = vmatprep.subr.mxu0 0.0
        %332 = vmatpush1.msra.mxu0 0.0
        %333 = vmatprep.subr.mxu0 0.0
        %334 = vmatpush1.msra.mxu0 0.0
        %335 = vmatprep.subr.mxu0 0.0
        %336 = vmatpush1.msra.mxu0 0.0
        %337 = vmatprep.subr.mxu0 0.0
        %338 = vmatpush1.msra.mxu0 0.0
        %339 = vmatprep.subr.mxu0 0.0
        %340 = vmatpush1.msra.mxu0 0.0
        %341 = vmatprep.subr.mxu0 0.0
        %342 = vmatpush1.msra.mxu0 0.0
        %343 = vmatprep.subr.mxu0 0.0
        %344 = vmatpush1.msra.mxu0 0.0
        %345 = vmatprep.subr.mxu0 0.0
        %346 = vmatpush1.msra.mxu0 0.0
        %347 = vmatprep.subr.mxu0 0.0
        %348 = vmatpush1.msra.mxu0 0.0
        %349 = vmatprep.subr.mxu0 0.0
        %350 = vmatpush1.msra.mxu0 0.0
        %351 = vmatprep.subr.mxu0 0.0
        %352 = vmatpush1.msra.mxu0 0.0
        %353 = vmatprep.subr.mxu0 0.0
        %354 = vmatpush1.msra.mxu0 0.0
        %355 = vmatprep.subr.mxu0 0.0
        %356 = vmatpush1.msra.mxu0 0.0
        %357 = vmatprep.mubr.f32.mxu0 0.0
        %358 = vmatmul.mubr.f32.gmra.mrb[0].mxu0 %v282
        %v359 = vpop.f32.mrb[0].mxu0
        %v360 = vadd.f32 0.0, %v359
        %v361 = vpop.f32.mrb[0].mxu0
        %v362 = vadd.f32 0.0, %v361
        %363 = vmatprep.mubr.f32.mxu0 0.0
        %364 = vmatmul.mubr.f32.gmra.mrb[0].mxu0 %v285
        %v365 = vpop.f32.mrb[0].mxu0
        %v366 = vadd.f32 0.0, %v365
        %v367 = vpop.f32.mrb[0].mxu0
        %v368 = vadd.f32 0.0, %v367
        %369 = vmatprep.mubr.f32.mxu0 0.0
        %370 = vmatmul.mubr.f32.gmra.mrb[0].mxu0 %v288
        %v371 = vpop.f32.mrb[0].mxu0
        %v372 = vadd.f32 0.0, %v371
        %v373 = vpop.f32.mrb[0].mxu0
        %v374 = vadd.f32 0.0, %v373
        %375 = vmatprep.mubr.f32.mxu0 0.0
        %376 = vmatmul.mubr.f32.gmra.mrb[0].mxu0 %v291
        %v377 = vpop.f32.mrb[0].mxu0
        %v378 = vadd.f32 0.0, %v377
        %v379 = vpop.f32.mrb[0].mxu0
        %v380 = vadd.f32 0.0, %v379
        %381 = vdwg.mxu0
        %v383 = vsel %vm280, %v234, 0
        %v386 = vsel %vm280, %v235, 0
        %v389 = vsel %vm280, %v236, 0
        %v392 = vsel %vm280, %v237, 0
        %394 = vmatprep.subr.mxu0 %v227
        %395 = vmatpush1.msra.mxu0 %v226
        %396 = vmatprep.subr.mxu0 %v229
        %397 = vmatpush1.msra.mxu0 %v228
        %398 = vmatprep.subr.mxu0 %v231
        %399 = vmatpush1.msra.mxu0 %v230
        %400 = vmatprep.subr.mxu0 %v233
        %401 = vmatpush1.msra.mxu0 %v232
        %402 = vmatprep.subr.mxu0 0.0
        %403 = vmatpush1.msra.mxu0 0.0
        %404 = vmatprep.subr.mxu0 0.0
        %405 = vmatpush1.msra.mxu0 0.0
        %406 = vmatprep.subr.mxu0 0.0
        %407 = vmatpush1.msra.mxu0 0.0
        %408 = vmatprep.subr.mxu0 0.0
        %409 = vmatpush1.msra.mxu0 0.0
        %410 = vmatprep.subr.mxu0 0.0
        %411 = vmatpush1.msra.mxu0 0.0
        %412 = vmatprep.subr.mxu0 0.0
        %413 = vmatpush1.msra.mxu0 0.0
        %414 = vmatprep.subr.mxu0 0.0
        %415 = vmatpush1.msra.mxu0 0.0
        %416 = vmatprep.subr.mxu0 0.0
        %417 = vmatpush1.msra.mxu0 0.0
        %418 = vmatprep.subr.mxu0 0.0
        %419 = vmatpush1.msra.mxu0 0.0
        %420 = vmatprep.subr.mxu0 0.0
        %421 = vmatpush1.msra.mxu0 0.0
        %422 = vmatprep.subr.mxu0 0.0
        %423 = vmatpush1.msra.mxu0 0.0
        %424 = vmatprep.subr.mxu0 0.0
        %425 = vmatpush1.msra.mxu0 0.0
        %426 = vmatprep.subr.mxu0 0.0
        %427 = vmatpush1.msra.mxu0 0.0
        %428 = vmatprep.subr.mxu0 0.0
        %429 = vmatpush1.msra.mxu0 0.0
        %430 = vmatprep.subr.mxu0 0.0
        %431 = vmatpush1.msra.mxu0 0.0
        %432 = vmatprep.subr.mxu0 0.0
        %433 = vmatpush1.msra.mxu0 0.0
        %434 = vmatprep.subr.mxu0 0.0
        %435 = vmatpush1.msra.mxu0 0.0
        %436 = vmatprep.subr.mxu0 0.0
        %437 = vmatpush1.msra.mxu0 0.0
        %438 = vmatprep.subr.mxu0 0.0
        %439 = vmatpush1.msra.mxu0 0.0
        %440 = vmatprep.subr.mxu0 0.0
        %441 = vmatpush1.msra.mxu0 0.0
        %442 = vmatprep.subr.mxu0 0.0
        %443 = vmatpush1.msra.mxu0 0.0
        %444 = vmatprep.subr.mxu0 0.0
        %445 = vmatpush1.msra.mxu0 0.0
        %446 = vmatprep.subr.mxu0 0.0
        %447 = vmatpush1.msra.mxu0 0.0
        %448 = vmatprep.subr.mxu0 0.0
        %449 = vmatpush1.msra.mxu0 0.0
        %450 = vmatprep.subr.mxu0 0.0
        %451 = vmatpush1.msra.mxu0 0.0
        %452 = vmatprep.subr.mxu0 0.0
        %453 = vmatpush1.msra.mxu0 0.0
        %454 = vmatprep.subr.mxu0 0.0
        %455 = vmatpush1.msra.mxu0 0.0
        %456 = vmatprep.subr.mxu0 0.0
        %457 = vmatpush1.msra.mxu0 0.0
        %458 = vmatprep.mubr.f32.mxu0 0.0
        %459 = vmatmul.mubr.f32.gmra.mrb[0].mxu0 %v383
        %v460 = vpop.f32.mrb[0].mxu0
        %v461 = vadd.f32 %v360, %v460
        %v462 = vpop.f32.mrb[0].mxu0
        %v463 = vadd.f32 %v362, %v462
        %464 = vmatprep.mubr.f32.mxu0 0.0
        %465 = vmatmul.mubr.f32.gmra.mrb[0].mxu0 %v386
        %v466 = vpop.f32.mrb[0].mxu0
        %v467 = vadd.f32 %v366, %v466
        %v468 = vpop.f32.mrb[0].mxu0
        %v469 = vadd.f32 %v368, %v468
        %470 = vmatprep.mubr.f32.mxu0 0.0
        %471 = vmatmul.mubr.f32.gmra.mrb[0].mxu0 %v389
        %v472 = vpop.f32.mrb[0].mxu0
        %v473 = vadd.f32 %v372, %v472
        %v474 = vpop.f32.mrb[0].mxu0
        %v475 = vadd.f32 %v374, %v474
        %476 = vmatprep.mubr.f32.mxu0 0.0
        %477 = vmatmul.mubr.f32.gmra.mrb[0].mxu0 %v392
        %v478 = vpop.f32.mrb[0].mxu0
        %v479 = vadd.f32 %v378, %v478
        %v480 = vpop.f32.mrb[0].mxu0
        %v481 = vadd.f32 %v380, %v480
        %482 = vdwg.mxu0
        %483 = vrot.lane.b32.xlu0 %v183, 15
        %v484 = vpop.permute.xlu0 %483
        %485 = vrot.lane.b32.xlu0 %v185, 15
        %v486 = vpop.permute.xlu0 %485
        %487 = vrot.lane.b32.xlu0 %v187, 15
        %v488 = vpop.permute.xlu0 %487
        %489 = vrot.lane.b32.xlu0 %v189, 15
        %v490 = vpop.permute.xlu0 %489
        %491 = vrot.lane.b32.xlu0 %v184, 15
        %v492 = vpop.permute.xlu0 %491
        %493 = vrot.lane.b32.xlu0 %v186, 15
        %v494 = vpop.permute.xlu0 %493
        %495 = vrot.lane.b32.xlu0 %v188, 15
        %v496 = vpop.permute.xlu0 %495
        %497 = vrot.lane.b32.xlu0 %v190, 15
        %v498 = vpop.permute.xlu0 %497
        %vm499 = vcmp.lt.s32.totalorder %v179, 15
        %v500 = vsel %vm499, %v484, %v492
        %v501 = vsel %vm499, %v486, %v494
        %v502 = vsel %vm499, %v488, %v496
        %v503 = vsel %vm499, %v490, %v498
        %v504 = vsel %vm499, %v492, %v484
        %v505 = vsel %vm499, %v494, %v486
        %v506 = vsel %vm499, %v496, %v488
        %v507 = vsel %vm499, %v498, %v490
        %vm508 = vcmp.lt.s32.totalorder %v181, 15
        %vm509 = vcmp.lt.s32.totalorder %v182, 15
        %vm510 = vmand %vm216, %vm508
        %vm511 = vmand %vm217, %vm509
        %v512 = vsel %vm510, 1, 0
        %v513 = vsel %vm511, 1, 0
        %vm514 = vcmp.eq.s32.totalorder %v512, 1
        %vm515 = vcmp.eq.s32.totalorder %v513, 1
        %v516 = vsel %vm514, %v504, 0.0
        %v517 = vsel %vm515, %v500, 0.0
        %v518 = vsel %vm514, %v505, 0.0
        %v519 = vsel %vm515, %v501, 0.0
        %v520 = vsel %vm514, %v506, 0.0
        %v521 = vsel %vm515, %v502, 0.0
        %v522 = vsel %vm514, %v507, 0.0
        %v523 = vsel %vm515, %v503, 0.0
        %s524 = scalar_lea.vmem [#allocation2], 64
        %v525 = vld [vmem:[%s524] sm:$0xff]
        %v526 = vld [vmem:[%s524 + $0x8] sm:$0xff]
        %v527 = vld [vmem:[%s524 + $0x10] sm:$0xff]
        %v528 = vld [vmem:[%s524 + $0x18] sm:$0xff]
        %v530 = vsel %vm280, %v525, 0
        %v533 = vsel %vm280, %v526, 0
        %v536 = vsel %vm280, %v527, 0
        %v539 = vsel %vm280, %v528, 0
        %541 = vmatprep.subr.mxu0 %v517
        %542 = vmatpush1.msra.mxu0 %v516
        %543 = vmatprep.subr.mxu0 %v519
        %544 = vmatpush1.msra.mxu0 %v518
        %545 = vmatprep.subr.mxu0 %v521
        %546 = vmatpush1.msra.mxu0 %v520
        %547 = vmatprep.subr.mxu0 %v523
        %548 = vmatpush1.msra.mxu0 %v522
        %549 = vmatprep.subr.mxu0 0.0
        %550 = vmatpush1.msra.mxu0 0.0
        %551 = vmatprep.subr.mxu0 0.0
        %552 = vmatpush1.msra.mxu0 0.0
        %553 = vmatprep.subr.mxu0 0.0
        %554 = vmatpush1.msra.mxu0 0.0
        %555 = vmatprep.subr.mxu0 0.0
        %556 = vmatpush1.msra.mxu0 0.0
        %557 = vmatprep.subr.mxu0 0.0
        %558 = vmatpush1.msra.mxu0 0.0
        %559 = vmatprep.subr.mxu0 0.0
        %560 = vmatpush1.msra.mxu0 0.0
        %561 = vmatprep.subr.mxu0 0.0
        %562 = vmatpush1.msra.mxu0 0.0
        %563 = vmatprep.subr.mxu0 0.0
        %564 = vmatpush1.msra.mxu0 0.0
        %565 = vmatprep.subr.mxu0 0.0
        %566 = vmatpush1.msra.mxu0 0.0
        %567 = vmatprep.subr.mxu0 0.0
        %568 = vmatpush1.msra.mxu0 0.0
        %569 = vmatprep.subr.mxu0 0.0
        %570 = vmatpush1.msra.mxu0 0.0
        %571 = vmatprep.subr.mxu0 0.0
        %572 = vmatpush1.msra.mxu0 0.0
        %573 = vmatprep.subr.mxu0 0.0
        %574 = vmatpush1.msra.mxu0 0.0
        %575 = vmatprep.subr.mxu0 0.0
        %576 = vmatpush1.msra.mxu0 0.0
        %577 = vmatprep.subr.mxu0 0.0
        %578 = vmatpush1.msra.mxu0 0.0
        %579 = vmatprep.subr.mxu0 0.0
        %580 = vmatpush1.msra.mxu0 0.0
        %581 = vmatprep.subr.mxu0 0.0
        %582 = vmatpush1.msra.mxu0 0.0
        %583 = vmatprep.subr.mxu0 0.0
        %584 = vmatpush1.msra.mxu0 0.0
        %585 = vmatprep.subr.mxu0 0.0
        %586 = vmatpush1.msra.mxu0 0.0
        %587 = vmatprep.subr.mxu0 0.0
        %588 = vmatpush1.msra.mxu0 0.0
        %589 = vmatprep.subr.mxu0 0.0
        %590 = vmatpush1.msra.mxu0 0.0
        %591 = vmatprep.subr.mxu0 0.0
        %592 = vmatpush1.msra.mxu0 0.0
        %593 = vmatprep.subr.mxu0 0.0
        %594 = vmatpush1.msra.mxu0 0.0
        %595 = vmatprep.subr.mxu0 0.0
        %596 = vmatpush1.msra.mxu0 0.0
        %597 = vmatprep.subr.mxu0 0.0
        %598 = vmatpush1.msra.mxu0 0.0
        %599 = vmatprep.subr.mxu0 0.0
        %600 = vmatpush1.msra.mxu0 0.0
        %601 = vmatprep.subr.mxu0 0.0
        %602 = vmatpush1.msra.mxu0 0.0
        %603 = vmatprep.subr.mxu0 0.0
        %604 = vmatpush1.msra.mxu0 0.0
        %605 = vmatprep.mubr.f32.mxu0 0.0
        %606 = vmatmul.mubr.f32.gmra.mrb[0].mxu0 %v530
        %v607 = vpop.f32.mrb[0].mxu0
        %v608 = vadd.f32 0.0, %v607
        %v609 = vpop.f32.mrb[0].mxu0
        %v610 = vadd.f32 0.0, %v609
        %611 = vmatprep.mubr.f32.mxu0 0.0
        %612 = vmatmul.mubr.f32.gmra.mrb[0].mxu0 %v533
        %v613 = vpop.f32.mrb[0].mxu0
        %v614 = vadd.f32 0.0, %v613
        %v615 = vpop.f32.mrb[0].mxu0
        %v616 = vadd.f32 0.0, %v615
        %617 = vmatprep.mubr.f32.mxu0 0.0
        %618 = vmatmul.mubr.f32.gmra.mrb[0].mxu0 %v536
        %v619 = vpop.f32.mrb[0].mxu0
        %v620 = vadd.f32 0.0, %v619
        %v621 = vpop.f32.mrb[0].mxu0
        %v622 = vadd.f32 0.0, %v621
        %623 = vmatprep.mubr.f32.mxu0 0.0
        %624 = vmatmul.mubr.f32.gmra.mrb[0].mxu0 %v539
        %v625 = vpop.f32.mrb[0].mxu0
        %v626 = vadd.f32 0.0, %v625
        %v627 = vpop.f32.mrb[0].mxu0
        %v628 = vadd.f32 0.0, %v627
        %629 = vdwg.mxu0
        %v630 = vadd.f32 %v461, %v608
        %v631 = vadd.f32 %v463, %v610
        %v632 = vadd.f32 %v467, %v614
        %v633 = vadd.f32 %v469, %v616
        %v634 = vadd.f32 %v473, %v620
        %v635 = vadd.f32 %v475, %v622
        %v636 = vadd.f32 %v479, %v626
        %v637 = vadd.f32 %v481, %v628
        %638 = vrot.lane.b32.xlu0 %v183, 1
        %v639 = vpop.permute.xlu0 %638
        %640 = vrot.lane.b32.xlu0 %v185, 1
        %v641 = vpop.permute.xlu0 %640
        %642 = vrot.lane.b32.xlu0 %v187, 1
        %v643 = vpop.permute.xlu0 %642
        %644 = vrot.lane.b32.xlu0 %v189, 1
        %v645 = vpop.permute.xlu0 %644
        %646 = vrot.lane.b32.xlu0 %v184, 1
        %v647 = vpop.permute.xlu0 %646
        %648 = vrot.lane.b32.xlu0 %v186, 1
        %v649 = vpop.permute.xlu0 %648
        %650 = vrot.lane.b32.xlu0 %v188, 1
        %v651 = vpop.permute.xlu0 %650
        %652 = vrot.lane.b32.xlu0 %v190, 1
        %v653 = vpop.permute.xlu0 %652
        %vm654 = vcmp.lt.s32.totalorder %v179, 1
        %v655 = vsel %vm654, %v639, %v647
        %v656 = vsel %vm654, %v641, %v649
        %v657 = vsel %vm654, %v643, %v651
        %v658 = vsel %vm654, %v645, %v653
        %v659 = vsel %vm654, %v647, %v639
        %v660 = vsel %vm654, %v649, %v641
        %v661 = vsel %vm654, %v651, %v643
        %v662 = vsel %vm654, %v653, %v645
        %v663 = vsel %vm218, 1, 0
        %v664 = vsel %vm219, 1, 0
        %vm665 = vcmp.eq.s32.totalorder %v663, 1
        %vm666 = vcmp.eq.s32.totalorder %v664, 1
        %v667 = vsel %vm665, %v659, 0.0
        %v668 = vsel %vm666, %v655, 0.0
        %v669 = vsel %vm665, %v660, 0.0
        %v670 = vsel %vm666, %v656, 0.0
        %v671 = vsel %vm665, %v661, 0.0
        %v672 = vsel %vm666, %v657, 0.0
        %v673 = vsel %vm665, %v662, 0.0
        %v674 = vsel %vm666, %v658, 0.0
        %s675 = scalar_lea.vmem [#allocation2], 96
        %v676 = vld [vmem:[%s675] sm:$0xff]
        %v677 = vld [vmem:[%s675 + $0x8] sm:$0xff]
        %v678 = vld [vmem:[%s675 + $0x10] sm:$0xff]
        %v679 = vld [vmem:[%s675 + $0x18] sm:$0xff]
        %v681 = vsel %vm280, %v676, 0
        %v684 = vsel %vm280, %v677, 0
        %v687 = vsel %vm280, %v678, 0
        %v690 = vsel %vm280, %v679, 0
        %692 = vmatprep.subr.mxu0 %v668
        %693 = vmatpush1.msra.mxu0 %v667
        %694 = vmatprep.subr.mxu0 %v670
        %695 = vmatpush1.msra.mxu0 %v669
        %696 = vmatprep.subr.mxu0 %v672
        %697 = vmatpush1.msra.mxu0 %v671
        %698 = vmatprep.subr.mxu0 %v674
        %699 = vmatpush1.msra.mxu0 %v673
        %700 = vmatprep.subr.mxu0 0.0
        %701 = vmatpush1.msra.mxu0 0.0
        %702 = vmatprep.subr.mxu0 0.0
        %703 = vmatpush1.msra.mxu0 0.0
        %704 = vmatprep.subr.mxu0 0.0
        %705 = vmatpush1.msra.mxu0 0.0
        %706 = vmatprep.subr.mxu0 0.0
        %707 = vmatpush1.msra.mxu0 0.0
        %708 = vmatprep.subr.mxu0 0.0
        %709 = vmatpush1.msra.mxu0 0.0
        %710 = vmatprep.subr.mxu0 0.0
        %711 = vmatpush1.msra.mxu0 0.0
        %712 = vmatprep.subr.mxu0 0.0
        %713 = vmatpush1.msra.mxu0 0.0
        %714 = vmatprep.subr.mxu0 0.0
        %715 = vmatpush1.msra.mxu0 0.0
        %716 = vmatprep.subr.mxu0 0.0
        %717 = vmatpush1.msra.mxu0 0.0
        %718 = vmatprep.subr.mxu0 0.0
        %719 = vmatpush1.msra.mxu0 0.0
        %720 = vmatprep.subr.mxu0 0.0
        %721 = vmatpush1.msra.mxu0 0.0
        %722 = vmatprep.subr.mxu0 0.0
        %723 = vmatpush1.msra.mxu0 0.0
        %724 = vmatprep.subr.mxu0 0.0
        %725 = vmatpush1.msra.mxu0 0.0
        %726 = vmatprep.subr.mxu0 0.0
        %727 = vmatpush1.msra.mxu0 0.0
        %728 = vmatprep.subr.mxu0 0.0
        %729 = vmatpush1.msra.mxu0 0.0
        %730 = vmatprep.subr.mxu0 0.0
        %731 = vmatpush1.msra.mxu0 0.0
        %732 = vmatprep.subr.mxu0 0.0
        %733 = vmatpush1.msra.mxu0 0.0
        %734 = vmatprep.subr.mxu0 0.0
        %735 = vmatpush1.msra.mxu0 0.0
        %736 = vmatprep.subr.mxu0 0.0
        %737 = vmatpush1.msra.mxu0 0.0
        %738 = vmatprep.subr.mxu0 0.0
        %739 = vmatpush1.msra.mxu0 0.0
        %740 = vmatprep.subr.mxu0 0.0
        %741 = vmatpush1.msra.mxu0 0.0
        %742 = vmatprep.subr.mxu0 0.0
        %743 = vmatpush1.msra.mxu0 0.0
        %744 = vmatprep.subr.mxu0 0.0
        %745 = vmatpush1.msra.mxu0 0.0
        %746 = vmatprep.subr.mxu0 0.0
        %747 = vmatpush1.msra.mxu0 0.0
        %748 = vmatprep.subr.mxu0 0.0
        %749 = vmatpush1.msra.mxu0 0.0
        %750 = vmatprep.subr.mxu0 0.0
        %751 = vmatpush1.msra.mxu0 0.0
        %752 = vmatprep.subr.mxu0 0.0
        %753 = vmatpush1.msra.mxu0 0.0
        %754 = vmatprep.subr.mxu0 0.0
        %755 = vmatpush1.msra.mxu0 0.0
        %756 = vmatprep.mubr.f32.mxu0 0.0
        %757 = vmatmul.mubr.f32.gmra.mrb[0].mxu0 %v681
        %v758 = vpop.f32.mrb[0].mxu0
        %v759 = vadd.f32 0.0, %v758
        %v760 = vpop.f32.mrb[0].mxu0
        %v761 = vadd.f32 0.0, %v760
        %762 = vmatprep.mubr.f32.mxu0 0.0
        %763 = vmatmul.mubr.f32.gmra.mrb[0].mxu0 %v684
        %v764 = vpop.f32.mrb[0].mxu0
        %v765 = vadd.f32 0.0, %v764
        %v766 = vpop.f32.mrb[0].mxu0
        %v767 = vadd.f32 0.0, %v766
        %768 = vmatprep.mubr.f32.mxu0 0.0
        %769 = vmatmul.mubr.f32.gmra.mrb[0].mxu0 %v687
        %v770 = vpop.f32.mrb[0].mxu0
        %v771 = vadd.f32 0.0, %v770
        %v772 = vpop.f32.mrb[0].mxu0
        %v773 = vadd.f32 0.0, %v772
        %774 = vmatprep.mubr.f32.mxu0 0.0
        %775 = vmatmul.mubr.f32.gmra.mrb[0].mxu0 %v690
        %v776 = vpop.f32.mrb[0].mxu0
        %v777 = vadd.f32 0.0, %v776
        %v778 = vpop.f32.mrb[0].mxu0
        %v779 = vadd.f32 0.0, %v778
        %780 = vdwg.mxu0
        %v781 = vadd.f32 %v630, %v759
        %v782 = vadd.f32 %v631, %v761
        %v783 = vadd.f32 %v632, %v765
        %v784 = vadd.f32 %v633, %v767
        %v785 = vadd.f32 %v634, %v771
        %v786 = vadd.f32 %v635, %v773
        %v787 = vadd.f32 %v636, %v777
        %v788 = vadd.f32 %v637, %v779
        %s789 = scalar_lea.vmem [#allocation2], 128
        %v790 = vld [vmem:[%s789] sm:$0xff]
        %v791 = vld [vmem:[%s789 + $0x8] sm:$0xff]
        %v792 = vld [vmem:[%s789 + $0x10] sm:$0xff]
        %v793 = vld [vmem:[%s789 + $0x18] sm:$0xff]
        %v795 = vsel %vm280, %v790, 0
        %v798 = vsel %vm280, %v791, 0
        %v801 = vsel %vm280, %v792, 0
        %v804 = vsel %vm280, %v793, 0
        %806 = vmatprep.subr.mxu0 %v184
        %807 = vmatpush1.msra.mxu0 %v183
        %808 = vmatprep.subr.mxu0 %v186
        %809 = vmatpush1.msra.mxu0 %v185
        %810 = vmatprep.subr.mxu0 %v188
        %811 = vmatpush1.msra.mxu0 %v187
        %812 = vmatprep.subr.mxu0 %v190
        %813 = vmatpush1.msra.mxu0 %v189
        %814 = vmatprep.subr.mxu0 0.0
        %815 = vmatpush1.msra.mxu0 0.0
        %816 = vmatprep.subr.mxu0 0.0
        %817 = vmatpush1.msra.mxu0 0.0
        %818 = vmatprep.subr.mxu0 0.0
        %819 = vmatpush1.msra.mxu0 0.0
        %820 = vmatprep.subr.mxu0 0.0
        %821 = vmatpush1.msra.mxu0 0.0
        %822 = vmatprep.subr.mxu0 0.0
        %823 = vmatpush1.msra.mxu0 0.0
        %824 = vmatprep.subr.mxu0 0.0
        %825 = vmatpush1.msra.mxu0 0.0
        %826 = vmatprep.subr.mxu0 0.0
        %827 = vmatpush1.msra.mxu0 0.0
        %828 = vmatprep.subr.mxu0 0.0
        %829 = vmatpush1.msra.mxu0 0.0
        %830 = vmatprep.subr.mxu0 0.0
        %831 = vmatpush1.msra.mxu0 0.0
        %832 = vmatprep.subr.mxu0 0.0
        %833 = vmatpush1.msra.mxu0 0.0
        %834 = vmatprep.subr.mxu0 0.0
        %835 = vmatpush1.msra.mxu0 0.0
        %836 = vmatprep.subr.mxu0 0.0
        %837 = vmatpush1.msra.mxu0 0.0
        %838 = vmatprep.subr.mxu0 0.0
        %839 = vmatpush1.msra.mxu0 0.0
        %840 = vmatprep.subr.mxu0 0.0
        %841 = vmatpush1.msra.mxu0 0.0
        %842 = vmatprep.subr.mxu0 0.0
        %843 = vmatpush1.msra.mxu0 0.0
        %844 = vmatprep.subr.mxu0 0.0
        %845 = vmatpush1.msra.mxu0 0.0
        %846 = vmatprep.subr.mxu0 0.0
        %847 = vmatpush1.msra.mxu0 0.0
        %848 = vmatprep.subr.mxu0 0.0
        %849 = vmatpush1.msra.mxu0 0.0
        %850 = vmatprep.subr.mxu0 0.0
        %851 = vmatpush1.msra.mxu0 0.0
        %852 = vmatprep.subr.mxu0 0.0
        %853 = vmatpush1.msra.mxu0 0.0
        %854 = vmatprep.subr.mxu0 0.0
        %855 = vmatpush1.msra.mxu0 0.0
        %856 = vmatprep.subr.mxu0 0.0
        %857 = vmatpush1.msra.mxu0 0.0
        %858 = vmatprep.subr.mxu0 0.0
        %859 = vmatpush1.msra.mxu0 0.0
        %860 = vmatprep.subr.mxu0 0.0
        %861 = vmatpush1.msra.mxu0 0.0
        %862 = vmatprep.subr.mxu0 0.0
        %863 = vmatpush1.msra.mxu0 0.0
        %864 = vmatprep.subr.mxu0 0.0
        %865 = vmatpush1.msra.mxu0 0.0
        %866 = vmatprep.subr.mxu0 0.0
        %867 = vmatpush1.msra.mxu0 0.0
        %868 = vmatprep.subr.mxu0 0.0
        %869 = vmatpush1.msra.mxu0 0.0
        %870 = vmatprep.mubr.f32.mxu0 0.0
        %871 = vmatmul.mubr.f32.gmra.mrb[0].mxu0 %v795
        %v872 = vpop.f32.mrb[0].mxu0
        %v873 = vadd.f32 0.0, %v872
        %v874 = vpop.f32.mrb[0].mxu0
        %v875 = vadd.f32 0.0, %v874
        %876 = vmatprep.mubr.f32.mxu0 0.0
        %877 = vmatmul.mubr.f32.gmra.mrb[0].mxu0 %v798
        %v878 = vpop.f32.mrb[0].mxu0
        %v879 = vadd.f32 0.0, %v878
        %v880 = vpop.f32.mrb[0].mxu0
        %v881 = vadd.f32 0.0, %v880
        %882 = vmatprep.mubr.f32.mxu0 0.0
        %883 = vmatmul.mubr.f32.gmra.mrb[0].mxu0 %v801
        %v884 = vpop.f32.mrb[0].mxu0
        %v885 = vadd.f32 0.0, %v884
        %v886 = vpop.f32.mrb[0].mxu0
        %v887 = vadd.f32 0.0, %v886
        %888 = vmatprep.mubr.f32.mxu0 0.0
        %889 = vmatmul.mubr.f32.gmra.mrb[0].mxu0 %v804
        %v890 = vpop.f32.mrb[0].mxu0
        %v891 = vadd.f32 0.0, %v890
        %v892 = vpop.f32.mrb[0].mxu0
        %v893 = vadd.f32 0.0, %v892
        %894 = vdwg.mxu0
        %v895 = vadd.f32 %v781, %v873
        %v896 = vadd.f32 %v782, %v875
        %v897 = vadd.f32 %v783, %v879
        %v898 = vadd.f32 %v784, %v881
        %v899 = vadd.f32 %v785, %v885
        %v900 = vadd.f32 %v786, %v887
        %v901 = vadd.f32 %v787, %v891
        %v902 = vadd.f32 %v788, %v893
        %903 = vrot.lane.b32.xlu0 %v183, 127
        %v904 = vpop.permute.xlu0 %903
        %905 = vrot.lane.b32.xlu0 %v185, 127
        %v906 = vpop.permute.xlu0 %905
        %907 = vrot.lane.b32.xlu0 %v187, 127
        %v908 = vpop.permute.xlu0 %907
        %909 = vrot.lane.b32.xlu0 %v189, 127
        %v910 = vpop.permute.xlu0 %909
        %911 = vrot.lane.b32.xlu0 %v184, 127
        %v912 = vpop.permute.xlu0 %911
        %913 = vrot.lane.b32.xlu0 %v186, 127
        %v914 = vpop.permute.xlu0 %913
        %915 = vrot.lane.b32.xlu0 %v188, 127
        %v916 = vpop.permute.xlu0 %915
        %917 = vrot.lane.b32.xlu0 %v190, 127
        %v918 = vpop.permute.xlu0 %917
        %vm919 = vcmp.lt.s32.totalorder %v179, 127
        %v920 = vsel %vm919, %v904, %v912
        %v921 = vsel %vm919, %v906, %v914
        %v922 = vsel %vm919, %v908, %v916
        %v923 = vsel %vm919, %v910, %v918
        %v924 = vsel %vm919, %v912, %v904
        %v925 = vsel %vm919, %v914, %v906
        %v926 = vsel %vm919, %v916, %v908
        %v927 = vsel %vm919, %v918, %v910
        %v928 = vsel %vm508, 1, 0
        %v929 = vsel %vm509, 1, 0
        %vm930 = vcmp.eq.s32.totalorder %v928, 1
        %vm931 = vcmp.eq.s32.totalorder %v929, 1
        %v932 = vsel %vm930, %v920, 0.0
        %v933 = vsel %vm931, %v924, 0.0
        %v934 = vsel %vm930, %v921, 0.0
        %v935 = vsel %vm931, %v925, 0.0
        %v936 = vsel %vm930, %v922, 0.0
        %v937 = vsel %vm931, %v926, 0.0
        %v938 = vsel %vm930, %v923, 0.0
        %v939 = vsel %vm931, %v927, 0.0
        %s940 = scalar_lea.vmem [#allocation2], 160
        %v941 = vld [vmem:[%s940] sm:$0xff]
        %v942 = vld [vmem:[%s940 + $0x8] sm:$0xff]
        %v943 = vld [vmem:[%s940 + $0x10] sm:$0xff]
        %v944 = vld [vmem:[%s940 + $0x18] sm:$0xff]
        %v946 = vsel %vm280, %v941, 0
        %v949 = vsel %vm280, %v942, 0
        %v952 = vsel %vm280, %v943, 0
        %v955 = vsel %vm280, %v944, 0
        %957 = vmatprep.subr.mxu0 %v933
        %958 = vmatpush1.msra.mxu0 %v932
        %959 = vmatprep.subr.mxu0 %v935
        %960 = vmatpush1.msra.mxu0 %v934
        %961 = vmatprep.subr.mxu0 %v937
        %962 = vmatpush1.msra.mxu0 %v936
        %963 = vmatprep.subr.mxu0 %v939
        %964 = vmatpush1.msra.mxu0 %v938
        %965 = vmatprep.subr.mxu0 0.0
        %966 = vmatpush1.msra.mxu0 0.0
        %967 = vmatprep.subr.mxu0 0.0
        %968 = vmatpush1.msra.mxu0 0.0
        %969 = vmatprep.subr.mxu0 0.0
        %970 = vmatpush1.msra.mxu0 0.0
        %971 = vmatprep.subr.mxu0 0.0
        %972 = vmatpush1.msra.mxu0 0.0
        %973 = vmatprep.subr.mxu0 0.0
        %974 = vmatpush1.msra.mxu0 0.0
        %975 = vmatprep.subr.mxu0 0.0
        %976 = vmatpush1.msra.mxu0 0.0
        %977 = vmatprep.subr.mxu0 0.0
        %978 = vmatpush1.msra.mxu0 0.0
        %979 = vmatprep.subr.mxu0 0.0
        %980 = vmatpush1.msra.mxu0 0.0
        %981 = vmatprep.subr.mxu0 0.0
        %982 = vmatpush1.msra.mxu0 0.0
        %983 = vmatprep.subr.mxu0 0.0
        %984 = vmatpush1.msra.mxu0 0.0
        %985 = vmatprep.subr.mxu0 0.0
        %986 = vmatpush1.msra.mxu0 0.0
        %987 = vmatprep.subr.mxu0 0.0
        %988 = vmatpush1.msra.mxu0 0.0
        %989 = vmatprep.subr.mxu0 0.0
        %990 = vmatpush1.msra.mxu0 0.0
        %991 = vmatprep.subr.mxu0 0.0
        %992 = vmatpush1.msra.mxu0 0.0
        %993 = vmatprep.subr.mxu0 0.0
        %994 = vmatpush1.msra.mxu0 0.0
        %995 = vmatprep.subr.mxu0 0.0
        %996 = vmatpush1.msra.mxu0 0.0
        %997 = vmatprep.subr.mxu0 0.0
        %998 = vmatpush1.msra.mxu0 0.0
        %999 = vmatprep.subr.mxu0 0.0
        %1000 = vmatpush1.msra.mxu0 0.0
        %1001 = vmatprep.subr.mxu0 0.0
        %1002 = vmatpush1.msra.mxu0 0.0
        %1003 = vmatprep.subr.mxu0 0.0
        %1004 = vmatpush1.msra.mxu0 0.0
        %1005 = vmatprep.subr.mxu0 0.0
        %1006 = vmatpush1.msra.mxu0 0.0
        %1007 = vmatprep.subr.mxu0 0.0
        %1008 = vmatpush1.msra.mxu0 0.0
        %1009 = vmatprep.subr.mxu0 0.0
        %1010 = vmatpush1.msra.mxu0 0.0
        %1011 = vmatprep.subr.mxu0 0.0
        %1012 = vmatpush1.msra.mxu0 0.0
        %1013 = vmatprep.subr.mxu0 0.0
        %1014 = vmatpush1.msra.mxu0 0.0
        %1015 = vmatprep.subr.mxu0 0.0
        %1016 = vmatpush1.msra.mxu0 0.0
        %1017 = vmatprep.subr.mxu0 0.0
        %1018 = vmatpush1.msra.mxu0 0.0
        %1019 = vmatprep.subr.mxu0 0.0
        %1020 = vmatpush1.msra.mxu0 0.0
        %1021 = vmatprep.mubr.f32.mxu0 0.0
        %1022 = vmatmul.mubr.f32.gmra.mrb[0].mxu0 %v946
        %v1023 = vpop.f32.mrb[0].mxu0
        %v1024 = vadd.f32 0.0, %v1023
        %v1025 = vpop.f32.mrb[0].mxu0
        %v1026 = vadd.f32 0.0, %v1025
        %1027 = vmatprep.mubr.f32.mxu0 0.0
        %1028 = vmatmul.mubr.f32.gmra.mrb[0].mxu0 %v949
        %v1029 = vpop.f32.mrb[0].mxu0
        %v1030 = vadd.f32 0.0, %v1029
        %v1031 = vpop.f32.mrb[0].mxu0
        %v1032 = vadd.f32 0.0, %v1031
        %1033 = vmatprep.mubr.f32.mxu0 0.0
        %1034 = vmatmul.mubr.f32.gmra.mrb[0].mxu0 %v952
        %v1035 = vpop.f32.mrb[0].mxu0
        %v1036 = vadd.f32 0.0, %v1035
        %v1037 = vpop.f32.mrb[0].mxu0
        %v1038 = vadd.f32 0.0, %v1037
        %1039 = vmatprep.mubr.f32.mxu0 0.0
        %1040 = vmatmul.mubr.f32.gmra.mrb[0].mxu0 %v955
        %v1041 = vpop.f32.mrb[0].mxu0
        %v1042 = vadd.f32 0.0, %v1041
        %v1043 = vpop.f32.mrb[0].mxu0
        %v1044 = vadd.f32 0.0, %v1043
        %1045 = vdwg.mxu0
        %v1046 = vadd.f32 %v895, %v1024
        %v1047 = vadd.f32 %v896, %v1026
        %v1048 = vadd.f32 %v897, %v1030
        %v1049 = vadd.f32 %v898, %v1032
        %v1050 = vadd.f32 %v899, %v1036
        %v1051 = vadd.f32 %v900, %v1038
        %v1052 = vadd.f32 %v901, %v1042
        %v1053 = vadd.f32 %v902, %v1044
        %1054 = vrot.lane.b32.xlu0 %v183, 113
        %v1055 = vpop.permute.xlu0 %1054
        %1056 = vrot.lane.b32.xlu0 %v185, 113
        %v1057 = vpop.permute.xlu0 %1056
        %1058 = vrot.lane.b32.xlu0 %v187, 113
        %v1059 = vpop.permute.xlu0 %1058
        %1060 = vrot.lane.b32.xlu0 %v189, 113
        %v1061 = vpop.permute.xlu0 %1060
        %1062 = vrot.lane.b32.xlu0 %v184, 113
        %v1063 = vpop.permute.xlu0 %1062
        %1064 = vrot.lane.b32.xlu0 %v186, 113
        %v1065 = vpop.permute.xlu0 %1064
        %1066 = vrot.lane.b32.xlu0 %v188, 113
        %v1067 = vpop.permute.xlu0 %1066
        %1068 = vrot.lane.b32.xlu0 %v190, 113
        %v1069 = vpop.permute.xlu0 %1068
        %vm1070 = vcmp.lt.s32.totalorder %v179, 113
        %v1071 = vsel %vm1070, %v1055, %v1063
        %v1072 = vsel %vm1070, %v1057, %v1065
        %v1073 = vsel %vm1070, %v1059, %v1067
        %v1074 = vsel %vm1070, %v1061, %v1069
        %v1075 = vsel %vm1070, %v1063, %v1055
        %v1076 = vsel %vm1070, %v1065, %v1057
        %v1077 = vsel %vm1070, %v1067, %v1059
        %v1078 = vsel %vm1070, %v1069, %v1061
        %vm1079 = vcmp.lt.s32.totalorder %v179, 240
        %vm1080 = vcmp.lt.s32.totalorder %v180, 240
        %vm1081 = vmand %vm1079, %vm218
        %vm1082 = vmand %vm1080, %vm219
        %v1083 = vsel %vm1081, 1, 0
        %v1084 = vsel %vm1082, 1, 0
        %vm1085 = vcmp.eq.s32.totalorder %v1083, 1
        %vm1086 = vcmp.eq.s32.totalorder %v1084, 1
        %v1087 = vsel %vm1085, %v1071, 0.0
        %v1088 = vsel %vm1086, %v1075, 0.0
        %v1089 = vsel %vm1085, %v1072, 0.0
        %v1090 = vsel %vm1086, %v1076, 0.0
        %v1091 = vsel %vm1085, %v1073, 0.0
        %v1092 = vsel %vm1086, %v1077, 0.0
        %v1093 = vsel %vm1085, %v1074, 0.0
        %v1094 = vsel %vm1086, %v1078, 0.0
        %s1095 = scalar_lea.vmem [#allocation2], 192
        %v1096 = vld [vmem:[%s1095] sm:$0xff]
        %v1097 = vld [vmem:[%s1095 + $0x8] sm:$0xff]
        %v1098 = vld [vmem:[%s1095 + $0x10] sm:$0xff]
        %v1099 = vld [vmem:[%s1095 + $0x18] sm:$0xff]
        %v1101 = vsel %vm280, %v1096, 0
        %v1104 = vsel %vm280, %v1097, 0
        %v1107 = vsel %vm280, %v1098, 0
        %v1110 = vsel %vm280, %v1099, 0
        %1112 = vmatprep.subr.mxu0 %v1088
        %1113 = vmatpush1.msra.mxu0 %v1087
        %1114 = vmatprep.subr.mxu0 %v1090
        %1115 = vmatpush1.msra.mxu0 %v1089
        %1116 = vmatprep.subr.mxu0 %v1092
        %1117 = vmatpush1.msra.mxu0 %v1091
        %1118 = vmatprep.subr.mxu0 %v1094
        %1119 = vmatpush1.msra.mxu0 %v1093
        %1120 = vmatprep.subr.mxu0 0.0
        %1121 = vmatpush1.msra.mxu0 0.0
        %1122 = vmatprep.subr.mxu0 0.0
        %1123 = vmatpush1.msra.mxu0 0.0
        %1124 = vmatprep.subr.mxu0 0.0
        %1125 = vmatpush1.msra.mxu0 0.0
        %1126 = vmatprep.subr.mxu0 0.0
        %1127 = vmatpush1.msra.mxu0 0.0
        %1128 = vmatprep.subr.mxu0 0.0
        %1129 = vmatpush1.msra.mxu0 0.0
        %1130 = vmatprep.subr.mxu0 0.0
        %1131 = vmatpush1.msra.mxu0 0.0
        %1132 = vmatprep.subr.mxu0 0.0
        %1133 = vmatpush1.msra.mxu0 0.0
        %1134 = vmatprep.subr.mxu0 0.0
        %1135 = vmatpush1.msra.mxu0 0.0
        %1136 = vmatprep.subr.mxu0 0.0
        %1137 = vmatpush1.msra.mxu0 0.0
        %1138 = vmatprep.subr.mxu0 0.0
        %1139 = vmatpush1.msra.mxu0 0.0
        %1140 = vmatprep.subr.mxu0 0.0
        %1141 = vmatpush1.msra.mxu0 0.0
        %1142 = vmatprep.subr.mxu0 0.0
        %1143 = vmatpush1.msra.mxu0 0.0
        %1144 = vmatprep.subr.mxu0 0.0
        %1145 = vmatpush1.msra.mxu0 0.0
        %1146 = vmatprep.subr.mxu0 0.0
        %1147 = vmatpush1.msra.mxu0 0.0
        %1148 = vmatprep.subr.mxu0 0.0
        %1149 = vmatpush1.msra.mxu0 0.0
        %1150 = vmatprep.subr.mxu0 0.0
        %1151 = vmatpush1.msra.mxu0 0.0
        %1152 = vmatprep.subr.mxu0 0.0
        %1153 = vmatpush1.msra.mxu0 0.0
        %1154 = vmatprep.subr.mxu0 0.0
        %1155 = vmatpush1.msra.mxu0 0.0
        %1156 = vmatprep.subr.mxu0 0.0
        %1157 = vmatpush1.msra.mxu0 0.0
        %1158 = vmatprep.subr.mxu0 0.0
        %1159 = vmatpush1.msra.mxu0 0.0
        %1160 = vmatprep.subr.mxu0 0.0
        %1161 = vmatpush1.msra.mxu0 0.0
        %1162 = vmatprep.subr.mxu0 0.0
        %1163 = vmatpush1.msra.mxu0 0.0
        %1164 = vmatprep.subr.mxu0 0.0
        %1165 = vmatpush1.msra.mxu0 0.0
        %1166 = vmatprep.subr.mxu0 0.0
        %1167 = vmatpush1.msra.mxu0 0.0
        %1168 = vmatprep.subr.mxu0 0.0
        %1169 = vmatpush1.msra.mxu0 0.0
        %1170 = vmatprep.subr.mxu0 0.0
        %1171 = vmatpush1.msra.mxu0 0.0
        %1172 = vmatprep.subr.mxu0 0.0
        %1173 = vmatpush1.msra.mxu0 0.0
        %1174 = vmatprep.subr.mxu0 0.0
        %1175 = vmatpush1.msra.mxu0 0.0
        %1176 = vmatprep.mubr.f32.mxu0 0.0
        %1177 = vmatmul.mubr.f32.gmra.mrb[0].mxu0 %v1101
        %v1178 = vpop.f32.mrb[0].mxu0
        %v1179 = vadd.f32 0.0, %v1178
        %v1180 = vpop.f32.mrb[0].mxu0
        %v1181 = vadd.f32 0.0, %v1180
        %1182 = vmatprep.mubr.f32.mxu0 0.0
        %1183 = vmatmul.mubr.f32.gmra.mrb[0].mxu0 %v1104
        %v1184 = vpop.f32.mrb[0].mxu0
        %v1185 = vadd.f32 0.0, %v1184
        %v1186 = vpop.f32.mrb[0].mxu0
        %v1187 = vadd.f32 0.0, %v1186
        %1188 = vmatprep.mubr.f32.mxu0 0.0
        %1189 = vmatmul.mubr.f32.gmra.mrb[0].mxu0 %v1107
        %v1190 = vpop.f32.mrb[0].mxu0
        %v1191 = vadd.f32 0.0, %v1190
        %v1192 = vpop.f32.mrb[0].mxu0
        %v1193 = vadd.f32 0.0, %v1192
        %1194 = vmatprep.mubr.f32.mxu0 0.0
        %1195 = vmatmul.mubr.f32.gmra.mrb[0].mxu0 %v1110
        %v1196 = vpop.f32.mrb[0].mxu0
        %v1197 = vadd.f32 0.0, %v1196
        %v1198 = vpop.f32.mrb[0].mxu0
        %v1199 = vadd.f32 0.0, %v1198
        %1200 = vdwg.mxu0
        %v1201 = vadd.f32 %v1046, %v1179
        %v1202 = vadd.f32 %v1047, %v1181
        %v1203 = vadd.f32 %v1048, %v1185
        %v1204 = vadd.f32 %v1049, %v1187
        %v1205 = vadd.f32 %v1050, %v1191
        %v1206 = vadd.f32 %v1051, %v1193
        %v1207 = vadd.f32 %v1052, %v1197
        %v1208 = vadd.f32 %v1053, %v1199
        %1209 = vrot.lane.b32.xlu0 %v183, 112
        %v1210 = vpop.permute.xlu0 %1209
        %1211 = vrot.lane.b32.xlu0 %v185, 112
        %v1212 = vpop.permute.xlu0 %1211
        %1213 = vrot.lane.b32.xlu0 %v187, 112
        %v1214 = vpop.permute.xlu0 %1213
        %1215 = vrot.lane.b32.xlu0 %v189, 112
        %v1216 = vpop.permute.xlu0 %1215
        %1217 = vrot.lane.b32.xlu0 %v184, 112
        %v1218 = vpop.permute.xlu0 %1217
        %1219 = vrot.lane.b32.xlu0 %v186, 112
        %v1220 = vpop.permute.xlu0 %1219
        %1221 = vrot.lane.b32.xlu0 %v188, 112
        %v1222 = vpop.permute.xlu0 %1221
        %1223 = vrot.lane.b32.xlu0 %v190, 112
        %v1224 = vpop.permute.xlu0 %1223
        %vm1225 = vcmp.lt.s32.totalorder %v179, 112
        %v1226 = vsel %vm1225, %v1210, %v1218
        %v1227 = vsel %vm1225, %v1212, %v1220
        %v1228 = vsel %vm1225, %v1214, %v1222
        %v1229 = vsel %vm1225, %v1216, %v1224
        %v1230 = vsel %vm1225, %v1218, %v1210
        %v1231 = vsel %vm1225, %v1220, %v1212
        %v1232 = vsel %vm1225, %v1222, %v1214
        %v1233 = vsel %vm1225, %v1224, %v1216
        %v1234 = vsel %vm1079, 1, 0
        %v1235 = vsel %vm1080, 1, 0
        %vm1236 = vcmp.eq.s32.totalorder %v1234, 1
        %vm1237 = vcmp.eq.s32.totalorder %v1235, 1
        %v1238 = vsel %vm1236, %v1226, 0.0
        %v1239 = vsel %vm1237, %v1230, 0.0
        %v1240 = vsel %vm1236, %v1227, 0.0
        %v1241 = vsel %vm1237, %v1231, 0.0
        %v1242 = vsel %vm1236, %v1228, 0.0
        %v1243 = vsel %vm1237, %v1232, 0.0
        %v1244 = vsel %vm1236, %v1229, 0.0
        %v1245 = vsel %vm1237, %v1233, 0.0
        %s1246 = scalar_lea.vmem [#allocation2], 224
        %v1247 = vld [vmem:[%s1246] sm:$0xff]
        %v1248 = vld [vmem:[%s1246 + $0x8] sm:$0xff]
        %v1249 = vld [vmem:[%s1246 + $0x10] sm:$0xff]
        %v1250 = vld [vmem:[%s1246 + $0x18] sm:$0xff]
        %v1252 = vsel %vm280, %v1247, 0
        %v1255 = vsel %vm280, %v1248, 0
        %v1258 = vsel %vm280, %v1249, 0
        %v1261 = vsel %vm280, %v1250, 0
        %1263 = vmatprep.subr.mxu0 %v1239
        %1264 = vmatpush1.msra.mxu0 %v1238
        %1265 = vmatprep.subr.mxu0 %v1241
        %1266 = vmatpush1.msra.mxu0 %v1240
        %1267 = vmatprep.subr.mxu0 %v1243
        %1268 = vmatpush1.msra.mxu0 %v1242
        %1269 = vmatprep.subr.mxu0 %v1245
        %1270 = vmatpush1.msra.mxu0 %v1244
        %1271 = vmatprep.subr.mxu0 0.0
        %1272 = vmatpush1.msra.mxu0 0.0
        %1273 = vmatprep.subr.mxu0 0.0
        %1274 = vmatpush1.msra.mxu0 0.0
        %1275 = vmatprep.subr.mxu0 0.0
        %1276 = vmatpush1.msra.mxu0 0.0
        %1277 = vmatprep.subr.mxu0 0.0
        %1278 = vmatpush1.msra.mxu0 0.0
        %1279 = vmatprep.subr.mxu0 0.0
        %1280 = vmatpush1.msra.mxu0 0.0
        %1281 = vmatprep.subr.mxu0 0.0
        %1282 = vmatpush1.msra.mxu0 0.0
        %1283 = vmatprep.subr.mxu0 0.0
        %1284 = vmatpush1.msra.mxu0 0.0
        %1285 = vmatprep.subr.mxu0 0.0
        %1286 = vmatpush1.msra.mxu0 0.0
        %1287 = vmatprep.subr.mxu0 0.0
        %1288 = vmatpush1.msra.mxu0 0.0
        %1289 = vmatprep.subr.mxu0 0.0
        %1290 = vmatpush1.msra.mxu0 0.0
        %1291 = vmatprep.subr.mxu0 0.0
        %1292 = vmatpush1.msra.mxu0 0.0
        %1293 = vmatprep.subr.mxu0 0.0
        %1294 = vmatpush1.msra.mxu0 0.0
        %1295 = vmatprep.subr.mxu0 0.0
        %1296 = vmatpush1.msra.mxu0 0.0
        %1297 = vmatprep.subr.mxu0 0.0
        %1298 = vmatpush1.msra.mxu0 0.0
        %1299 = vmatprep.subr.mxu0 0.0
        %1300 = vmatpush1.msra.mxu0 0.0
        %1301 = vmatprep.subr.mxu0 0.0
        %1302 = vmatpush1.msra.mxu0 0.0
        %1303 = vmatprep.subr.mxu0 0.0
        %1304 = vmatpush1.msra.mxu0 0.0
        %1305 = vmatprep.subr.mxu0 0.0
        %1306 = vmatpush1.msra.mxu0 0.0
        %1307 = vmatprep.subr.mxu0 0.0
        %1308 = vmatpush1.msra.mxu0 0.0
        %1309 = vmatprep.subr.mxu0 0.0
        %1310 = vmatpush1.msra.mxu0 0.0
        %1311 = vmatprep.subr.mxu0 0.0
        %1312 = vmatpush1.msra.mxu0 0.0
        %1313 = vmatprep.subr.mxu0 0.0
        %1314 = vmatpush1.msra.mxu0 0.0
        %1315 = vmatprep.subr.mxu0 0.0
        %1316 = vmatpush1.msra.mxu0 0.0
        %1317 = vmatprep.subr.mxu0 0.0
        %1318 = vmatpush1.msra.mxu0 0.0
        %1319 = vmatprep.subr.mxu0 0.0
        %1320 = vmatpush1.msra.mxu0 0.0
        %1321 = vmatprep.subr.mxu0 0.0
        %1322 = vmatpush1.msra.mxu0 0.0
        %1323 = vmatprep.subr.mxu0 0.0
        %1324 = vmatpush1.msra.mxu0 0.0
        %1325 = vmatprep.subr.mxu0 0.0
        %1326 = vmatpush1.msra.mxu0 0.0
        %1327 = vmatprep.mubr.f32.mxu0 0.0
        %1328 = vmatmul.mubr.f32.gmra.mrb[0].mxu0 %v1252
        %v1329 = vpop.f32.mrb[0].mxu0
        %v1330 = vadd.f32 0.0, %v1329
        %v1331 = vpop.f32.mrb[0].mxu0
        %v1332 = vadd.f32 0.0, %v1331
        %1333 = vmatprep.mubr.f32.mxu0 0.0
        %1334 = vmatmul.mubr.f32.gmra.mrb[0].mxu0 %v1255
        %v1335 = vpop.f32.mrb[0].mxu0
        %v1336 = vadd.f32 0.0, %v1335
        %v1337 = vpop.f32.mrb[0].mxu0
        %v1338 = vadd.f32 0.0, %v1337
        %1339 = vmatprep.mubr.f32.mxu0 0.0
        %1340 = vmatmul.mubr.f32.gmra.mrb[0].mxu0 %v1258
        %v1341 = vpop.f32.mrb[0].mxu0
        %v1342 = vadd.f32 0.0, %v1341
        %v1343 = vpop.f32.mrb[0].mxu0
        %v1344 = vadd.f32 0.0, %v1343
        %1345 = vmatprep.mubr.f32.mxu0 0.0
        %1346 = vmatmul.mubr.f32.gmra.mrb[0].mxu0 %v1261
        %v1347 = vpop.f32.mrb[0].mxu0
        %v1348 = vadd.f32 0.0, %v1347
        %v1349 = vpop.f32.mrb[0].mxu0
        %v1350 = vadd.f32 0.0, %v1349
        %1351 = vdwg.mxu0
        %v1352 = vadd.f32 %v1201, %v1330
        %v1353 = vadd.f32 %v1202, %v1332
        %v1354 = vadd.f32 %v1203, %v1336
        %v1355 = vadd.f32 %v1204, %v1338
        %v1356 = vadd.f32 %v1205, %v1342
        %v1357 = vadd.f32 %v1206, %v1344
        %v1358 = vadd.f32 %v1207, %v1348
        %v1359 = vadd.f32 %v1208, %v1350
        %1360 = vrot.lane.b32.xlu0 %v183, 111
        %v1361 = vpop.permute.xlu0 %1360
        %1362 = vrot.lane.b32.xlu0 %v185, 111
        %v1363 = vpop.permute.xlu0 %1362
        %1364 = vrot.lane.b32.xlu0 %v187, 111
        %v1365 = vpop.permute.xlu0 %1364
        %1366 = vrot.lane.b32.xlu0 %v189, 111
        %v1367 = vpop.permute.xlu0 %1366
        %1368 = vrot.lane.b32.xlu0 %v184, 111
        %v1369 = vpop.permute.xlu0 %1368
        %1370 = vrot.lane.b32.xlu0 %v186, 111
        %v1371 = vpop.permute.xlu0 %1370
        %1372 = vrot.lane.b32.xlu0 %v188, 111
        %v1373 = vpop.permute.xlu0 %1372
        %1374 = vrot.lane.b32.xlu0 %v190, 111
        %v1375 = vpop.permute.xlu0 %1374
        %vm1376 = vcmp.lt.s32.totalorder %v179, 111
        %v1377 = vsel %vm1376, %v1361, %v1369
        %v1378 = vsel %vm1376, %v1363, %v1371
        %v1379 = vsel %vm1376, %v1365, %v1373
        %v1380 = vsel %vm1376, %v1367, %v1375
        %v1381 = vsel %vm1376, %v1369, %v1361
        %v1382 = vsel %vm1376, %v1371, %v1363
        %v1383 = vsel %vm1376, %v1373, %v1365
        %v1384 = vsel %vm1376, %v1375, %v1367
        %vm1385 = vmand %vm1079, %vm508
        %vm1386 = vmand %vm1080, %vm509
        %v1387 = vsel %vm1385, 1, 0
        %v1388 = vsel %vm1386, 1, 0
        %vm1389 = vcmp.eq.s32.totalorder %v1387, 1
        %vm1390 = vcmp.eq.s32.totalorder %v1388, 1
        %v1391 = vsel %vm1389, %v1377, 0.0
        %v1392 = vsel %vm1390, %v1381, 0.0
        %v1393 = vsel %vm1389, %v1378, 0.0
        %v1394 = vsel %vm1390, %v1382, 0.0
        %v1395 = vsel %vm1389, %v1379, 0.0
        %v1396 = vsel %vm1390, %v1383, 0.0
        %v1397 = vsel %vm1389, %v1380, 0.0
        %v1398 = vsel %vm1390, %v1384, 0.0
        %s1399 = scalar_lea.vmem [#allocation2], 256
        %v1400 = vld [vmem:[%s1399] sm:$0xff]
        %v1401 = vld [vmem:[%s1399 + $0x8] sm:$0xff]
        %v1402 = vld [vmem:[%s1399 + $0x10] sm:$0xff]
        %v1403 = vld [vmem:[%s1399 + $0x18] sm:$0xff]
        %v1405 = vsel %vm280, %v1400, 0
        %v1408 = vsel %vm280, %v1401, 0
        %v1411 = vsel %vm280, %v1402, 0
        %v1414 = vsel %vm280, %v1403, 0
        %1416 = vmatprep.subr.mxu0 %v1392
        %1417 = vmatpush1.msra.mxu0 %v1391
        %1418 = vmatprep.subr.mxu0 %v1394
        %1419 = vmatpush1.msra.mxu0 %v1393
        %1420 = vmatprep.subr.mxu0 %v1396
        %1421 = vmatpush1.msra.mxu0 %v1395
        %1422 = vmatprep.subr.mxu0 %v1398
        %1423 = vmatpush1.msra.mxu0 %v1397
        %1424 = vmatprep.subr.mxu0 0.0
        %1425 = vmatpush1.msra.mxu0 0.0
        %1426 = vmatprep.subr.mxu0 0.0
        %1427 = vmatpush1.msra.mxu0 0.0
        %1428 = vmatprep.subr.mxu0 0.0
        %1429 = vmatpush1.msra.mxu0 0.0
        %1430 = vmatprep.subr.mxu0 0.0
        %1431 = vmatpush1.msra.mxu0 0.0
        %1432 = vmatprep.subr.mxu0 0.0
        %1433 = vmatpush1.msra.mxu0 0.0
        %1434 = vmatprep.subr.mxu0 0.0
        %1435 = vmatpush1.msra.mxu0 0.0
        %1436 = vmatprep.subr.mxu0 0.0
        %1437 = vmatpush1.msra.mxu0 0.0
        %1438 = vmatprep.subr.mxu0 0.0
        %1439 = vmatpush1.msra.mxu0 0.0
        %1440 = vmatprep.subr.mxu0 0.0
        %1441 = vmatpush1.msra.mxu0 0.0
        %1442 = vmatprep.subr.mxu0 0.0
        %1443 = vmatpush1.msra.mxu0 0.0
        %1444 = vmatprep.subr.mxu0 0.0
        %1445 = vmatpush1.msra.mxu0 0.0
        %1446 = vmatprep.subr.mxu0 0.0
        %1447 = vmatpush1.msra.mxu0 0.0
        %1448 = vmatprep.subr.mxu0 0.0
        %1449 = vmatpush1.msra.mxu0 0.0
        %1450 = vmatprep.subr.mxu0 0.0
        %1451 = vmatpush1.msra.mxu0 0.0
        %1452 = vmatprep.subr.mxu0 0.0
        %1453 = vmatpush1.msra.mxu0 0.0
        %1454 = vmatprep.subr.mxu0 0.0
        %1455 = vmatpush1.msra.mxu0 0.0
        %1456 = vmatprep.subr.mxu0 0.0
        %1457 = vmatpush1.msra.mxu0 0.0
        %1458 = vmatprep.subr.mxu0 0.0
        %1459 = vmatpush1.msra.mxu0 0.0
        %1460 = vmatprep.subr.mxu0 0.0
        %1461 = vmatpush1.msra.mxu0 0.0
        %1462 = vmatprep.subr.mxu0 0.0
        %1463 = vmatpush1.msra.mxu0 0.0
        %1464 = vmatprep.subr.mxu0 0.0
        %1465 = vmatpush1.msra.mxu0 0.0
        %1466 = vmatprep.subr.mxu0 0.0
        %1467 = vmatpush1.msra.mxu0 0.0
        %1468 = vmatprep.subr.mxu0 0.0
        %1469 = vmatpush1.msra.mxu0 0.0
        %1470 = vmatprep.subr.mxu0 0.0
        %1471 = vmatpush1.msra.mxu0 0.0
        %1472 = vmatprep.subr.mxu0 0.0
        %1473 = vmatpush1.msra.mxu0 0.0
        %1474 = vmatprep.subr.mxu0 0.0
        %1475 = vmatpush1.msra.mxu0 0.0
        %1476 = vmatprep.subr.mxu0 0.0
        %1477 = vmatpush1.msra.mxu0 0.0
        %1478 = vmatprep.subr.mxu0 0.0
        %1479 = vmatpush1.msra.mxu0 0.0
        %1480 = vmatprep.mubr.f32.mxu0 0.0
        %1481 = vmatmul.mubr.f32.gmra.mrb[0].mxu0 %v1405
        %v1482 = vpop.f32.mrb[0].mxu0
        %v1483 = vadd.f32 0.0, %v1482
        %v1484 = vpop.f32.mrb[0].mxu0
        %v1485 = vadd.f32 0.0, %v1484
        %1486 = vmatprep.mubr.f32.mxu0 0.0
        %1487 = vmatmul.mubr.f32.gmra.mrb[0].mxu0 %v1408
        %v1488 = vpop.f32.mrb[0].mxu0
        %v1489 = vadd.f32 0.0, %v1488
        %v1490 = vpop.f32.mrb[0].mxu0
        %v1491 = vadd.f32 0.0, %v1490
        %1492 = vmatprep.mubr.f32.mxu0 0.0
        %1493 = vmatmul.mubr.f32.gmra.mrb[0].mxu0 %v1411
        %v1494 = vpop.f32.mrb[0].mxu0
        %v1495 = vadd.f32 0.0, %v1494
        %v1496 = vpop.f32.mrb[0].mxu0
        %v1497 = vadd.f32 0.0, %v1496
        %1498 = vmatprep.mubr.f32.mxu0 0.0
        %1499 = vmatmul.mubr.f32.gmra.mrb[0].mxu0 %v1414
        %v1500 = vpop.f32.mrb[0].mxu0
        %v1501 = vadd.f32 0.0, %v1500
        %v1502 = vpop.f32.mrb[0].mxu0
        %v1503 = vadd.f32 0.0, %v1502
        %1504 = vdwg.mxu0
        %v1505 = vadd.f32 %v1352, %v1483
        %v1506 = vadd.f32 %v1353, %v1485
        %v1507 = vadd.f32 %v1354, %v1489
        %v1508 = vadd.f32 %v1355, %v1491
        %v1509 = vadd.f32 %v1356, %v1495
        %v1510 = vadd.f32 %v1357, %v1497
        %v1511 = vadd.f32 %v1358, %v1501
        %v1512 = vadd.f32 %v1359, %v1503
        %v1513 = vld [vmem:[%s2] sm:$0xff]
        %v1514 = vld [vmem:[%s2 + $0x8] sm:$0xff]
        %v1515 = vld [vmem:[%s2 + $0x10] sm:$0xff]
        %v1516 = vld [vmem:[%s2 + $0x18] sm:$0xff]
        %1518 = vset.pattern.permute.xlu0 0
        %1519 = vperm.xlu0 %1518, %v1513
        %v1520 = vpop.permute.xlu0 %1519
        %1523 = vset.pattern.permute.xlu0 0
        %1524 = vperm.xlu0 %1523, %v1514
        %v1525 = vpop.permute.xlu0 %1524
        %1528 = vset.pattern.permute.xlu0 0
        %1529 = vperm.xlu0 %1528, %v1515
        %v1530 = vpop.permute.xlu0 %1529
        %1533 = vset.pattern.permute.xlu0 0
        %1534 = vperm.xlu0 %1533, %v1516
        %v1535 = vpop.permute.xlu0 %1534
        %v1537 = vadd.f32 %v1505, %v1520
        %v1538 = vadd.f32 %v1506, %v1520
        %v1539 = vadd.f32 %v1507, %v1525
        %v1540 = vadd.f32 %v1508, %v1525
        %v1541 = vadd.f32 %v1509, %v1530
        %v1542 = vadd.f32 %v1510, %v1530
        %v1543 = vadd.f32 %v1511, %v1535
        %v1544 = vadd.f32 %v1512, %v1535
        %v1545 = vmax.f32 %v1537, 0.0
        %v1546 = vmax.f32 %v1538, 0.0
        %v1547 = vmax.f32 %v1539, 0.0
        %v1548 = vmax.f32 %v1540, 0.0
        %v1549 = vmax.f32 %v1541, 0.0
        %v1550 = vmax.f32 %v1542, 0.0
        %v1551 = vmax.f32 %v1543, 0.0
        %v1552 = vmax.f32 %v1544, 0.0
        %1553 = vrot.lane.b32.xlu0 %v1545, 17
        %v1554 = vpop.permute.xlu0 %1553
        %1555 = vrot.lane.b32.xlu0 %v1547, 17
        %v1556 = vpop.permute.xlu0 %1555
        %1557 = vrot.lane.b32.xlu0 %v1549, 17
        %v1558 = vpop.permute.xlu0 %1557
        %1559 = vrot.lane.b32.xlu0 %v1551, 17
        %v1560 = vpop.permute.xlu0 %1559
        %1561 = vrot.lane.b32.xlu0 %v1546, 17
        %v1562 = vpop.permute.xlu0 %1561
        %1563 = vrot.lane.b32.xlu0 %v1548, 17
        %v1564 = vpop.permute.xlu0 %1563
        %1565 = vrot.lane.b32.xlu0 %v1550, 17
        %v1566 = vpop.permute.xlu0 %1565
        %1567 = vrot.lane.b32.xlu0 %v1552, 17
        %v1568 = vpop.permute.xlu0 %1567
        %v1569 = vsel %vm207, %v1554, %v1562
        %v1570 = vsel %vm207, %v1556, %v1564
        %v1571 = vsel %vm207, %v1558, %v1566
        %v1572 = vsel %vm207, %v1560, %v1568
        %v1573 = vsel %vm207, %v1562, %v1554
        %v1574 = vsel %vm207, %v1564, %v1556
        %v1575 = vsel %vm207, %v1566, %v1558
        %v1576 = vsel %vm207, %v1568, %v1560
        %v1577 = vsel %vm224, %v1573, 0.0
        %v1578 = vsel %vm225, %v1569, 0.0
        %v1579 = vsel %vm224, %v1574, 0.0
        %v1580 = vsel %vm225, %v1570, 0.0
        %v1581 = vsel %vm224, %v1575, 0.0
        %v1582 = vsel %vm225, %v1571, 0.0
        %v1583 = vsel %vm224, %v1576, 0.0
        %v1584 = vsel %vm225, %v1572, 0.0
        %s1585 = scalar_lea.vmem [#allocation2], 288
        %v1586 = vld [vmem:[%s1585] sm:$0xff]
        %v1587 = vld [vmem:[%s1585 + $0x8] sm:$0xff]
        %v1588 = vld [vmem:[%s1585 + $0x10] sm:$0xff]
        %v1589 = vld [vmem:[%s1585 + $0x18] sm:$0xff]
        %1590 = vrot.lane.b32.xlu0 %v1545, 16
        %v1591 = vpop.permute.xlu0 %1590
        %1592 = vrot.lane.b32.xlu0 %v1547, 16
        %v1593 = vpop.permute.xlu0 %1592
        %1594 = vrot.lane.b32.xlu0 %v1549, 16
        %v1595 = vpop.permute.xlu0 %1594
        %1596 = vrot.lane.b32.xlu0 %v1551, 16
        %v1597 = vpop.permute.xlu0 %1596
        %1598 = vrot.lane.b32.xlu0 %v1546, 16
        %v1599 = vpop.permute.xlu0 %1598
        %1600 = vrot.lane.b32.xlu0 %v1548, 16
        %v1601 = vpop.permute.xlu0 %1600
        %1602 = vrot.lane.b32.xlu0 %v1550, 16
        %v1603 = vpop.permute.xlu0 %1602
        %1604 = vrot.lane.b32.xlu0 %v1552, 16
        %v1605 = vpop.permute.xlu0 %1604
        %v1606 = vsel %vm254, %v1591, %v1599
        %v1607 = vsel %vm254, %v1593, %v1601
        %v1608 = vsel %vm254, %v1595, %v1603
        %v1609 = vsel %vm254, %v1597, %v1605
        %v1610 = vsel %vm254, %v1599, %v1591
        %v1611 = vsel %vm254, %v1601, %v1593
        %v1612 = vsel %vm254, %v1603, %v1595
        %v1613 = vsel %vm254, %v1605, %v1597
        %v1614 = vsel %vm265, %v1610, 0.0
        %v1615 = vsel %vm266, %v1606, 0.0
        %v1616 = vsel %vm265, %v1611, 0.0
        %v1617 = vsel %vm266, %v1607, 0.0
        %v1618 = vsel %vm265, %v1612, 0.0
        %v1619 = vsel %vm266, %v1608, 0.0
        %v1620 = vsel %vm265, %v1613, 0.0
        %v1621 = vsel %vm266, %v1609, 0.0
        %s1622 = scalar_lea.vmem [#allocation2], 320
        %v1623 = vld [vmem:[%s1622] sm:$0xff]
        %v1624 = vld [vmem:[%s1622 + $0x8] sm:$0xff]
        %v1625 = vld [vmem:[%s1622 + $0x10] sm:$0xff]
        %v1626 = vld [vmem:[%s1622 + $0x18] sm:$0xff]
        %v1628 = vsel %vm280, %v1623, 0
        %v1631 = vsel %vm280, %v1624, 0
        %v1634 = vsel %vm280, %v1625, 0
        %v1637 = vsel %vm280, %v1626, 0
        %1639 = vmatprep.subr.mxu0 %v1615
        %1640 = vmatpush1.msra.mxu0 %v1614
        %1641 = vmatprep.subr.mxu0 %v1617
        %1642 = vmatpush1.msra.mxu0 %v1616
        %1643 = vmatprep.subr.mxu0 %v1619
        %1644 = vmatpush1.msra.mxu0 %v1618
        %1645 = vmatprep.subr.mxu0 %v1621
        %1646 = vmatpush1.msra.mxu0 %v1620
        %1647 = vmatprep.subr.mxu0 0.0
        %1648 = vmatpush1.msra.mxu0 0.0
        %1649 = vmatprep.subr.mxu0 0.0
        %1650 = vmatpush1.msra.mxu0 0.0
        %1651 = vmatprep.subr.mxu0 0.0
        %1652 = vmatpush1.msra.mxu0 0.0
        %1653 = vmatprep.subr.mxu0 0.0
        %1654 = vmatpush1.msra.mxu0 0.0
        %1655 = vmatprep.subr.mxu0 0.0
        %1656 = vmatpush1.msra.mxu0 0.0
        %1657 = vmatprep.subr.mxu0 0.0
        %1658 = vmatpush1.msra.mxu0 0.0
        %1659 = vmatprep.subr.mxu0 0.0
        %1660 = vmatpush1.msra.mxu0 0.0
        %1661 = vmatprep.subr.mxu0 0.0
        %1662 = vmatpush1.msra.mxu0 0.0
        %1663 = vmatprep.subr.mxu0 0.0
        %1664 = vmatpush1.msra.mxu0 0.0
        %1665 = vmatprep.subr.mxu0 0.0
        %1666 = vmatpush1.msra.mxu0 0.0
        %1667 = vmatprep.subr.mxu0 0.0
        %1668 = vmatpush1.msra.mxu0 0.0
        %1669 = vmatprep.subr.mxu0 0.0
        %1670 = vmatpush1.msra.mxu0 0.0
        %1671 = vmatprep.subr.mxu0 0.0
        %1672 = vmatpush1.msra.mxu0 0.0
        %1673 = vmatprep.subr.mxu0 0.0
        %1674 = vmatpush1.msra.mxu0 0.0
        %1675 = vmatprep.subr.mxu0 0.0
        %1676 = vmatpush1.msra.mxu0 0.0
        %1677 = vmatprep.subr.mxu0 0.0
        %1678 = vmatpush1.msra.mxu0 0.0
        %1679 = vmatprep.subr.mxu0 0.0
        %1680 = vmatpush1.msra.mxu0 0.0
        %1681 = vmatprep.subr.mxu0 0.0
        %1682 = vmatpush1.msra.mxu0 0.0
        %1683 = vmatprep.subr.mxu0 0.0
        %1684 = vmatpush1.msra.mxu0 0.0
        %1685 = vmatprep.subr.mxu0 0.0
        %1686 = vmatpush1.msra.mxu0 0.0
        %1687 = vmatprep.subr.mxu0 0.0
        %1688 = vmatpush1.msra.mxu0 0.0
        %1689 = vmatprep.subr.mxu0 0.0
        %1690 = vmatpush1.msra.mxu0 0.0
        %1691 = vmatprep.subr.mxu0 0.0
        %1692 = vmatpush1.msra.mxu0 0.0
        %1693 = vmatprep.subr.mxu0 0.0
        %1694 = vmatpush1.msra.mxu0 0.0
        %1695 = vmatprep.subr.mxu0 0.0
        %1696 = vmatpush1.msra.mxu0 0.0
        %1697 = vmatprep.subr.mxu0 0.0
        %1698 = vmatpush1.msra.mxu0 0.0
        %1699 = vmatprep.subr.mxu0 0.0
        %1700 = vmatpush1.msra.mxu0 0.0
        %1701 = vmatprep.subr.mxu0 0.0
        %1702 = vmatpush1.msra.mxu0 0.0
        %1703 = vmatprep.mubr.f32.mxu0 0.0
        %1704 = vmatmul.mubr.f32.gmra.mrb[0].mxu0 %v1628
        %v1705 = vpop.f32.mrb[0].mxu0
        %v1706 = vadd.f32 0.0, %v1705
        %v1707 = vpop.f32.mrb[0].mxu0
        %v1708 = vadd.f32 0.0, %v1707
        %1709 = vmatprep.mubr.f32.mxu0 0.0
        %1710 = vmatmul.mubr.f32.gmra.mrb[0].mxu0 %v1631
        %v1711 = vpop.f32.mrb[0].mxu0
        %v1712 = vadd.f32 0.0, %v1711
        %v1713 = vpop.f32.mrb[0].mxu0
        %v1714 = vadd.f32 0.0, %v1713
        %1715 = vmatprep.mubr.f32.mxu0 0.0
        %1716 = vmatmul.mubr.f32.gmra.mrb[0].mxu0 %v1634
        %v1717 = vpop.f32.mrb[0].mxu0
        %v1718 = vadd.f32 0.0, %v1717
        %v1719 = vpop.f32.mrb[0].mxu0
        %v1720 = vadd.f32 0.0, %v1719
        %1721 = vmatprep.mubr.f32.mxu0 0.0
        %1722 = vmatmul.mubr.f32.gmra.mrb[0].mxu0 %v1637
        %v1723 = vpop.f32.mrb[0].mxu0
        %v1724 = vadd.f32 0.0, %v1723
        %v1725 = vpop.f32.mrb[0].mxu0
        %v1726 = vadd.f32 0.0, %v1725
        %1727 = vdwg.mxu0
        %v1729 = vsel %vm280, %v1586, 0
        %v1732 = vsel %vm280, %v1587, 0
        %v1735 = vsel %vm280, %v1588, 0
        %v1738 = vsel %vm280, %v1589, 0
        %1740 = vmatprep.subr.mxu0 %v1578
        %1741 = vmatpush1.msra.mxu0 %v1577
        %1742 = vmatprep.subr.mxu0 %v1580
        %1743 = vmatpush1.msra.mxu0 %v1579
        %1744 = vmatprep.subr.mxu0 %v1582
        %1745 = vmatpush1.msra.mxu0 %v1581
        %1746 = vmatprep.subr.mxu0 %v1584
        %1747 = vmatpush1.msra.mxu0 %v1583
        %1748 = vmatprep.subr.mxu0 0.0
        %1749 = vmatpush1.msra.mxu0 0.0
        %1750 = vmatprep.subr.mxu0 0.0
        %1751 = vmatpush1.msra.mxu0 0.0
        %1752 = vmatprep.subr.mxu0 0.0
        %1753 = vmatpush1.msra.mxu0 0.0
        %1754 = vmatprep.subr.mxu0 0.0
        %1755 = vmatpush1.msra.mxu0 0.0
        %1756 = vmatprep.subr.mxu0 0.0
        %1757 = vmatpush1.msra.mxu0 0.0
        %1758 = vmatprep.subr.mxu0 0.0
        %1759 = vmatpush1.msra.mxu0 0.0
        %1760 = vmatprep.subr.mxu0 0.0
        %1761 = vmatpush1.msra.mxu0 0.0
        %1762 = vmatprep.subr.mxu0 0.0
        %1763 = vmatpush1.msra.mxu0 0.0
        %1764 = vmatprep.subr.mxu0 0.0
        %1765 = vmatpush1.msra.mxu0 0.0
        %1766 = vmatprep.subr.mxu0 0.0
        %1767 = vmatpush1.msra.mxu0 0.0
        %1768 = vmatprep.subr.mxu0 0.0
        %1769 = vmatpush1.msra.mxu0 0.0
        %1770 = vmatprep.subr.mxu0 0.0
        %1771 = vmatpush1.msra.mxu0 0.0
        %1772 = vmatprep.subr.mxu0 0.0
        %1773 = vmatpush1.msra.mxu0 0.0
        %1774 = vmatprep.subr.mxu0 0.0
        %1775 = vmatpush1.msra.mxu0 0.0
        %1776 = vmatprep.subr.mxu0 0.0
        %1777 = vmatpush1.msra.mxu0 0.0
        %1778 = vmatprep.subr.mxu0 0.0
        %1779 = vmatpush1.msra.mxu0 0.0
        %1780 = vmatprep.subr.mxu0 0.0
        %1781 = vmatpush1.msra.mxu0 0.0
        %1782 = vmatprep.subr.mxu0 0.0
        %1783 = vmatpush1.msra.mxu0 0.0
        %1784 = vmatprep.subr.mxu0 0.0
        %1785 = vmatpush1.msra.mxu0 0.0
        %1786 = vmatprep.subr.mxu0 0.0
        %1787 = vmatpush1.msra.mxu0 0.0
        %1788 = vmatprep.subr.mxu0 0.0
        %1789 = vmatpush1.msra.mxu0 0.0
        %1790 = vmatprep.subr.mxu0 0.0
        %1791 = vmatpush1.msra.mxu0 0.0
        %1792 = vmatprep.subr.mxu0 0.0
        %1793 = vmatpush1.msra.mxu0 0.0
        %1794 = vmatprep.subr.mxu0 0.0
        %1795 = vmatpush1.msra.mxu0 0.0
        %1796 = vmatprep.subr.mxu0 0.0
        %1797 = vmatpush1.msra.mxu0 0.0
        %1798 = vmatprep.subr.mxu0 0.0
        %1799 = vmatpush1.msra.mxu0 0.0
        %1800 = vmatprep.subr.mxu0 0.0
        %1801 = vmatpush1.msra.mxu0 0.0
        %1802 = vmatprep.subr.mxu0 0.0
        %1803 = vmatpush1.msra.mxu0 0.0
        %1804 = vmatprep.mubr.f32.mxu0 0.0
        %1805 = vmatmul.mubr.f32.gmra.mrb[0].mxu0 %v1729
        %v1806 = vpop.f32.mrb[0].mxu0
        %v1807 = vadd.f32 %v1706, %v1806
        %v1808 = vpop.f32.mrb[0].mxu0
        %v1809 = vadd.f32 %v1708, %v1808
        %1810 = vmatprep.mubr.f32.mxu0 0.0
        %1811 = vmatmul.mubr.f32.gmra.mrb[0].mxu0 %v1732
        %v1812 = vpop.f32.mrb[0].mxu0
        %v1813 = vadd.f32 %v1712, %v1812
        %v1814 = vpop.f32.mrb[0].mxu0
        %v1815 = vadd.f32 %v1714, %v1814
        %1816 = vmatprep.mubr.f32.mxu0 0.0
        %1817 = vmatmul.mubr.f32.gmra.mrb[0].mxu0 %v1735
        %v1818 = vpop.f32.mrb[0].mxu0
        %v1819 = vadd.f32 %v1718, %v1818
        %v1820 = vpop.f32.mrb[0].mxu0
        %v1821 = vadd.f32 %v1720, %v1820
        %1822 = vmatprep.mubr.f32.mxu0 0.0
        %1823 = vmatmul.mubr.f32.gmra.mrb[0].mxu0 %v1738
        %v1824 = vpop.f32.mrb[0].mxu0
        %v1825 = vadd.f32 %v1724, %v1824
        %v1826 = vpop.f32.mrb[0].mxu0
        %v1827 = vadd.f32 %v1726, %v1826
        %1828 = vdwg.mxu0
        %1829 = vrot.lane.b32.xlu0 %v1545, 15
        %v1830 = vpop.permute.xlu0 %1829
        %1831 = vrot.lane.b32.xlu0 %v1547, 15
        %v1832 = vpop.permute.xlu0 %1831
        %1833 = vrot.lane.b32.xlu0 %v1549, 15
        %v1834 = vpop.permute.xlu0 %1833
        %1835 = vrot.lane.b32.xlu0 %v1551, 15
        %v1836 = vpop.permute.xlu0 %1835
        %1837 = vrot.lane.b32.xlu0 %v1546, 15
        %v1838 = vpop.permute.xlu0 %1837
        %1839 = vrot.lane.b32.xlu0 %v1548, 15
        %v1840 = vpop.permute.xlu0 %1839
        %1841 = vrot.lane.b32.xlu0 %v1550, 15
        %v1842 = vpop.permute.xlu0 %1841
        %1843 = vrot.lane.b32.xlu0 %v1552, 15
        %v1844 = vpop.permute.xlu0 %1843
        %v1845 = vsel %vm499, %v1830, %v1838
        %v1846 = vsel %vm499, %v1832, %v1840
        %v1847 = vsel %vm499, %v1834, %v1842
        %v1848 = vsel %vm499, %v1836, %v1844
        %v1849 = vsel %vm499, %v1838, %v1830
        %v1850 = vsel %vm499, %v1840, %v1832
        %v1851 = vsel %vm499, %v1842, %v1834
        %v1852 = vsel %vm499, %v1844, %v1836
        %v1853 = vsel %vm514, %v1849, 0.0
        %v1854 = vsel %vm515, %v1845, 0.0
        %v1855 = vsel %vm514, %v1850, 0.0
        %v1856 = vsel %vm515, %v1846, 0.0
        %v1857 = vsel %vm514, %v1851, 0.0
        %v1858 = vsel %vm515, %v1847, 0.0
        %v1859 = vsel %vm514, %v1852, 0.0
        %v1860 = vsel %vm515, %v1848, 0.0
        %s1861 = scalar_lea.vmem [#allocation2], 352
        %v1862 = vld [vmem:[%s1861] sm:$0xff]
        %v1863 = vld [vmem:[%s1861 + $0x8] sm:$0xff]
        %v1864 = vld [vmem:[%s1861 + $0x10] sm:$0xff]
        %v1865 = vld [vmem:[%s1861 + $0x18] sm:$0xff]
        %v1867 = vsel %vm280, %v1862, 0
        %v1870 = vsel %vm280, %v1863, 0
        %v1873 = vsel %vm280, %v1864, 0
        %v1876 = vsel %vm280, %v1865, 0
        %1878 = vmatprep.subr.mxu0 %v1854
        %1879 = vmatpush1.msra.mxu0 %v1853
        %1880 = vmatprep.subr.mxu0 %v1856
        %1881 = vmatpush1.msra.mxu0 %v1855
        %1882 = vmatprep.subr.mxu0 %v1858
        %1883 = vmatpush1.msra.mxu0 %v1857
        %1884 = vmatprep.subr.mxu0 %v1860
        %1885 = vmatpush1.msra.mxu0 %v1859
        %1886 = vmatprep.subr.mxu0 0.0
        %1887 = vmatpush1.msra.mxu0 0.0
        %1888 = vmatprep.subr.mxu0 0.0
        %1889 = vmatpush1.msra.mxu0 0.0
        %1890 = vmatprep.subr.mxu0 0.0
        %1891 = vmatpush1.msra.mxu0 0.0
        %1892 = vmatprep.subr.mxu0 0.0
        %1893 = vmatpush1.msra.mxu0 0.0
        %1894 = vmatprep.subr.mxu0 0.0
        %1895 = vmatpush1.msra.mxu0 0.0
        %1896 = vmatprep.subr.mxu0 0.0
        %1897 = vmatpush1.msra.mxu0 0.0
        %1898 = vmatprep.subr.mxu0 0.0
        %1899 = vmatpush1.msra.mxu0 0.0
        %1900 = vmatprep.subr.mxu0 0.0
        %1901 = vmatpush1.msra.mxu0 0.0
        %1902 = vmatprep.subr.mxu0 0.0
        %1903 = vmatpush1.msra.mxu0 0.0
        %1904 = vmatprep.subr.mxu0 0.0
        %1905 = vmatpush1.msra.mxu0 0.0
        %1906 = vmatprep.subr.mxu0 0.0
        %1907 = vmatpush1.msra.mxu0 0.0
        %1908 = vmatprep.subr.mxu0 0.0
        %1909 = vmatpush1.msra.mxu0 0.0
        %1910 = vmatprep.subr.mxu0 0.0
        %1911 = vmatpush1.msra.mxu0 0.0
        %1912 = vmatprep.subr.mxu0 0.0
        %1913 = vmatpush1.msra.mxu0 0.0
        %1914 = vmatprep.subr.mxu0 0.0
        %1915 = vmatpush1.msra.mxu0 0.0
        %1916 = vmatprep.subr.mxu0 0.0
        %1917 = vmatpush1.msra.mxu0 0.0
        %1918 = vmatprep.subr.mxu0 0.0
        %1919 = vmatpush1.msra.mxu0 0.0
        %1920 = vmatprep.subr.mxu0 0.0
        %1921 = vmatpush1.msra.mxu0 0.0
        %1922 = vmatprep.subr.mxu0 0.0
        %1923 = vmatpush1.msra.mxu0 0.0
        %1924 = vmatprep.subr.mxu0 0.0
        %1925 = vmatpush1.msra.mxu0 0.0
        %1926 = vmatprep.subr.mxu0 0.0
        %1927 = vmatpush1.msra.mxu0 0.0
        %1928 = vmatprep.subr.mxu0 0.0
        %1929 = vmatpush1.msra.mxu0 0.0
        %1930 = vmatprep.subr.mxu0 0.0
        %1931 = vmatpush1.msra.mxu0 0.0
        %1932 = vmatprep.subr.mxu0 0.0
        %1933 = vmatpush1.msra.mxu0 0.0
        %1934 = vmatprep.subr.mxu0 0.0
        %1935 = vmatpush1.msra.mxu0 0.0
        %1936 = vmatprep.subr.mxu0 0.0
        %1937 = vmatpush1.msra.mxu0 0.0
        %1938 = vmatprep.subr.mxu0 0.0
        %1939 = vmatpush1.msra.mxu0 0.0
        %1940 = vmatprep.subr.mxu0 0.0
        %1941 = vmatpush1.msra.mxu0 0.0
        %1942 = vmatprep.mubr.f32.mxu0 0.0
        %1943 = vmatmul.mubr.f32.gmra.mrb[0].mxu0 %v1867
        %v1944 = vpop.f32.mrb[0].mxu0
        %v1945 = vadd.f32 0.0, %v1944
        %v1946 = vpop.f32.mrb[0].mxu0
        %v1947 = vadd.f32 0.0, %v1946
        %1948 = vmatprep.mubr.f32.mxu0 0.0
        %1949 = vmatmul.mubr.f32.gmra.mrb[0].mxu0 %v1870
        %v1950 = vpop.f32.mrb[0].mxu0
        %v1951 = vadd.f32 0.0, %v1950
        %v1952 = vpop.f32.mrb[0].mxu0
        %v1953 = vadd.f32 0.0, %v1952
        %1954 = vmatprep.mubr.f32.mxu0 0.0
        %1955 = vmatmul.mubr.f32.gmra.mrb[0].mxu0 %v1873
        %v1956 = vpop.f32.mrb[0].mxu0
        %v1957 = vadd.f32 0.0, %v1956
        %v1958 = vpop.f32.mrb[0].mxu0
        %v1959 = vadd.f32 0.0, %v1958
        %1960 = vmatprep.mubr.f32.mxu0 0.0
        %1961 = vmatmul.mubr.f32.gmra.mrb[0].mxu0 %v1876
        %v1962 = vpop.f32.mrb[0].mxu0
        %v1963 = vadd.f32 0.0, %v1962
        %v1964 = vpop.f32.mrb[0].mxu0
        %v1965 = vadd.f32 0.0, %v1964
        %1966 = vdwg.mxu0
        %v1967 = vadd.f32 %v1807, %v1945
        %v1968 = vadd.f32 %v1809, %v1947
        %v1969 = vadd.f32 %v1813, %v1951
        %v1970 = vadd.f32 %v1815, %v1953
        %v1971 = vadd.f32 %v1819, %v1957
        %v1972 = vadd.f32 %v1821, %v1959
        %v1973 = vadd.f32 %v1825, %v1963
        %v1974 = vadd.f32 %v1827, %v1965
        %1975 = vrot.lane.b32.xlu0 %v1545, 1
        %v1976 = vpop.permute.xlu0 %1975
        %1977 = vrot.lane.b32.xlu0 %v1547, 1
        %v1978 = vpop.permute.xlu0 %1977
        %1979 = vrot.lane.b32.xlu0 %v1549, 1
        %v1980 = vpop.permute.xlu0 %1979
        %1981 = vrot.lane.b32.xlu0 %v1551, 1
        %v1982 = vpop.permute.xlu0 %1981
        %1983 = vrot.lane.b32.xlu0 %v1546, 1
        %v1984 = vpop.permute.xlu0 %1983
        %1985 = vrot.lane.b32.xlu0 %v1548, 1
        %v1986 = vpop.permute.xlu0 %1985
        %1987 = vrot.lane.b32.xlu0 %v1550, 1
        %v1988 = vpop.permute.xlu0 %1987
        %1989 = vrot.lane.b32.xlu0 %v1552, 1
        %v1990 = vpop.permute.xlu0 %1989
        %v1991 = vsel %vm654, %v1976, %v1984
        %v1992 = vsel %vm654, %v1978, %v1986
        %v1993 = vsel %vm654, %v1980, %v1988
        %v1994 = vsel %vm654, %v1982, %v1990
        %v1995 = vsel %vm654, %v1984, %v1976
        %v1996 = vsel %vm654, %v1986, %v1978
        %v1997 = vsel %vm654, %v1988, %v1980
        %v1998 = vsel %vm654, %v1990, %v1982
        %v1999 = vsel %vm665, %v1995, 0.0
        %v2000 = vsel %vm666, %v1991, 0.0
        %v2001 = vsel %vm665, %v1996, 0.0
        %v2002 = vsel %vm666, %v1992, 0.0
        %v2003 = vsel %vm665, %v1997, 0.0
        %v2004 = vsel %vm666, %v1993, 0.0
        %v2005 = vsel %vm665, %v1998, 0.0
        %v2006 = vsel %vm666, %v1994, 0.0
        %s2007 = scalar_lea.vmem [#allocation2], 384
        %v2008 = vld [vmem:[%s2007] sm:$0xff]
        %v2009 = vld [vmem:[%s2007 + $0x8] sm:$0xff]
        %v2010 = vld [vmem:[%s2007 + $0x10] sm:$0xff]
        %v2011 = vld [vmem:[%s2007 + $0x18] sm:$0xff]
        %v2013 = vsel %vm280, %v2008, 0
        %v2016 = vsel %vm280, %v2009, 0
        %v2019 = vsel %vm280, %v2010, 0
        %v2022 = vsel %vm280, %v2011, 0
        %2024 = vmatprep.subr.mxu0 %v2000
        %2025 = vmatpush1.msra.mxu0 %v1999
        %2026 = vmatprep.subr.mxu0 %v2002
        %2027 = vmatpush1.msra.mxu0 %v2001
        %2028 = vmatprep.subr.mxu0 %v2004
        %2029 = vmatpush1.msra.mxu0 %v2003
        %2030 = vmatprep.subr.mxu0 %v2006
        %2031 = vmatpush1.msra.mxu0 %v2005
        %2032 = vmatprep.subr.mxu0 0.0
        %2033 = vmatpush1.msra.mxu0 0.0
        %2034 = vmatprep.subr.mxu0 0.0
        %2035 = vmatpush1.msra.mxu0 0.0
        %2036 = vmatprep.subr.mxu0 0.0
        %2037 = vmatpush1.msra.mxu0 0.0
        %2038 = vmatprep.subr.mxu0 0.0
        %2039 = vmatpush1.msra.mxu0 0.0
        %2040 = vmatprep.subr.mxu0 0.0
        %2041 = vmatpush1.msra.mxu0 0.0
        %2042 = vmatprep.subr.mxu0 0.0
        %2043 = vmatpush1.msra.mxu0 0.0
        %2044 = vmatprep.subr.mxu0 0.0
        %2045 = vmatpush1.msra.mxu0 0.0
        %2046 = vmatprep.subr.mxu0 0.0
        %2047 = vmatpush1.msra.mxu0 0.0
        %2048 = vmatprep.subr.mxu0 0.0
        %2049 = vmatpush1.msra.mxu0 0.0
        %2050 = vmatprep.subr.mxu0 0.0
        %2051 = vmatpush1.msra.mxu0 0.0
        %2052 = vmatprep.subr.mxu0 0.0
        %2053 = vmatpush1.msra.mxu0 0.0
        %2054 = vmatprep.subr.mxu0 0.0
        %2055 = vmatpush1.msra.mxu0 0.0
        %2056 = vmatprep.subr.mxu0 0.0
        %2057 = vmatpush1.msra.mxu0 0.0
        %2058 = vmatprep.subr.mxu0 0.0
        %2059 = vmatpush1.msra.mxu0 0.0
        %2060 = vmatprep.subr.mxu0 0.0
        %2061 = vmatpush1.msra.mxu0 0.0
        %2062 = vmatprep.subr.mxu0 0.0
        %2063 = vmatpush1.msra.mxu0 0.0
        %2064 = vmatprep.subr.mxu0 0.0
        %2065 = vmatpush1.msra.mxu0 0.0
        %2066 = vmatprep.subr.mxu0 0.0
        %2067 = vmatpush1.msra.mxu0 0.0
        %2068 = vmatprep.subr.mxu0 0.0
        %2069 = vmatpush1.msra.mxu0 0.0
        %2070 = vmatprep.subr.mxu0 0.0
        %2071 = vmatpush1.msra.mxu0 0.0
        %2072 = vmatprep.subr.mxu0 0.0
        %2073 = vmatpush1.msra.mxu0 0.0
        %2074 = vmatprep.subr.mxu0 0.0
        %2075 = vmatpush1.msra.mxu0 0.0
        %2076 = vmatprep.subr.mxu0 0.0
        %2077 = vmatpush1.msra.mxu0 0.0
        %2078 = vmatprep.subr.mxu0 0.0
        %2079 = vmatpush1.msra.mxu0 0.0
        %2080 = vmatprep.subr.mxu0 0.0
        %2081 = vmatpush1.msra.mxu0 0.0
        %2082 = vmatprep.subr.mxu0 0.0
        %2083 = vmatpush1.msra.mxu0 0.0
        %2084 = vmatprep.subr.mxu0 0.0
        %2085 = vmatpush1.msra.mxu0 0.0
        %2086 = vmatprep.subr.mxu0 0.0
        %2087 = vmatpush1.msra.mxu0 0.0
        %2088 = vmatprep.mubr.f32.mxu0 0.0
        %2089 = vmatmul.mubr.f32.gmra.mrb[0].mxu0 %v2013
        %v2090 = vpop.f32.mrb[0].mxu0
        %v2091 = vadd.f32 0.0, %v2090
        %v2092 = vpop.f32.mrb[0].mxu0
        %v2093 = vadd.f32 0.0, %v2092
        %2094 = vmatprep.mubr.f32.mxu0 0.0
        %2095 = vmatmul.mubr.f32.gmra.mrb[0].mxu0 %v2016
        %v2096 = vpop.f32.mrb[0].mxu0
        %v2097 = vadd.f32 0.0, %v2096
        %v2098 = vpop.f32.mrb[0].mxu0
        %v2099 = vadd.f32 0.0, %v2098
        %2100 = vmatprep.mubr.f32.mxu0 0.0
        %2101 = vmatmul.mubr.f32.gmra.mrb[0].mxu0 %v2019
        %v2102 = vpop.f32.mrb[0].mxu0
        %v2103 = vadd.f32 0.0, %v2102
        %v2104 = vpop.f32.mrb[0].mxu0
        %v2105 = vadd.f32 0.0, %v2104
        %2106 = vmatprep.mubr.f32.mxu0 0.0
        %2107 = vmatmul.mubr.f32.gmra.mrb[0].mxu0 %v2022
        %v2108 = vpop.f32.mrb[0].mxu0
        %v2109 = vadd.f32 0.0, %v2108
        %v2110 = vpop.f32.mrb[0].mxu0
        %v2111 = vadd.f32 0.0, %v2110
        %2112 = vdwg.mxu0
        %v2113 = vadd.f32 %v1967, %v2091
        %v2114 = vadd.f32 %v1968, %v2093
        %v2115 = vadd.f32 %v1969, %v2097
        %v2116 = vadd.f32 %v1970, %v2099
        %v2117 = vadd.f32 %v1971, %v2103
        %v2118 = vadd.f32 %v1972, %v2105
        %v2119 = vadd.f32 %v1973, %v2109
        %v2120 = vadd.f32 %v1974, %v2111
        %s2121 = scalar_lea.vmem [#allocation2], 416
        %v2122 = vld [vmem:[%s2121] sm:$0xff]
        %v2123 = vld [vmem:[%s2121 + $0x8] sm:$0xff]
        %v2124 = vld [vmem:[%s2121 + $0x10] sm:$0xff]
        %v2125 = vld [vmem:[%s2121 + $0x18] sm:$0xff]
        %v2127 = vsel %vm280, %v2122, 0
        %v2130 = vsel %vm280, %v2123, 0
        %v2133 = vsel %vm280, %v2124, 0
        %v2136 = vsel %vm280, %v2125, 0
        %2138 = vmatprep.subr.mxu0 %v1546
        %2139 = vmatpush1.msra.mxu0 %v1545
        %2140 = vmatprep.subr.mxu0 %v1548
        %2141 = vmatpush1.msra.mxu0 %v1547
        %2142 = vmatprep.subr.mxu0 %v1550
        %2143 = vmatpush1.msra.mxu0 %v1549
        %2144 = vmatprep.subr.mxu0 %v1552
        %2145 = vmatpush1.msra.mxu0 %v1551
        %2146 = vmatprep.subr.mxu0 0.0
        %2147 = vmatpush1.msra.mxu0 0.0
        %2148 = vmatprep.subr.mxu0 0.0
        %2149 = vmatpush1.msra.mxu0 0.0
        %2150 = vmatprep.subr.mxu0 0.0
        %2151 = vmatpush1.msra.mxu0 0.0
        %2152 = vmatprep.subr.mxu0 0.0
        %2153 = vmatpush1.msra.mxu0 0.0
        %2154 = vmatprep.subr.mxu0 0.0
        %2155 = vmatpush1.msra.mxu0 0.0
        %2156 = vmatprep.subr.mxu0 0.0
        %2157 = vmatpush1.msra.mxu0 0.0
        %2158 = vmatprep.subr.mxu0 0.0
        %2159 = vmatpush1.msra.mxu0 0.0
        %2160 = vmatprep.subr.mxu0 0.0
        %2161 = vmatpush1.msra.mxu0 0.0
        %2162 = vmatprep.subr.mxu0 0.0
        %2163 = vmatpush1.msra.mxu0 0.0
        %2164 = vmatprep.subr.mxu0 0.0
        %2165 = vmatpush1.msra.mxu0 0.0
        %2166 = vmatprep.subr.mxu0 0.0
        %2167 = vmatpush1.msra.mxu0 0.0
        %2168 = vmatprep.subr.mxu0 0.0
        %2169 = vmatpush1.msra.mxu0 0.0
        %2170 = vmatprep.subr.mxu0 0.0
        %2171 = vmatpush1.msra.mxu0 0.0
        %2172 = vmatprep.subr.mxu0 0.0
        %2173 = vmatpush1.msra.mxu0 0.0
        %2174 = vmatprep.subr.mxu0 0.0
        %2175 = vmatpush1.msra.mxu0 0.0
        %2176 = vmatprep.subr.mxu0 0.0
        %2177 = vmatpush1.msra.mxu0 0.0
        %2178 = vmatprep.subr.mxu0 0.0
        %2179 = vmatpush1.msra.mxu0 0.0
        %2180 = vmatprep.subr.mxu0 0.0
        %2181 = vmatpush1.msra.mxu0 0.0
        %2182 = vmatprep.subr.mxu0 0.0
        %2183 = vmatpush1.msra.mxu0 0.0
        %2184 = vmatprep.subr.mxu0 0.0
        %2185 = vmatpush1.msra.mxu0 0.0
        %2186 = vmatprep.subr.mxu0 0.0
        %2187 = vmatpush1.msra.mxu0 0.0
        %2188 = vmatprep.subr.mxu0 0.0
        %2189 = vmatpush1.msra.mxu0 0.0
        %2190 = vmatprep.subr.mxu0 0.0
        %2191 = vmatpush1.msra.mxu0 0.0
        %2192 = vmatprep.subr.mxu0 0.0
        %2193 = vmatpush1.msra.mxu0 0.0
        %2194 = vmatprep.subr.mxu0 0.0
        %2195 = vmatpush1.msra.mxu0 0.0
        %2196 = vmatprep.subr.mxu0 0.0
        %2197 = vmatpush1.msra.mxu0 0.0
        %2198 = vmatprep.subr.mxu0 0.0
        %2199 = vmatpush1.msra.mxu0 0.0
        %2200 = vmatprep.subr.mxu0 0.0
        %2201 = vmatpush1.msra.mxu0 0.0
        %2202 = vmatprep.mubr.f32.mxu0 0.0
        %2203 = vmatmul.mubr.f32.gmra.mrb[0].mxu0 %v2127
        %v2204 = vpop.f32.mrb[0].mxu0
        %v2205 = vadd.f32 0.0, %v2204
        %v2206 = vpop.f32.mrb[0].mxu0
        %v2207 = vadd.f32 0.0, %v2206
        %2208 = vmatprep.mubr.f32.mxu0 0.0
        %2209 = vmatmul.mubr.f32.gmra.mrb[0].mxu0 %v2130
        %v2210 = vpop.f32.mrb[0].mxu0
        %v2211 = vadd.f32 0.0, %v2210
        %v2212 = vpop.f32.mrb[0].mxu0
        %v2213 = vadd.f32 0.0, %v2212
        %2214 = vmatprep.mubr.f32.mxu0 0.0
        %2215 = vmatmul.mubr.f32.gmra.mrb[0].mxu0 %v2133
        %v2216 = vpop.f32.mrb[0].mxu0
        %v2217 = vadd.f32 0.0, %v2216
        %v2218 = vpop.f32.mrb[0].mxu0
        %v2219 = vadd.f32 0.0, %v2218
        %2220 = vmatprep.mubr.f32.mxu0 0.0
        %2221 = vmatmul.mubr.f32.gmra.mrb[0].mxu0 %v2136
        %v2222 = vpop.f32.mrb[0].mxu0
        %v2223 = vadd.f32 0.0, %v2222
        %v2224 = vpop.f32.mrb[0].mxu0
        %v2225 = vadd.f32 0.0, %v2224
        %2226 = vdwg.mxu0
        %v2227 = vadd.f32 %v2113, %v2205
        %v2228 = vadd.f32 %v2114, %v2207
        %v2229 = vadd.f32 %v2115, %v2211
        %v2230 = vadd.f32 %v2116, %v2213
        %v2231 = vadd.f32 %v2117, %v2217
        %v2232 = vadd.f32 %v2118, %v2219
        %v2233 = vadd.f32 %v2119, %v2223
        %v2234 = vadd.f32 %v2120, %v2225
        %2235 = vrot.lane.b32.xlu0 %v1545, 127
        %v2236 = vpop.permute.xlu0 %2235
        %2237 = vrot.lane.b32.xlu0 %v1547, 127
        %v2238 = vpop.permute.xlu0 %2237
        %2239 = vrot.lane.b32.xlu0 %v1549, 127
        %v2240 = vpop.permute.xlu0 %2239
        %2241 = vrot.lane.b32.xlu0 %v1551, 127
        %v2242 = vpop.permute.xlu0 %2241
        %2243 = vrot.lane.b32.xlu0 %v1546, 127
        %v2244 = vpop.permute.xlu0 %2243
        %2245 = vrot.lane.b32.xlu0 %v1548, 127
        %v2246 = vpop.permute.xlu0 %2245
        %2247 = vrot.lane.b32.xlu0 %v1550, 127
        %v2248 = vpop.permute.xlu0 %2247
        %2249 = vrot.lane.b32.xlu0 %v1552, 127
        %v2250 = vpop.permute.xlu0 %2249
        %v2251 = vsel %vm919, %v2236, %v2244
        %v2252 = vsel %vm919, %v2238, %v2246
        %v2253 = vsel %vm919, %v2240, %v2248
        %v2254 = vsel %vm919, %v2242, %v2250
        %v2255 = vsel %vm919, %v2244, %v2236
        %v2256 = vsel %vm919, %v2246, %v2238
        %v2257 = vsel %vm919, %v2248, %v2240
        %v2258 = vsel %vm919, %v2250, %v2242
        %v2259 = vsel %vm930, %v2251, 0.0
        %v2260 = vsel %vm931, %v2255, 0.0
        %v2261 = vsel %vm930, %v2252, 0.0
        %v2262 = vsel %vm931, %v2256, 0.0
        %v2263 = vsel %vm930, %v2253, 0.0
        %v2264 = vsel %vm931, %v2257, 0.0
        %v2265 = vsel %vm930, %v2254, 0.0
        %v2266 = vsel %vm931, %v2258, 0.0
        %s2267 = scalar_lea.vmem [#allocation2], 448
        %v2268 = vld [vmem:[%s2267] sm:$0xff]
        %v2269 = vld [vmem:[%s2267 + $0x8] sm:$0xff]
        %v2270 = vld [vmem:[%s2267 + $0x10] sm:$0xff]
        %v2271 = vld [vmem:[%s2267 + $0x18] sm:$0xff]
        %v2273 = vsel %vm280, %v2268, 0
        %v2276 = vsel %vm280, %v2269, 0
        %v2279 = vsel %vm280, %v2270, 0
        %v2282 = vsel %vm280, %v2271, 0
        %2284 = vmatprep.subr.mxu0 %v2260
        %2285 = vmatpush1.msra.mxu0 %v2259
        %2286 = vmatprep.subr.mxu0 %v2262
        %2287 = vmatpush1.msra.mxu0 %v2261
        %2288 = vmatprep.subr.mxu0 %v2264
        %2289 = vmatpush1.msra.mxu0 %v2263
        %2290 = vmatprep.subr.mxu0 %v2266
        %2291 = vmatpush1.msra.mxu0 %v2265
        %2292 = vmatprep.subr.mxu0 0.0
        %2293 = vmatpush1.msra.mxu0 0.0
        %2294 = vmatprep.subr.mxu0 0.0
        %2295 = vmatpush1.msra.mxu0 0.0
        %2296 = vmatprep.subr.mxu0 0.0
        %2297 = vmatpush1.msra.mxu0 0.0
        %2298 = vmatprep.subr.mxu0 0.0
        %2299 = vmatpush1.msra.mxu0 0.0
        %2300 = vmatprep.subr.mxu0 0.0
        %2301 = vmatpush1.msra.mxu0 0.0
        %2302 = vmatprep.subr.mxu0 0.0
        %2303 = vmatpush1.msra.mxu0 0.0
        %2304 = vmatprep.subr.mxu0 0.0
        %2305 = vmatpush1.msra.mxu0 0.0
        %2306 = vmatprep.subr.mxu0 0.0
        %2307 = vmatpush1.msra.mxu0 0.0
        %2308 = vmatprep.subr.mxu0 0.0
        %2309 = vmatpush1.msra.mxu0 0.0
        %2310 = vmatprep.subr.mxu0 0.0
        %2311 = vmatpush1.msra.mxu0 0.0
        %2312 = vmatprep.subr.mxu0 0.0
        %2313 = vmatpush1.msra.mxu0 0.0
        %2314 = vmatprep.subr.mxu0 0.0
        %2315 = vmatpush1.msra.mxu0 0.0
        %2316 = vmatprep.subr.mxu0 0.0
        %2317 = vmatpush1.msra.mxu0 0.0
        %2318 = vmatprep.subr.mxu0 0.0
        %2319 = vmatpush1.msra.mxu0 0.0
        %2320 = vmatprep.subr.mxu0 0.0
        %2321 = vmatpush1.msra.mxu0 0.0
        %2322 = vmatprep.subr.mxu0 0.0
        %2323 = vmatpush1.msra.mxu0 0.0
        %2324 = vmatprep.subr.mxu0 0.0
        %2325 = vmatpush1.msra.mxu0 0.0
        %2326 = vmatprep.subr.mxu0 0.0
        %2327 = vmatpush1.msra.mxu0 0.0
        %2328 = vmatprep.subr.mxu0 0.0
        %2329 = vmatpush1.msra.mxu0 0.0
        %2330 = vmatprep.subr.mxu0 0.0
        %2331 = vmatpush1.msra.mxu0 0.0
        %2332 = vmatprep.subr.mxu0 0.0
        %2333 = vmatpush1.msra.mxu0 0.0
        %2334 = vmatprep.subr.mxu0 0.0
        %2335 = vmatpush1.msra.mxu0 0.0
        %2336 = vmatprep.subr.mxu0 0.0
        %2337 = vmatpush1.msra.mxu0 0.0
        %2338 = vmatprep.subr.mxu0 0.0
        %2339 = vmatpush1.msra.mxu0 0.0
        %2340 = vmatprep.subr.mxu0 0.0
        %2341 = vmatpush1.msra.mxu0 0.0
        %2342 = vmatprep.subr.mxu0 0.0
        %2343 = vmatpush1.msra.mxu0 0.0
        %2344 = vmatprep.subr.mxu0 0.0
        %2345 = vmatpush1.msra.mxu0 0.0
        %2346 = vmatprep.subr.mxu0 0.0
        %2347 = vmatpush1.msra.mxu0 0.0
        %2348 = vmatprep.mubr.f32.mxu0 0.0
        %2349 = vmatmul.mubr.f32.gmra.mrb[0].mxu0 %v2273
        %v2350 = vpop.f32.mrb[0].mxu0
        %v2351 = vadd.f32 0.0, %v2350
        %v2352 = vpop.f32.mrb[0].mxu0
        %v2353 = vadd.f32 0.0, %v2352
        %2354 = vmatprep.mubr.f32.mxu0 0.0
        %2355 = vmatmul.mubr.f32.gmra.mrb[0].mxu0 %v2276
        %v2356 = vpop.f32.mrb[0].mxu0
        %v2357 = vadd.f32 0.0, %v2356
        %v2358 = vpop.f32.mrb[0].mxu0
        %v2359 = vadd.f32 0.0, %v2358
        %2360 = vmatprep.mubr.f32.mxu0 0.0
        %2361 = vmatmul.mubr.f32.gmra.mrb[0].mxu0 %v2279
        %v2362 = vpop.f32.mrb[0].mxu0
        %v2363 = vadd.f32 0.0, %v2362
        %v2364 = vpop.f32.mrb[0].mxu0
        %v2365 = vadd.f32 0.0, %v2364
        %2366 = vmatprep.mubr.f32.mxu0 0.0
        %2367 = vmatmul.mubr.f32.gmra.mrb[0].mxu0 %v2282
        %v2368 = vpop.f32.mrb[0].mxu0
        %v2369 = vadd.f32 0.0, %v2368
        %v2370 = vpop.f32.mrb[0].mxu0
        %v2371 = vadd.f32 0.0, %v2370
        %2372 = vdwg.mxu0
        %v2373 = vadd.f32 %v2227, %v2351
        %v2374 = vadd.f32 %v2228, %v2353
        %v2375 = vadd.f32 %v2229, %v2357
        %v2376 = vadd.f32 %v2230, %v2359
        %v2377 = vadd.f32 %v2231, %v2363
        %v2378 = vadd.f32 %v2232, %v2365
        %v2379 = vadd.f32 %v2233, %v2369
        %v2380 = vadd.f32 %v2234, %v2371
        %2381 = vrot.lane.b32.xlu0 %v1545, 113
        %v2382 = vpop.permute.xlu0 %2381
        %2383 = vrot.lane.b32.xlu0 %v1547, 113
        %v2384 = vpop.permute.xlu0 %2383
        %2385 = vrot.lane.b32.xlu0 %v1549, 113
        %v2386 = vpop.permute.xlu0 %2385
        %2387 = vrot.lane.b32.xlu0 %v1551, 113
        %v2388 = vpop.permute.xlu0 %2387
        %2389 = vrot.lane.b32.xlu0 %v1546, 113
        %v2390 = vpop.permute.xlu0 %2389
        %2391 = vrot.lane.b32.xlu0 %v1548, 113
        %v2392 = vpop.permute.xlu0 %2391
        %2393 = vrot.lane.b32.xlu0 %v1550, 113
        %v2394 = vpop.permute.xlu0 %2393
        %2395 = vrot.lane.b32.xlu0 %v1552, 113
        %v2396 = vpop.permute.xlu0 %2395
        %v2397 = vsel %vm1070, %v2382, %v2390
        %v2398 = vsel %vm1070, %v2384, %v2392
        %v2399 = vsel %vm1070, %v2386, %v2394
        %v2400 = vsel %vm1070, %v2388, %v2396
        %v2401 = vsel %vm1070, %v2390, %v2382
        %v2402 = vsel %vm1070, %v2392, %v2384
        %v2403 = vsel %vm1070, %v2394, %v2386
        %v2404 = vsel %vm1070, %v2396, %v2388
        %v2405 = vsel %vm1085, %v2397, 0.0
        %v2406 = vsel %vm1086, %v2401, 0.0
        %v2407 = vsel %vm1085, %v2398, 0.0
        %v2408 = vsel %vm1086, %v2402, 0.0
        %v2409 = vsel %vm1085, %v2399, 0.0
        %v2410 = vsel %vm1086, %v2403, 0.0
        %v2411 = vsel %vm1085, %v2400, 0.0
        %v2412 = vsel %vm1086, %v2404, 0.0
        %s2413 = scalar_lea.vmem [#allocation2], 480
        %v2414 = vld [vmem:[%s2413] sm:$0xff]
        %v2415 = vld [vmem:[%s2413 + $0x8] sm:$0xff]
        %v2416 = vld [vmem:[%s2413 + $0x10] sm:$0xff]
        %v2417 = vld [vmem:[%s2413 + $0x18] sm:$0xff]
        %v2419 = vsel %vm280, %v2414, 0
        %v2422 = vsel %vm280, %v2415, 0
        %v2425 = vsel %vm280, %v2416, 0
        %v2428 = vsel %vm280, %v2417, 0
        %2430 = vmatprep.subr.mxu0 %v2406
        %2431 = vmatpush1.msra.mxu0 %v2405
        %2432 = vmatprep.subr.mxu0 %v2408
        %2433 = vmatpush1.msra.mxu0 %v2407
        %2434 = vmatprep.subr.mxu0 %v2410
        %2435 = vmatpush1.msra.mxu0 %v2409
        %2436 = vmatprep.subr.mxu0 %v2412
        %2437 = vmatpush1.msra.mxu0 %v2411
        %2438 = vmatprep.subr.mxu0 0.0
        %2439 = vmatpush1.msra.mxu0 0.0
        %2440 = vmatprep.subr.mxu0 0.0
        %2441 = vmatpush1.msra.mxu0 0.0
        %2442 = vmatprep.subr.mxu0 0.0
        %2443 = vmatpush1.msra.mxu0 0.0
        %2444 = vmatprep.subr.mxu0 0.0
        %2445 = vmatpush1.msra.mxu0 0.0
        %2446 = vmatprep.subr.mxu0 0.0
        %2447 = vmatpush1.msra.mxu0 0.0
        %2448 = vmatprep.subr.mxu0 0.0
        %2449 = vmatpush1.msra.mxu0 0.0
        %2450 = vmatprep.subr.mxu0 0.0
        %2451 = vmatpush1.msra.mxu0 0.0
        %2452 = vmatprep.subr.mxu0 0.0
        %2453 = vmatpush1.msra.mxu0 0.0
        %2454 = vmatprep.subr.mxu0 0.0
        %2455 = vmatpush1.msra.mxu0 0.0
        %2456 = vmatprep.subr.mxu0 0.0
        %2457 = vmatpush1.msra.mxu0 0.0
        %2458 = vmatprep.subr.mxu0 0.0
        %2459 = vmatpush1.msra.mxu0 0.0
        %2460 = vmatprep.subr.mxu0 0.0
        %2461 = vmatpush1.msra.mxu0 0.0
        %2462 = vmatprep.subr.mxu0 0.0
        %2463 = vmatpush1.msra.mxu0 0.0
        %2464 = vmatprep.subr.mxu0 0.0
        %2465 = vmatpush1.msra.mxu0 0.0
        %2466 = vmatprep.subr.mxu0 0.0
        %2467 = vmatpush1.msra.mxu0 0.0
        %2468 = vmatprep.subr.mxu0 0.0
        %2469 = vmatpush1.msra.mxu0 0.0
        %2470 = vmatprep.subr.mxu0 0.0
        %2471 = vmatpush1.msra.mxu0 0.0
        %2472 = vmatprep.subr.mxu0 0.0
        %2473 = vmatpush1.msra.mxu0 0.0
        %2474 = vmatprep.subr.mxu0 0.0
        %2475 = vmatpush1.msra.mxu0 0.0
        %2476 = vmatprep.subr.mxu0 0.0
        %2477 = vmatpush1.msra.mxu0 0.0
        %2478 = vmatprep.subr.mxu0 0.0
        %2479 = vmatpush1.msra.mxu0 0.0
        %2480 = vmatprep.subr.mxu0 0.0
        %2481 = vmatpush1.msra.mxu0 0.0
        %2482 = vmatprep.subr.mxu0 0.0
        %2483 = vmatpush1.msra.mxu0 0.0
        %2484 = vmatprep.subr.mxu0 0.0
        %2485 = vmatpush1.msra.mxu0 0.0
        %2486 = vmatprep.subr.mxu0 0.0
        %2487 = vmatpush1.msra.mxu0 0.0
        %2488 = vmatprep.subr.mxu0 0.0
        %2489 = vmatpush1.msra.mxu0 0.0
        %2490 = vmatprep.subr.mxu0 0.0
        %2491 = vmatpush1.msra.mxu0 0.0
        %2492 = vmatprep.subr.mxu0 0.0
        %2493 = vmatpush1.msra.mxu0 0.0
        %2494 = vmatprep.mubr.f32.mxu0 0.0
        %2495 = vmatmul.mubr.f32.gmra.mrb[0].mxu0 %v2419
        %v2496 = vpop.f32.mrb[0].mxu0
        %v2497 = vadd.f32 0.0, %v2496
        %v2498 = vpop.f32.mrb[0].mxu0
        %v2499 = vadd.f32 0.0, %v2498
        %2500 = vmatprep.mubr.f32.mxu0 0.0
        %2501 = vmatmul.mubr.f32.gmra.mrb[0].mxu0 %v2422
        %v2502 = vpop.f32.mrb[0].mxu0
        %v2503 = vadd.f32 0.0, %v2502
        %v2504 = vpop.f32.mrb[0].mxu0
        %v2505 = vadd.f32 0.0, %v2504
        %2506 = vmatprep.mubr.f32.mxu0 0.0
        %2507 = vmatmul.mubr.f32.gmra.mrb[0].mxu0 %v2425
        %v2508 = vpop.f32.mrb[0].mxu0
        %v2509 = vadd.f32 0.0, %v2508
        %v2510 = vpop.f32.mrb[0].mxu0
        %v2511 = vadd.f32 0.0, %v2510
        %2512 = vmatprep.mubr.f32.mxu0 0.0
        %2513 = vmatmul.mubr.f32.gmra.mrb[0].mxu0 %v2428
        %v2514 = vpop.f32.mrb[0].mxu0
        %v2515 = vadd.f32 0.0, %v2514
        %v2516 = vpop.f32.mrb[0].mxu0
        %v2517 = vadd.f32 0.0, %v2516
        %2518 = vdwg.mxu0
        %v2519 = vadd.f32 %v2373, %v2497
        %v2520 = vadd.f32 %v2374, %v2499
        %v2521 = vadd.f32 %v2375, %v2503
        %v2522 = vadd.f32 %v2376, %v2505
        %v2523 = vadd.f32 %v2377, %v2509
        %v2524 = vadd.f32 %v2378, %v2511
        %v2525 = vadd.f32 %v2379, %v2515
        %v2526 = vadd.f32 %v2380, %v2517
        %2527 = vrot.lane.b32.xlu0 %v1545, 112
        %v2528 = vpop.permute.xlu0 %2527
        %2529 = vrot.lane.b32.xlu0 %v1547, 112
        %v2530 = vpop.permute.xlu0 %2529
        %2531 = vrot.lane.b32.xlu0 %v1549, 112
        %v2532 = vpop.permute.xlu0 %2531
        %2533 = vrot.lane.b32.xlu0 %v1551, 112
        %v2534 = vpop.permute.xlu0 %2533
        %2535 = vrot.lane.b32.xlu0 %v1546, 112
        %v2536 = vpop.permute.xlu0 %2535
        %2537 = vrot.lane.b32.xlu0 %v1548, 112
        %v2538 = vpop.permute.xlu0 %2537
        %2539 = vrot.lane.b32.xlu0 %v1550, 112
        %v2540 = vpop.permute.xlu0 %2539
        %2541 = vrot.lane.b32.xlu0 %v1552, 112
        %v2542 = vpop.permute.xlu0 %2541
        %v2543 = vsel %vm1225, %v2528, %v2536
        %v2544 = vsel %vm1225, %v2530, %v2538
        %v2545 = vsel %vm1225, %v2532, %v2540
        %v2546 = vsel %vm1225, %v2534, %v2542
        %v2547 = vsel %vm1225, %v2536, %v2528
        %v2548 = vsel %vm1225, %v2538, %v2530
        %v2549 = vsel %vm1225, %v2540, %v2532
        %v2550 = vsel %vm1225, %v2542, %v2534
        %v2551 = vsel %vm1236, %v2543, 0.0
        %v2552 = vsel %vm1237, %v2547, 0.0
        %v2553 = vsel %vm1236, %v2544, 0.0
        %v2554 = vsel %vm1237, %v2548, 0.0
        %v2555 = vsel %vm1236, %v2545, 0.0
        %v2556 = vsel %vm1237, %v2549, 0.0
        %v2557 = vsel %vm1236, %v2546, 0.0
        %v2558 = vsel %vm1237, %v2550, 0.0
        %s2559 = scalar_lea.vmem [#allocation2], 512
        %v2560 = vld [vmem:[%s2559] sm:$0xff]
        %v2561 = vld [vmem:[%s2559 + $0x8] sm:$0xff]
        %v2562 = vld [vmem:[%s2559 + $0x10] sm:$0xff]
        %v2563 = vld [vmem:[%s2559 + $0x18] sm:$0xff]
        %v2565 = vsel %vm280, %v2560, 0
        %v2568 = vsel %vm280, %v2561, 0
        %v2571 = vsel %vm280, %v2562, 0
        %v2574 = vsel %vm280, %v2563, 0
        %2576 = vmatprep.subr.mxu0 %v2552
        %2577 = vmatpush1.msra.mxu0 %v2551
        %2578 = vmatprep.subr.mxu0 %v2554
        %2579 = vmatpush1.msra.mxu0 %v2553
        %2580 = vmatprep.subr.mxu0 %v2556
        %2581 = vmatpush1.msra.mxu0 %v2555
        %2582 = vmatprep.subr.mxu0 %v2558
        %2583 = vmatpush1.msra.mxu0 %v2557
        %2584 = vmatprep.subr.mxu0 0.0
        %2585 = vmatpush1.msra.mxu0 0.0
        %2586 = vmatprep.subr.mxu0 0.0
        %2587 = vmatpush1.msra.mxu0 0.0
        %2588 = vmatprep.subr.mxu0 0.0
        %2589 = vmatpush1.msra.mxu0 0.0
        %2590 = vmatprep.subr.mxu0 0.0
        %2591 = vmatpush1.msra.mxu0 0.0
        %2592 = vmatprep.subr.mxu0 0.0
        %2593 = vmatpush1.msra.mxu0 0.0
        %2594 = vmatprep.subr.mxu0 0.0
        %2595 = vmatpush1.msra.mxu0 0.0
        %2596 = vmatprep.subr.mxu0 0.0
        %2597 = vmatpush1.msra.mxu0 0.0
        %2598 = vmatprep.subr.mxu0 0.0
        %2599 = vmatpush1.msra.mxu0 0.0
        %2600 = vmatprep.subr.mxu0 0.0
        %2601 = vmatpush1.msra.mxu0 0.0
        %2602 = vmatprep.subr.mxu0 0.0
        %2603 = vmatpush1.msra.mxu0 0.0
        %2604 = vmatprep.subr.mxu0 0.0
        %2605 = vmatpush1.msra.mxu0 0.0
        %2606 = vmatprep.subr.mxu0 0.0
        %2607 = vmatpush1.msra.mxu0 0.0
        %2608 = vmatprep.subr.mxu0 0.0
        %2609 = vmatpush1.msra.mxu0 0.0
        %2610 = vmatprep.subr.mxu0 0.0
        %2611 = vmatpush1.msra.mxu0 0.0
        %2612 = vmatprep.subr.mxu0 0.0
        %2613 = vmatpush1.msra.mxu0 0.0
        %2614 = vmatprep.subr.mxu0 0.0
        %2615 = vmatpush1.msra.mxu0 0.0
        %2616 = vmatprep.subr.mxu0 0.0
        %2617 = vmatpush1.msra.mxu0 0.0
        %2618 = vmatprep.subr.mxu0 0.0
        %2619 = vmatpush1.msra.mxu0 0.0
        %2620 = vmatprep.subr.mxu0 0.0
        %2621 = vmatpush1.msra.mxu0 0.0
        %2622 = vmatprep.subr.mxu0 0.0
        %2623 = vmatpush1.msra.mxu0 0.0
        %2624 = vmatprep.subr.mxu0 0.0
        %2625 = vmatpush1.msra.mxu0 0.0
        %2626 = vmatprep.subr.mxu0 0.0
        %2627 = vmatpush1.msra.mxu0 0.0
        %2628 = vmatprep.subr.mxu0 0.0
        %2629 = vmatpush1.msra.mxu0 0.0
        %2630 = vmatprep.subr.mxu0 0.0
        %2631 = vmatpush1.msra.mxu0 0.0
        %2632 = vmatprep.subr.mxu0 0.0
        %2633 = vmatpush1.msra.mxu0 0.0
        %2634 = vmatprep.subr.mxu0 0.0
        %2635 = vmatpush1.msra.mxu0 0.0
        %2636 = vmatprep.subr.mxu0 0.0
        %2637 = vmatpush1.msra.mxu0 0.0
        %2638 = vmatprep.subr.mxu0 0.0
        %2639 = vmatpush1.msra.mxu0 0.0
        %2640 = vmatprep.mubr.f32.mxu0 0.0
        %2641 = vmatmul.mubr.f32.gmra.mrb[0].mxu0 %v2565
        %v2642 = vpop.f32.mrb[0].mxu0
        %v2643 = vadd.f32 0.0, %v2642
        %v2644 = vpop.f32.mrb[0].mxu0
        %v2645 = vadd.f32 0.0, %v2644
        %2646 = vmatprep.mubr.f32.mxu0 0.0
        %2647 = vmatmul.mubr.f32.gmra.mrb[0].mxu0 %v2568
        %v2648 = vpop.f32.mrb[0].mxu0
        %v2649 = vadd.f32 0.0, %v2648
        %v2650 = vpop.f32.mrb[0].mxu0
        %v2651 = vadd.f32 0.0, %v2650
        %2652 = vmatprep.mubr.f32.mxu0 0.0
        %2653 = vmatmul.mubr.f32.gmra.mrb[0].mxu0 %v2571
        %v2654 = vpop.f32.mrb[0].mxu0
        %v2655 = vadd.f32 0.0, %v2654
        %v2656 = vpop.f32.mrb[0].mxu0
        %v2657 = vadd.f32 0.0, %v2656
        %2658 = vmatprep.mubr.f32.mxu0 0.0
        %2659 = vmatmul.mubr.f32.gmra.mrb[0].mxu0 %v2574
        %v2660 = vpop.f32.mrb[0].mxu0
        %v2661 = vadd.f32 0.0, %v2660
        %v2662 = vpop.f32.mrb[0].mxu0
        %v2663 = vadd.f32 0.0, %v2662
        %2664 = vdwg.mxu0
        %v2665 = vadd.f32 %v2519, %v2643
        %v2666 = vadd.f32 %v2520, %v2645
        %v2667 = vadd.f32 %v2521, %v2649
        %v2668 = vadd.f32 %v2522, %v2651
        %v2669 = vadd.f32 %v2523, %v2655
        %v2670 = vadd.f32 %v2524, %v2657
        %v2671 = vadd.f32 %v2525, %v2661
        %v2672 = vadd.f32 %v2526, %v2663
        %2673 = vrot.lane.b32.xlu0 %v1545, 111
        %v2674 = vpop.permute.xlu0 %2673
        %2675 = vrot.lane.b32.xlu0 %v1547, 111
        %v2676 = vpop.permute.xlu0 %2675
        %2677 = vrot.lane.b32.xlu0 %v1549, 111
        %v2678 = vpop.permute.xlu0 %2677
        %2679 = vrot.lane.b32.xlu0 %v1551, 111
        %v2680 = vpop.permute.xlu0 %2679
        %2681 = vrot.lane.b32.xlu0 %v1546, 111
        %v2682 = vpop.permute.xlu0 %2681
        %2683 = vrot.lane.b32.xlu0 %v1548, 111
        %v2684 = vpop.permute.xlu0 %2683
        %2685 = vrot.lane.b32.xlu0 %v1550, 111
        %v2686 = vpop.permute.xlu0 %2685
        %2687 = vrot.lane.b32.xlu0 %v1552, 111
        %v2688 = vpop.permute.xlu0 %2687
        %v2689 = vsel %vm1376, %v2674, %v2682
        %v2690 = vsel %vm1376, %v2676, %v2684
        %v2691 = vsel %vm1376, %v2678, %v2686
        %v2692 = vsel %vm1376, %v2680, %v2688
        %v2693 = vsel %vm1376, %v2682, %v2674
        %v2694 = vsel %vm1376, %v2684, %v2676
        %v2695 = vsel %vm1376, %v2686, %v2678
        %v2696 = vsel %vm1376, %v2688, %v2680
        %v2697 = vsel %vm1389, %v2689, 0.0
        %v2698 = vsel %vm1390, %v2693, 0.0
        %v2699 = vsel %vm1389, %v2690, 0.0
        %v2700 = vsel %vm1390, %v2694, 0.0
        %v2701 = vsel %vm1389, %v2691, 0.0
        %v2702 = vsel %vm1390, %v2695, 0.0
        %v2703 = vsel %vm1389, %v2692, 0.0
        %v2704 = vsel %vm1390, %v2696, 0.0
        %s2705 = scalar_lea.vmem [#allocation2], 544
        %v2706 = vld [vmem:[%s2705] sm:$0xff]
        %v2707 = vld [vmem:[%s2705 + $0x8] sm:$0xff]
        %v2708 = vld [vmem:[%s2705 + $0x10] sm:$0xff]
        %v2709 = vld [vmem:[%s2705 + $0x18] sm:$0xff]
        %v2711 = vsel %vm280, %v2706, 0
        %v2714 = vsel %vm280, %v2707, 0
        %v2717 = vsel %vm280, %v2708, 0
        %v2720 = vsel %vm280, %v2709, 0
        %2722 = vmatprep.subr.mxu0 %v2698
        %2723 = vmatpush1.msra.mxu0 %v2697
        %2724 = vmatprep.subr.mxu0 %v2700
        %2725 = vmatpush1.msra.mxu0 %v2699
        %2726 = vmatprep.subr.mxu0 %v2702
        %2727 = vmatpush1.msra.mxu0 %v2701
        %2728 = vmatprep.subr.mxu0 %v2704
        %2729 = vmatpush1.msra.mxu0 %v2703
        %2730 = vmatprep.subr.mxu0 0.0
        %2731 = vmatpush1.msra.mxu0 0.0
        %2732 = vmatprep.subr.mxu0 0.0
        %2733 = vmatpush1.msra.mxu0 0.0
        %2734 = vmatprep.subr.mxu0 0.0
        %2735 = vmatpush1.msra.mxu0 0.0
        %2736 = vmatprep.subr.mxu0 0.0
        %2737 = vmatpush1.msra.mxu0 0.0
        %2738 = vmatprep.subr.mxu0 0.0
        %2739 = vmatpush1.msra.mxu0 0.0
        %2740 = vmatprep.subr.mxu0 0.0
        %2741 = vmatpush1.msra.mxu0 0.0
        %2742 = vmatprep.subr.mxu0 0.0
        %2743 = vmatpush1.msra.mxu0 0.0
        %2744 = vmatprep.subr.mxu0 0.0
        %2745 = vmatpush1.msra.mxu0 0.0
        %2746 = vmatprep.subr.mxu0 0.0
        %2747 = vmatpush1.msra.mxu0 0.0
        %2748 = vmatprep.subr.mxu0 0.0
        %2749 = vmatpush1.msra.mxu0 0.0
        %2750 = vmatprep.subr.mxu0 0.0
        %2751 = vmatpush1.msra.mxu0 0.0
        %2752 = vmatprep.subr.mxu0 0.0
        %2753 = vmatpush1.msra.mxu0 0.0
        %2754 = vmatprep.subr.mxu0 0.0
        %2755 = vmatpush1.msra.mxu0 0.0
        %2756 = vmatprep.subr.mxu0 0.0
        %2757 = vmatpush1.msra.mxu0 0.0
        %2758 = vmatprep.subr.mxu0 0.0
        %2759 = vmatpush1.msra.mxu0 0.0
        %2760 = vmatprep.subr.mxu0 0.0
        %2761 = vmatpush1.msra.mxu0 0.0
        %2762 = vmatprep.subr.mxu0 0.0
        %2763 = vmatpush1.msra.mxu0 0.0
        %2764 = vmatprep.subr.mxu0 0.0
        %2765 = vmatpush1.msra.mxu0 0.0
        %2766 = vmatprep.subr.mxu0 0.0
        %2767 = vmatpush1.msra.mxu0 0.0
        %2768 = vmatprep.subr.mxu0 0.0
        %2769 = vmatpush1.msra.mxu0 0.0
        %2770 = vmatprep.subr.mxu0 0.0
        %2771 = vmatpush1.msra.mxu0 0.0
        %2772 = vmatprep.subr.mxu0 0.0
        %2773 = vmatpush1.msra.mxu0 0.0
        %2774 = vmatprep.subr.mxu0 0.0
        %2775 = vmatpush1.msra.mxu0 0.0
        %2776 = vmatprep.subr.mxu0 0.0
        %2777 = vmatpush1.msra.mxu0 0.0
        %2778 = vmatprep.subr.mxu0 0.0
        %2779 = vmatpush1.msra.mxu0 0.0
        %2780 = vmatprep.subr.mxu0 0.0
        %2781 = vmatpush1.msra.mxu0 0.0
        %2782 = vmatprep.subr.mxu0 0.0
        %2783 = vmatpush1.msra.mxu0 0.0
        %2784 = vmatprep.subr.mxu0 0.0
        %2785 = vmatpush1.msra.mxu0 0.0
        %2786 = vmatprep.mubr.f32.mxu0 0.0
        %2787 = vmatmul.mubr.f32.gmra.mrb[0].mxu0 %v2711
        %v2788 = vpop.f32.mrb[0].mxu0
        %v2789 = vadd.f32 0.0, %v2788
        %v2790 = vpop.f32.mrb[0].mxu0
        %v2791 = vadd.f32 0.0, %v2790
        %2792 = vmatprep.mubr.f32.mxu0 0.0
        %2793 = vmatmul.mubr.f32.gmra.mrb[0].mxu0 %v2714
        %v2794 = vpop.f32.mrb[0].mxu0
        %v2795 = vadd.f32 0.0, %v2794
        %v2796 = vpop.f32.mrb[0].mxu0
        %v2797 = vadd.f32 0.0, %v2796
        %2798 = vmatprep.mubr.f32.mxu0 0.0
        %2799 = vmatmul.mubr.f32.gmra.mrb[0].mxu0 %v2717
        %v2800 = vpop.f32.mrb[0].mxu0
        %v2801 = vadd.f32 0.0, %v2800
        %v2802 = vpop.f32.mrb[0].mxu0
        %v2803 = vadd.f32 0.0, %v2802
        %2804 = vmatprep.mubr.f32.mxu0 0.0
        %2805 = vmatmul.mubr.f32.gmra.mrb[0].mxu0 %v2720
        %v2806 = vpop.f32.mrb[0].mxu0
        %v2807 = vadd.f32 0.0, %v2806
        %v2808 = vpop.f32.mrb[0].mxu0
        %v2809 = vadd.f32 0.0, %v2808
        %2810 = vdwg.mxu0
        %v2811 = vadd.f32 %v2665, %v2789
        %v2812 = vadd.f32 %v2666, %v2791
        %v2813 = vadd.f32 %v2667, %v2795
        %v2814 = vadd.f32 %v2668, %v2797
        %v2815 = vadd.f32 %v2669, %v2801
        %v2816 = vadd.f32 %v2670, %v2803
        %v2817 = vadd.f32 %v2671, %v2807
        %v2818 = vadd.f32 %v2672, %v2809
        %s2819 = scalar_lea.vmem %s2, 32
        %v2820 = vld [vmem:[%s2819] sm:$0xff]
        %v2821 = vld [vmem:[%s2819 + $0x8] sm:$0xff]
        %v2822 = vld [vmem:[%s2819 + $0x10] sm:$0xff]
        %v2823 = vld [vmem:[%s2819 + $0x18] sm:$0xff]
        %2825 = vset.pattern.permute.xlu0 0
        %2826 = vperm.xlu0 %2825, %v2820
        %v2827 = vpop.permute.xlu0 %2826
        %2830 = vset.pattern.permute.xlu0 0
        %2831 = vperm.xlu0 %2830, %v2821
        %v2832 = vpop.permute.xlu0 %2831
        %2835 = vset.pattern.permute.xlu0 0
        %2836 = vperm.xlu0 %2835, %v2822
        %v2837 = vpop.permute.xlu0 %2836
        %2840 = vset.pattern.permute.xlu0 0
        %2841 = vperm.xlu0 %2840, %v2823
        %v2842 = vpop.permute.xlu0 %2841
        %v2844 = vadd.f32 %v2811, %v2827
        %v2845 = vadd.f32 %v2812, %v2827
        %v2846 = vadd.f32 %v2813, %v2832
        %v2847 = vadd.f32 %v2814, %v2832
        %v2848 = vadd.f32 %v2815, %v2837
        %v2849 = vadd.f32 %v2816, %v2837
        %v2850 = vadd.f32 %v2817, %v2842
        %v2851 = vadd.f32 %v2818, %v2842
        %v2852 = vmax.f32 %v2844, 0.0
        %v2853 = vmax.f32 %v2845, 0.0
        %v2854 = vmax.f32 %v2846, 0.0
        %v2855 = vmax.f32 %v2847, 0.0
        %v2856 = vmax.f32 %v2848, 0.0
        %v2857 = vmax.f32 %v2849, 0.0
        %v2858 = vmax.f32 %v2850, 0.0
        %v2859 = vmax.f32 %v2851, 0.0
        %2860 = vrot.lane.b32.xlu0 %v2852, 17
        %v2861 = vpop.permute.xlu0 %2860
        %2862 = vrot.lane.b32.xlu0 %v2854, 17
        %v2863 = vpop.permute.xlu0 %2862
        %2864 = vrot.lane.b32.xlu0 %v2856, 17
        %v2865 = vpop.permute.xlu0 %2864
        %2866 = vrot.lane.b32.xlu0 %v2858, 17
        %v2867 = vpop.permute.xlu0 %2866
        %2868 = vrot.lane.b32.xlu0 %v2853, 17
        %v2869 = vpop.permute.xlu0 %2868
        %2870 = vrot.lane.b32.xlu0 %v2855, 17
        %v2871 = vpop.permute.xlu0 %2870
        %2872 = vrot.lane.b32.xlu0 %v2857, 17
        %v2873 = vpop.permute.xlu0 %2872
        %2874 = vrot.lane.b32.xlu0 %v2859, 17
        %v2875 = vpop.permute.xlu0 %2874
        %v2876 = vsel %vm207, %v2861, %v2869
        %v2877 = vsel %vm207, %v2863, %v2871
        %v2878 = vsel %vm207, %v2865, %v2873
        %v2879 = vsel %vm207, %v2867, %v2875
        %v2880 = vsel %vm207, %v2869, %v2861
        %v2881 = vsel %vm207, %v2871, %v2863
        %v2882 = vsel %vm207, %v2873, %v2865
        %v2883 = vsel %vm207, %v2875, %v2867
        %v2884 = vsel %vm224, %v2880, 0.0
        %v2885 = vsel %vm225, %v2876, 0.0
        %v2886 = vsel %vm224, %v2881, 0.0
        %v2887 = vsel %vm225, %v2877, 0.0
        %v2888 = vsel %vm224, %v2882, 0.0
        %v2889 = vsel %vm225, %v2878, 0.0
        %v2890 = vsel %vm224, %v2883, 0.0
        %v2891 = vsel %vm225, %v2879, 0.0
        %s2892 = scalar_lea.vmem [#allocation2], 576
        %v2893 = vld [vmem:[%s2892] sm:$0xff]
        %v2894 = vld [vmem:[%s2892 + $0x8] sm:$0xff]
        %v2895 = vld [vmem:[%s2892 + $0x10] sm:$0xff]
        %v2896 = vld [vmem:[%s2892 + $0x18] sm:$0xff]
        %2897 = vrot.lane.b32.xlu0 %v2852, 16
        %v2898 = vpop.permute.xlu0 %2897
        %2899 = vrot.lane.b32.xlu0 %v2854, 16
        %v2900 = vpop.permute.xlu0 %2899
        %2901 = vrot.lane.b32.xlu0 %v2856, 16
        %v2902 = vpop.permute.xlu0 %2901
        %2903 = vrot.lane.b32.xlu0 %v2858, 16
        %v2904 = vpop.permute.xlu0 %2903
        %2905 = vrot.lane.b32.xlu0 %v2853, 16
        %v2906 = vpop.permute.xlu0 %2905
        %2907 = vrot.lane.b32.xlu0 %v2855, 16
        %v2908 = vpop.permute.xlu0 %2907
        %2909 = vrot.lane.b32.xlu0 %v2857, 16
        %v2910 = vpop.permute.xlu0 %2909
        %2911 = vrot.lane.b32.xlu0 %v2859, 16
        %v2912 = vpop.permute.xlu0 %2911
        %v2913 = vsel %vm254, %v2898, %v2906
        %v2914 = vsel %vm254, %v2900, %v2908
        %v2915 = vsel %vm254, %v2902, %v2910
        %v2916 = vsel %vm254, %v2904, %v2912
        %v2917 = vsel %vm254, %v2906, %v2898
        %v2918 = vsel %vm254, %v2908, %v2900
        %v2919 = vsel %vm254, %v2910, %v2902
        %v2920 = vsel %vm254, %v2912, %v2904
        %v2921 = vsel %vm265, %v2917, 0.0
        %v2922 = vsel %vm266, %v2913, 0.0
        %v2923 = vsel %vm265, %v2918, 0.0
        %v2924 = vsel %vm266, %v2914, 0.0
        %v2925 = vsel %vm265, %v2919, 0.0
        %v2926 = vsel %vm266, %v2915, 0.0
        %v2927 = vsel %vm265, %v2920, 0.0
        %v2928 = vsel %vm266, %v2916, 0.0
        %s2929 = scalar_lea.vmem [#allocation2], 608
        %v2930 = vld [vmem:[%s2929] sm:$0xff]
        %v2931 = vld [vmem:[%s2929 + $0x8] sm:$0xff]
        %v2932 = vld [vmem:[%s2929 + $0x10] sm:$0xff]
        %v2933 = vld [vmem:[%s2929 + $0x18] sm:$0xff]
        %v2935 = vsel %vm280, %v2930, 0
        %v2938 = vsel %vm280, %v2931, 0
        %v2941 = vsel %vm280, %v2932, 0
        %v2944 = vsel %vm280, %v2933, 0
        %2946 = vmatprep.subr.mxu0 %v2922
        %2947 = vmatpush1.msra.mxu0 %v2921
        %2948 = vmatprep.subr.mxu0 %v2924
        %2949 = vmatpush1.msra.mxu0 %v2923
        %2950 = vmatprep.subr.mxu0 %v2926
        %2951 = vmatpush1.msra.mxu0 %v2925
        %2952 = vmatprep.subr.mxu0 %v2928
        %2953 = vmatpush1.msra.mxu0 %v2927
        %2954 = vmatprep.subr.mxu0 0.0
        %2955 = vmatpush1.msra.mxu0 0.0
        %2956 = vmatprep.subr.mxu0 0.0
        %2957 = vmatpush1.msra.mxu0 0.0
        %2958 = vmatprep.subr.mxu0 0.0
        %2959 = vmatpush1.msra.mxu0 0.0
        %2960 = vmatprep.subr.mxu0 0.0
        %2961 = vmatpush1.msra.mxu0 0.0
        %2962 = vmatprep.subr.mxu0 0.0
        %2963 = vmatpush1.msra.mxu0 0.0
        %2964 = vmatprep.subr.mxu0 0.0
        %2965 = vmatpush1.msra.mxu0 0.0
        %2966 = vmatprep.subr.mxu0 0.0
        %2967 = vmatpush1.msra.mxu0 0.0
        %2968 = vmatprep.subr.mxu0 0.0
        %2969 = vmatpush1.msra.mxu0 0.0
        %2970 = vmatprep.subr.mxu0 0.0
        %2971 = vmatpush1.msra.mxu0 0.0
        %2972 = vmatprep.subr.mxu0 0.0
        %2973 = vmatpush1.msra.mxu0 0.0
        %2974 = vmatprep.subr.mxu0 0.0
        %2975 = vmatpush1.msra.mxu0 0.0
        %2976 = vmatprep.subr.mxu0 0.0
        %2977 = vmatpush1.msra.mxu0 0.0
        %2978 = vmatprep.subr.mxu0 0.0
        %2979 = vmatpush1.msra.mxu0 0.0
        %2980 = vmatprep.subr.mxu0 0.0
        %2981 = vmatpush1.msra.mxu0 0.0
        %2982 = vmatprep.subr.mxu0 0.0
        %2983 = vmatpush1.msra.mxu0 0.0
        %2984 = vmatprep.subr.mxu0 0.0
        %2985 = vmatpush1.msra.mxu0 0.0
        %2986 = vmatprep.subr.mxu0 0.0
        %2987 = vmatpush1.msra.mxu0 0.0
        %2988 = vmatprep.subr.mxu0 0.0
        %2989 = vmatpush1.msra.mxu0 0.0
        %2990 = vmatprep.subr.mxu0 0.0
        %2991 = vmatpush1.msra.mxu0 0.0
        %2992 = vmatprep.subr.mxu0 0.0
        %2993 = vmatpush1.msra.mxu0 0.0
        %2994 = vmatprep.subr.mxu0 0.0
        %2995 = vmatpush1.msra.mxu0 0.0
        %2996 = vmatprep.subr.mxu0 0.0
        %2997 = vmatpush1.msra.mxu0 0.0
        %2998 = vmatprep.subr.mxu0 0.0
        %2999 = vmatpush1.msra.mxu0 0.0
        %3000 = vmatprep.subr.mxu0 0.0
        %3001 = vmatpush1.msra.mxu0 0.0
        %3002 = vmatprep.subr.mxu0 0.0
        %3003 = vmatpush1.msra.mxu0 0.0
        %3004 = vmatprep.subr.mxu0 0.0
        %3005 = vmatpush1.msra.mxu0 0.0
        %3006 = vmatprep.subr.mxu0 0.0
        %3007 = vmatpush1.msra.mxu0 0.0
        %3008 = vmatprep.subr.mxu0 0.0
        %3009 = vmatpush1.msra.mxu0 0.0
        %3010 = vmatprep.mubr.f32.mxu0 0.0
        %3011 = vmatmul.mubr.f32.gmra.mrb[0].mxu0 %v2935
        %v3012 = vpop.f32.mrb[0].mxu0
        %v3013 = vadd.f32 0.0, %v3012
        %v3014 = vpop.f32.mrb[0].mxu0
        %v3015 = vadd.f32 0.0, %v3014
        %3016 = vmatprep.mubr.f32.mxu0 0.0
        %3017 = vmatmul.mubr.f32.gmra.mrb[0].mxu0 %v2938
        %v3018 = vpop.f32.mrb[0].mxu0
        %v3019 = vadd.f32 0.0, %v3018
        %v3020 = vpop.f32.mrb[0].mxu0
        %v3021 = vadd.f32 0.0, %v3020
        %3022 = vmatprep.mubr.f32.mxu0 0.0
        %3023 = vmatmul.mubr.f32.gmra.mrb[0].mxu0 %v2941
        %v3024 = vpop.f32.mrb[0].mxu0
        %v3025 = vadd.f32 0.0, %v3024
        %v3026 = vpop.f32.mrb[0].mxu0
        %v3027 = vadd.f32 0.0, %v3026
        %3028 = vmatprep.mubr.f32.mxu0 0.0
        %3029 = vmatmul.mubr.f32.gmra.mrb[0].mxu0 %v2944
        %v3030 = vpop.f32.mrb[0].mxu0
        %v3031 = vadd.f32 0.0, %v3030
        %v3032 = vpop.f32.mrb[0].mxu0
        %v3033 = vadd.f32 0.0, %v3032
        %3034 = vdwg.mxu0
        %v3036 = vsel %vm280, %v2893, 0
        %v3039 = vsel %vm280, %v2894, 0
        %v3042 = vsel %vm280, %v2895, 0
        %v3045 = vsel %vm280, %v2896, 0
        %3047 = vmatprep.subr.mxu0 %v2885
        %3048 = vmatpush1.msra.mxu0 %v2884
        %3049 = vmatprep.subr.mxu0 %v2887
        %3050 = vmatpush1.msra.mxu0 %v2886
        %3051 = vmatprep.subr.mxu0 %v2889
        %3052 = vmatpush1.msra.mxu0 %v2888
        %3053 = vmatprep.subr.mxu0 %v2891
        %3054 = vmatpush1.msra.mxu0 %v2890
        %3055 = vmatprep.subr.mxu0 0.0
        %3056 = vmatpush1.msra.mxu0 0.0
        %3057 = vmatprep.subr.mxu0 0.0
        %3058 = vmatpush1.msra.mxu0 0.0
        %3059 = vmatprep.subr.mxu0 0.0
        %3060 = vmatpush1.msra.mxu0 0.0
        %3061 = vmatprep.subr.mxu0 0.0
        %3062 = vmatpush1.msra.mxu0 0.0
        %3063 = vmatprep.subr.mxu0 0.0
        %3064 = vmatpush1.msra.mxu0 0.0
        %3065 = vmatprep.subr.mxu0 0.0
        %3066 = vmatpush1.msra.mxu0 0.0
        %3067 = vmatprep.subr.mxu0 0.0
        %3068 = vmatpush1.msra.mxu0 0.0
        %3069 = vmatprep.subr.mxu0 0.0
        %3070 = vmatpush1.msra.mxu0 0.0
        %3071 = vmatprep.subr.mxu0 0.0
        %3072 = vmatpush1.msra.mxu0 0.0
        %3073 = vmatprep.subr.mxu0 0.0
        %3074 = vmatpush1.msra.mxu0 0.0
        %3075 = vmatprep.subr.mxu0 0.0
        %3076 = vmatpush1.msra.mxu0 0.0
        %3077 = vmatprep.subr.mxu0 0.0
        %3078 = vmatpush1.msra.mxu0 0.0
        %3079 = vmatprep.subr.mxu0 0.0
        %3080 = vmatpush1.msra.mxu0 0.0
        %3081 = vmatprep.subr.mxu0 0.0
        %3082 = vmatpush1.msra.mxu0 0.0
        %3083 = vmatprep.subr.mxu0 0.0
        %3084 = vmatpush1.msra.mxu0 0.0
        %3085 = vmatprep.subr.mxu0 0.0
        %3086 = vmatpush1.msra.mxu0 0.0
        %3087 = vmatprep.subr.mxu0 0.0
        %3088 = vmatpush1.msra.mxu0 0.0
        %3089 = vmatprep.subr.mxu0 0.0
        %3090 = vmatpush1.msra.mxu0 0.0
        %3091 = vmatprep.subr.mxu0 0.0
        %3092 = vmatpush1.msra.mxu0 0.0
        %3093 = vmatprep.subr.mxu0 0.0
        %3094 = vmatpush1.msra.mxu0 0.0
        %3095 = vmatprep.subr.mxu0 0.0
        %3096 = vmatpush1.msra.mxu0 0.0
        %3097 = vmatprep.subr.mxu0 0.0
        %3098 = vmatpush1.msra.mxu0 0.0
        %3099 = vmatprep.subr.mxu0 0.0
        %3100 = vmatpush1.msra.mxu0 0.0
        %3101 = vmatprep.subr.mxu0 0.0
        %3102 = vmatpush1.msra.mxu0 0.0
        %3103 = vmatprep.subr.mxu0 0.0
        %3104 = vmatpush1.msra.mxu0 0.0
        %3105 = vmatprep.subr.mxu0 0.0
        %3106 = vmatpush1.msra.mxu0 0.0
        %3107 = vmatprep.subr.mxu0 0.0
        %3108 = vmatpush1.msra.mxu0 0.0
        %3109 = vmatprep.subr.mxu0 0.0
        %3110 = vmatpush1.msra.mxu0 0.0
        %3111 = vmatprep.mubr.f32.mxu0 0.0
        %3112 = vmatmul.mubr.f32.gmra.mrb[0].mxu0 %v3036
        %v3113 = vpop.f32.mrb[0].mxu0
        %v3114 = vadd.f32 %v3013, %v3113
        %v3115 = vpop.f32.mrb[0].mxu0
        %v3116 = vadd.f32 %v3015, %v3115
        %3117 = vmatprep.mubr.f32.mxu0 0.0
        %3118 = vmatmul.mubr.f32.gmra.mrb[0].mxu0 %v3039
        %v3119 = vpop.f32.mrb[0].mxu0
        %v3120 = vadd.f32 %v3019, %v3119
        %v3121 = vpop.f32.mrb[0].mxu0
        %v3122 = vadd.f32 %v3021, %v3121
        %3123 = vmatprep.mubr.f32.mxu0 0.0
        %3124 = vmatmul.mubr.f32.gmra.mrb[0].mxu0 %v3042
        %v3125 = vpop.f32.mrb[0].mxu0
        %v3126 = vadd.f32 %v3025, %v3125
        %v3127 = vpop.f32.mrb[0].mxu0
        %v3128 = vadd.f32 %v3027, %v3127
        %3129 = vmatprep.mubr.f32.mxu0 0.0
        %3130 = vmatmul.mubr.f32.gmra.mrb[0].mxu0 %v3045
        %v3131 = vpop.f32.mrb[0].mxu0
        %v3132 = vadd.f32 %v3031, %v3131
        %v3133 = vpop.f32.mrb[0].mxu0
        %v3134 = vadd.f32 %v3033, %v3133
        %3135 = vdwg.mxu0
        %3136 = vrot.lane.b32.xlu0 %v2852, 15
        %v3137 = vpop.permute.xlu0 %3136
        %3138 = vrot.lane.b32.xlu0 %v2854, 15
        %v3139 = vpop.permute.xlu0 %3138
        %3140 = vrot.lane.b32.xlu0 %v2856, 15
        %v3141 = vpop.permute.xlu0 %3140
        %3142 = vrot.lane.b32.xlu0 %v2858, 15
        %v3143 = vpop.permute.xlu0 %3142
        %3144 = vrot.lane.b32.xlu0 %v2853, 15
        %v3145 = vpop.permute.xlu0 %3144
        %3146 = vrot.lane.b32.xlu0 %v2855, 15
        %v3147 = vpop.permute.xlu0 %3146
        %3148 = vrot.lane.b32.xlu0 %v2857, 15
        %v3149 = vpop.permute.xlu0 %3148
        %3150 = vrot.lane.b32.xlu0 %v2859, 15
        %v3151 = vpop.permute.xlu0 %3150
        %v3152 = vsel %vm499, %v3137, %v3145
        %v3153 = vsel %vm499, %v3139, %v3147
        %v3154 = vsel %vm499, %v3141, %v3149
        %v3155 = vsel %vm499, %v3143, %v3151
        %v3156 = vsel %vm499, %v3145, %v3137
        %v3157 = vsel %vm499, %v3147, %v3139
        %v3158 = vsel %vm499, %v3149, %v3141
        %v3159 = vsel %vm499, %v3151, %v3143
        %v3160 = vsel %vm514, %v3156, 0.0
        %v3161 = vsel %vm515, %v3152, 0.0
        %v3162 = vsel %vm514, %v3157, 0.0
        %v3163 = vsel %vm515, %v3153, 0.0
        %v3164 = vsel %vm514, %v3158, 0.0
        %v3165 = vsel %vm515, %v3154, 0.0
        %v3166 = vsel %vm514, %v3159, 0.0
        %v3167 = vsel %vm515, %v3155, 0.0
        %s3168 = scalar_lea.vmem [#allocation2], 640
        %v3169 = vld [vmem:[%s3168] sm:$0xff]
        %v3170 = vld [vmem:[%s3168 + $0x8] sm:$0xff]
        %v3171 = vld [vmem:[%s3168 + $0x10] sm:$0xff]
        %v3172 = vld [vmem:[%s3168 + $0x18] sm:$0xff]
        %v3174 = vsel %vm280, %v3169, 0
        %v3177 = vsel %vm280, %v3170, 0
        %v3180 = vsel %vm280, %v3171, 0
        %v3183 = vsel %vm280, %v3172, 0
        %3185 = vmatprep.subr.mxu0 %v3161
        %3186 = vmatpush1.msra.mxu0 %v3160
        %3187 = vmatprep.subr.mxu0 %v3163
        %3188 = vmatpush1.msra.mxu0 %v3162
        %3189 = vmatprep.subr.mxu0 %v3165
        %3190 = vmatpush1.msra.mxu0 %v3164
        %3191 = vmatprep.subr.mxu0 %v3167
        %3192 = vmatpush1.msra.mxu0 %v3166
        %3193 = vmatprep.subr.mxu0 0.0
        %3194 = vmatpush1.msra.mxu0 0.0
        %3195 = vmatprep.subr.mxu0 0.0
        %3196 = vmatpush1.msra.mxu0 0.0
        %3197 = vmatprep.subr.mxu0 0.0
        %3198 = vmatpush1.msra.mxu0 0.0
        %3199 = vmatprep.subr.mxu0 0.0
        %3200 = vmatpush1.msra.mxu0 0.0
        %3201 = vmatprep.subr.mxu0 0.0
        %3202 = vmatpush1.msra.mxu0 0.0
        %3203 = vmatprep.subr.mxu0 0.0
        %3204 = vmatpush1.msra.mxu0 0.0
        %3205 = vmatprep.subr.mxu0 0.0
        %3206 = vmatpush1.msra.mxu0 0.0
        %3207 = vmatprep.subr.mxu0 0.0
        %3208 = vmatpush1.msra.mxu0 0.0
        %3209 = vmatprep.subr.mxu0 0.0
        %3210 = vmatpush1.msra.mxu0 0.0
        %3211 = vmatprep.subr.mxu0 0.0
        %3212 = vmatpush1.msra.mxu0 0.0
        %3213 = vmatprep.subr.mxu0 0.0
        %3214 = vmatpush1.msra.mxu0 0.0
        %3215 = vmatprep.subr.mxu0 0.0
        %3216 = vmatpush1.msra.mxu0 0.0
        %3217 = vmatprep.subr.mxu0 0.0
        %3218 = vmatpush1.msra.mxu0 0.0
        %3219 = vmatprep.subr.mxu0 0.0
        %3220 = vmatpush1.msra.mxu0 0.0
        %3221 = vmatprep.subr.mxu0 0.0
        %3222 = vmatpush1.msra.mxu0 0.0
        %3223 = vmatprep.subr.mxu0 0.0
        %3224 = vmatpush1.msra.mxu0 0.0
        %3225 = vmatprep.subr.mxu0 0.0
        %3226 = vmatpush1.msra.mxu0 0.0
        %3227 = vmatprep.subr.mxu0 0.0
        %3228 = vmatpush1.msra.mxu0 0.0
        %3229 = vmatprep.subr.mxu0 0.0
        %3230 = vmatpush1.msra.mxu0 0.0
        %3231 = vmatprep.subr.mxu0 0.0
        %3232 = vmatpush1.msra.mxu0 0.0
        %3233 = vmatprep.subr.mxu0 0.0
        %3234 = vmatpush1.msra.mxu0 0.0
        %3235 = vmatprep.subr.mxu0 0.0
        %3236 = vmatpush1.msra.mxu0 0.0
        %3237 = vmatprep.subr.mxu0 0.0
        %3238 = vmatpush1.msra.mxu0 0.0
        %3239 = vmatprep.subr.mxu0 0.0
        %3240 = vmatpush1.msra.mxu0 0.0
        %3241 = vmatprep.subr.mxu0 0.0
        %3242 = vmatpush1.msra.mxu0 0.0
        %3243 = vmatprep.subr.mxu0 0.0
        %3244 = vmatpush1.msra.mxu0 0.0
        %3245 = vmatprep.subr.mxu0 0.0
        %3246 = vmatpush1.msra.mxu0 0.0
        %3247 = vmatprep.subr.mxu0 0.0
        %3248 = vmatpush1.msra.mxu0 0.0
        %3249 = vmatprep.mubr.f32.mxu0 0.0
        %3250 = vmatmul.mubr.f32.gmra.mrb[0].mxu0 %v3174
        %v3251 = vpop.f32.mrb[0].mxu0
        %v3252 = vadd.f32 0.0, %v3251
        %v3253 = vpop.f32.mrb[0].mxu0
        %v3254 = vadd.f32 0.0, %v3253
        %3255 = vmatprep.mubr.f32.mxu0 0.0
        %3256 = vmatmul.mubr.f32.gmra.mrb[0].mxu0 %v3177
        %v3257 = vpop.f32.mrb[0].mxu0
        %v3258 = vadd.f32 0.0, %v3257
        %v3259 = vpop.f32.mrb[0].mxu0
        %v3260 = vadd.f32 0.0, %v3259
        %3261 = vmatprep.mubr.f32.mxu0 0.0
        %3262 = vmatmul.mubr.f32.gmra.mrb[0].mxu0 %v3180
        %v3263 = vpop.f32.mrb[0].mxu0
        %v3264 = vadd.f32 0.0, %v3263
        %v3265 = vpop.f32.mrb[0].mxu0
        %v3266 = vadd.f32 0.0, %v3265
        %3267 = vmatprep.mubr.f32.mxu0 0.0
        %3268 = vmatmul.mubr.f32.gmra.mrb[0].mxu0 %v3183
        %v3269 = vpop.f32.mrb[0].mxu0
        %v3270 = vadd.f32 0.0, %v3269
        %v3271 = vpop.f32.mrb[0].mxu0
        %v3272 = vadd.f32 0.0, %v3271
        %3273 = vdwg.mxu0
        %v3274 = vadd.f32 %v3114, %v3252
        %v3275 = vadd.f32 %v3116, %v3254
        %v3276 = vadd.f32 %v3120, %v3258
        %v3277 = vadd.f32 %v3122, %v3260
        %v3278 = vadd.f32 %v3126, %v3264
        %v3279 = vadd.f32 %v3128, %v3266
        %v3280 = vadd.f32 %v3132, %v3270
        %v3281 = vadd.f32 %v3134, %v3272
        %3282 = vrot.lane.b32.xlu0 %v2852, 1
        %v3283 = vpop.permute.xlu0 %3282
        %3284 = vrot.lane.b32.xlu0 %v2854, 1
        %v3285 = vpop.permute.xlu0 %3284
        %3286 = vrot.lane.b32.xlu0 %v2856, 1
        %v3287 = vpop.permute.xlu0 %3286
        %3288 = vrot.lane.b32.xlu0 %v2858, 1
        %v3289 = vpop.permute.xlu0 %3288
        %3290 = vrot.lane.b32.xlu0 %v2853, 1
        %v3291 = vpop.permute.xlu0 %3290
        %3292 = vrot.lane.b32.xlu0 %v2855, 1
        %v3293 = vpop.permute.xlu0 %3292
        %3294 = vrot.lane.b32.xlu0 %v2857, 1
        %v3295 = vpop.permute.xlu0 %3294
        %3296 = vrot.lane.b32.xlu0 %v2859, 1
        %v3297 = vpop.permute.xlu0 %3296
        %v3298 = vsel %vm654, %v3283, %v3291
        %v3299 = vsel %vm654, %v3285, %v3293
        %v3300 = vsel %vm654, %v3287, %v3295
        %v3301 = vsel %vm654, %v3289, %v3297
        %v3302 = vsel %vm654, %v3291, %v3283
        %v3303 = vsel %vm654, %v3293, %v3285
        %v3304 = vsel %vm654, %v3295, %v3287
        %v3305 = vsel %vm654, %v3297, %v3289
        %v3306 = vsel %vm665, %v3302, 0.0
        %v3307 = vsel %vm666, %v3298, 0.0
        %v3308 = vsel %vm665, %v3303, 0.0
        %v3309 = vsel %vm666, %v3299, 0.0
        %v3310 = vsel %vm665, %v3304, 0.0
        %v3311 = vsel %vm666, %v3300, 0.0
        %v3312 = vsel %vm665, %v3305, 0.0
        %v3313 = vsel %vm666, %v3301, 0.0
        %s3314 = scalar_lea.vmem [#allocation2], 672
        %v3315 = vld [vmem:[%s3314] sm:$0xff]
        %v3316 = vld [vmem:[%s3314 + $0x8] sm:$0xff]
        %v3317 = vld [vmem:[%s3314 + $0x10] sm:$0xff]
        %v3318 = vld [vmem:[%s3314 + $0x18] sm:$0xff]
        %v3320 = vsel %vm280, %v3315, 0
        %v3323 = vsel %vm280, %v3316, 0
        %v3326 = vsel %vm280, %v3317, 0
        %v3329 = vsel %vm280, %v3318, 0
        %3331 = vmatprep.subr.mxu0 %v3307
        %3332 = vmatpush1.msra.mxu0 %v3306
        %3333 = vmatprep.subr.mxu0 %v3309
        %3334 = vmatpush1.msra.mxu0 %v3308
        %3335 = vmatprep.subr.mxu0 %v3311
        %3336 = vmatpush1.msra.mxu0 %v3310
        %3337 = vmatprep.subr.mxu0 %v3313
        %3338 = vmatpush1.msra.mxu0 %v3312
        %3339 = vmatprep.subr.mxu0 0.0
        %3340 = vmatpush1.msra.mxu0 0.0
        %3341 = vmatprep.subr.mxu0 0.0
        %3342 = vmatpush1.msra.mxu0 0.0
        %3343 = vmatprep.subr.mxu0 0.0
        %3344 = vmatpush1.msra.mxu0 0.0
        %3345 = vmatprep.subr.mxu0 0.0
        %3346 = vmatpush1.msra.mxu0 0.0
        %3347 = vmatprep.subr.mxu0 0.0
        %3348 = vmatpush1.msra.mxu0 0.0
        %3349 = vmatprep.subr.mxu0 0.0
        %3350 = vmatpush1.msra.mxu0 0.0
        %3351 = vmatprep.subr.mxu0 0.0
        %3352 = vmatpush1.msra.mxu0 0.0
        %3353 = vmatprep.subr.mxu0 0.0
        %3354 = vmatpush1.msra.mxu0 0.0
        %3355 = vmatprep.subr.mxu0 0.0
        %3356 = vmatpush1.msra.mxu0 0.0
        %3357 = vmatprep.subr.mxu0 0.0
        %3358 = vmatpush1.msra.mxu0 0.0
        %3359 = vmatprep.subr.mxu0 0.0
        %3360 = vmatpush1.msra.mxu0 0.0
        %3361 = vmatprep.subr.mxu0 0.0
        %3362 = vmatpush1.msra.mxu0 0.0
        %3363 = vmatprep.subr.mxu0 0.0
        %3364 = vmatpush1.msra.mxu0 0.0
        %3365 = vmatprep.subr.mxu0 0.0
        %3366 = vmatpush1.msra.mxu0 0.0
        %3367 = vmatprep.subr.mxu0 0.0
        %3368 = vmatpush1.msra.mxu0 0.0
        %3369 = vmatprep.subr.mxu0 0.0
        %3370 = vmatpush1.msra.mxu0 0.0
        %3371 = vmatprep.subr.mxu0 0.0
        %3372 = vmatpush1.msra.mxu0 0.0
        %3373 = vmatprep.subr.mxu0 0.0
        %3374 = vmatpush1.msra.mxu0 0.0
        %3375 = vmatprep.subr.mxu0 0.0
        %3376 = vmatpush1.msra.mxu0 0.0
        %3377 = vmatprep.subr.mxu0 0.0
        %3378 = vmatpush1.msra.mxu0 0.0
        %3379 = vmatprep.subr.mxu0 0.0
        %3380 = vmatpush1.msra.mxu0 0.0
        %3381 = vmatprep.subr.mxu0 0.0
        %3382 = vmatpush1.msra.mxu0 0.0
        %3383 = vmatprep.subr.mxu0 0.0
        %3384 = vmatpush1.msra.mxu0 0.0
        %3385 = vmatprep.subr.mxu0 0.0
        %3386 = vmatpush1.msra.mxu0 0.0
        %3387 = vmatprep.subr.mxu0 0.0
        %3388 = vmatpush1.msra.mxu0 0.0
        %3389 = vmatprep.subr.mxu0 0.0
        %3390 = vmatpush1.msra.mxu0 0.0
        %3391 = vmatprep.subr.mxu0 0.0
        %3392 = vmatpush1.msra.mxu0 0.0
        %3393 = vmatprep.subr.mxu0 0.0
        %3394 = vmatpush1.msra.mxu0 0.0
        %3395 = vmatprep.mubr.f32.mxu0 0.0
        %3396 = vmatmul.mubr.f32.gmra.mrb[0].mxu0 %v3320
        %v3397 = vpop.f32.mrb[0].mxu0
        %v3398 = vadd.f32 0.0, %v3397
        %v3399 = vpop.f32.mrb[0].mxu0
        %v3400 = vadd.f32 0.0, %v3399
        %3401 = vmatprep.mubr.f32.mxu0 0.0
        %3402 = vmatmul.mubr.f32.gmra.mrb[0].mxu0 %v3323
        %v3403 = vpop.f32.mrb[0].mxu0
        %v3404 = vadd.f32 0.0, %v3403
        %v3405 = vpop.f32.mrb[0].mxu0
        %v3406 = vadd.f32 0.0, %v3405
        %3407 = vmatprep.mubr.f32.mxu0 0.0
        %3408 = vmatmul.mubr.f32.gmra.mrb[0].mxu0 %v3326
        %v3409 = vpop.f32.mrb[0].mxu0
        %v3410 = vadd.f32 0.0, %v3409
        %v3411 = vpop.f32.mrb[0].mxu0
        %v3412 = vadd.f32 0.0, %v3411
        %3413 = vmatprep.mubr.f32.mxu0 0.0
        %3414 = vmatmul.mubr.f32.gmra.mrb[0].mxu0 %v3329
        %v3415 = vpop.f32.mrb[0].mxu0
        %v3416 = vadd.f32 0.0, %v3415
        %v3417 = vpop.f32.mrb[0].mxu0
        %v3418 = vadd.f32 0.0, %v3417
        %3419 = vdwg.mxu0
        %v3420 = vadd.f32 %v3274, %v3398
        %v3421 = vadd.f32 %v3275, %v3400
        %v3422 = vadd.f32 %v3276, %v3404
        %v3423 = vadd.f32 %v3277, %v3406
        %v3424 = vadd.f32 %v3278, %v3410
        %v3425 = vadd.f32 %v3279, %v3412
        %v3426 = vadd.f32 %v3280, %v3416
        %v3427 = vadd.f32 %v3281, %v3418
        %s3428 = scalar_lea.vmem [#allocation2], 704
        %v3429 = vld [vmem:[%s3428] sm:$0xff]
        %v3430 = vld [vmem:[%s3428 + $0x8] sm:$0xff]
        %v3431 = vld [vmem:[%s3428 + $0x10] sm:$0xff]
        %v3432 = vld [vmem:[%s3428 + $0x18] sm:$0xff]
        %v3434 = vsel %vm280, %v3429, 0
        %v3437 = vsel %vm280, %v3430, 0
        %v3440 = vsel %vm280, %v3431, 0
        %v3443 = vsel %vm280, %v3432, 0
        %3445 = vmatprep.subr.mxu0 %v2853
        %3446 = vmatpush1.msra.mxu0 %v2852
        %3447 = vmatprep.subr.mxu0 %v2855
        %3448 = vmatpush1.msra.mxu0 %v2854
        %3449 = vmatprep.subr.mxu0 %v2857
        %3450 = vmatpush1.msra.mxu0 %v2856
        %3451 = vmatprep.subr.mxu0 %v2859
        %3452 = vmatpush1.msra.mxu0 %v2858
        %3453 = vmatprep.subr.mxu0 0.0
        %3454 = vmatpush1.msra.mxu0 0.0
        %3455 = vmatprep.subr.mxu0 0.0
        %3456 = vmatpush1.msra.mxu0 0.0
        %3457 = vmatprep.subr.mxu0 0.0
        %3458 = vmatpush1.msra.mxu0 0.0
        %3459 = vmatprep.subr.mxu0 0.0
        %3460 = vmatpush1.msra.mxu0 0.0
        %3461 = vmatprep.subr.mxu0 0.0
        %3462 = vmatpush1.msra.mxu0 0.0
        %3463 = vmatprep.subr.mxu0 0.0
        %3464 = vmatpush1.msra.mxu0 0.0
        %3465 = vmatprep.subr.mxu0 0.0
        %3466 = vmatpush1.msra.mxu0 0.0
        %3467 = vmatprep.subr.mxu0 0.0
        %3468 = vmatpush1.msra.mxu0 0.0
        %3469 = vmatprep.subr.mxu0 0.0
        %3470 = vmatpush1.msra.mxu0 0.0
        %3471 = vmatprep.subr.mxu0 0.0
        %3472 = vmatpush1.msra.mxu0 0.0
        %3473 = vmatprep.subr.mxu0 0.0
        %3474 = vmatpush1.msra.mxu0 0.0
        %3475 = vmatprep.subr.mxu0 0.0
        %3476 = vmatpush1.msra.mxu0 0.0
        %3477 = vmatprep.subr.mxu0 0.0
        %3478 = vmatpush1.msra.mxu0 0.0
        %3479 = vmatprep.subr.mxu0 0.0
        %3480 = vmatpush1.msra.mxu0 0.0
        %3481 = vmatprep.subr.mxu0 0.0
        %3482 = vmatpush1.msra.mxu0 0.0
        %3483 = vmatprep.subr.mxu0 0.0
        %3484 = vmatpush1.msra.mxu0 0.0
        %3485 = vmatprep.subr.mxu0 0.0
        %3486 = vmatpush1.msra.mxu0 0.0
        %3487 = vmatprep.subr.mxu0 0.0
        %3488 = vmatpush1.msra.mxu0 0.0
        %3489 = vmatprep.subr.mxu0 0.0
        %3490 = vmatpush1.msra.mxu0 0.0
        %3491 = vmatprep.subr.mxu0 0.0
        %3492 = vmatpush1.msra.mxu0 0.0
        %3493 = vmatprep.subr.mxu0 0.0
        %3494 = vmatpush1.msra.mxu0 0.0
        %3495 = vmatprep.subr.mxu0 0.0
        %3496 = vmatpush1.msra.mxu0 0.0
        %3497 = vmatprep.subr.mxu0 0.0
        %3498 = vmatpush1.msra.mxu0 0.0
        %3499 = vmatprep.subr.mxu0 0.0
        %3500 = vmatpush1.msra.mxu0 0.0
        %3501 = vmatprep.subr.mxu0 0.0
        %3502 = vmatpush1.msra.mxu0 0.0
        %3503 = vmatprep.subr.mxu0 0.0
        %3504 = vmatpush1.msra.mxu0 0.0
        %3505 = vmatprep.subr.mxu0 0.0
        %3506 = vmatpush1.msra.mxu0 0.0
        %3507 = vmatprep.subr.mxu0 0.0
        %3508 = vmatpush1.msra.mxu0 0.0
        %3509 = vmatprep.mubr.f32.mxu0 0.0
        %3510 = vmatmul.mubr.f32.gmra.mrb[0].mxu0 %v3434
        %v3511 = vpop.f32.mrb[0].mxu0
        %v3512 = vadd.f32 0.0, %v3511
        %v3513 = vpop.f32.mrb[0].mxu0
        %v3514 = vadd.f32 0.0, %v3513
        %3515 = vmatprep.mubr.f32.mxu0 0.0
        %3516 = vmatmul.mubr.f32.gmra.mrb[0].mxu0 %v3437
        %v3517 = vpop.f32.mrb[0].mxu0
        %v3518 = vadd.f32 0.0, %v3517
        %v3519 = vpop.f32.mrb[0].mxu0
        %v3520 = vadd.f32 0.0, %v3519
        %3521 = vmatprep.mubr.f32.mxu0 0.0
        %3522 = vmatmul.mubr.f32.gmra.mrb[0].mxu0 %v3440
        %v3523 = vpop.f32.mrb[0].mxu0
        %v3524 = vadd.f32 0.0, %v3523
        %v3525 = vpop.f32.mrb[0].mxu0
        %v3526 = vadd.f32 0.0, %v3525
        %3527 = vmatprep.mubr.f32.mxu0 0.0
        %3528 = vmatmul.mubr.f32.gmra.mrb[0].mxu0 %v3443
        %v3529 = vpop.f32.mrb[0].mxu0
        %v3530 = vadd.f32 0.0, %v3529
        %v3531 = vpop.f32.mrb[0].mxu0
        %v3532 = vadd.f32 0.0, %v3531
        %3533 = vdwg.mxu0
        %v3534 = vadd.f32 %v3420, %v3512
        %v3535 = vadd.f32 %v3421, %v3514
        %v3536 = vadd.f32 %v3422, %v3518
        %v3537 = vadd.f32 %v3423, %v3520
        %v3538 = vadd.f32 %v3424, %v3524
        %v3539 = vadd.f32 %v3425, %v3526
        %v3540 = vadd.f32 %v3426, %v3530
        %v3541 = vadd.f32 %v3427, %v3532
        %3542 = vrot.lane.b32.xlu0 %v2852, 127
        %v3543 = vpop.permute.xlu0 %3542
        %3544 = vrot.lane.b32.xlu0 %v2854, 127
        %v3545 = vpop.permute.xlu0 %3544
        %3546 = vrot.lane.b32.xlu0 %v2856, 127
        %v3547 = vpop.permute.xlu0 %3546
        %3548 = vrot.lane.b32.xlu0 %v2858, 127
        %v3549 = vpop.permute.xlu0 %3548
        %3550 = vrot.lane.b32.xlu0 %v2853, 127
        %v3551 = vpop.permute.xlu0 %3550
        %3552 = vrot.lane.b32.xlu0 %v2855, 127
        %v3553 = vpop.permute.xlu0 %3552
        %3554 = vrot.lane.b32.xlu0 %v2857, 127
        %v3555 = vpop.permute.xlu0 %3554
        %3556 = vrot.lane.b32.xlu0 %v2859, 127
        %v3557 = vpop.permute.xlu0 %3556
        %v3558 = vsel %vm919, %v3543, %v3551
        %v3559 = vsel %vm919, %v3545, %v3553
        %v3560 = vsel %vm919, %v3547, %v3555
        %v3561 = vsel %vm919, %v3549, %v3557
        %v3562 = vsel %vm919, %v3551, %v3543
        %v3563 = vsel %vm919, %v3553, %v3545
        %v3564 = vsel %vm919, %v3555, %v3547
        %v3565 = vsel %vm919, %v3557, %v3549
        %v3566 = vsel %vm930, %v3558, 0.0
        %v3567 = vsel %vm931, %v3562, 0.0
        %v3568 = vsel %vm930, %v3559, 0.0
        %v3569 = vsel %vm931, %v3563, 0.0
        %v3570 = vsel %vm930, %v3560, 0.0
        %v3571 = vsel %vm931, %v3564, 0.0
        %v3572 = vsel %vm930, %v3561, 0.0
        %v3573 = vsel %vm931, %v3565, 0.0
        %s3574 = scalar_lea.vmem [#allocation2], 736
        %v3575 = vld [vmem:[%s3574] sm:$0xff]
        %v3576 = vld [vmem:[%s3574 + $0x8] sm:$0xff]
        %v3577 = vld [vmem:[%s3574 + $0x10] sm:$0xff]
        %v3578 = vld [vmem:[%s3574 + $0x18] sm:$0xff]
        %v3580 = vsel %vm280, %v3575, 0
        %v3583 = vsel %vm280, %v3576, 0
        %v3586 = vsel %vm280, %v3577, 0
        %v3589 = vsel %vm280, %v3578, 0
        %3591 = vmatprep.subr.mxu0 %v3567
        %3592 = vmatpush1.msra.mxu0 %v3566
        %3593 = vmatprep.subr.mxu0 %v3569
        %3594 = vmatpush1.msra.mxu0 %v3568
        %3595 = vmatprep.subr.mxu0 %v3571
        %3596 = vmatpush1.msra.mxu0 %v3570
        %3597 = vmatprep.subr.mxu0 %v3573
        %3598 = vmatpush1.msra.mxu0 %v3572
        %3599 = vmatprep.subr.mxu0 0.0
        %3600 = vmatpush1.msra.mxu0 0.0
        %3601 = vmatprep.subr.mxu0 0.0
        %3602 = vmatpush1.msra.mxu0 0.0
        %3603 = vmatprep.subr.mxu0 0.0
        %3604 = vmatpush1.msra.mxu0 0.0
        %3605 = vmatprep.subr.mxu0 0.0
        %3606 = vmatpush1.msra.mxu0 0.0
        %3607 = vmatprep.subr.mxu0 0.0
        %3608 = vmatpush1.msra.mxu0 0.0
        %3609 = vmatprep.subr.mxu0 0.0
        %3610 = vmatpush1.msra.mxu0 0.0
        %3611 = vmatprep.subr.mxu0 0.0
        %3612 = vmatpush1.msra.mxu0 0.0
        %3613 = vmatprep.subr.mxu0 0.0
        %3614 = vmatpush1.msra.mxu0 0.0
        %3615 = vmatprep.subr.mxu0 0.0
        %3616 = vmatpush1.msra.mxu0 0.0
        %3617 = vmatprep.subr.mxu0 0.0
        %3618 = vmatpush1.msra.mxu0 0.0
        %3619 = vmatprep.subr.mxu0 0.0
        %3620 = vmatpush1.msra.mxu0 0.0
        %3621 = vmatprep.subr.mxu0 0.0
        %3622 = vmatpush1.msra.mxu0 0.0
        %3623 = vmatprep.subr.mxu0 0.0
        %3624 = vmatpush1.msra.mxu0 0.0
        %3625 = vmatprep.subr.mxu0 0.0
        %3626 = vmatpush1.msra.mxu0 0.0
        %3627 = vmatprep.subr.mxu0 0.0
        %3628 = vmatpush1.msra.mxu0 0.0
        %3629 = vmatprep.subr.mxu0 0.0
        %3630 = vmatpush1.msra.mxu0 0.0
        %3631 = vmatprep.subr.mxu0 0.0
        %3632 = vmatpush1.msra.mxu0 0.0
        %3633 = vmatprep.subr.mxu0 0.0
        %3634 = vmatpush1.msra.mxu0 0.0
        %3635 = vmatprep.subr.mxu0 0.0
        %3636 = vmatpush1.msra.mxu0 0.0
        %3637 = vmatprep.subr.mxu0 0.0
        %3638 = vmatpush1.msra.mxu0 0.0
        %3639 = vmatprep.subr.mxu0 0.0
        %3640 = vmatpush1.msra.mxu0 0.0
        %3641 = vmatprep.subr.mxu0 0.0
        %3642 = vmatpush1.msra.mxu0 0.0
        %3643 = vmatprep.subr.mxu0 0.0
        %3644 = vmatpush1.msra.mxu0 0.0
        %3645 = vmatprep.subr.mxu0 0.0
        %3646 = vmatpush1.msra.mxu0 0.0
        %3647 = vmatprep.subr.mxu0 0.0
        %3648 = vmatpush1.msra.mxu0 0.0
        %3649 = vmatprep.subr.mxu0 0.0
        %3650 = vmatpush1.msra.mxu0 0.0
        %3651 = vmatprep.subr.mxu0 0.0
        %3652 = vmatpush1.msra.mxu0 0.0
        %3653 = vmatprep.subr.mxu0 0.0
        %3654 = vmatpush1.msra.mxu0 0.0
        %3655 = vmatprep.mubr.f32.mxu0 0.0
        %3656 = vmatmul.mubr.f32.gmra.mrb[0].mxu0 %v3580
        %v3657 = vpop.f32.mrb[0].mxu0
        %v3658 = vadd.f32 0.0, %v3657
        %v3659 = vpop.f32.mrb[0].mxu0
        %v3660 = vadd.f32 0.0, %v3659
        %3661 = vmatprep.mubr.f32.mxu0 0.0
        %3662 = vmatmul.mubr.f32.gmra.mrb[0].mxu0 %v3583
        %v3663 = vpop.f32.mrb[0].mxu0
        %v3664 = vadd.f32 0.0, %v3663
        %v3665 = vpop.f32.mrb[0].mxu0
        %v3666 = vadd.f32 0.0, %v3665
        %3667 = vmatprep.mubr.f32.mxu0 0.0
        %3668 = vmatmul.mubr.f32.gmra.mrb[0].mxu0 %v3586
        %v3669 = vpop.f32.mrb[0].mxu0
        %v3670 = vadd.f32 0.0, %v3669
        %v3671 = vpop.f32.mrb[0].mxu0
        %v3672 = vadd.f32 0.0, %v3671
        %3673 = vmatprep.mubr.f32.mxu0 0.0
        %3674 = vmatmul.mubr.f32.gmra.mrb[0].mxu0 %v3589
        %v3675 = vpop.f32.mrb[0].mxu0
        %v3676 = vadd.f32 0.0, %v3675
        %v3677 = vpop.f32.mrb[0].mxu0
        %v3678 = vadd.f32 0.0, %v3677
        %3679 = vdwg.mxu0
        %v3680 = vadd.f32 %v3534, %v3658
        %v3681 = vadd.f32 %v3535, %v3660
        %v3682 = vadd.f32 %v3536, %v3664
        %v3683 = vadd.f32 %v3537, %v3666
        %v3684 = vadd.f32 %v3538, %v3670
        %v3685 = vadd.f32 %v3539, %v3672
        %v3686 = vadd.f32 %v3540, %v3676
        %v3687 = vadd.f32 %v3541, %v3678
        %3688 = vrot.lane.b32.xlu0 %v2852, 113
        %v3689 = vpop.permute.xlu0 %3688
        %3690 = vrot.lane.b32.xlu0 %v2854, 113
        %v3691 = vpop.permute.xlu0 %3690
        %3692 = vrot.lane.b32.xlu0 %v2856, 113
        %v3693 = vpop.permute.xlu0 %3692
        %3694 = vrot.lane.b32.xlu0 %v2858, 113
        %v3695 = vpop.permute.xlu0 %3694
        %3696 = vrot.lane.b32.xlu0 %v2853, 113
        %v3697 = vpop.permute.xlu0 %3696
        %3698 = vrot.lane.b32.xlu0 %v2855, 113
        %v3699 = vpop.permute.xlu0 %3698
        %3700 = vrot.lane.b32.xlu0 %v2857, 113
        %v3701 = vpop.permute.xlu0 %3700
        %3702 = vrot.lane.b32.xlu0 %v2859, 113
        %v3703 = vpop.permute.xlu0 %3702
        %v3704 = vsel %vm1070, %v3689, %v3697
        %v3705 = vsel %vm1070, %v3691, %v3699
        %v3706 = vsel %vm1070, %v3693, %v3701
        %v3707 = vsel %vm1070, %v3695, %v3703
        %v3708 = vsel %vm1070, %v3697, %v3689
        %v3709 = vsel %vm1070, %v3699, %v3691
        %v3710 = vsel %vm1070, %v3701, %v3693
        %v3711 = vsel %vm1070, %v3703, %v3695
        %v3712 = vsel %vm1085, %v3704, 0.0
        %v3713 = vsel %vm1086, %v3708, 0.0
        %v3714 = vsel %vm1085, %v3705, 0.0
        %v3715 = vsel %vm1086, %v3709, 0.0
        %v3716 = vsel %vm1085, %v3706, 0.0
        %v3717 = vsel %vm1086, %v3710, 0.0
        %v3718 = vsel %vm1085, %v3707, 0.0
        %v3719 = vsel %vm1086, %v3711, 0.0
        %s3720 = scalar_lea.vmem [#allocation2], 768
        %v3721 = vld [vmem:[%s3720] sm:$0xff]
        %v3722 = vld [vmem:[%s3720 + $0x8] sm:$0xff]
        %v3723 = vld [vmem:[%s3720 + $0x10] sm:$0xff]
        %v3724 = vld [vmem:[%s3720 + $0x18] sm:$0xff]
        %v3726 = vsel %vm280, %v3721, 0
        %v3729 = vsel %vm280, %v3722, 0
        %v3732 = vsel %vm280, %v3723, 0
        %v3735 = vsel %vm280, %v3724, 0
        %3737 = vmatprep.subr.mxu0 %v3713
        %3738 = vmatpush1.msra.mxu0 %v3712
        %3739 = vmatprep.subr.mxu0 %v3715
        %3740 = vmatpush1.msra.mxu0 %v3714
        %3741 = vmatprep.subr.mxu0 %v3717
        %3742 = vmatpush1.msra.mxu0 %v3716
        %3743 = vmatprep.subr.mxu0 %v3719
        %3744 = vmatpush1.msra.mxu0 %v3718
        %3745 = vmatprep.subr.mxu0 0.0
        %3746 = vmatpush1.msra.mxu0 0.0
        %3747 = vmatprep.subr.mxu0 0.0
        %3748 = vmatpush1.msra.mxu0 0.0
        %3749 = vmatprep.subr.mxu0 0.0
        %3750 = vmatpush1.msra.mxu0 0.0
        %3751 = vmatprep.subr.mxu0 0.0
        %3752 = vmatpush1.msra.mxu0 0.0
        %3753 = vmatprep.subr.mxu0 0.0
        %3754 = vmatpush1.msra.mxu0 0.0
        %3755 = vmatprep.subr.mxu0 0.0
        %3756 = vmatpush1.msra.mxu0 0.0
        %3757 = vmatprep.subr.mxu0 0.0
        %3758 = vmatpush1.msra.mxu0 0.0
        %3759 = vmatprep.subr.mxu0 0.0
        %3760 = vmatpush1.msra.mxu0 0.0
        %3761 = vmatprep.subr.mxu0 0.0
        %3762 = vmatpush1.msra.mxu0 0.0
        %3763 = vmatprep.subr.mxu0 0.0
        %3764 = vmatpush1.msra.mxu0 0.0
        %3765 = vmatprep.subr.mxu0 0.0
        %3766 = vmatpush1.msra.mxu0 0.0
        %3767 = vmatprep.subr.mxu0 0.0
        %3768 = vmatpush1.msra.mxu0 0.0
        %3769 = vmatprep.subr.mxu0 0.0
        %3770 = vmatpush1.msra.mxu0 0.0
        %3771 = vmatprep.subr.mxu0 0.0
        %3772 = vmatpush1.msra.mxu0 0.0
        %3773 = vmatprep.subr.mxu0 0.0
        %3774 = vmatpush1.msra.mxu0 0.0
        %3775 = vmatprep.subr.mxu0 0.0
        %3776 = vmatpush1.msra.mxu0 0.0
        %3777 = vmatprep.subr.mxu0 0.0
        %3778 = vmatpush1.msra.mxu0 0.0
        %3779 = vmatprep.subr.mxu0 0.0
        %3780 = vmatpush1.msra.mxu0 0.0
        %3781 = vmatprep.subr.mxu0 0.0
        %3782 = vmatpush1.msra.mxu0 0.0
        %3783 = vmatprep.subr.mxu0 0.0
        %3784 = vmatpush1.msra.mxu0 0.0
        %3785 = vmatprep.subr.mxu0 0.0
        %3786 = vmatpush1.msra.mxu0 0.0
        %3787 = vmatprep.subr.mxu0 0.0
        %3788 = vmatpush1.msra.mxu0 0.0
        %3789 = vmatprep.subr.mxu0 0.0
        %3790 = vmatpush1.msra.mxu0 0.0
        %3791 = vmatprep.subr.mxu0 0.0
        %3792 = vmatpush1.msra.mxu0 0.0
        %3793 = vmatprep.subr.mxu0 0.0
        %3794 = vmatpush1.msra.mxu0 0.0
        %3795 = vmatprep.subr.mxu0 0.0
        %3796 = vmatpush1.msra.mxu0 0.0
        %3797 = vmatprep.subr.mxu0 0.0
        %3798 = vmatpush1.msra.mxu0 0.0
        %3799 = vmatprep.subr.mxu0 0.0
        %3800 = vmatpush1.msra.mxu0 0.0
        %3801 = vmatprep.mubr.f32.mxu0 0.0
        %3802 = vmatmul.mubr.f32.gmra.mrb[0].mxu0 %v3726
        %v3803 = vpop.f32.mrb[0].mxu0
        %v3804 = vadd.f32 0.0, %v3803
        %v3805 = vpop.f32.mrb[0].mxu0
        %v3806 = vadd.f32 0.0, %v3805
        %3807 = vmatprep.mubr.f32.mxu0 0.0
        %3808 = vmatmul.mubr.f32.gmra.mrb[0].mxu0 %v3729
        %v3809 = vpop.f32.mrb[0].mxu0
        %v3810 = vadd.f32 0.0, %v3809
        %v3811 = vpop.f32.mrb[0].mxu0
        %v3812 = vadd.f32 0.0, %v3811
        %3813 = vmatprep.mubr.f32.mxu0 0.0
        %3814 = vmatmul.mubr.f32.gmra.mrb[0].mxu0 %v3732
        %v3815 = vpop.f32.mrb[0].mxu0
        %v3816 = vadd.f32 0.0, %v3815
        %v3817 = vpop.f32.mrb[0].mxu0
        %v3818 = vadd.f32 0.0, %v3817
        %3819 = vmatprep.mubr.f32.mxu0 0.0
        %3820 = vmatmul.mubr.f32.gmra.mrb[0].mxu0 %v3735
        %v3821 = vpop.f32.mrb[0].mxu0
        %v3822 = vadd.f32 0.0, %v3821
        %v3823 = vpop.f32.mrb[0].mxu0
        %v3824 = vadd.f32 0.0, %v3823
        %3825 = vdwg.mxu0
        %v3826 = vadd.f32 %v3680, %v3804
        %v3827 = vadd.f32 %v3681, %v3806
        %v3828 = vadd.f32 %v3682, %v3810
        %v3829 = vadd.f32 %v3683, %v3812
        %v3830 = vadd.f32 %v3684, %v3816
        %v3831 = vadd.f32 %v3685, %v3818
        %v3832 = vadd.f32 %v3686, %v3822
        %v3833 = vadd.f32 %v3687, %v3824
        %3834 = vrot.lane.b32.xlu0 %v2852, 112
        %v3835 = vpop.permute.xlu0 %3834
        %3836 = vrot.lane.b32.xlu0 %v2854, 112
        %v3837 = vpop.permute.xlu0 %3836
        %3838 = vrot.lane.b32.xlu0 %v2856, 112
        %v3839 = vpop.permute.xlu0 %3838
        %3840 = vrot.lane.b32.xlu0 %v2858, 112
        %v3841 = vpop.permute.xlu0 %3840
        %3842 = vrot.lane.b32.xlu0 %v2853, 112
        %v3843 = vpop.permute.xlu0 %3842
        %3844 = vrot.lane.b32.xlu0 %v2855, 112
        %v3845 = vpop.permute.xlu0 %3844
        %3846 = vrot.lane.b32.xlu0 %v2857, 112
        %v3847 = vpop.permute.xlu0 %3846
        %3848 = vrot.lane.b32.xlu0 %v2859, 112
        %v3849 = vpop.permute.xlu0 %3848
        %v3850 = vsel %vm1225, %v3835, %v3843
        %v3851 = vsel %vm1225, %v3837, %v3845
        %v3852 = vsel %vm1225, %v3839, %v3847
        %v3853 = vsel %vm1225, %v3841, %v3849
        %v3854 = vsel %vm1225, %v3843, %v3835
        %v3855 = vsel %vm1225, %v3845, %v3837
        %v3856 = vsel %vm1225, %v3847, %v3839
        %v3857 = vsel %vm1225, %v3849, %v3841
        %v3858 = vsel %vm1236, %v3850, 0.0
        %v3859 = vsel %vm1237, %v3854, 0.0
        %v3860 = vsel %vm1236, %v3851, 0.0
        %v3861 = vsel %vm1237, %v3855, 0.0
        %v3862 = vsel %vm1236, %v3852, 0.0
        %v3863 = vsel %vm1237, %v3856, 0.0
        %v3864 = vsel %vm1236, %v3853, 0.0
        %v3865 = vsel %vm1237, %v3857, 0.0
        %s3866 = scalar_lea.vmem [#allocation2], 800
        %v3867 = vld [vmem:[%s3866] sm:$0xff]
        %v3868 = vld [vmem:[%s3866 + $0x8] sm:$0xff]
        %v3869 = vld [vmem:[%s3866 + $0x10] sm:$0xff]
        %v3870 = vld [vmem:[%s3866 + $0x18] sm:$0xff]
        %v3872 = vsel %vm280, %v3867, 0
        %v3875 = vsel %vm280, %v3868, 0
        %v3878 = vsel %vm280, %v3869, 0
        %v3881 = vsel %vm280, %v3870, 0
        %3883 = vmatprep.subr.mxu0 %v3859
        %3884 = vmatpush1.msra.mxu0 %v3858
        %3885 = vmatprep.subr.mxu0 %v3861
        %3886 = vmatpush1.msra.mxu0 %v3860
        %3887 = vmatprep.subr.mxu0 %v3863
        %3888 = vmatpush1.msra.mxu0 %v3862
        %3889 = vmatprep.subr.mxu0 %v3865
        %3890 = vmatpush1.msra.mxu0 %v3864
        %3891 = vmatprep.subr.mxu0 0.0
        %3892 = vmatpush1.msra.mxu0 0.0
        %3893 = vmatprep.subr.mxu0 0.0
        %3894 = vmatpush1.msra.mxu0 0.0
        %3895 = vmatprep.subr.mxu0 0.0
        %3896 = vmatpush1.msra.mxu0 0.0
        %3897 = vmatprep.subr.mxu0 0.0
        %3898 = vmatpush1.msra.mxu0 0.0
        %3899 = vmatprep.subr.mxu0 0.0
        %3900 = vmatpush1.msra.mxu0 0.0
        %3901 = vmatprep.subr.mxu0 0.0
        %3902 = vmatpush1.msra.mxu0 0.0
        %3903 = vmatprep.subr.mxu0 0.0
        %3904 = vmatpush1.msra.mxu0 0.0
        %3905 = vmatprep.subr.mxu0 0.0
        %3906 = vmatpush1.msra.mxu0 0.0
        %3907 = vmatprep.subr.mxu0 0.0
        %3908 = vmatpush1.msra.mxu0 0.0
        %3909 = vmatprep.subr.mxu0 0.0
        %3910 = vmatpush1.msra.mxu0 0.0
        %3911 = vmatprep.subr.mxu0 0.0
        %3912 = vmatpush1.msra.mxu0 0.0
        %3913 = vmatprep.subr.mxu0 0.0
        %3914 = vmatpush1.msra.mxu0 0.0
        %3915 = vmatprep.subr.mxu0 0.0
        %3916 = vmatpush1.msra.mxu0 0.0
        %3917 = vmatprep.subr.mxu0 0.0
        %3918 = vmatpush1.msra.mxu0 0.0
        %3919 = vmatprep.subr.mxu0 0.0
        %3920 = vmatpush1.msra.mxu0 0.0
        %3921 = vmatprep.subr.mxu0 0.0
        %3922 = vmatpush1.msra.mxu0 0.0
        %3923 = vmatprep.subr.mxu0 0.0
        %3924 = vmatpush1.msra.mxu0 0.0
        %3925 = vmatprep.subr.mxu0 0.0
        %3926 = vmatpush1.msra.mxu0 0.0
        %3927 = vmatprep.subr.mxu0 0.0
        %3928 = vmatpush1.msra.mxu0 0.0
        %3929 = vmatprep.subr.mxu0 0.0
        %3930 = vmatpush1.msra.mxu0 0.0
        %3931 = vmatprep.subr.mxu0 0.0
        %3932 = vmatpush1.msra.mxu0 0.0
        %3933 = vmatprep.subr.mxu0 0.0
        %3934 = vmatpush1.msra.mxu0 0.0
        %3935 = vmatprep.subr.mxu0 0.0
        %3936 = vmatpush1.msra.mxu0 0.0
        %3937 = vmatprep.subr.mxu0 0.0
        %3938 = vmatpush1.msra.mxu0 0.0
        %3939 = vmatprep.subr.mxu0 0.0
        %3940 = vmatpush1.msra.mxu0 0.0
        %3941 = vmatprep.subr.mxu0 0.0
        %3942 = vmatpush1.msra.mxu0 0.0
        %3943 = vmatprep.subr.mxu0 0.0
        %3944 = vmatpush1.msra.mxu0 0.0
        %3945 = vmatprep.subr.mxu0 0.0
        %3946 = vmatpush1.msra.mxu0 0.0
        %3947 = vmatprep.mubr.f32.mxu0 0.0
        %3948 = vmatmul.mubr.f32.gmra.mrb[0].mxu0 %v3872
        %v3949 = vpop.f32.mrb[0].mxu0
        %v3950 = vadd.f32 0.0, %v3949
        %v3951 = vpop.f32.mrb[0].mxu0
        %v3952 = vadd.f32 0.0, %v3951
        %3953 = vmatprep.mubr.f32.mxu0 0.0
        %3954 = vmatmul.mubr.f32.gmra.mrb[0].mxu0 %v3875
        %v3955 = vpop.f32.mrb[0].mxu0
        %v3956 = vadd.f32 0.0, %v3955
        %v3957 = vpop.f32.mrb[0].mxu0
        %v3958 = vadd.f32 0.0, %v3957
        %3959 = vmatprep.mubr.f32.mxu0 0.0
        %3960 = vmatmul.mubr.f32.gmra.mrb[0].mxu0 %v3878
        %v3961 = vpop.f32.mrb[0].mxu0
        %v3962 = vadd.f32 0.0, %v3961
        %v3963 = vpop.f32.mrb[0].mxu0
        %v3964 = vadd.f32 0.0, %v3963
        %3965 = vmatprep.mubr.f32.mxu0 0.0
        %3966 = vmatmul.mubr.f32.gmra.mrb[0].mxu0 %v3881
        %v3967 = vpop.f32.mrb[0].mxu0
        %v3968 = vadd.f32 0.0, %v3967
        %v3969 = vpop.f32.mrb[0].mxu0
        %v3970 = vadd.f32 0.0, %v3969
        %3971 = vdwg.mxu0
        %v3972 = vadd.f32 %v3826, %v3950
        %v3973 = vadd.f32 %v3827, %v3952
        %v3974 = vadd.f32 %v3828, %v3956
        %v3975 = vadd.f32 %v3829, %v3958
        %v3976 = vadd.f32 %v3830, %v3962
        %v3977 = vadd.f32 %v3831, %v3964
        %v3978 = vadd.f32 %v3832, %v3968
        %v3979 = vadd.f32 %v3833, %v3970
        %3980 = vrot.lane.b32.xlu0 %v2852, 111
        %v3981 = vpop.permute.xlu0 %3980
        %3982 = vrot.lane.b32.xlu0 %v2854, 111
        %v3983 = vpop.permute.xlu0 %3982
        %3984 = vrot.lane.b32.xlu0 %v2856, 111
        %v3985 = vpop.permute.xlu0 %3984
        %3986 = vrot.lane.b32.xlu0 %v2858, 111
        %v3987 = vpop.permute.xlu0 %3986
        %3988 = vrot.lane.b32.xlu0 %v2853, 111
        %v3989 = vpop.permute.xlu0 %3988
        %3990 = vrot.lane.b32.xlu0 %v2855, 111
        %v3991 = vpop.permute.xlu0 %3990
        %3992 = vrot.lane.b32.xlu0 %v2857, 111
        %v3993 = vpop.permute.xlu0 %3992
        %3994 = vrot.lane.b32.xlu0 %v2859, 111
        %v3995 = vpop.permute.xlu0 %3994
        %v3996 = vsel %vm1376, %v3981, %v3989
        %v3997 = vsel %vm1376, %v3983, %v3991
        %v3998 = vsel %vm1376, %v3985, %v3993
        %v3999 = vsel %vm1376, %v3987, %v3995
        %v4000 = vsel %vm1376, %v3989, %v3981
        %v4001 = vsel %vm1376, %v3991, %v3983
        %v4002 = vsel %vm1376, %v3993, %v3985
        %v4003 = vsel %vm1376, %v3995, %v3987
        %v4004 = vsel %vm1389, %v3996, 0.0
        %v4005 = vsel %vm1390, %v4000, 0.0
        %v4006 = vsel %vm1389, %v3997, 0.0
        %v4007 = vsel %vm1390, %v4001, 0.0
        %v4008 = vsel %vm1389, %v3998, 0.0
        %v4009 = vsel %vm1390, %v4002, 0.0
        %v4010 = vsel %vm1389, %v3999, 0.0
        %v4011 = vsel %vm1390, %v4003, 0.0
        %s4012 = scalar_lea.vmem [#allocation2], 832
        %v4013 = vld [vmem:[%s4012] sm:$0xff]
        %v4014 = vld [vmem:[%s4012 + $0x8] sm:$0xff]
        %v4015 = vld [vmem:[%s4012 + $0x10] sm:$0xff]
        %v4016 = vld [vmem:[%s4012 + $0x18] sm:$0xff]
        %v4018 = vsel %vm280, %v4013, 0
        %v4021 = vsel %vm280, %v4014, 0
        %v4024 = vsel %vm280, %v4015, 0
        %v4027 = vsel %vm280, %v4016, 0
        %4029 = vmatprep.subr.mxu0 %v4005
        %4030 = vmatpush1.msra.mxu0 %v4004
        %4031 = vmatprep.subr.mxu0 %v4007
        %4032 = vmatpush1.msra.mxu0 %v4006
        %4033 = vmatprep.subr.mxu0 %v4009
        %4034 = vmatpush1.msra.mxu0 %v4008
        %4035 = vmatprep.subr.mxu0 %v4011
        %4036 = vmatpush1.msra.mxu0 %v4010
        %4037 = vmatprep.subr.mxu0 0.0
        %4038 = vmatpush1.msra.mxu0 0.0
        %4039 = vmatprep.subr.mxu0 0.0
        %4040 = vmatpush1.msra.mxu0 0.0
        %4041 = vmatprep.subr.mxu0 0.0
        %4042 = vmatpush1.msra.mxu0 0.0
        %4043 = vmatprep.subr.mxu0 0.0
        %4044 = vmatpush1.msra.mxu0 0.0
        %4045 = vmatprep.subr.mxu0 0.0
        %4046 = vmatpush1.msra.mxu0 0.0
        %4047 = vmatprep.subr.mxu0 0.0
        %4048 = vmatpush1.msra.mxu0 0.0
        %4049 = vmatprep.subr.mxu0 0.0
        %4050 = vmatpush1.msra.mxu0 0.0
        %4051 = vmatprep.subr.mxu0 0.0
        %4052 = vmatpush1.msra.mxu0 0.0
        %4053 = vmatprep.subr.mxu0 0.0
        %4054 = vmatpush1.msra.mxu0 0.0
        %4055 = vmatprep.subr.mxu0 0.0
        %4056 = vmatpush1.msra.mxu0 0.0
        %4057 = vmatprep.subr.mxu0 0.0
        %4058 = vmatpush1.msra.mxu0 0.0
        %4059 = vmatprep.subr.mxu0 0.0
        %4060 = vmatpush1.msra.mxu0 0.0
        %4061 = vmatprep.subr.mxu0 0.0
        %4062 = vmatpush1.msra.mxu0 0.0
        %4063 = vmatprep.subr.mxu0 0.0
        %4064 = vmatpush1.msra.mxu0 0.0
        %4065 = vmatprep.subr.mxu0 0.0
        %4066 = vmatpush1.msra.mxu0 0.0
        %4067 = vmatprep.subr.mxu0 0.0
        %4068 = vmatpush1.msra.mxu0 0.0
        %4069 = vmatprep.subr.mxu0 0.0
        %4070 = vmatpush1.msra.mxu0 0.0
        %4071 = vmatprep.subr.mxu0 0.0
        %4072 = vmatpush1.msra.mxu0 0.0
        %4073 = vmatprep.subr.mxu0 0.0
        %4074 = vmatpush1.msra.mxu0 0.0
        %4075 = vmatprep.subr.mxu0 0.0
        %4076 = vmatpush1.msra.mxu0 0.0
        %4077 = vmatprep.subr.mxu0 0.0
        %4078 = vmatpush1.msra.mxu0 0.0
        %4079 = vmatprep.subr.mxu0 0.0
        %4080 = vmatpush1.msra.mxu0 0.0
        %4081 = vmatprep.subr.mxu0 0.0
        %4082 = vmatpush1.msra.mxu0 0.0
        %4083 = vmatprep.subr.mxu0 0.0
        %4084 = vmatpush1.msra.mxu0 0.0
        %4085 = vmatprep.subr.mxu0 0.0
        %4086 = vmatpush1.msra.mxu0 0.0
        %4087 = vmatprep.subr.mxu0 0.0
        %4088 = vmatpush1.msra.mxu0 0.0
        %4089 = vmatprep.subr.mxu0 0.0
        %4090 = vmatpush1.msra.mxu0 0.0
        %4091 = vmatprep.subr.mxu0 0.0
        %4092 = vmatpush1.msra.mxu0 0.0
        %4093 = vmatprep.mubr.f32.mxu0 0.0
        %4094 = vmatmul.mubr.f32.gmra.mrb[0].mxu0 %v4018
        %v4095 = vpop.f32.mrb[0].mxu0
        %v4096 = vadd.f32 0.0, %v4095
        %v4097 = vpop.f32.mrb[0].mxu0
        %v4098 = vadd.f32 0.0, %v4097
        %4099 = vmatprep.mubr.f32.mxu0 0.0
        %4100 = vmatmul.mubr.f32.gmra.mrb[0].mxu0 %v4021
        %v4101 = vpop.f32.mrb[0].mxu0
        %v4102 = vadd.f32 0.0, %v4101
        %v4103 = vpop.f32.mrb[0].mxu0
        %v4104 = vadd.f32 0.0, %v4103
        %4105 = vmatprep.mubr.f32.mxu0 0.0
        %4106 = vmatmul.mubr.f32.gmra.mrb[0].mxu0 %v4024
        %v4107 = vpop.f32.mrb[0].mxu0
        %v4108 = vadd.f32 0.0, %v4107
        %v4109 = vpop.f32.mrb[0].mxu0
        %v4110 = vadd.f32 0.0, %v4109
        %4111 = vmatprep.mubr.f32.mxu0 0.0
        %4112 = vmatmul.mubr.f32.gmra.mrb[0].mxu0 %v4027
        %v4113 = vpop.f32.mrb[0].mxu0
        %v4114 = vadd.f32 0.0, %v4113
        %v4115 = vpop.f32.mrb[0].mxu0
        %v4116 = vadd.f32 0.0, %v4115
        %4117 = vdwg.mxu0
        %v4118 = vadd.f32 %v3972, %v4096
        %v4119 = vadd.f32 %v3973, %v4098
        %v4120 = vadd.f32 %v3974, %v4102
        %v4121 = vadd.f32 %v3975, %v4104
        %v4122 = vadd.f32 %v3976, %v4108
        %v4123 = vadd.f32 %v3977, %v4110
        %v4124 = vadd.f32 %v3978, %v4114
        %v4125 = vadd.f32 %v3979, %v4116
        %s4126 = scalar_lea.vmem %s2, 64
        %v4127 = vld [vmem:[%s4126] sm:$0xff]
        %v4128 = vld [vmem:[%s4126 + $0x8] sm:$0xff]
        %v4129 = vld [vmem:[%s4126 + $0x10] sm:$0xff]
        %v4130 = vld [vmem:[%s4126 + $0x18] sm:$0xff]
        %4132 = vset.pattern.permute.xlu0 0
        %4133 = vperm.xlu0 %4132, %v4127
        %v4134 = vpop.permute.xlu0 %4133
        %4137 = vset.pattern.permute.xlu0 0
        %4138 = vperm.xlu0 %4137, %v4128
        %v4139 = vpop.permute.xlu0 %4138
        %4142 = vset.pattern.permute.xlu0 0
        %4143 = vperm.xlu0 %4142, %v4129
        %v4144 = vpop.permute.xlu0 %4143
        %4147 = vset.pattern.permute.xlu0 0
        %4148 = vperm.xlu0 %4147, %v4130
        %v4149 = vpop.permute.xlu0 %4148
        %v4151 = vadd.f32 %v4118, %v4134
        %v4152 = vadd.f32 %v4119, %v4134
        %v4153 = vadd.f32 %v4120, %v4139
        %v4154 = vadd.f32 %v4121, %v4139
        %v4155 = vadd.f32 %v4122, %v4144
        %v4156 = vadd.f32 %v4123, %v4144
        %v4157 = vadd.f32 %v4124, %v4149
        %v4158 = vadd.f32 %v4125, %v4149
        %v4159 = vmax.f32 %v4151, 0.0
        %v4160 = vmax.f32 %v4152, 0.0
        %v4161 = vmax.f32 %v4153, 0.0
        %v4162 = vmax.f32 %v4154, 0.0
        %v4163 = vmax.f32 %v4155, 0.0
        %v4164 = vmax.f32 %v4156, 0.0
        %v4165 = vmax.f32 %v4157, 0.0
        %v4166 = vmax.f32 %v4158, 0.0
        %4167 = vrot.lane.b32.xlu0 %v4159, 17
        %v4168 = vpop.permute.xlu0 %4167
        %4169 = vrot.lane.b32.xlu0 %v4161, 17
        %v4170 = vpop.permute.xlu0 %4169
        %4171 = vrot.lane.b32.xlu0 %v4163, 17
        %v4172 = vpop.permute.xlu0 %4171
        %4173 = vrot.lane.b32.xlu0 %v4165, 17
        %v4174 = vpop.permute.xlu0 %4173
        %4175 = vrot.lane.b32.xlu0 %v4160, 17
        %v4176 = vpop.permute.xlu0 %4175
        %4177 = vrot.lane.b32.xlu0 %v4162, 17
        %v4178 = vpop.permute.xlu0 %4177
        %4179 = vrot.lane.b32.xlu0 %v4164, 17
        %v4180 = vpop.permute.xlu0 %4179
        %4181 = vrot.lane.b32.xlu0 %v4166, 17
        %v4182 = vpop.permute.xlu0 %4181
        %v4183 = vsel %vm207, %v4168, %v4176
        %v4184 = vsel %vm207, %v4170, %v4178
        %v4185 = vsel %vm207, %v4172, %v4180
        %v4186 = vsel %vm207, %v4174, %v4182
        %v4187 = vsel %vm207, %v4176, %v4168
        %v4188 = vsel %vm207, %v4178, %v4170
        %v4189 = vsel %vm207, %v4180, %v4172
        %v4190 = vsel %vm207, %v4182, %v4174
        %v4191 = vsel %vm224, %v4187, 0.0
        %v4192 = vsel %vm225, %v4183, 0.0
        %v4193 = vsel %vm224, %v4188, 0.0
        %v4194 = vsel %vm225, %v4184, 0.0
        %v4195 = vsel %vm224, %v4189, 0.0
        %v4196 = vsel %vm225, %v4185, 0.0
        %v4197 = vsel %vm224, %v4190, 0.0
        %v4198 = vsel %vm225, %v4186, 0.0
        %s4199 = scalar_lea.vmem [#allocation2], 864
        %v4200 = vld [vmem:[%s4199] sm:$0xff]
        %v4201 = vld [vmem:[%s4199 + $0x8] sm:$0xff]
        %v4202 = vld [vmem:[%s4199 + $0x10] sm:$0xff]
        %v4203 = vld [vmem:[%s4199 + $0x18] sm:$0xff]
        %4204 = vrot.lane.b32.xlu0 %v4159, 16
        %v4205 = vpop.permute.xlu0 %4204
        %4206 = vrot.lane.b32.xlu0 %v4161, 16
        %v4207 = vpop.permute.xlu0 %4206
        %4208 = vrot.lane.b32.xlu0 %v4163, 16
        %v4209 = vpop.permute.xlu0 %4208
        %4210 = vrot.lane.b32.xlu0 %v4165, 16
        %v4211 = vpop.permute.xlu0 %4210
        %4212 = vrot.lane.b32.xlu0 %v4160, 16
        %v4213 = vpop.permute.xlu0 %4212
        %4214 = vrot.lane.b32.xlu0 %v4162, 16
        %v4215 = vpop.permute.xlu0 %4214
        %4216 = vrot.lane.b32.xlu0 %v4164, 16
        %v4217 = vpop.permute.xlu0 %4216
        %4218 = vrot.lane.b32.xlu0 %v4166, 16
        %v4219 = vpop.permute.xlu0 %4218
        %v4220 = vsel %vm254, %v4205, %v4213
        %v4221 = vsel %vm254, %v4207, %v4215
        %v4222 = vsel %vm254, %v4209, %v4217
        %v4223 = vsel %vm254, %v4211, %v4219
        %v4224 = vsel %vm254, %v4213, %v4205
        %v4225 = vsel %vm254, %v4215, %v4207
        %v4226 = vsel %vm254, %v4217, %v4209
        %v4227 = vsel %vm254, %v4219, %v4211
        %v4228 = vsel %vm265, %v4224, 0.0
        %v4229 = vsel %vm266, %v4220, 0.0
        %v4230 = vsel %vm265, %v4225, 0.0
        %v4231 = vsel %vm266, %v4221, 0.0
        %v4232 = vsel %vm265, %v4226, 0.0
        %v4233 = vsel %vm266, %v4222, 0.0
        %v4234 = vsel %vm265, %v4227, 0.0
        %v4235 = vsel %vm266, %v4223, 0.0
        %s4236 = scalar_lea.vmem [#allocation2], 896
        %v4237 = vld [vmem:[%s4236] sm:$0xff]
        %v4238 = vld [vmem:[%s4236 + $0x8] sm:$0xff]
        %v4239 = vld [vmem:[%s4236 + $0x10] sm:$0xff]
        %v4240 = vld [vmem:[%s4236 + $0x18] sm:$0xff]
        %v4242 = vsel %vm280, %v4237, 0
        %v4245 = vsel %vm280, %v4238, 0
        %v4248 = vsel %vm280, %v4239, 0
        %v4251 = vsel %vm280, %v4240, 0
        %4253 = vmatprep.subr.mxu0 %v4229
        %4254 = vmatpush1.msra.mxu0 %v4228
        %4255 = vmatprep.subr.mxu0 %v4231
        %4256 = vmatpush1.msra.mxu0 %v4230
        %4257 = vmatprep.subr.mxu0 %v4233
        %4258 = vmatpush1.msra.mxu0 %v4232
        %4259 = vmatprep.subr.mxu0 %v4235
        %4260 = vmatpush1.msra.mxu0 %v4234
        %4261 = vmatprep.subr.mxu0 0.0
        %4262 = vmatpush1.msra.mxu0 0.0
        %4263 = vmatprep.subr.mxu0 0.0
        %4264 = vmatpush1.msra.mxu0 0.0
        %4265 = vmatprep.subr.mxu0 0.0
        %4266 = vmatpush1.msra.mxu0 0.0
        %4267 = vmatprep.subr.mxu0 0.0
        %4268 = vmatpush1.msra.mxu0 0.0
        %4269 = vmatprep.subr.mxu0 0.0
        %4270 = vmatpush1.msra.mxu0 0.0
        %4271 = vmatprep.subr.mxu0 0.0
        %4272 = vmatpush1.msra.mxu0 0.0
        %4273 = vmatprep.subr.mxu0 0.0
        %4274 = vmatpush1.msra.mxu0 0.0
        %4275 = vmatprep.subr.mxu0 0.0
        %4276 = vmatpush1.msra.mxu0 0.0
        %4277 = vmatprep.subr.mxu0 0.0
        %4278 = vmatpush1.msra.mxu0 0.0
        %4279 = vmatprep.subr.mxu0 0.0
        %4280 = vmatpush1.msra.mxu0 0.0
        %4281 = vmatprep.subr.mxu0 0.0
        %4282 = vmatpush1.msra.mxu0 0.0
        %4283 = vmatprep.subr.mxu0 0.0
        %4284 = vmatpush1.msra.mxu0 0.0
        %4285 = vmatprep.subr.mxu0 0.0
        %4286 = vmatpush1.msra.mxu0 0.0
        %4287 = vmatprep.subr.mxu0 0.0
        %4288 = vmatpush1.msra.mxu0 0.0
        %4289 = vmatprep.subr.mxu0 0.0
        %4290 = vmatpush1.msra.mxu0 0.0
        %4291 = vmatprep.subr.mxu0 0.0
        %4292 = vmatpush1.msra.mxu0 0.0
        %4293 = vmatprep.subr.mxu0 0.0
        %4294 = vmatpush1.msra.mxu0 0.0
        %4295 = vmatprep.subr.mxu0 0.0
        %4296 = vmatpush1.msra.mxu0 0.0
        %4297 = vmatprep.subr.mxu0 0.0
        %4298 = vmatpush1.msra.mxu0 0.0
        %4299 = vmatprep.subr.mxu0 0.0
        %4300 = vmatpush1.msra.mxu0 0.0
        %4301 = vmatprep.subr.mxu0 0.0
        %4302 = vmatpush1.msra.mxu0 0.0
        %4303 = vmatprep.subr.mxu0 0.0
        %4304 = vmatpush1.msra.mxu0 0.0
        %4305 = vmatprep.subr.mxu0 0.0
        %4306 = vmatpush1.msra.mxu0 0.0
        %4307 = vmatprep.subr.mxu0 0.0
        %4308 = vmatpush1.msra.mxu0 0.0
        %4309 = vmatprep.subr.mxu0 0.0
        %4310 = vmatpush1.msra.mxu0 0.0
        %4311 = vmatprep.subr.mxu0 0.0
        %4312 = vmatpush1.msra.mxu0 0.0
        %4313 = vmatprep.subr.mxu0 0.0
        %4314 = vmatpush1.msra.mxu0 0.0
        %4315 = vmatprep.subr.mxu0 0.0
        %4316 = vmatpush1.msra.mxu0 0.0
        %4317 = vmatprep.mubr.f32.mxu0 0.0
        %4318 = vmatmul.mubr.f32.gmra.mrb[0].mxu0 %v4242
        %v4319 = vpop.f32.mrb[0].mxu0
        %v4320 = vadd.f32 0.0, %v4319
        %v4321 = vpop.f32.mrb[0].mxu0
        %v4322 = vadd.f32 0.0, %v4321
        %4323 = vmatprep.mubr.f32.mxu0 0.0
        %4324 = vmatmul.mubr.f32.gmra.mrb[0].mxu0 %v4245
        %v4325 = vpop.f32.mrb[0].mxu0
        %v4326 = vadd.f32 0.0, %v4325
        %v4327 = vpop.f32.mrb[0].mxu0
        %v4328 = vadd.f32 0.0, %v4327
        %4329 = vmatprep.mubr.f32.mxu0 0.0
        %4330 = vmatmul.mubr.f32.gmra.mrb[0].mxu0 %v4248
        %v4331 = vpop.f32.mrb[0].mxu0
        %v4332 = vadd.f32 0.0, %v4331
        %v4333 = vpop.f32.mrb[0].mxu0
        %v4334 = vadd.f32 0.0, %v4333
        %4335 = vmatprep.mubr.f32.mxu0 0.0
        %4336 = vmatmul.mubr.f32.gmra.mrb[0].mxu0 %v4251
        %v4337 = vpop.f32.mrb[0].mxu0
        %v4338 = vadd.f32 0.0, %v4337
        %v4339 = vpop.f32.mrb[0].mxu0
        %v4340 = vadd.f32 0.0, %v4339
        %4341 = vdwg.mxu0
        %v4343 = vsel %vm280, %v4200, 0
        %v4346 = vsel %vm280, %v4201, 0
        %v4349 = vsel %vm280, %v4202, 0
        %v4352 = vsel %vm280, %v4203, 0
        %4354 = vmatprep.subr.mxu0 %v4192
        %4355 = vmatpush1.msra.mxu0 %v4191
        %4356 = vmatprep.subr.mxu0 %v4194
        %4357 = vmatpush1.msra.mxu0 %v4193
        %4358 = vmatprep.subr.mxu0 %v4196
        %4359 = vmatpush1.msra.mxu0 %v4195
        %4360 = vmatprep.subr.mxu0 %v4198
        %4361 = vmatpush1.msra.mxu0 %v4197
        %4362 = vmatprep.subr.mxu0 0.0
        %4363 = vmatpush1.msra.mxu0 0.0
        %4364 = vmatprep.subr.mxu0 0.0
        %4365 = vmatpush1.msra.mxu0 0.0
        %4366 = vmatprep.subr.mxu0 0.0
        %4367 = vmatpush1.msra.mxu0 0.0
        %4368 = vmatprep.subr.mxu0 0.0
        %4369 = vmatpush1.msra.mxu0 0.0
        %4370 = vmatprep.subr.mxu0 0.0
        %4371 = vmatpush1.msra.mxu0 0.0
        %4372 = vmatprep.subr.mxu0 0.0
        %4373 = vmatpush1.msra.mxu0 0.0
        %4374 = vmatprep.subr.mxu0 0.0
        %4375 = vmatpush1.msra.mxu0 0.0
        %4376 = vmatprep.subr.mxu0 0.0
        %4377 = vmatpush1.msra.mxu0 0.0
        %4378 = vmatprep.subr.mxu0 0.0
        %4379 = vmatpush1.msra.mxu0 0.0
        %4380 = vmatprep.subr.mxu0 0.0
        %4381 = vmatpush1.msra.mxu0 0.0
        %4382 = vmatprep.subr.mxu0 0.0
        %4383 = vmatpush1.msra.mxu0 0.0
        %4384 = vmatprep.subr.mxu0 0.0
        %4385 = vmatpush1.msra.mxu0 0.0
        %4386 = vmatprep.subr.mxu0 0.0
        %4387 = vmatpush1.msra.mxu0 0.0
        %4388 = vmatprep.subr.mxu0 0.0
        %4389 = vmatpush1.msra.mxu0 0.0
        %4390 = vmatprep.subr.mxu0 0.0
        %4391 = vmatpush1.msra.mxu0 0.0
        %4392 = vmatprep.subr.mxu0 0.0
        %4393 = vmatpush1.msra.mxu0 0.0
        %4394 = vmatprep.subr.mxu0 0.0
        %4395 = vmatpush1.msra.mxu0 0.0
        %4396 = vmatprep.subr.mxu0 0.0
        %4397 = vmatpush1.msra.mxu0 0.0
        %4398 = vmatprep.subr.mxu0 0.0
        %4399 = vmatpush1.msra.mxu0 0.0
        %4400 = vmatprep.subr.mxu0 0.0
        %4401 = vmatpush1.msra.mxu0 0.0
        %4402 = vmatprep.subr.mxu0 0.0
        %4403 = vmatpush1.msra.mxu0 0.0
        %4404 = vmatprep.subr.mxu0 0.0
        %4405 = vmatpush1.msra.mxu0 0.0
        %4406 = vmatprep.subr.mxu0 0.0
        %4407 = vmatpush1.msra.mxu0 0.0
        %4408 = vmatprep.subr.mxu0 0.0
        %4409 = vmatpush1.msra.mxu0 0.0
        %4410 = vmatprep.subr.mxu0 0.0
        %4411 = vmatpush1.msra.mxu0 0.0
        %4412 = vmatprep.subr.mxu0 0.0
        %4413 = vmatpush1.msra.mxu0 0.0
        %4414 = vmatprep.subr.mxu0 0.0
        %4415 = vmatpush1.msra.mxu0 0.0
        %4416 = vmatprep.subr.mxu0 0.0
        %4417 = vmatpush1.msra.mxu0 0.0
        %4418 = vmatprep.mubr.f32.mxu0 0.0
        %4419 = vmatmul.mubr.f32.gmra.mrb[0].mxu0 %v4343
        %v4420 = vpop.f32.mrb[0].mxu0
        %v4421 = vadd.f32 %v4320, %v4420
        %v4422 = vpop.f32.mrb[0].mxu0
        %v4423 = vadd.f32 %v4322, %v4422
        %4424 = vmatprep.mubr.f32.mxu0 0.0
        %4425 = vmatmul.mubr.f32.gmra.mrb[0].mxu0 %v4346
        %v4426 = vpop.f32.mrb[0].mxu0
        %v4427 = vadd.f32 %v4326, %v4426
        %v4428 = vpop.f32.mrb[0].mxu0
        %v4429 = vadd.f32 %v4328, %v4428
        %4430 = vmatprep.mubr.f32.mxu0 0.0
        %4431 = vmatmul.mubr.f32.gmra.mrb[0].mxu0 %v4349
        %v4432 = vpop.f32.mrb[0].mxu0
        %v4433 = vadd.f32 %v4332, %v4432
        %v4434 = vpop.f32.mrb[0].mxu0
        %v4435 = vadd.f32 %v4334, %v4434
        %4436 = vmatprep.mubr.f32.mxu0 0.0
        %4437 = vmatmul.mubr.f32.gmra.mrb[0].mxu0 %v4352
        %v4438 = vpop.f32.mrb[0].mxu0
        %v4439 = vadd.f32 %v4338, %v4438
        %v4440 = vpop.f32.mrb[0].mxu0
        %v4441 = vadd.f32 %v4340, %v4440
        %4442 = vdwg.mxu0
        %4443 = vrot.lane.b32.xlu0 %v4159, 15
        %v4444 = vpop.permute.xlu0 %4443
        %4445 = vrot.lane.b32.xlu0 %v4161, 15
        %v4446 = vpop.permute.xlu0 %4445
        %4447 = vrot.lane.b32.xlu0 %v4163, 15
        %v4448 = vpop.permute.xlu0 %4447
        %4449 = vrot.lane.b32.xlu0 %v4165, 15
        %v4450 = vpop.permute.xlu0 %4449
        %4451 = vrot.lane.b32.xlu0 %v4160, 15
        %v4452 = vpop.permute.xlu0 %4451
        %4453 = vrot.lane.b32.xlu0 %v4162, 15
        %v4454 = vpop.permute.xlu0 %4453
        %4455 = vrot.lane.b32.xlu0 %v4164, 15
        %v4456 = vpop.permute.xlu0 %4455
        %4457 = vrot.lane.b32.xlu0 %v4166, 15
        %v4458 = vpop.permute.xlu0 %4457
        %v4459 = vsel %vm499, %v4444, %v4452
        %v4460 = vsel %vm499, %v4446, %v4454
        %v4461 = vsel %vm499, %v4448, %v4456
        %v4462 = vsel %vm499, %v4450, %v4458
        %v4463 = vsel %vm499, %v4452, %v4444
        %v4464 = vsel %vm499, %v4454, %v4446
        %v4465 = vsel %vm499, %v4456, %v4448
        %v4466 = vsel %vm499, %v4458, %v4450
        %v4467 = vsel %vm514, %v4463, 0.0
        %v4468 = vsel %vm515, %v4459, 0.0
        %v4469 = vsel %vm514, %v4464, 0.0
        %v4470 = vsel %vm515, %v4460, 0.0
        %v4471 = vsel %vm514, %v4465, 0.0
        %v4472 = vsel %vm515, %v4461, 0.0
        %v4473 = vsel %vm514, %v4466, 0.0
        %v4474 = vsel %vm515, %v4462, 0.0
        %s4475 = scalar_lea.vmem [#allocation2], 928
        %v4476 = vld [vmem:[%s4475] sm:$0xff]
        %v4477 = vld [vmem:[%s4475 + $0x8] sm:$0xff]
        %v4478 = vld [vmem:[%s4475 + $0x10] sm:$0xff]
        %v4479 = vld [vmem:[%s4475 + $0x18] sm:$0xff]
        %v4481 = vsel %vm280, %v4476, 0
        %v4484 = vsel %vm280, %v4477, 0
        %v4487 = vsel %vm280, %v4478, 0
        %v4490 = vsel %vm280, %v4479, 0
        %4492 = vmatprep.subr.mxu0 %v4468
        %4493 = vmatpush1.msra.mxu0 %v4467
        %4494 = vmatprep.subr.mxu0 %v4470
        %4495 = vmatpush1.msra.mxu0 %v4469
        %4496 = vmatprep.subr.mxu0 %v4472
        %4497 = vmatpush1.msra.mxu0 %v4471
        %4498 = vmatprep.subr.mxu0 %v4474
        %4499 = vmatpush1.msra.mxu0 %v4473
        %4500 = vmatprep.subr.mxu0 0.0
        %4501 = vmatpush1.msra.mxu0 0.0
        %4502 = vmatprep.subr.mxu0 0.0
        %4503 = vmatpush1.msra.mxu0 0.0
        %4504 = vmatprep.subr.mxu0 0.0
        %4505 = vmatpush1.msra.mxu0 0.0
        %4506 = vmatprep.subr.mxu0 0.0
        %4507 = vmatpush1.msra.mxu0 0.0
        %4508 = vmatprep.subr.mxu0 0.0
        %4509 = vmatpush1.msra.mxu0 0.0
        %4510 = vmatprep.subr.mxu0 0.0
        %4511 = vmatpush1.msra.mxu0 0.0
        %4512 = vmatprep.subr.mxu0 0.0
        %4513 = vmatpush1.msra.mxu0 0.0
        %4514 = vmatprep.subr.mxu0 0.0
        %4515 = vmatpush1.msra.mxu0 0.0
        %4516 = vmatprep.subr.mxu0 0.0
        %4517 = vmatpush1.msra.mxu0 0.0
        %4518 = vmatprep.subr.mxu0 0.0
        %4519 = vmatpush1.msra.mxu0 0.0
        %4520 = vmatprep.subr.mxu0 0.0
        %4521 = vmatpush1.msra.mxu0 0.0
        %4522 = vmatprep.subr.mxu0 0.0
        %4523 = vmatpush1.msra.mxu0 0.0
        %4524 = vmatprep.subr.mxu0 0.0
        %4525 = vmatpush1.msra.mxu0 0.0
        %4526 = vmatprep.subr.mxu0 0.0
        %4527 = vmatpush1.msra.mxu0 0.0
        %4528 = vmatprep.subr.mxu0 0.0
        %4529 = vmatpush1.msra.mxu0 0.0
        %4530 = vmatprep.subr.mxu0 0.0
        %4531 = vmatpush1.msra.mxu0 0.0
        %4532 = vmatprep.subr.mxu0 0.0
        %4533 = vmatpush1.msra.mxu0 0.0
        %4534 = vmatprep.subr.mxu0 0.0
        %4535 = vmatpush1.msra.mxu0 0.0
        %4536 = vmatprep.subr.mxu0 0.0
        %4537 = vmatpush1.msra.mxu0 0.0
        %4538 = vmatprep.subr.mxu0 0.0
        %4539 = vmatpush1.msra.mxu0 0.0
        %4540 = vmatprep.subr.mxu0 0.0
        %4541 = vmatpush1.msra.mxu0 0.0
        %4542 = vmatprep.subr.mxu0 0.0
        %4543 = vmatpush1.msra.mxu0 0.0
        %4544 = vmatprep.subr.mxu0 0.0
        %4545 = vmatpush1.msra.mxu0 0.0
        %4546 = vmatprep.subr.mxu0 0.0
        %4547 = vmatpush1.msra.mxu0 0.0
        %4548 = vmatprep.subr.mxu0 0.0
        %4549 = vmatpush1.msra.mxu0 0.0
        %4550 = vmatprep.subr.mxu0 0.0
        %4551 = vmatpush1.msra.mxu0 0.0
        %4552 = vmatprep.subr.mxu0 0.0
        %4553 = vmatpush1.msra.mxu0 0.0
        %4554 = vmatprep.subr.mxu0 0.0
        %4555 = vmatpush1.msra.mxu0 0.0
        %4556 = vmatprep.mubr.f32.mxu0 0.0
        %4557 = vmatmul.mubr.f32.gmra.mrb[0].mxu0 %v4481
        %v4558 = vpop.f32.mrb[0].mxu0
        %v4559 = vadd.f32 0.0, %v4558
        %v4560 = vpop.f32.mrb[0].mxu0
        %v4561 = vadd.f32 0.0, %v4560
        %4562 = vmatprep.mubr.f32.mxu0 0.0
        %4563 = vmatmul.mubr.f32.gmra.mrb[0].mxu0 %v4484
        %v4564 = vpop.f32.mrb[0].mxu0
        %v4565 = vadd.f32 0.0, %v4564
        %v4566 = vpop.f32.mrb[0].mxu0
        %v4567 = vadd.f32 0.0, %v4566
        %4568 = vmatprep.mubr.f32.mxu0 0.0
        %4569 = vmatmul.mubr.f32.gmra.mrb[0].mxu0 %v4487
        %v4570 = vpop.f32.mrb[0].mxu0
        %v4571 = vadd.f32 0.0, %v4570
        %v4572 = vpop.f32.mrb[0].mxu0
        %v4573 = vadd.f32 0.0, %v4572
        %4574 = vmatprep.mubr.f32.mxu0 0.0
        %4575 = vmatmul.mubr.f32.gmra.mrb[0].mxu0 %v4490
        %v4576 = vpop.f32.mrb[0].mxu0
        %v4577 = vadd.f32 0.0, %v4576
        %v4578 = vpop.f32.mrb[0].mxu0
        %v4579 = vadd.f32 0.0, %v4578
        %4580 = vdwg.mxu0
        %v4581 = vadd.f32 %v4421, %v4559
        %v4582 = vadd.f32 %v4423, %v4561
        %v4583 = vadd.f32 %v4427, %v4565
        %v4584 = vadd.f32 %v4429, %v4567
        %v4585 = vadd.f32 %v4433, %v4571
        %v4586 = vadd.f32 %v4435, %v4573
        %v4587 = vadd.f32 %v4439, %v4577
        %v4588 = vadd.f32 %v4441, %v4579
        %4589 = vrot.lane.b32.xlu0 %v4159, 1
        %v4590 = vpop.permute.xlu0 %4589
        %4591 = vrot.lane.b32.xlu0 %v4161, 1
        %v4592 = vpop.permute.xlu0 %4591
        %4593 = vrot.lane.b32.xlu0 %v4163, 1
        %v4594 = vpop.permute.xlu0 %4593
        %4595 = vrot.lane.b32.xlu0 %v4165, 1
        %v4596 = vpop.permute.xlu0 %4595
        %4597 = vrot.lane.b32.xlu0 %v4160, 1
        %v4598 = vpop.permute.xlu0 %4597
        %4599 = vrot.lane.b32.xlu0 %v4162, 1
        %v4600 = vpop.permute.xlu0 %4599
        %4601 = vrot.lane.b32.xlu0 %v4164, 1
        %v4602 = vpop.permute.xlu0 %4601
        %4603 = vrot.lane.b32.xlu0 %v4166, 1
        %v4604 = vpop.permute.xlu0 %4603
        %v4605 = vsel %vm654, %v4590, %v4598
        %v4606 = vsel %vm654, %v4592, %v4600
        %v4607 = vsel %vm654, %v4594, %v4602
        %v4608 = vsel %vm654, %v4596, %v4604
        %v4609 = vsel %vm654, %v4598, %v4590
        %v4610 = vsel %vm654, %v4600, %v4592
        %v4611 = vsel %vm654, %v4602, %v4594
        %v4612 = vsel %vm654, %v4604, %v4596
        %v4613 = vsel %vm665, %v4609, 0.0
        %v4614 = vsel %vm666, %v4605, 0.0
        %v4615 = vsel %vm665, %v4610, 0.0
        %v4616 = vsel %vm666, %v4606, 0.0
        %v4617 = vsel %vm665, %v4611, 0.0
        %v4618 = vsel %vm666, %v4607, 0.0
        %v4619 = vsel %vm665, %v4612, 0.0
        %v4620 = vsel %vm666, %v4608, 0.0
        %s4621 = scalar_lea.vmem [#allocation2], 960
        %v4622 = vld [vmem:[%s4621] sm:$0xff]
        %v4623 = vld [vmem:[%s4621 + $0x8] sm:$0xff]
        %v4624 = vld [vmem:[%s4621 + $0x10] sm:$0xff]
        %v4625 = vld [vmem:[%s4621 + $0x18] sm:$0xff]
        %v4627 = vsel %vm280, %v4622, 0
        %v4630 = vsel %vm280, %v4623, 0
        %v4633 = vsel %vm280, %v4624, 0
        %v4636 = vsel %vm280, %v4625, 0
        %4638 = vmatprep.subr.mxu0 %v4614
        %4639 = vmatpush1.msra.mxu0 %v4613
        %4640 = vmatprep.subr.mxu0 %v4616
        %4641 = vmatpush1.msra.mxu0 %v4615
        %4642 = vmatprep.subr.mxu0 %v4618
        %4643 = vmatpush1.msra.mxu0 %v4617
        %4644 = vmatprep.subr.mxu0 %v4620
        %4645 = vmatpush1.msra.mxu0 %v4619
        %4646 = vmatprep.subr.mxu0 0.0
        %4647 = vmatpush1.msra.mxu0 0.0
        %4648 = vmatprep.subr.mxu0 0.0
        %4649 = vmatpush1.msra.mxu0 0.0
        %4650 = vmatprep.subr.mxu0 0.0
        %4651 = vmatpush1.msra.mxu0 0.0
        %4652 = vmatprep.subr.mxu0 0.0
        %4653 = vmatpush1.msra.mxu0 0.0
        %4654 = vmatprep.subr.mxu0 0.0
        %4655 = vmatpush1.msra.mxu0 0.0
        %4656 = vmatprep.subr.mxu0 0.0
        %4657 = vmatpush1.msra.mxu0 0.0
        %4658 = vmatprep.subr.mxu0 0.0
        %4659 = vmatpush1.msra.mxu0 0.0
        %4660 = vmatprep.subr.mxu0 0.0
        %4661 = vmatpush1.msra.mxu0 0.0
        %4662 = vmatprep.subr.mxu0 0.0
        %4663 = vmatpush1.msra.mxu0 0.0
        %4664 = vmatprep.subr.mxu0 0.0
        %4665 = vmatpush1.msra.mxu0 0.0
        %4666 = vmatprep.subr.mxu0 0.0
        %4667 = vmatpush1.msra.mxu0 0.0
        %4668 = vmatprep.subr.mxu0 0.0
        %4669 = vmatpush1.msra.mxu0 0.0
        %4670 = vmatprep.subr.mxu0 0.0
        %4671 = vmatpush1.msra.mxu0 0.0
        %4672 = vmatprep.subr.mxu0 0.0
        %4673 = vmatpush1.msra.mxu0 0.0
        %4674 = vmatprep.subr.mxu0 0.0
        %4675 = vmatpush1.msra.mxu0 0.0
        %4676 = vmatprep.subr.mxu0 0.0
        %4677 = vmatpush1.msra.mxu0 0.0
        %4678 = vmatprep.subr.mxu0 0.0
        %4679 = vmatpush1.msra.mxu0 0.0
        %4680 = vmatprep.subr.mxu0 0.0
        %4681 = vmatpush1.msra.mxu0 0.0
        %4682 = vmatprep.subr.mxu0 0.0
        %4683 = vmatpush1.msra.mxu0 0.0
        %4684 = vmatprep.subr.mxu0 0.0
        %4685 = vmatpush1.msra.mxu0 0.0
        %4686 = vmatprep.subr.mxu0 0.0
        %4687 = vmatpush1.msra.mxu0 0.0
        %4688 = vmatprep.subr.mxu0 0.0
        %4689 = vmatpush1.msra.mxu0 0.0
        %4690 = vmatprep.subr.mxu0 0.0
        %4691 = vmatpush1.msra.mxu0 0.0
        %4692 = vmatprep.subr.mxu0 0.0
        %4693 = vmatpush1.msra.mxu0 0.0
        %4694 = vmatprep.subr.mxu0 0.0
        %4695 = vmatpush1.msra.mxu0 0.0
        %4696 = vmatprep.subr.mxu0 0.0
        %4697 = vmatpush1.msra.mxu0 0.0
        %4698 = vmatprep.subr.mxu0 0.0
        %4699 = vmatpush1.msra.mxu0 0.0
        %4700 = vmatprep.subr.mxu0 0.0
        %4701 = vmatpush1.msra.mxu0 0.0
        %4702 = vmatprep.mubr.f32.mxu0 0.0
        %4703 = vmatmul.mubr.f32.gmra.mrb[0].mxu0 %v4627
        %v4704 = vpop.f32.mrb[0].mxu0
        %v4705 = vadd.f32 0.0, %v4704
        %v4706 = vpop.f32.mrb[0].mxu0
        %v4707 = vadd.f32 0.0, %v4706
        %4708 = vmatprep.mubr.f32.mxu0 0.0
        %4709 = vmatmul.mubr.f32.gmra.mrb[0].mxu0 %v4630
        %v4710 = vpop.f32.mrb[0].mxu0
        %v4711 = vadd.f32 0.0, %v4710
        %v4712 = vpop.f32.mrb[0].mxu0
        %v4713 = vadd.f32 0.0, %v4712
        %4714 = vmatprep.mubr.f32.mxu0 0.0
        %4715 = vmatmul.mubr.f32.gmra.mrb[0].mxu0 %v4633
        %v4716 = vpop.f32.mrb[0].mxu0
        %v4717 = vadd.f32 0.0, %v4716
        %v4718 = vpop.f32.mrb[0].mxu0
        %v4719 = vadd.f32 0.0, %v4718
        %4720 = vmatprep.mubr.f32.mxu0 0.0
        %4721 = vmatmul.mubr.f32.gmra.mrb[0].mxu0 %v4636
        %v4722 = vpop.f32.mrb[0].mxu0
        %v4723 = vadd.f32 0.0, %v4722
        %v4724 = vpop.f32.mrb[0].mxu0
        %v4725 = vadd.f32 0.0, %v4724
        %4726 = vdwg.mxu0
        %v4727 = vadd.f32 %v4581, %v4705
        %v4728 = vadd.f32 %v4582, %v4707
        %v4729 = vadd.f32 %v4583, %v4711
        %v4730 = vadd.f32 %v4584, %v4713
        %v4731 = vadd.f32 %v4585, %v4717
        %v4732 = vadd.f32 %v4586, %v4719
        %v4733 = vadd.f32 %v4587, %v4723
        %v4734 = vadd.f32 %v4588, %v4725
        %s4735 = scalar_lea.vmem [#allocation2], 992
        %v4736 = vld [vmem:[%s4735] sm:$0xff]
        %v4737 = vld [vmem:[%s4735 + $0x8] sm:$0xff]
        %v4738 = vld [vmem:[%s4735 + $0x10] sm:$0xff]
        %v4739 = vld [vmem:[%s4735 + $0x18] sm:$0xff]
        %v4741 = vsel %vm280, %v4736, 0
        %v4744 = vsel %vm280, %v4737, 0
        %v4747 = vsel %vm280, %v4738, 0
        %v4750 = vsel %vm280, %v4739, 0
        %4752 = vmatprep.subr.mxu0 %v4160
        %4753 = vmatpush1.msra.mxu0 %v4159
        %4754 = vmatprep.subr.mxu0 %v4162
        %4755 = vmatpush1.msra.mxu0 %v4161
        %4756 = vmatprep.subr.mxu0 %v4164
        %4757 = vmatpush1.msra.mxu0 %v4163
        %4758 = vmatprep.subr.mxu0 %v4166
        %4759 = vmatpush1.msra.mxu0 %v4165
        %4760 = vmatprep.subr.mxu0 0.0
        %4761 = vmatpush1.msra.mxu0 0.0
        %4762 = vmatprep.subr.mxu0 0.0
        %4763 = vmatpush1.msra.mxu0 0.0
        %4764 = vmatprep.subr.mxu0 0.0
        %4765 = vmatpush1.msra.mxu0 0.0
        %4766 = vmatprep.subr.mxu0 0.0
        %4767 = vmatpush1.msra.mxu0 0.0
        %4768 = vmatprep.subr.mxu0 0.0
        %4769 = vmatpush1.msra.mxu0 0.0
        %4770 = vmatprep.subr.mxu0 0.0
        %4771 = vmatpush1.msra.mxu0 0.0
        %4772 = vmatprep.subr.mxu0 0.0
        %4773 = vmatpush1.msra.mxu0 0.0
        %4774 = vmatprep.subr.mxu0 0.0
        %4775 = vmatpush1.msra.mxu0 0.0
        %4776 = vmatprep.subr.mxu0 0.0
        %4777 = vmatpush1.msra.mxu0 0.0
        %4778 = vmatprep.subr.mxu0 0.0
        %4779 = vmatpush1.msra.mxu0 0.0
        %4780 = vmatprep.subr.mxu0 0.0
        %4781 = vmatpush1.msra.mxu0 0.0
        %4782 = vmatprep.subr.mxu0 0.0
        %4783 = vmatpush1.msra.mxu0 0.0
        %4784 = vmatprep.subr.mxu0 0.0
        %4785 = vmatpush1.msra.mxu0 0.0
        %4786 = vmatprep.subr.mxu0 0.0
        %4787 = vmatpush1.msra.mxu0 0.0
        %4788 = vmatprep.subr.mxu0 0.0
        %4789 = vmatpush1.msra.mxu0 0.0
        %4790 = vmatprep.subr.mxu0 0.0
        %4791 = vmatpush1.msra.mxu0 0.0
        %4792 = vmatprep.subr.mxu0 0.0
        %4793 = vmatpush1.msra.mxu0 0.0
        %4794 = vmatprep.subr.mxu0 0.0
        %4795 = vmatpush1.msra.mxu0 0.0
        %4796 = vmatprep.subr.mxu0 0.0
        %4797 = vmatpush1.msra.mxu0 0.0
        %4798 = vmatprep.subr.mxu0 0.0
        %4799 = vmatpush1.msra.mxu0 0.0
        %4800 = vmatprep.subr.mxu0 0.0
        %4801 = vmatpush1.msra.mxu0 0.0
        %4802 = vmatprep.subr.mxu0 0.0
        %4803 = vmatpush1.msra.mxu0 0.0
        %4804 = vmatprep.subr.mxu0 0.0
        %4805 = vmatpush1.msra.mxu0 0.0
        %4806 = vmatprep.subr.mxu0 0.0
        %4807 = vmatpush1.msra.mxu0 0.0
        %4808 = vmatprep.subr.mxu0 0.0
        %4809 = vmatpush1.msra.mxu0 0.0
        %4810 = vmatprep.subr.mxu0 0.0
        %4811 = vmatpush1.msra.mxu0 0.0
        %4812 = vmatprep.subr.mxu0 0.0
        %4813 = vmatpush1.msra.mxu0 0.0
        %4814 = vmatprep.subr.mxu0 0.0
        %4815 = vmatpush1.msra.mxu0 0.0
        %4816 = vmatprep.mubr.f32.mxu0 0.0
        %4817 = vmatmul.mubr.f32.gmra.mrb[0].mxu0 %v4741
        %v4818 = vpop.f32.mrb[0].mxu0
        %v4819 = vadd.f32 0.0, %v4818
        %v4820 = vpop.f32.mrb[0].mxu0
        %v4821 = vadd.f32 0.0, %v4820
        %4822 = vmatprep.mubr.f32.mxu0 0.0
        %4823 = vmatmul.mubr.f32.gmra.mrb[0].mxu0 %v4744
        %v4824 = vpop.f32.mrb[0].mxu0
        %v4825 = vadd.f32 0.0, %v4824
        %v4826 = vpop.f32.mrb[0].mxu0
        %v4827 = vadd.f32 0.0, %v4826
        %4828 = vmatprep.mubr.f32.mxu0 0.0
        %4829 = vmatmul.mubr.f32.gmra.mrb[0].mxu0 %v4747
        %v4830 = vpop.f32.mrb[0].mxu0
        %v4831 = vadd.f32 0.0, %v4830
        %v4832 = vpop.f32.mrb[0].mxu0
        %v4833 = vadd.f32 0.0, %v4832
        %4834 = vmatprep.mubr.f32.mxu0 0.0
        %4835 = vmatmul.mubr.f32.gmra.mrb[0].mxu0 %v4750
        %v4836 = vpop.f32.mrb[0].mxu0
        %v4837 = vadd.f32 0.0, %v4836
        %v4838 = vpop.f32.mrb[0].mxu0
        %v4839 = vadd.f32 0.0, %v4838
        %4840 = vdwg.mxu0
        %v4841 = vadd.f32 %v4727, %v4819
        %v4842 = vadd.f32 %v4728, %v4821
        %v4843 = vadd.f32 %v4729, %v4825
        %v4844 = vadd.f32 %v4730, %v4827
        %v4845 = vadd.f32 %v4731, %v4831
        %v4846 = vadd.f32 %v4732, %v4833
        %v4847 = vadd.f32 %v4733, %v4837
        %v4848 = vadd.f32 %v4734, %v4839
        %4849 = vrot.lane.b32.xlu0 %v4159, 127
        %v4850 = vpop.permute.xlu0 %4849
        %4851 = vrot.lane.b32.xlu0 %v4161, 127
        %v4852 = vpop.permute.xlu0 %4851
        %4853 = vrot.lane.b32.xlu0 %v4163, 127
        %v4854 = vpop.permute.xlu0 %4853
        %4855 = vrot.lane.b32.xlu0 %v4165, 127
        %v4856 = vpop.permute.xlu0 %4855
        %4857 = vrot.lane.b32.xlu0 %v4160, 127
        %v4858 = vpop.permute.xlu0 %4857
        %4859 = vrot.lane.b32.xlu0 %v4162, 127
        %v4860 = vpop.permute.xlu0 %4859
        %4861 = vrot.lane.b32.xlu0 %v4164, 127
        %v4862 = vpop.permute.xlu0 %4861
        %4863 = vrot.lane.b32.xlu0 %v4166, 127
        %v4864 = vpop.permute.xlu0 %4863
        %v4865 = vsel %vm919, %v4850, %v4858
        %v4866 = vsel %vm919, %v4852, %v4860
        %v4867 = vsel %vm919, %v4854, %v4862
        %v4868 = vsel %vm919, %v4856, %v4864
        %v4869 = vsel %vm919, %v4858, %v4850
        %v4870 = vsel %vm919, %v4860, %v4852
        %v4871 = vsel %vm919, %v4862, %v4854
        %v4872 = vsel %vm919, %v4864, %v4856
        %v4873 = vsel %vm930, %v4865, 0.0
        %v4874 = vsel %vm931, %v4869, 0.0
        %v4875 = vsel %vm930, %v4866, 0.0
        %v4876 = vsel %vm931, %v4870, 0.0
        %v4877 = vsel %vm930, %v4867, 0.0
        %v4878 = vsel %vm931, %v4871, 0.0
        %v4879 = vsel %vm930, %v4868, 0.0
        %v4880 = vsel %vm931, %v4872, 0.0
        %s4881 = scalar_lea.vmem [#allocation2], 1024
        %v4882 = vld [vmem:[%s4881] sm:$0xff]
        %v4883 = vld [vmem:[%s4881 + $0x8] sm:$0xff]
        %v4884 = vld [vmem:[%s4881 + $0x10] sm:$0xff]
        %v4885 = vld [vmem:[%s4881 + $0x18] sm:$0xff]
        %v4887 = vsel %vm280, %v4882, 0
        %v4890 = vsel %vm280, %v4883, 0
        %v4893 = vsel %vm280, %v4884, 0
        %v4896 = vsel %vm280, %v4885, 0
        %4898 = vmatprep.subr.mxu0 %v4874
        %4899 = vmatpush1.msra.mxu0 %v4873
        %4900 = vmatprep.subr.mxu0 %v4876
        %4901 = vmatpush1.msra.mxu0 %v4875
        %4902 = vmatprep.subr.mxu0 %v4878
        %4903 = vmatpush1.msra.mxu0 %v4877
        %4904 = vmatprep.subr.mxu0 %v4880
        %4905 = vmatpush1.msra.mxu0 %v4879
        %4906 = vmatprep.subr.mxu0 0.0
        %4907 = vmatpush1.msra.mxu0 0.0
        %4908 = vmatprep.subr.mxu0 0.0
        %4909 = vmatpush1.msra.mxu0 0.0
        %4910 = vmatprep.subr.mxu0 0.0
        %4911 = vmatpush1.msra.mxu0 0.0
        %4912 = vmatprep.subr.mxu0 0.0
        %4913 = vmatpush1.msra.mxu0 0.0
        %4914 = vmatprep.subr.mxu0 0.0
        %4915 = vmatpush1.msra.mxu0 0.0
        %4916 = vmatprep.subr.mxu0 0.0
        %4917 = vmatpush1.msra.mxu0 0.0
        %4918 = vmatprep.subr.mxu0 0.0
        %4919 = vmatpush1.msra.mxu0 0.0
        %4920 = vmatprep.subr.mxu0 0.0
        %4921 = vmatpush1.msra.mxu0 0.0
        %4922 = vmatprep.subr.mxu0 0.0
        %4923 = vmatpush1.msra.mxu0 0.0
        %4924 = vmatprep.subr.mxu0 0.0
        %4925 = vmatpush1.msra.mxu0 0.0
        %4926 = vmatprep.subr.mxu0 0.0
        %4927 = vmatpush1.msra.mxu0 0.0
        %4928 = vmatprep.subr.mxu0 0.0
        %4929 = vmatpush1.msra.mxu0 0.0
        %4930 = vmatprep.subr.mxu0 0.0
        %4931 = vmatpush1.msra.mxu0 0.0
        %4932 = vmatprep.subr.mxu0 0.0
        %4933 = vmatpush1.msra.mxu0 0.0
        %4934 = vmatprep.subr.mxu0 0.0
        %4935 = vmatpush1.msra.mxu0 0.0
        %4936 = vmatprep.subr.mxu0 0.0
        %4937 = vmatpush1.msra.mxu0 0.0
        %4938 = vmatprep.subr.mxu0 0.0
        %4939 = vmatpush1.msra.mxu0 0.0
        %4940 = vmatprep.subr.mxu0 0.0
        %4941 = vmatpush1.msra.mxu0 0.0
        %4942 = vmatprep.subr.mxu0 0.0
        %4943 = vmatpush1.msra.mxu0 0.0
        %4944 = vmatprep.subr.mxu0 0.0
        %4945 = vmatpush1.msra.mxu0 0.0
        %4946 = vmatprep.subr.mxu0 0.0
        %4947 = vmatpush1.msra.mxu0 0.0
        %4948 = vmatprep.subr.mxu0 0.0
        %4949 = vmatpush1.msra.mxu0 0.0
        %4950 = vmatprep.subr.mxu0 0.0
        %4951 = vmatpush1.msra.mxu0 0.0
        %4952 = vmatprep.subr.mxu0 0.0
        %4953 = vmatpush1.msra.mxu0 0.0
        %4954 = vmatprep.subr.mxu0 0.0
        %4955 = vmatpush1.msra.mxu0 0.0
        %4956 = vmatprep.subr.mxu0 0.0
        %4957 = vmatpush1.msra.mxu0 0.0
        %4958 = vmatprep.subr.mxu0 0.0
        %4959 = vmatpush1.msra.mxu0 0.0
        %4960 = vmatprep.subr.mxu0 0.0
        %4961 = vmatpush1.msra.mxu0 0.0
        %4962 = vmatprep.mubr.f32.mxu0 0.0
        %4963 = vmatmul.mubr.f32.gmra.mrb[0].mxu0 %v4887
        %v4964 = vpop.f32.mrb[0].mxu0
        %v4965 = vadd.f32 0.0, %v4964
        %v4966 = vpop.f32.mrb[0].mxu0
        %v4967 = vadd.f32 0.0, %v4966
        %4968 = vmatprep.mubr.f32.mxu0 0.0
        %4969 = vmatmul.mubr.f32.gmra.mrb[0].mxu0 %v4890
        %v4970 = vpop.f32.mrb[0].mxu0
        %v4971 = vadd.f32 0.0, %v4970
        %v4972 = vpop.f32.mrb[0].mxu0
        %v4973 = vadd.f32 0.0, %v4972
        %4974 = vmatprep.mubr.f32.mxu0 0.0
        %4975 = vmatmul.mubr.f32.gmra.mrb[0].mxu0 %v4893
        %v4976 = vpop.f32.mrb[0].mxu0
        %v4977 = vadd.f32 0.0, %v4976
        %v4978 = vpop.f32.mrb[0].mxu0
        %v4979 = vadd.f32 0.0, %v4978
        %4980 = vmatprep.mubr.f32.mxu0 0.0
        %4981 = vmatmul.mubr.f32.gmra.mrb[0].mxu0 %v4896
        %v4982 = vpop.f32.mrb[0].mxu0
        %v4983 = vadd.f32 0.0, %v4982
        %v4984 = vpop.f32.mrb[0].mxu0
        %v4985 = vadd.f32 0.0, %v4984
        %4986 = vdwg.mxu0
        %v4987 = vadd.f32 %v4841, %v4965
        %v4988 = vadd.f32 %v4842, %v4967
        %v4989 = vadd.f32 %v4843, %v4971
        %v4990 = vadd.f32 %v4844, %v4973
        %v4991 = vadd.f32 %v4845, %v4977
        %v4992 = vadd.f32 %v4846, %v4979
        %v4993 = vadd.f32 %v4847, %v4983
        %v4994 = vadd.f32 %v4848, %v4985
        %4995 = vrot.lane.b32.xlu0 %v4159, 113
        %v4996 = vpop.permute.xlu0 %4995
        %4997 = vrot.lane.b32.xlu0 %v4161, 113
        %v4998 = vpop.permute.xlu0 %4997
        %4999 = vrot.lane.b32.xlu0 %v4163, 113
        %v5000 = vpop.permute.xlu0 %4999
        %5001 = vrot.lane.b32.xlu0 %v4165, 113
        %v5002 = vpop.permute.xlu0 %5001
        %5003 = vrot.lane.b32.xlu0 %v4160, 113
        %v5004 = vpop.permute.xlu0 %5003
        %5005 = vrot.lane.b32.xlu0 %v4162, 113
        %v5006 = vpop.permute.xlu0 %5005
        %5007 = vrot.lane.b32.xlu0 %v4164, 113
        %v5008 = vpop.permute.xlu0 %5007
        %5009 = vrot.lane.b32.xlu0 %v4166, 113
        %v5010 = vpop.permute.xlu0 %5009
        %v5011 = vsel %vm1070, %v4996, %v5004
        %v5012 = vsel %vm1070, %v4998, %v5006
        %v5013 = vsel %vm1070, %v5000, %v5008
        %v5014 = vsel %vm1070, %v5002, %v5010
        %v5015 = vsel %vm1070, %v5004, %v4996
        %v5016 = vsel %vm1070, %v5006, %v4998
        %v5017 = vsel %vm1070, %v5008, %v5000
        %v5018 = vsel %vm1070, %v5010, %v5002
        %v5019 = vsel %vm1085, %v5011, 0.0
        %v5020 = vsel %vm1086, %v5015, 0.0
        %v5021 = vsel %vm1085, %v5012, 0.0
        %v5022 = vsel %vm1086, %v5016, 0.0
        %v5023 = vsel %vm1085, %v5013, 0.0
        %v5024 = vsel %vm1086, %v5017, 0.0
        %v5025 = vsel %vm1085, %v5014, 0.0
        %v5026 = vsel %vm1086, %v5018, 0.0
        %s5027 = scalar_lea.vmem [#allocation2], 1056
        %v5028 = vld [vmem:[%s5027] sm:$0xff]
        %v5029 = vld [vmem:[%s5027 + $0x8] sm:$0xff]
        %v5030 = vld [vmem:[%s5027 + $0x10] sm:$0xff]
        %v5031 = vld [vmem:[%s5027 + $0x18] sm:$0xff]
        %v5033 = vsel %vm280, %v5028, 0
        %v5036 = vsel %vm280, %v5029, 0
        %v5039 = vsel %vm280, %v5030, 0
        %v5042 = vsel %vm280, %v5031, 0
        %5044 = vmatprep.subr.mxu0 %v5020
        %5045 = vmatpush1.msra.mxu0 %v5019
        %5046 = vmatprep.subr.mxu0 %v5022
        %5047 = vmatpush1.msra.mxu0 %v5021
        %5048 = vmatprep.subr.mxu0 %v5024
        %5049 = vmatpush1.msra.mxu0 %v5023
        %5050 = vmatprep.subr.mxu0 %v5026
        %5051 = vmatpush1.msra.mxu0 %v5025
        %5052 = vmatprep.subr.mxu0 0.0
        %5053 = vmatpush1.msra.mxu0 0.0
        %5054 = vmatprep.subr.mxu0 0.0
        %5055 = vmatpush1.msra.mxu0 0.0
        %5056 = vmatprep.subr.mxu0 0.0
        %5057 = vmatpush1.msra.mxu0 0.0
        %5058 = vmatprep.subr.mxu0 0.0
        %5059 = vmatpush1.msra.mxu0 0.0
        %5060 = vmatprep.subr.mxu0 0.0
        %5061 = vmatpush1.msra.mxu0 0.0
        %5062 = vmatprep.subr.mxu0 0.0
        %5063 = vmatpush1.msra.mxu0 0.0
        %5064 = vmatprep.subr.mxu0 0.0
        %5065 = vmatpush1.msra.mxu0 0.0
        %5066 = vmatprep.subr.mxu0 0.0
        %5067 = vmatpush1.msra.mxu0 0.0
        %5068 = vmatprep.subr.mxu0 0.0
        %5069 = vmatpush1.msra.mxu0 0.0
        %5070 = vmatprep.subr.mxu0 0.0
        %5071 = vmatpush1.msra.mxu0 0.0
        %5072 = vmatprep.subr.mxu0 0.0
        %5073 = vmatpush1.msra.mxu0 0.0
        %5074 = vmatprep.subr.mxu0 0.0
        %5075 = vmatpush1.msra.mxu0 0.0
        %5076 = vmatprep.subr.mxu0 0.0
        %5077 = vmatpush1.msra.mxu0 0.0
        %5078 = vmatprep.subr.mxu0 0.0
        %5079 = vmatpush1.msra.mxu0 0.0
        %5080 = vmatprep.subr.mxu0 0.0
        %5081 = vmatpush1.msra.mxu0 0.0
        %5082 = vmatprep.subr.mxu0 0.0
        %5083 = vmatpush1.msra.mxu0 0.0
        %5084 = vmatprep.subr.mxu0 0.0
        %5085 = vmatpush1.msra.mxu0 0.0
        %5086 = vmatprep.subr.mxu0 0.0
        %5087 = vmatpush1.msra.mxu0 0.0
        %5088 = vmatprep.subr.mxu0 0.0
        %5089 = vmatpush1.msra.mxu0 0.0
        %5090 = vmatprep.subr.mxu0 0.0
        %5091 = vmatpush1.msra.mxu0 0.0
        %5092 = vmatprep.subr.mxu0 0.0
        %5093 = vmatpush1.msra.mxu0 0.0
        %5094 = vmatprep.subr.mxu0 0.0
        %5095 = vmatpush1.msra.mxu0 0.0
        %5096 = vmatprep.subr.mxu0 0.0
        %5097 = vmatpush1.msra.mxu0 0.0
        %5098 = vmatprep.subr.mxu0 0.0
        %5099 = vmatpush1.msra.mxu0 0.0
        %5100 = vmatprep.subr.mxu0 0.0
        %5101 = vmatpush1.msra.mxu0 0.0
        %5102 = vmatprep.subr.mxu0 0.0
        %5103 = vmatpush1.msra.mxu0 0.0
        %5104 = vmatprep.subr.mxu0 0.0
        %5105 = vmatpush1.msra.mxu0 0.0
        %5106 = vmatprep.subr.mxu0 0.0
        %5107 = vmatpush1.msra.mxu0 0.0
        %5108 = vmatprep.mubr.f32.mxu0 0.0
        %5109 = vmatmul.mubr.f32.gmra.mrb[0].mxu0 %v5033
        %v5110 = vpop.f32.mrb[0].mxu0
        %v5111 = vadd.f32 0.0, %v5110
        %v5112 = vpop.f32.mrb[0].mxu0
        %v5113 = vadd.f32 0.0, %v5112
        %5114 = vmatprep.mubr.f32.mxu0 0.0
        %5115 = vmatmul.mubr.f32.gmra.mrb[0].mxu0 %v5036
        %v5116 = vpop.f32.mrb[0].mxu0
        %v5117 = vadd.f32 0.0, %v5116
        %v5118 = vpop.f32.mrb[0].mxu0
        %v5119 = vadd.f32 0.0, %v5118
        %5120 = vmatprep.mubr.f32.mxu0 0.0
        %5121 = vmatmul.mubr.f32.gmra.mrb[0].mxu0 %v5039
        %v5122 = vpop.f32.mrb[0].mxu0
        %v5123 = vadd.f32 0.0, %v5122
        %v5124 = vpop.f32.mrb[0].mxu0
        %v5125 = vadd.f32 0.0, %v5124
        %5126 = vmatprep.mubr.f32.mxu0 0.0
        %5127 = vmatmul.mubr.f32.gmra.mrb[0].mxu0 %v5042
        %v5128 = vpop.f32.mrb[0].mxu0
        %v5129 = vadd.f32 0.0, %v5128
        %v5130 = vpop.f32.mrb[0].mxu0
        %v5131 = vadd.f32 0.0, %v5130
        %5132 = vdwg.mxu0
        %v5133 = vadd.f32 %v4987, %v5111
        %v5134 = vadd.f32 %v4988, %v5113
        %v5135 = vadd.f32 %v4989, %v5117
        %v5136 = vadd.f32 %v4990, %v5119
        %v5137 = vadd.f32 %v4991, %v5123
        %v5138 = vadd.f32 %v4992, %v5125
        %v5139 = vadd.f32 %v4993, %v5129
        %v5140 = vadd.f32 %v4994, %v5131
        %5141 = vrot.lane.b32.xlu0 %v4159, 112
        %v5142 = vpop.permute.xlu0 %5141
        %5143 = vrot.lane.b32.xlu0 %v4161, 112
        %v5144 = vpop.permute.xlu0 %5143
        %5145 = vrot.lane.b32.xlu0 %v4163, 112
        %v5146 = vpop.permute.xlu0 %5145
        %5147 = vrot.lane.b32.xlu0 %v4165, 112
        %v5148 = vpop.permute.xlu0 %5147
        %5149 = vrot.lane.b32.xlu0 %v4160, 112
        %v5150 = vpop.permute.xlu0 %5149
        %5151 = vrot.lane.b32.xlu0 %v4162, 112
        %v5152 = vpop.permute.xlu0 %5151
        %5153 = vrot.lane.b32.xlu0 %v4164, 112
        %v5154 = vpop.permute.xlu0 %5153
        %5155 = vrot.lane.b32.xlu0 %v4166, 112
        %v5156 = vpop.permute.xlu0 %5155
        %v5157 = vsel %vm1225, %v5142, %v5150
        %v5158 = vsel %vm1225, %v5144, %v5152
        %v5159 = vsel %vm1225, %v5146, %v5154
        %v5160 = vsel %vm1225, %v5148, %v5156
        %v5161 = vsel %vm1225, %v5150, %v5142
        %v5162 = vsel %vm1225, %v5152, %v5144
        %v5163 = vsel %vm1225, %v5154, %v5146
        %v5164 = vsel %vm1225, %v5156, %v5148
        %v5165 = vsel %vm1236, %v5157, 0.0
        %v5166 = vsel %vm1237, %v5161, 0.0
        %v5167 = vsel %vm1236, %v5158, 0.0
        %v5168 = vsel %vm1237, %v5162, 0.0
        %v5169 = vsel %vm1236, %v5159, 0.0
        %v5170 = vsel %vm1237, %v5163, 0.0
        %v5171 = vsel %vm1236, %v5160, 0.0
        %v5172 = vsel %vm1237, %v5164, 0.0
        %s5173 = scalar_lea.vmem [#allocation2], 1088
        %v5174 = vld [vmem:[%s5173] sm:$0xff]
        %v5175 = vld [vmem:[%s5173 + $0x8] sm:$0xff]
        %v5176 = vld [vmem:[%s5173 + $0x10] sm:$0xff]
        %v5177 = vld [vmem:[%s5173 + $0x18] sm:$0xff]
        %v5179 = vsel %vm280, %v5174, 0
        %v5182 = vsel %vm280, %v5175, 0
        %v5185 = vsel %vm280, %v5176, 0
        %v5188 = vsel %vm280, %v5177, 0
        %5190 = vmatprep.subr.mxu0 %v5166
        %5191 = vmatpush1.msra.mxu0 %v5165
        %5192 = vmatprep.subr.mxu0 %v5168
        %5193 = vmatpush1.msra.mxu0 %v5167
        %5194 = vmatprep.subr.mxu0 %v5170
        %5195 = vmatpush1.msra.mxu0 %v5169
        %5196 = vmatprep.subr.mxu0 %v5172
        %5197 = vmatpush1.msra.mxu0 %v5171
        %5198 = vmatprep.subr.mxu0 0.0
        %5199 = vmatpush1.msra.mxu0 0.0
        %5200 = vmatprep.subr.mxu0 0.0
        %5201 = vmatpush1.msra.mxu0 0.0
        %5202 = vmatprep.subr.mxu0 0.0
        %5203 = vmatpush1.msra.mxu0 0.0
        %5204 = vmatprep.subr.mxu0 0.0
        %5205 = vmatpush1.msra.mxu0 0.0
        %5206 = vmatprep.subr.mxu0 0.0
        %5207 = vmatpush1.msra.mxu0 0.0
        %5208 = vmatprep.subr.mxu0 0.0
        %5209 = vmatpush1.msra.mxu0 0.0
        %5210 = vmatprep.subr.mxu0 0.0
        %5211 = vmatpush1.msra.mxu0 0.0
        %5212 = vmatprep.subr.mxu0 0.0
        %5213 = vmatpush1.msra.mxu0 0.0
        %5214 = vmatprep.subr.mxu0 0.0
        %5215 = vmatpush1.msra.mxu0 0.0
        %5216 = vmatprep.subr.mxu0 0.0
        %5217 = vmatpush1.msra.mxu0 0.0
        %5218 = vmatprep.subr.mxu0 0.0
        %5219 = vmatpush1.msra.mxu0 0.0
        %5220 = vmatprep.subr.mxu0 0.0
        %5221 = vmatpush1.msra.mxu0 0.0
        %5222 = vmatprep.subr.mxu0 0.0
        %5223 = vmatpush1.msra.mxu0 0.0
        %5224 = vmatprep.subr.mxu0 0.0
        %5225 = vmatpush1.msra.mxu0 0.0
        %5226 = vmatprep.subr.mxu0 0.0
        %5227 = vmatpush1.msra.mxu0 0.0
        %5228 = vmatprep.subr.mxu0 0.0
        %5229 = vmatpush1.msra.mxu0 0.0
        %5230 = vmatprep.subr.mxu0 0.0
        %5231 = vmatpush1.msra.mxu0 0.0
        %5232 = vmatprep.subr.mxu0 0.0
        %5233 = vmatpush1.msra.mxu0 0.0
        %5234 = vmatprep.subr.mxu0 0.0
        %5235 = vmatpush1.msra.mxu0 0.0
        %5236 = vmatprep.subr.mxu0 0.0
        %5237 = vmatpush1.msra.mxu0 0.0
        %5238 = vmatprep.subr.mxu0 0.0
        %5239 = vmatpush1.msra.mxu0 0.0
        %5240 = vmatprep.subr.mxu0 0.0
        %5241 = vmatpush1.msra.mxu0 0.0
        %5242 = vmatprep.subr.mxu0 0.0
        %5243 = vmatpush1.msra.mxu0 0.0
        %5244 = vmatprep.subr.mxu0 0.0
        %5245 = vmatpush1.msra.mxu0 0.0
        %5246 = vmatprep.subr.mxu0 0.0
        %5247 = vmatpush1.msra.mxu0 0.0
        %5248 = vmatprep.subr.mxu0 0.0
        %5249 = vmatpush1.msra.mxu0 0.0
        %5250 = vmatprep.subr.mxu0 0.0
        %5251 = vmatpush1.msra.mxu0 0.0
        %5252 = vmatprep.subr.mxu0 0.0
        %5253 = vmatpush1.msra.mxu0 0.0
        %5254 = vmatprep.mubr.f32.mxu0 0.0
        %5255 = vmatmul.mubr.f32.gmra.mrb[0].mxu0 %v5179
        %v5256 = vpop.f32.mrb[0].mxu0
        %v5257 = vadd.f32 0.0, %v5256
        %v5258 = vpop.f32.mrb[0].mxu0
        %v5259 = vadd.f32 0.0, %v5258
        %5260 = vmatprep.mubr.f32.mxu0 0.0
        %5261 = vmatmul.mubr.f32.gmra.mrb[0].mxu0 %v5182
        %v5262 = vpop.f32.mrb[0].mxu0
        %v5263 = vadd.f32 0.0, %v5262
        %v5264 = vpop.f32.mrb[0].mxu0
        %v5265 = vadd.f32 0.0, %v5264
        %5266 = vmatprep.mubr.f32.mxu0 0.0
        %5267 = vmatmul.mubr.f32.gmra.mrb[0].mxu0 %v5185
        %v5268 = vpop.f32.mrb[0].mxu0
        %v5269 = vadd.f32 0.0, %v5268
        %v5270 = vpop.f32.mrb[0].mxu0
        %v5271 = vadd.f32 0.0, %v5270
        %5272 = vmatprep.mubr.f32.mxu0 0.0
        %5273 = vmatmul.mubr.f32.gmra.mrb[0].mxu0 %v5188
        %v5274 = vpop.f32.mrb[0].mxu0
        %v5275 = vadd.f32 0.0, %v5274
        %v5276 = vpop.f32.mrb[0].mxu0
        %v5277 = vadd.f32 0.0, %v5276
        %5278 = vdwg.mxu0
        %v5279 = vadd.f32 %v5133, %v5257
        %v5280 = vadd.f32 %v5134, %v5259
        %v5281 = vadd.f32 %v5135, %v5263
        %v5282 = vadd.f32 %v5136, %v5265
        %v5283 = vadd.f32 %v5137, %v5269
        %v5284 = vadd.f32 %v5138, %v5271
        %v5285 = vadd.f32 %v5139, %v5275
        %v5286 = vadd.f32 %v5140, %v5277
        %5287 = vrot.lane.b32.xlu0 %v4159, 111
        %v5288 = vpop.permute.xlu0 %5287
        %5289 = vrot.lane.b32.xlu0 %v4161, 111
        %v5290 = vpop.permute.xlu0 %5289
        %5291 = vrot.lane.b32.xlu0 %v4163, 111
        %v5292 = vpop.permute.xlu0 %5291
        %5293 = vrot.lane.b32.xlu0 %v4165, 111
        %v5294 = vpop.permute.xlu0 %5293
        %5295 = vrot.lane.b32.xlu0 %v4160, 111
        %v5296 = vpop.permute.xlu0 %5295
        %5297 = vrot.lane.b32.xlu0 %v4162, 111
        %v5298 = vpop.permute.xlu0 %5297
        %5299 = vrot.lane.b32.xlu0 %v4164, 111
        %v5300 = vpop.permute.xlu0 %5299
        %5301 = vrot.lane.b32.xlu0 %v4166, 111
        %v5302 = vpop.permute.xlu0 %5301
        %v5303 = vsel %vm1376, %v5288, %v5296
        %v5304 = vsel %vm1376, %v5290, %v5298
        %v5305 = vsel %vm1376, %v5292, %v5300
        %v5306 = vsel %vm1376, %v5294, %v5302
        %v5307 = vsel %vm1376, %v5296, %v5288
        %v5308 = vsel %vm1376, %v5298, %v5290
        %v5309 = vsel %vm1376, %v5300, %v5292
        %v5310 = vsel %vm1376, %v5302, %v5294
        %v5311 = vsel %vm1389, %v5303, 0.0
        %v5312 = vsel %vm1390, %v5307, 0.0
        %v5313 = vsel %vm1389, %v5304, 0.0
        %v5314 = vsel %vm1390, %v5308, 0.0
        %v5315 = vsel %vm1389, %v5305, 0.0
        %v5316 = vsel %vm1390, %v5309, 0.0
        %v5317 = vsel %vm1389, %v5306, 0.0
        %v5318 = vsel %vm1390, %v5310, 0.0
        %s5319 = scalar_lea.vmem [#allocation2], 1120
        %v5320 = vld [vmem:[%s5319] sm:$0xff]
        %v5321 = vld [vmem:[%s5319 + $0x8] sm:$0xff]
        %v5322 = vld [vmem:[%s5319 + $0x10] sm:$0xff]
        %v5323 = vld [vmem:[%s5319 + $0x18] sm:$0xff]
        %v5325 = vsel %vm280, %v5320, 0
        %v5328 = vsel %vm280, %v5321, 0
        %v5331 = vsel %vm280, %v5322, 0
        %v5334 = vsel %vm280, %v5323, 0
        %5336 = vmatprep.subr.mxu0 %v5312
        %5337 = vmatpush1.msra.mxu0 %v5311
        %5338 = vmatprep.subr.mxu0 %v5314
        %5339 = vmatpush1.msra.mxu0 %v5313
        %5340 = vmatprep.subr.mxu0 %v5316
        %5341 = vmatpush1.msra.mxu0 %v5315
        %5342 = vmatprep.subr.mxu0 %v5318
        %5343 = vmatpush1.msra.mxu0 %v5317
        %5344 = vmatprep.subr.mxu0 0.0
        %5345 = vmatpush1.msra.mxu0 0.0
        %5346 = vmatprep.subr.mxu0 0.0
        %5347 = vmatpush1.msra.mxu0 0.0
        %5348 = vmatprep.subr.mxu0 0.0
        %5349 = vmatpush1.msra.mxu0 0.0
        %5350 = vmatprep.subr.mxu0 0.0
        %5351 = vmatpush1.msra.mxu0 0.0
        %5352 = vmatprep.subr.mxu0 0.0
        %5353 = vmatpush1.msra.mxu0 0.0
        %5354 = vmatprep.subr.mxu0 0.0
        %5355 = vmatpush1.msra.mxu0 0.0
        %5356 = vmatprep.subr.mxu0 0.0
        %5357 = vmatpush1.msra.mxu0 0.0
        %5358 = vmatprep.subr.mxu0 0.0
        %5359 = vmatpush1.msra.mxu0 0.0
        %5360 = vmatprep.subr.mxu0 0.0
        %5361 = vmatpush1.msra.mxu0 0.0
        %5362 = vmatprep.subr.mxu0 0.0
        %5363 = vmatpush1.msra.mxu0 0.0
        %5364 = vmatprep.subr.mxu0 0.0
        %5365 = vmatpush1.msra.mxu0 0.0
        %5366 = vmatprep.subr.mxu0 0.0
        %5367 = vmatpush1.msra.mxu0 0.0
        %5368 = vmatprep.subr.mxu0 0.0
        %5369 = vmatpush1.msra.mxu0 0.0
        %5370 = vmatprep.subr.mxu0 0.0
        %5371 = vmatpush1.msra.mxu0 0.0
        %5372 = vmatprep.subr.mxu0 0.0
        %5373 = vmatpush1.msra.mxu0 0.0
        %5374 = vmatprep.subr.mxu0 0.0
        %5375 = vmatpush1.msra.mxu0 0.0
        %5376 = vmatprep.subr.mxu0 0.0
        %5377 = vmatpush1.msra.mxu0 0.0
        %5378 = vmatprep.subr.mxu0 0.0
        %5379 = vmatpush1.msra.mxu0 0.0
        %5380 = vmatprep.subr.mxu0 0.0
        %5381 = vmatpush1.msra.mxu0 0.0
        %5382 = vmatprep.subr.mxu0 0.0
        %5383 = vmatpush1.msra.mxu0 0.0
        %5384 = vmatprep.subr.mxu0 0.0
        %5385 = vmatpush1.msra.mxu0 0.0
        %5386 = vmatprep.subr.mxu0 0.0
        %5387 = vmatpush1.msra.mxu0 0.0
        %5388 = vmatprep.subr.mxu0 0.0
        %5389 = vmatpush1.msra.mxu0 0.0
        %5390 = vmatprep.subr.mxu0 0.0
        %5391 = vmatpush1.msra.mxu0 0.0
        %5392 = vmatprep.subr.mxu0 0.0
        %5393 = vmatpush1.msra.mxu0 0.0
        %5394 = vmatprep.subr.mxu0 0.0
        %5395 = vmatpush1.msra.mxu0 0.0
        %5396 = vmatprep.subr.mxu0 0.0
        %5397 = vmatpush1.msra.mxu0 0.0
        %5398 = vmatprep.subr.mxu0 0.0
        %5399 = vmatpush1.msra.mxu0 0.0
        %5400 = vmatprep.mubr.f32.mxu0 0.0
        %5401 = vmatmul.mubr.f32.gmra.mrb[0].mxu0 %v5325
        %v5402 = vpop.f32.mrb[0].mxu0
        %v5403 = vadd.f32 0.0, %v5402
        %v5404 = vpop.f32.mrb[0].mxu0
        %v5405 = vadd.f32 0.0, %v5404
        %5406 = vmatprep.mubr.f32.mxu0 0.0
        %5407 = vmatmul.mubr.f32.gmra.mrb[0].mxu0 %v5328
        %v5408 = vpop.f32.mrb[0].mxu0
        %v5409 = vadd.f32 0.0, %v5408
        %v5410 = vpop.f32.mrb[0].mxu0
        %v5411 = vadd.f32 0.0, %v5410
        %5412 = vmatprep.mubr.f32.mxu0 0.0
        %5413 = vmatmul.mubr.f32.gmra.mrb[0].mxu0 %v5331
        %v5414 = vpop.f32.mrb[0].mxu0
        %v5415 = vadd.f32 0.0, %v5414
        %v5416 = vpop.f32.mrb[0].mxu0
        %v5417 = vadd.f32 0.0, %v5416
        %5418 = vmatprep.mubr.f32.mxu0 0.0
        %5419 = vmatmul.mubr.f32.gmra.mrb[0].mxu0 %v5334
        %v5420 = vpop.f32.mrb[0].mxu0
        %v5421 = vadd.f32 0.0, %v5420
        %v5422 = vpop.f32.mrb[0].mxu0
        %v5423 = vadd.f32 0.0, %v5422
        %5424 = vdwg.mxu0
        %v5425 = vadd.f32 %v5279, %v5403
        %v5426 = vadd.f32 %v5280, %v5405
        %v5427 = vadd.f32 %v5281, %v5409
        %v5428 = vadd.f32 %v5282, %v5411
        %v5429 = vadd.f32 %v5283, %v5415
        %v5430 = vadd.f32 %v5284, %v5417
        %v5431 = vadd.f32 %v5285, %v5421
        %v5432 = vadd.f32 %v5286, %v5423
        %s5433 = scalar_lea.vmem %s2, 96
        %v5434 = vld [vmem:[%s5433] sm:$0xff]
        %v5435 = vld [vmem:[%s5433 + $0x8] sm:$0xff]
        %v5436 = vld [vmem:[%s5433 + $0x10] sm:$0xff]
        %v5437 = vld [vmem:[%s5433 + $0x18] sm:$0xff]
        %5439 = vset.pattern.permute.xlu0 0
        %5440 = vperm.xlu0 %5439, %v5434
        %v5441 = vpop.permute.xlu0 %5440
        %5444 = vset.pattern.permute.xlu0 0
        %5445 = vperm.xlu0 %5444, %v5435
        %v5446 = vpop.permute.xlu0 %5445
        %5449 = vset.pattern.permute.xlu0 0
        %5450 = vperm.xlu0 %5449, %v5436
        %v5451 = vpop.permute.xlu0 %5450
        %5454 = vset.pattern.permute.xlu0 0
        %5455 = vperm.xlu0 %5454, %v5437
        %v5456 = vpop.permute.xlu0 %5455
        %v5458 = vadd.f32 %v5425, %v5441
        %v5459 = vadd.f32 %v5426, %v5441
        %v5460 = vadd.f32 %v5427, %v5446
        %v5461 = vadd.f32 %v5428, %v5446
        %v5462 = vadd.f32 %v5429, %v5451
        %v5463 = vadd.f32 %v5430, %v5451
        %v5464 = vadd.f32 %v5431, %v5456
        %v5465 = vadd.f32 %v5432, %v5456
        %v5466 = vmax.f32 %v5458, 0.0
        %v5467 = vmax.f32 %v5459, 0.0
        %v5468 = vmax.f32 %v5460, 0.0
        %v5469 = vmax.f32 %v5461, 0.0
        %v5470 = vmax.f32 %v5462, 0.0
        %v5471 = vmax.f32 %v5463, 0.0
        %v5472 = vmax.f32 %v5464, 0.0
        %v5473 = vmax.f32 %v5465, 0.0
        %5474 = vrot.lane.b32.xlu0 %v5466, 17
        %v5475 = vpop.permute.xlu0 %5474
        %5476 = vrot.lane.b32.xlu0 %v5468, 17
        %v5477 = vpop.permute.xlu0 %5476
        %5478 = vrot.lane.b32.xlu0 %v5470, 17
        %v5479 = vpop.permute.xlu0 %5478
        %5480 = vrot.lane.b32.xlu0 %v5472, 17
        %v5481 = vpop.permute.xlu0 %5480
        %5482 = vrot.lane.b32.xlu0 %v5467, 17
        %v5483 = vpop.permute.xlu0 %5482
        %5484 = vrot.lane.b32.xlu0 %v5469, 17
        %v5485 = vpop.permute.xlu0 %5484
        %5486 = vrot.lane.b32.xlu0 %v5471, 17
        %v5487 = vpop.permute.xlu0 %5486
        %5488 = vrot.lane.b32.xlu0 %v5473, 17
        %v5489 = vpop.permute.xlu0 %5488
        %v5490 = vsel %vm207, %v5475, %v5483
        %v5491 = vsel %vm207, %v5477, %v5485
        %v5492 = vsel %vm207, %v5479, %v5487
        %v5493 = vsel %vm207, %v5481, %v5489
        %v5494 = vsel %vm207, %v5483, %v5475
        %v5495 = vsel %vm207, %v5485, %v5477
        %v5496 = vsel %vm207, %v5487, %v5479
        %v5497 = vsel %vm207, %v5489, %v5481
        %v5498 = vsel %vm224, %v5494, 0.0
        %v5499 = vsel %vm225, %v5490, 0.0
        %v5500 = vsel %vm224, %v5495, 0.0
        %v5501 = vsel %vm225, %v5491, 0.0
        %v5502 = vsel %vm224, %v5496, 0.0
        %v5503 = vsel %vm225, %v5492, 0.0
        %v5504 = vsel %vm224, %v5497, 0.0
        %v5505 = vsel %vm225, %v5493, 0.0
        %s5506 = scalar_lea.vmem [#allocation2], 1152
        %v5507 = vld [vmem:[%s5506] sm:$0xff]
        %v5508 = vld [vmem:[%s5506 + $0x8] sm:$0xff]
        %v5509 = vld [vmem:[%s5506 + $0x10] sm:$0xff]
        %v5510 = vld [vmem:[%s5506 + $0x18] sm:$0xff]
        %5511 = vrot.lane.b32.xlu0 %v5466, 16
        %v5512 = vpop.permute.xlu0 %5511
        %5513 = vrot.lane.b32.xlu0 %v5468, 16
        %v5514 = vpop.permute.xlu0 %5513
        %5515 = vrot.lane.b32.xlu0 %v5470, 16
        %v5516 = vpop.permute.xlu0 %5515
        %5517 = vrot.lane.b32.xlu0 %v5472, 16
        %v5518 = vpop.permute.xlu0 %5517
        %5519 = vrot.lane.b32.xlu0 %v5467, 16
        %v5520 = vpop.permute.xlu0 %5519
        %5521 = vrot.lane.b32.xlu0 %v5469, 16
        %v5522 = vpop.permute.xlu0 %5521
        %5523 = vrot.lane.b32.xlu0 %v5471, 16
        %v5524 = vpop.permute.xlu0 %5523
        %5525 = vrot.lane.b32.xlu0 %v5473, 16
        %v5526 = vpop.permute.xlu0 %5525
        %v5527 = vsel %vm254, %v5512, %v5520
        %v5528 = vsel %vm254, %v5514, %v5522
        %v5529 = vsel %vm254, %v5516, %v5524
        %v5530 = vsel %vm254, %v5518, %v5526
        %v5531 = vsel %vm254, %v5520, %v5512
        %v5532 = vsel %vm254, %v5522, %v5514
        %v5533 = vsel %vm254, %v5524, %v5516
        %v5534 = vsel %vm254, %v5526, %v5518
        %v5535 = vsel %vm265, %v5531, 0.0
        %v5536 = vsel %vm266, %v5527, 0.0
        %v5537 = vsel %vm265, %v5532, 0.0
        %v5538 = vsel %vm266, %v5528, 0.0
        %v5539 = vsel %vm265, %v5533, 0.0
        %v5540 = vsel %vm266, %v5529, 0.0
        %v5541 = vsel %vm265, %v5534, 0.0
        %v5542 = vsel %vm266, %v5530, 0.0
        %s5543 = scalar_lea.vmem [#allocation2], 1184
        %v5544 = vld [vmem:[%s5543] sm:$0xff]
        %v5545 = vld [vmem:[%s5543 + $0x8] sm:$0xff]
        %v5546 = vld [vmem:[%s5543 + $0x10] sm:$0xff]
        %v5547 = vld [vmem:[%s5543 + $0x18] sm:$0xff]
        %v5549 = vsel %vm280, %v5544, 0
        %v5552 = vsel %vm280, %v5545, 0
        %v5555 = vsel %vm280, %v5546, 0
        %v5558 = vsel %vm280, %v5547, 0
        %5560 = vmatprep.subr.mxu0 %v5536
        %5561 = vmatpush1.msra.mxu0 %v5535
        %5562 = vmatprep.subr.mxu0 %v5538
        %5563 = vmatpush1.msra.mxu0 %v5537
        %5564 = vmatprep.subr.mxu0 %v5540
        %5565 = vmatpush1.msra.mxu0 %v5539
        %5566 = vmatprep.subr.mxu0 %v5542
        %5567 = vmatpush1.msra.mxu0 %v5541
        %5568 = vmatprep.subr.mxu0 0.0
        %5569 = vmatpush1.msra.mxu0 0.0
        %5570 = vmatprep.subr.mxu0 0.0
        %5571 = vmatpush1.msra.mxu0 0.0
        %5572 = vmatprep.subr.mxu0 0.0
        %5573 = vmatpush1.msra.mxu0 0.0
        %5574 = vmatprep.subr.mxu0 0.0
        %5575 = vmatpush1.msra.mxu0 0.0
        %5576 = vmatprep.subr.mxu0 0.0
        %5577 = vmatpush1.msra.mxu0 0.0
        %5578 = vmatprep.subr.mxu0 0.0
        %5579 = vmatpush1.msra.mxu0 0.0
        %5580 = vmatprep.subr.mxu0 0.0
        %5581 = vmatpush1.msra.mxu0 0.0
        %5582 = vmatprep.subr.mxu0 0.0
        %5583 = vmatpush1.msra.mxu0 0.0
        %5584 = vmatprep.subr.mxu0 0.0
        %5585 = vmatpush1.msra.mxu0 0.0
        %5586 = vmatprep.subr.mxu0 0.0
        %5587 = vmatpush1.msra.mxu0 0.0
        %5588 = vmatprep.subr.mxu0 0.0
        %5589 = vmatpush1.msra.mxu0 0.0
        %5590 = vmatprep.subr.mxu0 0.0
        %5591 = vmatpush1.msra.mxu0 0.0
        %5592 = vmatprep.subr.mxu0 0.0
        %5593 = vmatpush1.msra.mxu0 0.0
        %5594 = vmatprep.subr.mxu0 0.0
        %5595 = vmatpush1.msra.mxu0 0.0
        %5596 = vmatprep.subr.mxu0 0.0
        %5597 = vmatpush1.msra.mxu0 0.0
        %5598 = vmatprep.subr.mxu0 0.0
        %5599 = vmatpush1.msra.mxu0 0.0
        %5600 = vmatprep.subr.mxu0 0.0
        %5601 = vmatpush1.msra.mxu0 0.0
        %5602 = vmatprep.subr.mxu0 0.0
        %5603 = vmatpush1.msra.mxu0 0.0
        %5604 = vmatprep.subr.mxu0 0.0
        %5605 = vmatpush1.msra.mxu0 0.0
        %5606 = vmatprep.subr.mxu0 0.0
        %5607 = vmatpush1.msra.mxu0 0.0
        %5608 = vmatprep.subr.mxu0 0.0
        %5609 = vmatpush1.msra.mxu0 0.0
        %5610 = vmatprep.subr.mxu0 0.0
        %5611 = vmatpush1.msra.mxu0 0.0
        %5612 = vmatprep.subr.mxu0 0.0
        %5613 = vmatpush1.msra.mxu0 0.0
        %5614 = vmatprep.subr.mxu0 0.0
        %5615 = vmatpush1.msra.mxu0 0.0
        %5616 = vmatprep.subr.mxu0 0.0
        %5617 = vmatpush1.msra.mxu0 0.0
        %5618 = vmatprep.subr.mxu0 0.0
        %5619 = vmatpush1.msra.mxu0 0.0
        %5620 = vmatprep.subr.mxu0 0.0
        %5621 = vmatpush1.msra.mxu0 0.0
        %5622 = vmatprep.subr.mxu0 0.0
        %5623 = vmatpush1.msra.mxu0 0.0
        %5624 = vmatprep.mubr.f32.mxu0 0.0
        %5625 = vmatmul.mubr.f32.gmra.mrb[0].mxu0 %v5549
        %v5626 = vpop.f32.mrb[0].mxu0
        %v5627 = vadd.f32 0.0, %v5626
        %v5628 = vpop.f32.mrb[0].mxu0
        %v5629 = vadd.f32 0.0, %v5628
        %5630 = vmatprep.mubr.f32.mxu0 0.0
        %5631 = vmatmul.mubr.f32.gmra.mrb[0].mxu0 %v5552
        %v5632 = vpop.f32.mrb[0].mxu0
        %v5633 = vadd.f32 0.0, %v5632
        %v5634 = vpop.f32.mrb[0].mxu0
        %v5635 = vadd.f32 0.0, %v5634
        %5636 = vmatprep.mubr.f32.mxu0 0.0
        %5637 = vmatmul.mubr.f32.gmra.mrb[0].mxu0 %v5555
        %v5638 = vpop.f32.mrb[0].mxu0
        %v5639 = vadd.f32 0.0, %v5638
        %v5640 = vpop.f32.mrb[0].mxu0
        %v5641 = vadd.f32 0.0, %v5640
        %5642 = vmatprep.mubr.f32.mxu0 0.0
        %5643 = vmatmul.mubr.f32.gmra.mrb[0].mxu0 %v5558
        %v5644 = vpop.f32.mrb[0].mxu0
        %v5645 = vadd.f32 0.0, %v5644
        %v5646 = vpop.f32.mrb[0].mxu0
        %v5647 = vadd.f32 0.0, %v5646
        %5648 = vdwg.mxu0
        %v5650 = vsel %vm280, %v5507, 0
        %v5653 = vsel %vm280, %v5508, 0
        %v5656 = vsel %vm280, %v5509, 0
        %v5659 = vsel %vm280, %v5510, 0
        %5661 = vmatprep.subr.mxu0 %v5499
        %5662 = vmatpush1.msra.mxu0 %v5498
        %5663 = vmatprep.subr.mxu0 %v5501
        %5664 = vmatpush1.msra.mxu0 %v5500
        %5665 = vmatprep.subr.mxu0 %v5503
        %5666 = vmatpush1.msra.mxu0 %v5502
        %5667 = vmatprep.subr.mxu0 %v5505
        %5668 = vmatpush1.msra.mxu0 %v5504
        %5669 = vmatprep.subr.mxu0 0.0
        %5670 = vmatpush1.msra.mxu0 0.0
        %5671 = vmatprep.subr.mxu0 0.0
        %5672 = vmatpush1.msra.mxu0 0.0
        %5673 = vmatprep.subr.mxu0 0.0
        %5674 = vmatpush1.msra.mxu0 0.0
        %5675 = vmatprep.subr.mxu0 0.0
        %5676 = vmatpush1.msra.mxu0 0.0
        %5677 = vmatprep.subr.mxu0 0.0
        %5678 = vmatpush1.msra.mxu0 0.0
        %5679 = vmatprep.subr.mxu0 0.0
        %5680 = vmatpush1.msra.mxu0 0.0
        %5681 = vmatprep.subr.mxu0 0.0
        %5682 = vmatpush1.msra.mxu0 0.0
        %5683 = vmatprep.subr.mxu0 0.0
        %5684 = vmatpush1.msra.mxu0 0.0
        %5685 = vmatprep.subr.mxu0 0.0
        %5686 = vmatpush1.msra.mxu0 0.0
        %5687 = vmatprep.subr.mxu0 0.0
        %5688 = vmatpush1.msra.mxu0 0.0
        %5689 = vmatprep.subr.mxu0 0.0
        %5690 = vmatpush1.msra.mxu0 0.0
        %5691 = vmatprep.subr.mxu0 0.0
        %5692 = vmatpush1.msra.mxu0 0.0
        %5693 = vmatprep.subr.mxu0 0.0
        %5694 = vmatpush1.msra.mxu0 0.0
        %5695 = vmatprep.subr.mxu0 0.0
        %5696 = vmatpush1.msra.mxu0 0.0
        %5697 = vmatprep.subr.mxu0 0.0
        %5698 = vmatpush1.msra.mxu0 0.0
        %5699 = vmatprep.subr.mxu0 0.0
        %5700 = vmatpush1.msra.mxu0 0.0
        %5701 = vmatprep.subr.mxu0 0.0
        %5702 = vmatpush1.msra.mxu0 0.0
        %5703 = vmatprep.subr.mxu0 0.0
        %5704 = vmatpush1.msra.mxu0 0.0
        %5705 = vmatprep.subr.mxu0 0.0
        %5706 = vmatpush1.msra.mxu0 0.0
        %5707 = vmatprep.subr.mxu0 0.0
        %5708 = vmatpush1.msra.mxu0 0.0
        %5709 = vmatprep.subr.mxu0 0.0
        %5710 = vmatpush1.msra.mxu0 0.0
        %5711 = vmatprep.subr.mxu0 0.0
        %5712 = vmatpush1.msra.mxu0 0.0
        %5713 = vmatprep.subr.mxu0 0.0
        %5714 = vmatpush1.msra.mxu0 0.0
        %5715 = vmatprep.subr.mxu0 0.0
        %5716 = vmatpush1.msra.mxu0 0.0
        %5717 = vmatprep.subr.mxu0 0.0
        %5718 = vmatpush1.msra.mxu0 0.0
        %5719 = vmatprep.subr.mxu0 0.0
        %5720 = vmatpush1.msra.mxu0 0.0
        %5721 = vmatprep.subr.mxu0 0.0
        %5722 = vmatpush1.msra.mxu0 0.0
        %5723 = vmatprep.subr.mxu0 0.0
        %5724 = vmatpush1.msra.mxu0 0.0
        %5725 = vmatprep.mubr.f32.mxu0 0.0
        %5726 = vmatmul.mubr.f32.gmra.mrb[0].mxu0 %v5650
        %v5727 = vpop.f32.mrb[0].mxu0
        %v5728 = vadd.f32 %v5627, %v5727
        %v5729 = vpop.f32.mrb[0].mxu0
        %v5730 = vadd.f32 %v5629, %v5729
        %5731 = vmatprep.mubr.f32.mxu0 0.0
        %5732 = vmatmul.mubr.f32.gmra.mrb[0].mxu0 %v5653
        %v5733 = vpop.f32.mrb[0].mxu0
        %v5734 = vadd.f32 %v5633, %v5733
        %v5735 = vpop.f32.mrb[0].mxu0
        %v5736 = vadd.f32 %v5635, %v5735
        %5737 = vmatprep.mubr.f32.mxu0 0.0
        %5738 = vmatmul.mubr.f32.gmra.mrb[0].mxu0 %v5656
        %v5739 = vpop.f32.mrb[0].mxu0
        %v5740 = vadd.f32 %v5639, %v5739
        %v5741 = vpop.f32.mrb[0].mxu0
        %v5742 = vadd.f32 %v5641, %v5741
        %5743 = vmatprep.mubr.f32.mxu0 0.0
        %5744 = vmatmul.mubr.f32.gmra.mrb[0].mxu0 %v5659
        %v5745 = vpop.f32.mrb[0].mxu0
        %v5746 = vadd.f32 %v5645, %v5745
        %v5747 = vpop.f32.mrb[0].mxu0
        %v5748 = vadd.f32 %v5647, %v5747
        %5749 = vdwg.mxu0
        %5750 = vrot.lane.b32.xlu0 %v5466, 15
        %v5751 = vpop.permute.xlu0 %5750
        %5752 = vrot.lane.b32.xlu0 %v5468, 15
        %v5753 = vpop.permute.xlu0 %5752
        %5754 = vrot.lane.b32.xlu0 %v5470, 15
        %v5755 = vpop.permute.xlu0 %5754
        %5756 = vrot.lane.b32.xlu0 %v5472, 15
        %v5757 = vpop.permute.xlu0 %5756
        %5758 = vrot.lane.b32.xlu0 %v5467, 15
        %v5759 = vpop.permute.xlu0 %5758
        %5760 = vrot.lane.b32.xlu0 %v5469, 15
        %v5761 = vpop.permute.xlu0 %5760
        %5762 = vrot.lane.b32.xlu0 %v5471, 15
        %v5763 = vpop.permute.xlu0 %5762
        %5764 = vrot.lane.b32.xlu0 %v5473, 15
        %v5765 = vpop.permute.xlu0 %5764
        %v5766 = vsel %vm499, %v5751, %v5759
        %v5767 = vsel %vm499, %v5753, %v5761
        %v5768 = vsel %vm499, %v5755, %v5763
        %v5769 = vsel %vm499, %v5757, %v5765
        %v5770 = vsel %vm499, %v5759, %v5751
        %v5771 = vsel %vm499, %v5761, %v5753
        %v5772 = vsel %vm499, %v5763, %v5755
        %v5773 = vsel %vm499, %v5765, %v5757
        %v5774 = vsel %vm514, %v5770, 0.0
        %v5775 = vsel %vm515, %v5766, 0.0
        %v5776 = vsel %vm514, %v5771, 0.0
        %v5777 = vsel %vm515, %v5767, 0.0
        %v5778 = vsel %vm514, %v5772, 0.0
        %v5779 = vsel %vm515, %v5768, 0.0
        %v5780 = vsel %vm514, %v5773, 0.0
        %v5781 = vsel %vm515, %v5769, 0.0
        %s5782 = scalar_lea.vmem [#allocation2], 1216
        %v5783 = vld [vmem:[%s5782] sm:$0xff]
        %v5784 = vld [vmem:[%s5782 + $0x8] sm:$0xff]
        %v5785 = vld [vmem:[%s5782 + $0x10] sm:$0xff]
        %v5786 = vld [vmem:[%s5782 + $0x18] sm:$0xff]
        %v5788 = vsel %vm280, %v5783, 0
        %v5791 = vsel %vm280, %v5784, 0
        %v5794 = vsel %vm280, %v5785, 0
        %v5797 = vsel %vm280, %v5786, 0
        %5799 = vmatprep.subr.mxu0 %v5775
        %5800 = vmatpush1.msra.mxu0 %v5774
        %5801 = vmatprep.subr.mxu0 %v5777
        %5802 = vmatpush1.msra.mxu0 %v5776
        %5803 = vmatprep.subr.mxu0 %v5779
        %5804 = vmatpush1.msra.mxu0 %v5778
        %5805 = vmatprep.subr.mxu0 %v5781
        %5806 = vmatpush1.msra.mxu0 %v5780
        %5807 = vmatprep.subr.mxu0 0.0
        %5808 = vmatpush1.msra.mxu0 0.0
        %5809 = vmatprep.subr.mxu0 0.0
        %5810 = vmatpush1.msra.mxu0 0.0
        %5811 = vmatprep.subr.mxu0 0.0
        %5812 = vmatpush1.msra.mxu0 0.0
        %5813 = vmatprep.subr.mxu0 0.0
        %5814 = vmatpush1.msra.mxu0 0.0
        %5815 = vmatprep.subr.mxu0 0.0
        %5816 = vmatpush1.msra.mxu0 0.0
        %5817 = vmatprep.subr.mxu0 0.0
        %5818 = vmatpush1.msra.mxu0 0.0
        %5819 = vmatprep.subr.mxu0 0.0
        %5820 = vmatpush1.msra.mxu0 0.0
        %5821 = vmatprep.subr.mxu0 0.0
        %5822 = vmatpush1.msra.mxu0 0.0
        %5823 = vmatprep.subr.mxu0 0.0
        %5824 = vmatpush1.msra.mxu0 0.0
        %5825 = vmatprep.subr.mxu0 0.0
        %5826 = vmatpush1.msra.mxu0 0.0
        %5827 = vmatprep.subr.mxu0 0.0
        %5828 = vmatpush1.msra.mxu0 0.0
        %5829 = vmatprep.subr.mxu0 0.0
        %5830 = vmatpush1.msra.mxu0 0.0
        %5831 = vmatprep.subr.mxu0 0.0
        %5832 = vmatpush1.msra.mxu0 0.0
        %5833 = vmatprep.subr.mxu0 0.0
        %5834 = vmatpush1.msra.mxu0 0.0
        %5835 = vmatprep.subr.mxu0 0.0
        %5836 = vmatpush1.msra.mxu0 0.0
        %5837 = vmatprep.subr.mxu0 0.0
        %5838 = vmatpush1.msra.mxu0 0.0
        %5839 = vmatprep.subr.mxu0 0.0
        %5840 = vmatpush1.msra.mxu0 0.0
        %5841 = vmatprep.subr.mxu0 0.0
        %5842 = vmatpush1.msra.mxu0 0.0
        %5843 = vmatprep.subr.mxu0 0.0
        %5844 = vmatpush1.msra.mxu0 0.0
        %5845 = vmatprep.subr.mxu0 0.0
        %5846 = vmatpush1.msra.mxu0 0.0
        %5847 = vmatprep.subr.mxu0 0.0
        %5848 = vmatpush1.msra.mxu0 0.0
        %5849 = vmatprep.subr.mxu0 0.0
        %5850 = vmatpush1.msra.mxu0 0.0
        %5851 = vmatprep.subr.mxu0 0.0
        %5852 = vmatpush1.msra.mxu0 0.0
        %5853 = vmatprep.subr.mxu0 0.0
        %5854 = vmatpush1.msra.mxu0 0.0
        %5855 = vmatprep.subr.mxu0 0.0
        %5856 = vmatpush1.msra.mxu0 0.0
        %5857 = vmatprep.subr.mxu0 0.0
        %5858 = vmatpush1.msra.mxu0 0.0
        %5859 = vmatprep.subr.mxu0 0.0
        %5860 = vmatpush1.msra.mxu0 0.0
        %5861 = vmatprep.subr.mxu0 0.0
        %5862 = vmatpush1.msra.mxu0 0.0
        %5863 = vmatprep.mubr.f32.mxu0 0.0
        %5864 = vmatmul.mubr.f32.gmra.mrb[0].mxu0 %v5788
        %v5865 = vpop.f32.mrb[0].mxu0
        %v5866 = vadd.f32 0.0, %v5865
        %v5867 = vpop.f32.mrb[0].mxu0
        %v5868 = vadd.f32 0.0, %v5867
        %5869 = vmatprep.mubr.f32.mxu0 0.0
        %5870 = vmatmul.mubr.f32.gmra.mrb[0].mxu0 %v5791
        %v5871 = vpop.f32.mrb[0].mxu0
        %v5872 = vadd.f32 0.0, %v5871
        %v5873 = vpop.f32.mrb[0].mxu0
        %v5874 = vadd.f32 0.0, %v5873
        %5875 = vmatprep.mubr.f32.mxu0 0.0
        %5876 = vmatmul.mubr.f32.gmra.mrb[0].mxu0 %v5794
        %v5877 = vpop.f32.mrb[0].mxu0
        %v5878 = vadd.f32 0.0, %v5877
        %v5879 = vpop.f32.mrb[0].mxu0
        %v5880 = vadd.f32 0.0, %v5879
        %5881 = vmatprep.mubr.f32.mxu0 0.0
        %5882 = vmatmul.mubr.f32.gmra.mrb[0].mxu0 %v5797
        %v5883 = vpop.f32.mrb[0].mxu0
        %v5884 = vadd.f32 0.0, %v5883
        %v5885 = vpop.f32.mrb[0].mxu0
        %v5886 = vadd.f32 0.0, %v5885
        %5887 = vdwg.mxu0
        %v5888 = vadd.f32 %v5728, %v5866
        %v5889 = vadd.f32 %v5730, %v5868
        %v5890 = vadd.f32 %v5734, %v5872
        %v5891 = vadd.f32 %v5736, %v5874
        %v5892 = vadd.f32 %v5740, %v5878
        %v5893 = vadd.f32 %v5742, %v5880
        %v5894 = vadd.f32 %v5746, %v5884
        %v5895 = vadd.f32 %v5748, %v5886
        %5896 = vrot.lane.b32.xlu0 %v5466, 1
        %v5897 = vpop.permute.xlu0 %5896
        %5898 = vrot.lane.b32.xlu0 %v5468, 1
        %v5899 = vpop.permute.xlu0 %5898
        %5900 = vrot.lane.b32.xlu0 %v5470, 1
        %v5901 = vpop.permute.xlu0 %5900
        %5902 = vrot.lane.b32.xlu0 %v5472, 1
        %v5903 = vpop.permute.xlu0 %5902
        %5904 = vrot.lane.b32.xlu0 %v5467, 1
        %v5905 = vpop.permute.xlu0 %5904
        %5906 = vrot.lane.b32.xlu0 %v5469, 1
        %v5907 = vpop.permute.xlu0 %5906
        %5908 = vrot.lane.b32.xlu0 %v5471, 1
        %v5909 = vpop.permute.xlu0 %5908
        %5910 = vrot.lane.b32.xlu0 %v5473, 1
        %v5911 = vpop.permute.xlu0 %5910
        %v5912 = vsel %vm654, %v5897, %v5905
        %v5913 = vsel %vm654, %v5899, %v5907
        %v5914 = vsel %vm654, %v5901, %v5909
        %v5915 = vsel %vm654, %v5903, %v5911
        %v5916 = vsel %vm654, %v5905, %v5897
        %v5917 = vsel %vm654, %v5907, %v5899
        %v5918 = vsel %vm654, %v5909, %v5901
        %v5919 = vsel %vm654, %v5911, %v5903
        %v5920 = vsel %vm665, %v5916, 0.0
        %v5921 = vsel %vm666, %v5912, 0.0
        %v5922 = vsel %vm665, %v5917, 0.0
        %v5923 = vsel %vm666, %v5913, 0.0
        %v5924 = vsel %vm665, %v5918, 0.0
        %v5925 = vsel %vm666, %v5914, 0.0
        %v5926 = vsel %vm665, %v5919, 0.0
        %v5927 = vsel %vm666, %v5915, 0.0
        %s5928 = scalar_lea.vmem [#allocation2], 1248
        %v5929 = vld [vmem:[%s5928] sm:$0xff]
        %v5930 = vld [vmem:[%s5928 + $0x8] sm:$0xff]
        %v5931 = vld [vmem:[%s5928 + $0x10] sm:$0xff]
        %v5932 = vld [vmem:[%s5928 + $0x18] sm:$0xff]
        %v5934 = vsel %vm280, %v5929, 0
        %v5937 = vsel %vm280, %v5930, 0
        %v5940 = vsel %vm280, %v5931, 0
        %v5943 = vsel %vm280, %v5932, 0
        %5945 = vmatprep.subr.mxu0 %v5921
        %5946 = vmatpush1.msra.mxu0 %v5920
        %5947 = vmatprep.subr.mxu0 %v5923
        %5948 = vmatpush1.msra.mxu0 %v5922
        %5949 = vmatprep.subr.mxu0 %v5925
        %5950 = vmatpush1.msra.mxu0 %v5924
        %5951 = vmatprep.subr.mxu0 %v5927
        %5952 = vmatpush1.msra.mxu0 %v5926
        %5953 = vmatprep.subr.mxu0 0.0
        %5954 = vmatpush1.msra.mxu0 0.0
        %5955 = vmatprep.subr.mxu0 0.0
        %5956 = vmatpush1.msra.mxu0 0.0
        %5957 = vmatprep.subr.mxu0 0.0
        %5958 = vmatpush1.msra.mxu0 0.0
        %5959 = vmatprep.subr.mxu0 0.0
        %5960 = vmatpush1.msra.mxu0 0.0
        %5961 = vmatprep.subr.mxu0 0.0
        %5962 = vmatpush1.msra.mxu0 0.0
        %5963 = vmatprep.subr.mxu0 0.0
        %5964 = vmatpush1.msra.mxu0 0.0
        %5965 = vmatprep.subr.mxu0 0.0
        %5966 = vmatpush1.msra.mxu0 0.0
        %5967 = vmatprep.subr.mxu0 0.0
        %5968 = vmatpush1.msra.mxu0 0.0
        %5969 = vmatprep.subr.mxu0 0.0
        %5970 = vmatpush1.msra.mxu0 0.0
        %5971 = vmatprep.subr.mxu0 0.0
        %5972 = vmatpush1.msra.mxu0 0.0
        %5973 = vmatprep.subr.mxu0 0.0
        %5974 = vmatpush1.msra.mxu0 0.0
        %5975 = vmatprep.subr.mxu0 0.0
        %5976 = vmatpush1.msra.mxu0 0.0
        %5977 = vmatprep.subr.mxu0 0.0
        %5978 = vmatpush1.msra.mxu0 0.0
        %5979 = vmatprep.subr.mxu0 0.0
        %5980 = vmatpush1.msra.mxu0 0.0
        %5981 = vmatprep.subr.mxu0 0.0
        %5982 = vmatpush1.msra.mxu0 0.0
        %5983 = vmatprep.subr.mxu0 0.0
        %5984 = vmatpush1.msra.mxu0 0.0
        %5985 = vmatprep.subr.mxu0 0.0
        %5986 = vmatpush1.msra.mxu0 0.0
        %5987 = vmatprep.subr.mxu0 0.0
        %5988 = vmatpush1.msra.mxu0 0.0
        %5989 = vmatprep.subr.mxu0 0.0
        %5990 = vmatpush1.msra.mxu0 0.0
        %5991 = vmatprep.subr.mxu0 0.0
        %5992 = vmatpush1.msra.mxu0 0.0
        %5993 = vmatprep.subr.mxu0 0.0
        %5994 = vmatpush1.msra.mxu0 0.0
        %5995 = vmatprep.subr.mxu0 0.0
        %5996 = vmatpush1.msra.mxu0 0.0
        %5997 = vmatprep.subr.mxu0 0.0
        %5998 = vmatpush1.msra.mxu0 0.0
        %5999 = vmatprep.subr.mxu0 0.0
        %6000 = vmatpush1.msra.mxu0 0.0
        %6001 = vmatprep.subr.mxu0 0.0
        %6002 = vmatpush1.msra.mxu0 0.0
        %6003 = vmatprep.subr.mxu0 0.0
        %6004 = vmatpush1.msra.mxu0 0.0
        %6005 = vmatprep.subr.mxu0 0.0
        %6006 = vmatpush1.msra.mxu0 0.0
        %6007 = vmatprep.subr.mxu0 0.0
        %6008 = vmatpush1.msra.mxu0 0.0
        %6009 = vmatprep.mubr.f32.mxu0 0.0
        %6010 = vmatmul.mubr.f32.gmra.mrb[0].mxu0 %v5934
        %v6011 = vpop.f32.mrb[0].mxu0
        %v6012 = vadd.f32 0.0, %v6011
        %v6013 = vpop.f32.mrb[0].mxu0
        %v6014 = vadd.f32 0.0, %v6013
        %6015 = vmatprep.mubr.f32.mxu0 0.0
        %6016 = vmatmul.mubr.f32.gmra.mrb[0].mxu0 %v5937
        %v6017 = vpop.f32.mrb[0].mxu0
        %v6018 = vadd.f32 0.0, %v6017
        %v6019 = vpop.f32.mrb[0].mxu0
        %v6020 = vadd.f32 0.0, %v6019
        %6021 = vmatprep.mubr.f32.mxu0 0.0
        %6022 = vmatmul.mubr.f32.gmra.mrb[0].mxu0 %v5940
        %v6023 = vpop.f32.mrb[0].mxu0
        %v6024 = vadd.f32 0.0, %v6023
        %v6025 = vpop.f32.mrb[0].mxu0
        %v6026 = vadd.f32 0.0, %v6025
        %6027 = vmatprep.mubr.f32.mxu0 0.0
        %6028 = vmatmul.mubr.f32.gmra.mrb[0].mxu0 %v5943
        %v6029 = vpop.f32.mrb[0].mxu0
        %v6030 = vadd.f32 0.0, %v6029
        %v6031 = vpop.f32.mrb[0].mxu0
        %v6032 = vadd.f32 0.0, %v6031
        %6033 = vdwg.mxu0
        %v6034 = vadd.f32 %v5888, %v6012
        %v6035 = vadd.f32 %v5889, %v6014
        %v6036 = vadd.f32 %v5890, %v6018
        %v6037 = vadd.f32 %v5891, %v6020
        %v6038 = vadd.f32 %v5892, %v6024
        %v6039 = vadd.f32 %v5893, %v6026
        %v6040 = vadd.f32 %v5894, %v6030
        %v6041 = vadd.f32 %v5895, %v6032
        %s6042 = scalar_lea.vmem [#allocation2], 1280
        %v6043 = vld [vmem:[%s6042] sm:$0xff]
        %v6044 = vld [vmem:[%s6042 + $0x8] sm:$0xff]
        %v6045 = vld [vmem:[%s6042 + $0x10] sm:$0xff]
        %v6046 = vld [vmem:[%s6042 + $0x18] sm:$0xff]
        %v6048 = vsel %vm280, %v6043, 0
        %v6051 = vsel %vm280, %v6044, 0
        %v6054 = vsel %vm280, %v6045, 0
        %v6057 = vsel %vm280, %v6046, 0
        %6059 = vmatprep.subr.mxu0 %v5467
        %6060 = vmatpush1.msra.mxu0 %v5466
        %6061 = vmatprep.subr.mxu0 %v5469
        %6062 = vmatpush1.msra.mxu0 %v5468
        %6063 = vmatprep.subr.mxu0 %v5471
        %6064 = vmatpush1.msra.mxu0 %v5470
        %6065 = vmatprep.subr.mxu0 %v5473
        %6066 = vmatpush1.msra.mxu0 %v5472
        %6067 = vmatprep.subr.mxu0 0.0
        %6068 = vmatpush1.msra.mxu0 0.0
        %6069 = vmatprep.subr.mxu0 0.0
        %6070 = vmatpush1.msra.mxu0 0.0
        %6071 = vmatprep.subr.mxu0 0.0
        %6072 = vmatpush1.msra.mxu0 0.0
        %6073 = vmatprep.subr.mxu0 0.0
        %6074 = vmatpush1.msra.mxu0 0.0
        %6075 = vmatprep.subr.mxu0 0.0
        %6076 = vmatpush1.msra.mxu0 0.0
        %6077 = vmatprep.subr.mxu0 0.0
        %6078 = vmatpush1.msra.mxu0 0.0
        %6079 = vmatprep.subr.mxu0 0.0
        %6080 = vmatpush1.msra.mxu0 0.0
        %6081 = vmatprep.subr.mxu0 0.0
        %6082 = vmatpush1.msra.mxu0 0.0
        %6083 = vmatprep.subr.mxu0 0.0
        %6084 = vmatpush1.msra.mxu0 0.0
        %6085 = vmatprep.subr.mxu0 0.0
        %6086 = vmatpush1.msra.mxu0 0.0
        %6087 = vmatprep.subr.mxu0 0.0
        %6088 = vmatpush1.msra.mxu0 0.0
        %6089 = vmatprep.subr.mxu0 0.0
        %6090 = vmatpush1.msra.mxu0 0.0
        %6091 = vmatprep.subr.mxu0 0.0
        %6092 = vmatpush1.msra.mxu0 0.0
        %6093 = vmatprep.subr.mxu0 0.0
        %6094 = vmatpush1.msra.mxu0 0.0
        %6095 = vmatprep.subr.mxu0 0.0
        %6096 = vmatpush1.msra.mxu0 0.0
        %6097 = vmatprep.subr.mxu0 0.0
        %6098 = vmatpush1.msra.mxu0 0.0
        %6099 = vmatprep.subr.mxu0 0.0
        %6100 = vmatpush1.msra.mxu0 0.0
        %6101 = vmatprep.subr.mxu0 0.0
        %6102 = vmatpush1.msra.mxu0 0.0
        %6103 = vmatprep.subr.mxu0 0.0
        %6104 = vmatpush1.msra.mxu0 0.0
        %6105 = vmatprep.subr.mxu0 0.0
        %6106 = vmatpush1.msra.mxu0 0.0
        %6107 = vmatprep.subr.mxu0 0.0
        %6108 = vmatpush1.msra.mxu0 0.0
        %6109 = vmatprep.subr.mxu0 0.0
        %6110 = vmatpush1.msra.mxu0 0.0
        %6111 = vmatprep.subr.mxu0 0.0
        %6112 = vmatpush1.msra.mxu0 0.0
        %6113 = vmatprep.subr.mxu0 0.0
        %6114 = vmatpush1.msra.mxu0 0.0
        %6115 = vmatprep.subr.mxu0 0.0
        %6116 = vmatpush1.msra.mxu0 0.0
        %6117 = vmatprep.subr.mxu0 0.0
        %6118 = vmatpush1.msra.mxu0 0.0
        %6119 = vmatprep.subr.mxu0 0.0
        %6120 = vmatpush1.msra.mxu0 0.0
        %6121 = vmatprep.subr.mxu0 0.0
        %6122 = vmatpush1.msra.mxu0 0.0
        %6123 = vmatprep.mubr.f32.mxu0 0.0
        %6124 = vmatmul.mubr.f32.gmra.mrb[0].mxu0 %v6048
        %v6125 = vpop.f32.mrb[0].mxu0
        %v6126 = vadd.f32 0.0, %v6125
        %v6127 = vpop.f32.mrb[0].mxu0
        %v6128 = vadd.f32 0.0, %v6127
        %6129 = vmatprep.mubr.f32.mxu0 0.0
        %6130 = vmatmul.mubr.f32.gmra.mrb[0].mxu0 %v6051
        %v6131 = vpop.f32.mrb[0].mxu0
        %v6132 = vadd.f32 0.0, %v6131
        %v6133 = vpop.f32.mrb[0].mxu0
        %v6134 = vadd.f32 0.0, %v6133
        %6135 = vmatprep.mubr.f32.mxu0 0.0
        %6136 = vmatmul.mubr.f32.gmra.mrb[0].mxu0 %v6054
        %v6137 = vpop.f32.mrb[0].mxu0
        %v6138 = vadd.f32 0.0, %v6137
        %v6139 = vpop.f32.mrb[0].mxu0
        %v6140 = vadd.f32 0.0, %v6139
        %6141 = vmatprep.mubr.f32.mxu0 0.0
        %6142 = vmatmul.mubr.f32.gmra.mrb[0].mxu0 %v6057
        %v6143 = vpop.f32.mrb[0].mxu0
        %v6144 = vadd.f32 0.0, %v6143
        %v6145 = vpop.f32.mrb[0].mxu0
        %v6146 = vadd.f32 0.0, %v6145
        %6147 = vdwg.mxu0
        %v6148 = vadd.f32 %v6034, %v6126
        %v6149 = vadd.f32 %v6035, %v6128
        %v6150 = vadd.f32 %v6036, %v6132
        %v6151 = vadd.f32 %v6037, %v6134
        %v6152 = vadd.f32 %v6038, %v6138
        %v6153 = vadd.f32 %v6039, %v6140
        %v6154 = vadd.f32 %v6040, %v6144
        %v6155 = vadd.f32 %v6041, %v6146
        %6156 = vrot.lane.b32.xlu0 %v5466, 127
        %v6157 = vpop.permute.xlu0 %6156
        %6158 = vrot.lane.b32.xlu0 %v5468, 127
        %v6159 = vpop.permute.xlu0 %6158
        %6160 = vrot.lane.b32.xlu0 %v5470, 127
        %v6161 = vpop.permute.xlu0 %6160
        %6162 = vrot.lane.b32.xlu0 %v5472, 127
        %v6163 = vpop.permute.xlu0 %6162
        %6164 = vrot.lane.b32.xlu0 %v5467, 127
        %v6165 = vpop.permute.xlu0 %6164
        %6166 = vrot.lane.b32.xlu0 %v5469, 127
        %v6167 = vpop.permute.xlu0 %6166
        %6168 = vrot.lane.b32.xlu0 %v5471, 127
        %v6169 = vpop.permute.xlu0 %6168
        %6170 = vrot.lane.b32.xlu0 %v5473, 127
        %v6171 = vpop.permute.xlu0 %6170
        %v6172 = vsel %vm919, %v6157, %v6165
        %v6173 = vsel %vm919, %v6159, %v6167
        %v6174 = vsel %vm919, %v6161, %v6169
        %v6175 = vsel %vm919, %v6163, %v6171
        %v6176 = vsel %vm919, %v6165, %v6157
        %v6177 = vsel %vm919, %v6167, %v6159
        %v6178 = vsel %vm919, %v6169, %v6161
        %v6179 = vsel %vm919, %v6171, %v6163
        %v6180 = vsel %vm930, %v6172, 0.0
        %v6181 = vsel %vm931, %v6176, 0.0
        %v6182 = vsel %vm930, %v6173, 0.0
        %v6183 = vsel %vm931, %v6177, 0.0
        %v6184 = vsel %vm930, %v6174, 0.0
        %v6185 = vsel %vm931, %v6178, 0.0
        %v6186 = vsel %vm930, %v6175, 0.0
        %v6187 = vsel %vm931, %v6179, 0.0
        %s6188 = scalar_lea.vmem [#allocation2], 1312
        %v6189 = vld [vmem:[%s6188] sm:$0xff]
        %v6190 = vld [vmem:[%s6188 + $0x8] sm:$0xff]
        %v6191 = vld [vmem:[%s6188 + $0x10] sm:$0xff]
        %v6192 = vld [vmem:[%s6188 + $0x18] sm:$0xff]
        %v6194 = vsel %vm280, %v6189, 0
        %v6197 = vsel %vm280, %v6190, 0
        %v6200 = vsel %vm280, %v6191, 0
        %v6203 = vsel %vm280, %v6192, 0
        %6205 = vmatprep.subr.mxu0 %v6181
        %6206 = vmatpush1.msra.mxu0 %v6180
        %6207 = vmatprep.subr.mxu0 %v6183
        %6208 = vmatpush1.msra.mxu0 %v6182
        %6209 = vmatprep.subr.mxu0 %v6185
        %6210 = vmatpush1.msra.mxu0 %v6184
        %6211 = vmatprep.subr.mxu0 %v6187
        %6212 = vmatpush1.msra.mxu0 %v6186
        %6213 = vmatprep.subr.mxu0 0.0
        %6214 = vmatpush1.msra.mxu0 0.0
        %6215 = vmatprep.subr.mxu0 0.0
        %6216 = vmatpush1.msra.mxu0 0.0
        %6217 = vmatprep.subr.mxu0 0.0
        %6218 = vmatpush1.msra.mxu0 0.0
        %6219 = vmatprep.subr.mxu0 0.0
        %6220 = vmatpush1.msra.mxu0 0.0
        %6221 = vmatprep.subr.mxu0 0.0
        %6222 = vmatpush1.msra.mxu0 0.0
        %6223 = vmatprep.subr.mxu0 0.0
        %6224 = vmatpush1.msra.mxu0 0.0
        %6225 = vmatprep.subr.mxu0 0.0
        %6226 = vmatpush1.msra.mxu0 0.0
        %6227 = vmatprep.subr.mxu0 0.0
        %6228 = vmatpush1.msra.mxu0 0.0
        %6229 = vmatprep.subr.mxu0 0.0
        %6230 = vmatpush1.msra.mxu0 0.0
        %6231 = vmatprep.subr.mxu0 0.0
        %6232 = vmatpush1.msra.mxu0 0.0
        %6233 = vmatprep.subr.mxu0 0.0
        %6234 = vmatpush1.msra.mxu0 0.0
        %6235 = vmatprep.subr.mxu0 0.0
        %6236 = vmatpush1.msra.mxu0 0.0
        %6237 = vmatprep.subr.mxu0 0.0
        %6238 = vmatpush1.msra.mxu0 0.0
        %6239 = vmatprep.subr.mxu0 0.0
        %6240 = vmatpush1.msra.mxu0 0.0
        %6241 = vmatprep.subr.mxu0 0.0
        %6242 = vmatpush1.msra.mxu0 0.0
        %6243 = vmatprep.subr.mxu0 0.0
        %6244 = vmatpush1.msra.mxu0 0.0
        %6245 = vmatprep.subr.mxu0 0.0
        %6246 = vmatpush1.msra.mxu0 0.0
        %6247 = vmatprep.subr.mxu0 0.0
        %6248 = vmatpush1.msra.mxu0 0.0
        %6249 = vmatprep.subr.mxu0 0.0
        %6250 = vmatpush1.msra.mxu0 0.0
        %6251 = vmatprep.subr.mxu0 0.0
        %6252 = vmatpush1.msra.mxu0 0.0
        %6253 = vmatprep.subr.mxu0 0.0
        %6254 = vmatpush1.msra.mxu0 0.0
        %6255 = vmatprep.subr.mxu0 0.0
        %6256 = vmatpush1.msra.mxu0 0.0
        %6257 = vmatprep.subr.mxu0 0.0
        %6258 = vmatpush1.msra.mxu0 0.0
        %6259 = vmatprep.subr.mxu0 0.0
        %6260 = vmatpush1.msra.mxu0 0.0
        %6261 = vmatprep.subr.mxu0 0.0
        %6262 = vmatpush1.msra.mxu0 0.0
        %6263 = vmatprep.subr.mxu0 0.0
        %6264 = vmatpush1.msra.mxu0 0.0
        %6265 = vmatprep.subr.mxu0 0.0
        %6266 = vmatpush1.msra.mxu0 0.0
        %6267 = vmatprep.subr.mxu0 0.0
        %6268 = vmatpush1.msra.mxu0 0.0
        %6269 = vmatprep.mubr.f32.mxu0 0.0
        %6270 = vmatmul.mubr.f32.gmra.mrb[0].mxu0 %v6194
        %v6271 = vpop.f32.mrb[0].mxu0
        %v6272 = vadd.f32 0.0, %v6271
        %v6273 = vpop.f32.mrb[0].mxu0
        %v6274 = vadd.f32 0.0, %v6273
        %6275 = vmatprep.mubr.f32.mxu0 0.0
        %6276 = vmatmul.mubr.f32.gmra.mrb[0].mxu0 %v6197
        %v6277 = vpop.f32.mrb[0].mxu0
        %v6278 = vadd.f32 0.0, %v6277
        %v6279 = vpop.f32.mrb[0].mxu0
        %v6280 = vadd.f32 0.0, %v6279
        %6281 = vmatprep.mubr.f32.mxu0 0.0
        %6282 = vmatmul.mubr.f32.gmra.mrb[0].mxu0 %v6200
        %v6283 = vpop.f32.mrb[0].mxu0
        %v6284 = vadd.f32 0.0, %v6283
        %v6285 = vpop.f32.mrb[0].mxu0
        %v6286 = vadd.f32 0.0, %v6285
        %6287 = vmatprep.mubr.f32.mxu0 0.0
        %6288 = vmatmul.mubr.f32.gmra.mrb[0].mxu0 %v6203
        %v6289 = vpop.f32.mrb[0].mxu0
        %v6290 = vadd.f32 0.0, %v6289
        %v6291 = vpop.f32.mrb[0].mxu0
        %v6292 = vadd.f32 0.0, %v6291
        %6293 = vdwg.mxu0
        %v6294 = vadd.f32 %v6148, %v6272
        %v6295 = vadd.f32 %v6149, %v6274
        %v6296 = vadd.f32 %v6150, %v6278
        %v6297 = vadd.f32 %v6151, %v6280
        %v6298 = vadd.f32 %v6152, %v6284
        %v6299 = vadd.f32 %v6153, %v6286
        %v6300 = vadd.f32 %v6154, %v6290
        %v6301 = vadd.f32 %v6155, %v6292
        %6302 = vrot.lane.b32.xlu0 %v5466, 113
        %v6303 = vpop.permute.xlu0 %6302
        %6304 = vrot.lane.b32.xlu0 %v5468, 113
        %v6305 = vpop.permute.xlu0 %6304
        %6306 = vrot.lane.b32.xlu0 %v5470, 113
        %v6307 = vpop.permute.xlu0 %6306
        %6308 = vrot.lane.b32.xlu0 %v5472, 113
        %v6309 = vpop.permute.xlu0 %6308
        %6310 = vrot.lane.b32.xlu0 %v5467, 113
        %v6311 = vpop.permute.xlu0 %6310
        %6312 = vrot.lane.b32.xlu0 %v5469, 113
        %v6313 = vpop.permute.xlu0 %6312
        %6314 = vrot.lane.b32.xlu0 %v5471, 113
        %v6315 = vpop.permute.xlu0 %6314
        %6316 = vrot.lane.b32.xlu0 %v5473, 113
        %v6317 = vpop.permute.xlu0 %6316
        %v6318 = vsel %vm1070, %v6303, %v6311
        %v6319 = vsel %vm1070, %v6305, %v6313
        %v6320 = vsel %vm1070, %v6307, %v6315
        %v6321 = vsel %vm1070, %v6309, %v6317
        %v6322 = vsel %vm1070, %v6311, %v6303
        %v6323 = vsel %vm1070, %v6313, %v6305
        %v6324 = vsel %vm1070, %v6315, %v6307
        %v6325 = vsel %vm1070, %v6317, %v6309
        %v6326 = vsel %vm1085, %v6318, 0.0
        %v6327 = vsel %vm1086, %v6322, 0.0
        %v6328 = vsel %vm1085, %v6319, 0.0
        %v6329 = vsel %vm1086, %v6323, 0.0
        %v6330 = vsel %vm1085, %v6320, 0.0
        %v6331 = vsel %vm1086, %v6324, 0.0
        %v6332 = vsel %vm1085, %v6321, 0.0
        %v6333 = vsel %vm1086, %v6325, 0.0
        %s6334 = scalar_lea.vmem [#allocation2], 1344
        %v6335 = vld [vmem:[%s6334] sm:$0xff]
        %v6336 = vld [vmem:[%s6334 + $0x8] sm:$0xff]
        %v6337 = vld [vmem:[%s6334 + $0x10] sm:$0xff]
        %v6338 = vld [vmem:[%s6334 + $0x18] sm:$0xff]
        %v6340 = vsel %vm280, %v6335, 0
        %v6343 = vsel %vm280, %v6336, 0
        %v6346 = vsel %vm280, %v6337, 0
        %v6349 = vsel %vm280, %v6338, 0
        %6351 = vmatprep.subr.mxu0 %v6327
        %6352 = vmatpush1.msra.mxu0 %v6326
        %6353 = vmatprep.subr.mxu0 %v6329
        %6354 = vmatpush1.msra.mxu0 %v6328
        %6355 = vmatprep.subr.mxu0 %v6331
        %6356 = vmatpush1.msra.mxu0 %v6330
        %6357 = vmatprep.subr.mxu0 %v6333
        %6358 = vmatpush1.msra.mxu0 %v6332
        %6359 = vmatprep.subr.mxu0 0.0
        %6360 = vmatpush1.msra.mxu0 0.0
        %6361 = vmatprep.subr.mxu0 0.0
        %6362 = vmatpush1.msra.mxu0 0.0
        %6363 = vmatprep.subr.mxu0 0.0
        %6364 = vmatpush1.msra.mxu0 0.0
        %6365 = vmatprep.subr.mxu0 0.0
        %6366 = vmatpush1.msra.mxu0 0.0
        %6367 = vmatprep.subr.mxu0 0.0
        %6368 = vmatpush1.msra.mxu0 0.0
        %6369 = vmatprep.subr.mxu0 0.0
        %6370 = vmatpush1.msra.mxu0 0.0
        %6371 = vmatprep.subr.mxu0 0.0
        %6372 = vmatpush1.msra.mxu0 0.0
        %6373 = vmatprep.subr.mxu0 0.0
        %6374 = vmatpush1.msra.mxu0 0.0
        %6375 = vmatprep.subr.mxu0 0.0
        %6376 = vmatpush1.msra.mxu0 0.0
        %6377 = vmatprep.subr.mxu0 0.0
        %6378 = vmatpush1.msra.mxu0 0.0
        %6379 = vmatprep.subr.mxu0 0.0
        %6380 = vmatpush1.msra.mxu0 0.0
        %6381 = vmatprep.subr.mxu0 0.0
        %6382 = vmatpush1.msra.mxu0 0.0
        %6383 = vmatprep.subr.mxu0 0.0
        %6384 = vmatpush1.msra.mxu0 0.0
        %6385 = vmatprep.subr.mxu0 0.0
        %6386 = vmatpush1.msra.mxu0 0.0
        %6387 = vmatprep.subr.mxu0 0.0
        %6388 = vmatpush1.msra.mxu0 0.0
        %6389 = vmatprep.subr.mxu0 0.0
        %6390 = vmatpush1.msra.mxu0 0.0
        %6391 = vmatprep.subr.mxu0 0.0
        %6392 = vmatpush1.msra.mxu0 0.0
        %6393 = vmatprep.subr.mxu0 0.0
        %6394 = vmatpush1.msra.mxu0 0.0
        %6395 = vmatprep.subr.mxu0 0.0
        %6396 = vmatpush1.msra.mxu0 0.0
        %6397 = vmatprep.subr.mxu0 0.0
        %6398 = vmatpush1.msra.mxu0 0.0
        %6399 = vmatprep.subr.mxu0 0.0
        %6400 = vmatpush1.msra.mxu0 0.0
        %6401 = vmatprep.subr.mxu0 0.0
        %6402 = vmatpush1.msra.mxu0 0.0
        %6403 = vmatprep.subr.mxu0 0.0
        %6404 = vmatpush1.msra.mxu0 0.0
        %6405 = vmatprep.subr.mxu0 0.0
        %6406 = vmatpush1.msra.mxu0 0.0
        %6407 = vmatprep.subr.mxu0 0.0
        %6408 = vmatpush1.msra.mxu0 0.0
        %6409 = vmatprep.subr.mxu0 0.0
        %6410 = vmatpush1.msra.mxu0 0.0
        %6411 = vmatprep.subr.mxu0 0.0
        %6412 = vmatpush1.msra.mxu0 0.0
        %6413 = vmatprep.subr.mxu0 0.0
        %6414 = vmatpush1.msra.mxu0 0.0
        %6415 = vmatprep.mubr.f32.mxu0 0.0
        %6416 = vmatmul.mubr.f32.gmra.mrb[0].mxu0 %v6340
        %v6417 = vpop.f32.mrb[0].mxu0
        %v6418 = vadd.f32 0.0, %v6417
        %v6419 = vpop.f32.mrb[0].mxu0
        %v6420 = vadd.f32 0.0, %v6419
        %6421 = vmatprep.mubr.f32.mxu0 0.0
        %6422 = vmatmul.mubr.f32.gmra.mrb[0].mxu0 %v6343
        %v6423 = vpop.f32.mrb[0].mxu0
        %v6424 = vadd.f32 0.0, %v6423
        %v6425 = vpop.f32.mrb[0].mxu0
        %v6426 = vadd.f32 0.0, %v6425
        %6427 = vmatprep.mubr.f32.mxu0 0.0
        %6428 = vmatmul.mubr.f32.gmra.mrb[0].mxu0 %v6346
        %v6429 = vpop.f32.mrb[0].mxu0
        %v6430 = vadd.f32 0.0, %v6429
        %v6431 = vpop.f32.mrb[0].mxu0
        %v6432 = vadd.f32 0.0, %v6431
        %6433 = vmatprep.mubr.f32.mxu0 0.0
        %6434 = vmatmul.mubr.f32.gmra.mrb[0].mxu0 %v6349
        %v6435 = vpop.f32.mrb[0].mxu0
        %v6436 = vadd.f32 0.0, %v6435
        %v6437 = vpop.f32.mrb[0].mxu0
        %v6438 = vadd.f32 0.0, %v6437
        %6439 = vdwg.mxu0
        %v6440 = vadd.f32 %v6294, %v6418
        %v6441 = vadd.f32 %v6295, %v6420
        %v6442 = vadd.f32 %v6296, %v6424
        %v6443 = vadd.f32 %v6297, %v6426
        %v6444 = vadd.f32 %v6298, %v6430
        %v6445 = vadd.f32 %v6299, %v6432
        %v6446 = vadd.f32 %v6300, %v6436
        %v6447 = vadd.f32 %v6301, %v6438
        %6448 = vrot.lane.b32.xlu0 %v5466, 112
        %v6449 = vpop.permute.xlu0 %6448
        %6450 = vrot.lane.b32.xlu0 %v5468, 112
        %v6451 = vpop.permute.xlu0 %6450
        %6452 = vrot.lane.b32.xlu0 %v5470, 112
        %v6453 = vpop.permute.xlu0 %6452
        %6454 = vrot.lane.b32.xlu0 %v5472, 112
        %v6455 = vpop.permute.xlu0 %6454
        %6456 = vrot.lane.b32.xlu0 %v5467, 112
        %v6457 = vpop.permute.xlu0 %6456
        %6458 = vrot.lane.b32.xlu0 %v5469, 112
        %v6459 = vpop.permute.xlu0 %6458
        %6460 = vrot.lane.b32.xlu0 %v5471, 112
        %v6461 = vpop.permute.xlu0 %6460
        %6462 = vrot.lane.b32.xlu0 %v5473, 112
        %v6463 = vpop.permute.xlu0 %6462
        %v6464 = vsel %vm1225, %v6449, %v6457
        %v6465 = vsel %vm1225, %v6451, %v6459
        %v6466 = vsel %vm1225, %v6453, %v6461
        %v6467 = vsel %vm1225, %v6455, %v6463
        %v6468 = vsel %vm1225, %v6457, %v6449
        %v6469 = vsel %vm1225, %v6459, %v6451
        %v6470 = vsel %vm1225, %v6461, %v6453
        %v6471 = vsel %vm1225, %v6463, %v6455
        %v6472 = vsel %vm1236, %v6464, 0.0
        %v6473 = vsel %vm1237, %v6468, 0.0
        %v6474 = vsel %vm1236, %v6465, 0.0
        %v6475 = vsel %vm1237, %v6469, 0.0
        %v6476 = vsel %vm1236, %v6466, 0.0
        %v6477 = vsel %vm1237, %v6470, 0.0
        %v6478 = vsel %vm1236, %v6467, 0.0
        %v6479 = vsel %vm1237, %v6471, 0.0
        %s6480 = scalar_lea.vmem [#allocation2], 1376
        %v6481 = vld [vmem:[%s6480] sm:$0xff]
        %v6482 = vld [vmem:[%s6480 + $0x8] sm:$0xff]
        %v6483 = vld [vmem:[%s6480 + $0x10] sm:$0xff]
        %v6484 = vld [vmem:[%s6480 + $0x18] sm:$0xff]
        %v6486 = vsel %vm280, %v6481, 0
        %v6489 = vsel %vm280, %v6482, 0
        %v6492 = vsel %vm280, %v6483, 0
        %v6495 = vsel %vm280, %v6484, 0
        %6497 = vmatprep.subr.mxu0 %v6473
        %6498 = vmatpush1.msra.mxu0 %v6472
        %6499 = vmatprep.subr.mxu0 %v6475
        %6500 = vmatpush1.msra.mxu0 %v6474
        %6501 = vmatprep.subr.mxu0 %v6477
        %6502 = vmatpush1.msra.mxu0 %v6476
        %6503 = vmatprep.subr.mxu0 %v6479
        %6504 = vmatpush1.msra.mxu0 %v6478
        %6505 = vmatprep.subr.mxu0 0.0
        %6506 = vmatpush1.msra.mxu0 0.0
        %6507 = vmatprep.subr.mxu0 0.0
        %6508 = vmatpush1.msra.mxu0 0.0
        %6509 = vmatprep.subr.mxu0 0.0
        %6510 = vmatpush1.msra.mxu0 0.0
        %6511 = vmatprep.subr.mxu0 0.0
        %6512 = vmatpush1.msra.mxu0 0.0
        %6513 = vmatprep.subr.mxu0 0.0
        %6514 = vmatpush1.msra.mxu0 0.0
        %6515 = vmatprep.subr.mxu0 0.0
        %6516 = vmatpush1.msra.mxu0 0.0
        %6517 = vmatprep.subr.mxu0 0.0
        %6518 = vmatpush1.msra.mxu0 0.0
        %6519 = vmatprep.subr.mxu0 0.0
        %6520 = vmatpush1.msra.mxu0 0.0
        %6521 = vmatprep.subr.mxu0 0.0
        %6522 = vmatpush1.msra.mxu0 0.0
        %6523 = vmatprep.subr.mxu0 0.0
        %6524 = vmatpush1.msra.mxu0 0.0
        %6525 = vmatprep.subr.mxu0 0.0
        %6526 = vmatpush1.msra.mxu0 0.0
        %6527 = vmatprep.subr.mxu0 0.0
        %6528 = vmatpush1.msra.mxu0 0.0
        %6529 = vmatprep.subr.mxu0 0.0
        %6530 = vmatpush1.msra.mxu0 0.0
        %6531 = vmatprep.subr.mxu0 0.0
        %6532 = vmatpush1.msra.mxu0 0.0
        %6533 = vmatprep.subr.mxu0 0.0
        %6534 = vmatpush1.msra.mxu0 0.0
        %6535 = vmatprep.subr.mxu0 0.0
        %6536 = vmatpush1.msra.mxu0 0.0
        %6537 = vmatprep.subr.mxu0 0.0
        %6538 = vmatpush1.msra.mxu0 0.0
        %6539 = vmatprep.subr.mxu0 0.0
        %6540 = vmatpush1.msra.mxu0 0.0
        %6541 = vmatprep.subr.mxu0 0.0
        %6542 = vmatpush1.msra.mxu0 0.0
        %6543 = vmatprep.subr.mxu0 0.0
        %6544 = vmatpush1.msra.mxu0 0.0
        %6545 = vmatprep.subr.mxu0 0.0
        %6546 = vmatpush1.msra.mxu0 0.0
        %6547 = vmatprep.subr.mxu0 0.0
        %6548 = vmatpush1.msra.mxu0 0.0
        %6549 = vmatprep.subr.mxu0 0.0
        %6550 = vmatpush1.msra.mxu0 0.0
        %6551 = vmatprep.subr.mxu0 0.0
        %6552 = vmatpush1.msra.mxu0 0.0
        %6553 = vmatprep.subr.mxu0 0.0
        %6554 = vmatpush1.msra.mxu0 0.0
        %6555 = vmatprep.subr.mxu0 0.0
        %6556 = vmatpush1.msra.mxu0 0.0
        %6557 = vmatprep.subr.mxu0 0.0
        %6558 = vmatpush1.msra.mxu0 0.0
        %6559 = vmatprep.subr.mxu0 0.0
        %6560 = vmatpush1.msra.mxu0 0.0
        %6561 = vmatprep.mubr.f32.mxu0 0.0
        %6562 = vmatmul.mubr.f32.gmra.mrb[0].mxu0 %v6486
        %v6563 = vpop.f32.mrb[0].mxu0
        %v6564 = vadd.f32 0.0, %v6563
        %v6565 = vpop.f32.mrb[0].mxu0
        %v6566 = vadd.f32 0.0, %v6565
        %6567 = vmatprep.mubr.f32.mxu0 0.0
        %6568 = vmatmul.mubr.f32.gmra.mrb[0].mxu0 %v6489
        %v6569 = vpop.f32.mrb[0].mxu0
        %v6570 = vadd.f32 0.0, %v6569
        %v6571 = vpop.f32.mrb[0].mxu0
        %v6572 = vadd.f32 0.0, %v6571
        %6573 = vmatprep.mubr.f32.mxu0 0.0
        %6574 = vmatmul.mubr.f32.gmra.mrb[0].mxu0 %v6492
        %v6575 = vpop.f32.mrb[0].mxu0
        %v6576 = vadd.f32 0.0, %v6575
        %v6577 = vpop.f32.mrb[0].mxu0
        %v6578 = vadd.f32 0.0, %v6577
        %6579 = vmatprep.mubr.f32.mxu0 0.0
        %6580 = vmatmul.mubr.f32.gmra.mrb[0].mxu0 %v6495
        %v6581 = vpop.f32.mrb[0].mxu0
        %v6582 = vadd.f32 0.0, %v6581
        %v6583 = vpop.f32.mrb[0].mxu0
        %v6584 = vadd.f32 0.0, %v6583
        %6585 = vdwg.mxu0
        %v6586 = vadd.f32 %v6440, %v6564
        %v6587 = vadd.f32 %v6441, %v6566
        %v6588 = vadd.f32 %v6442, %v6570
        %v6589 = vadd.f32 %v6443, %v6572
        %v6590 = vadd.f32 %v6444, %v6576
        %v6591 = vadd.f32 %v6445, %v6578
        %v6592 = vadd.f32 %v6446, %v6582
        %v6593 = vadd.f32 %v6447, %v6584
        %6594 = vrot.lane.b32.xlu0 %v5466, 111
        %v6595 = vpop.permute.xlu0 %6594
        %6596 = vrot.lane.b32.xlu0 %v5468, 111
        %v6597 = vpop.permute.xlu0 %6596
        %6598 = vrot.lane.b32.xlu0 %v5470, 111
        %v6599 = vpop.permute.xlu0 %6598
        %6600 = vrot.lane.b32.xlu0 %v5472, 111
        %v6601 = vpop.permute.xlu0 %6600
        %6602 = vrot.lane.b32.xlu0 %v5467, 111
        %v6603 = vpop.permute.xlu0 %6602
        %6604 = vrot.lane.b32.xlu0 %v5469, 111
        %v6605 = vpop.permute.xlu0 %6604
        %6606 = vrot.lane.b32.xlu0 %v5471, 111
        %v6607 = vpop.permute.xlu0 %6606
        %6608 = vrot.lane.b32.xlu0 %v5473, 111
        %v6609 = vpop.permute.xlu0 %6608
        %v6610 = vsel %vm1376, %v6595, %v6603
        %v6611 = vsel %vm1376, %v6597, %v6605
        %v6612 = vsel %vm1376, %v6599, %v6607
        %v6613 = vsel %vm1376, %v6601, %v6609
        %v6614 = vsel %vm1376, %v6603, %v6595
        %v6615 = vsel %vm1376, %v6605, %v6597
        %v6616 = vsel %vm1376, %v6607, %v6599
        %v6617 = vsel %vm1376, %v6609, %v6601
        %v6618 = vsel %vm1389, %v6610, 0.0
        %v6619 = vsel %vm1390, %v6614, 0.0
        %v6620 = vsel %vm1389, %v6611, 0.0
        %v6621 = vsel %vm1390, %v6615, 0.0
        %v6622 = vsel %vm1389, %v6612, 0.0
        %v6623 = vsel %vm1390, %v6616, 0.0
        %v6624 = vsel %vm1389, %v6613, 0.0
        %v6625 = vsel %vm1390, %v6617, 0.0
        %s6626 = scalar_lea.vmem [#allocation2], 1408
        %v6627 = vld [vmem:[%s6626] sm:$0xff]
        %v6628 = vld [vmem:[%s6626 + $0x8] sm:$0xff]
        %v6629 = vld [vmem:[%s6626 + $0x10] sm:$0xff]
        %v6630 = vld [vmem:[%s6626 + $0x18] sm:$0xff]
        %v6632 = vsel %vm280, %v6627, 0
        %v6635 = vsel %vm280, %v6628, 0
        %v6638 = vsel %vm280, %v6629, 0
        %v6641 = vsel %vm280, %v6630, 0
        %6643 = vmatprep.subr.mxu0 %v6619
        %6644 = vmatpush1.msra.mxu0 %v6618
        %6645 = vmatprep.subr.mxu0 %v6621
        %6646 = vmatpush1.msra.mxu0 %v6620
        %6647 = vmatprep.subr.mxu0 %v6623
        %6648 = vmatpush1.msra.mxu0 %v6622
        %6649 = vmatprep.subr.mxu0 %v6625
        %6650 = vmatpush1.msra.mxu0 %v6624
        %6651 = vmatprep.subr.mxu0 0.0
        %6652 = vmatpush1.msra.mxu0 0.0
        %6653 = vmatprep.subr.mxu0 0.0
        %6654 = vmatpush1.msra.mxu0 0.0
        %6655 = vmatprep.subr.mxu0 0.0
        %6656 = vmatpush1.msra.mxu0 0.0
        %6657 = vmatprep.subr.mxu0 0.0
        %6658 = vmatpush1.msra.mxu0 0.0
        %6659 = vmatprep.subr.mxu0 0.0
        %6660 = vmatpush1.msra.mxu0 0.0
        %6661 = vmatprep.subr.mxu0 0.0
        %6662 = vmatpush1.msra.mxu0 0.0
        %6663 = vmatprep.subr.mxu0 0.0
        %6664 = vmatpush1.msra.mxu0 0.0
        %6665 = vmatprep.subr.mxu0 0.0
        %6666 = vmatpush1.msra.mxu0 0.0
        %6667 = vmatprep.subr.mxu0 0.0
        %6668 = vmatpush1.msra.mxu0 0.0
        %6669 = vmatprep.subr.mxu0 0.0
        %6670 = vmatpush1.msra.mxu0 0.0
        %6671 = vmatprep.subr.mxu0 0.0
        %6672 = vmatpush1.msra.mxu0 0.0
        %6673 = vmatprep.subr.mxu0 0.0
        %6674 = vmatpush1.msra.mxu0 0.0
        %6675 = vmatprep.subr.mxu0 0.0
        %6676 = vmatpush1.msra.mxu0 0.0
        %6677 = vmatprep.subr.mxu0 0.0
        %6678 = vmatpush1.msra.mxu0 0.0
        %6679 = vmatprep.subr.mxu0 0.0
        %6680 = vmatpush1.msra.mxu0 0.0
        %6681 = vmatprep.subr.mxu0 0.0
        %6682 = vmatpush1.msra.mxu0 0.0
        %6683 = vmatprep.subr.mxu0 0.0
        %6684 = vmatpush1.msra.mxu0 0.0
        %6685 = vmatprep.subr.mxu0 0.0
        %6686 = vmatpush1.msra.mxu0 0.0
        %6687 = vmatprep.subr.mxu0 0.0
        %6688 = vmatpush1.msra.mxu0 0.0
        %6689 = vmatprep.subr.mxu0 0.0
        %6690 = vmatpush1.msra.mxu0 0.0
        %6691 = vmatprep.subr.mxu0 0.0
        %6692 = vmatpush1.msra.mxu0 0.0
        %6693 = vmatprep.subr.mxu0 0.0
        %6694 = vmatpush1.msra.mxu0 0.0
        %6695 = vmatprep.subr.mxu0 0.0
        %6696 = vmatpush1.msra.mxu0 0.0
        %6697 = vmatprep.subr.mxu0 0.0
        %6698 = vmatpush1.msra.mxu0 0.0
        %6699 = vmatprep.subr.mxu0 0.0
        %6700 = vmatpush1.msra.mxu0 0.0
        %6701 = vmatprep.subr.mxu0 0.0
        %6702 = vmatpush1.msra.mxu0 0.0
        %6703 = vmatprep.subr.mxu0 0.0
        %6704 = vmatpush1.msra.mxu0 0.0
        %6705 = vmatprep.subr.mxu0 0.0
        %6706 = vmatpush1.msra.mxu0 0.0
        %6707 = vmatprep.mubr.f32.mxu0 0.0
        %6708 = vmatmul.mubr.f32.gmra.mrb[0].mxu0 %v6632
        %v6709 = vpop.f32.mrb[0].mxu0
        %v6710 = vadd.f32 0.0, %v6709
        %v6711 = vpop.f32.mrb[0].mxu0
        %v6712 = vadd.f32 0.0, %v6711
        %6713 = vmatprep.mubr.f32.mxu0 0.0
        %6714 = vmatmul.mubr.f32.gmra.mrb[0].mxu0 %v6635
        %v6715 = vpop.f32.mrb[0].mxu0
        %v6716 = vadd.f32 0.0, %v6715
        %v6717 = vpop.f32.mrb[0].mxu0
        %v6718 = vadd.f32 0.0, %v6717
        %6719 = vmatprep.mubr.f32.mxu0 0.0
        %6720 = vmatmul.mubr.f32.gmra.mrb[0].mxu0 %v6638
        %v6721 = vpop.f32.mrb[0].mxu0
        %v6722 = vadd.f32 0.0, %v6721
        %v6723 = vpop.f32.mrb[0].mxu0
        %v6724 = vadd.f32 0.0, %v6723
        %6725 = vmatprep.mubr.f32.mxu0 0.0
        %6726 = vmatmul.mubr.f32.gmra.mrb[0].mxu0 %v6641
        %v6727 = vpop.f32.mrb[0].mxu0
        %v6728 = vadd.f32 0.0, %v6727
        %v6729 = vpop.f32.mrb[0].mxu0
        %v6730 = vadd.f32 0.0, %v6729
        %6731 = vdwg.mxu0
        %v6732 = vadd.f32 %v6586, %v6710
        %v6733 = vadd.f32 %v6587, %v6712
        %v6734 = vadd.f32 %v6588, %v6716
        %v6735 = vadd.f32 %v6589, %v6718
        %v6736 = vadd.f32 %v6590, %v6722
        %v6737 = vadd.f32 %v6591, %v6724
        %v6738 = vadd.f32 %v6592, %v6728
        %v6739 = vadd.f32 %v6593, %v6730
        %s6740 = scalar_lea.vmem %s2, 128
        %v6741 = vld [vmem:[%s6740] sm:$0xff]
        %v6742 = vld [vmem:[%s6740 + $0x8] sm:$0xff]
        %v6743 = vld [vmem:[%s6740 + $0x10] sm:$0xff]
        %v6744 = vld [vmem:[%s6740 + $0x18] sm:$0xff]
        %6746 = vset.pattern.permute.xlu0 0
        %6747 = vperm.xlu0 %6746, %v6741
        %v6748 = vpop.permute.xlu0 %6747
        %6751 = vset.pattern.permute.xlu0 0
        %6752 = vperm.xlu0 %6751, %v6742
        %v6753 = vpop.permute.xlu0 %6752
        %6756 = vset.pattern.permute.xlu0 0
        %6757 = vperm.xlu0 %6756, %v6743
        %v6758 = vpop.permute.xlu0 %6757
        %6761 = vset.pattern.permute.xlu0 0
        %6762 = vperm.xlu0 %6761, %v6744
        %v6763 = vpop.permute.xlu0 %6762
        %v6765 = vadd.f32 %v6732, %v6748
        %v6766 = vadd.f32 %v6733, %v6748
        %v6767 = vadd.f32 %v6734, %v6753
        %v6768 = vadd.f32 %v6735, %v6753
        %v6769 = vadd.f32 %v6736, %v6758
        %v6770 = vadd.f32 %v6737, %v6758
        %v6771 = vadd.f32 %v6738, %v6763
        %v6772 = vadd.f32 %v6739, %v6763
        %v6773 = vand.u32 2147483647, %v6765
        %v6774 = vand.u32 2147483647, %v6766
        %v6775 = vand.u32 2147483647, %v6767
        %v6776 = vand.u32 2147483647, %v6768
        %v6777 = vand.u32 2147483647, %v6769
        %v6778 = vand.u32 2147483647, %v6770
        %v6779 = vand.u32 2147483647, %v6771
        %v6780 = vand.u32 2147483647, %v6772
        %v6781 = vadd.f32 %v6773, %v6774
        %6782 = vadd.xlane.f32.xlu0 %v6781
        %v6783 = vpop.xlane.xlu0 %6782
        %v6784 = vadd.f32 %v6775, %v6776
        %6785 = vadd.xlane.f32.xlu0 %v6784
        %v6786 = vpop.xlane.xlu0 %6785
        %v6787 = vadd.f32 %v6777, %v6778
        %6788 = vadd.xlane.f32.xlu0 %v6787
        %v6789 = vpop.xlane.xlu0 %6788
        %v6790 = vadd.f32 %v6779, %v6780
        %6791 = vadd.xlane.f32.xlu0 %v6790
        %v6792 = vpop.xlane.xlu0 %6791
        %v6793 = vadd.f32 %v6783, %v6786
        %v6794 = vadd.f32 %v6793, %v6789
        %v6795 = vadd.f32 %v6794, %v6792
        %v6796 = vrot.slane %v6795, 4
        %v6797 = vadd.f32 %v6795, %v6796
        %v6798 = vrot.slane %v6797, 2
        %v6799 = vadd.f32 %v6797, %v6798
        %v6800 = vrot.slane %v6799, 1
        %v6801 = vadd.f32 %v6799, %v6800
        %v6802 = vld [vmem:[#allocation5] sm:$0x1]
        %v6803 = vadd.f32 %v6802, %v6801
        %vm6804 = vcmask 0
        %6805 = vst.msk [vmem:[#allocation5] sm:$0x1] %vm6804, %v6803
        %p6806 = scmp.eq.s32.totalorder %s16, 1
        // Predicated region
        $region41: #{estimation_forward.1} parent=31 // pred_check
          %p6807 = pneg %p6806
        $region42: #{estimation_forward.1} parent=31 // pred_check_branch
          %6809 = sbr.rel (%p6807) target = $region44
        $region43: #{estimation_forward.1} parent=31 // pred_region
          %v6810 = vld [vmem:[#allocation5] sm:$0x1]
          %v6811 = vmul.f32 %v6810, 0.0013020834
          %6812 = vst.msk [vmem:[#allocation5] sm:$0x1] %vm6804, %v6811
        $region44: #{estimation_forward.1} parent=31 // pred_fallthru
          _
        // Predicated region
        $region45: #{estimation_forward.1} parent=31 // pred_check
          %p6813 = pneg %p97
        $region46: #{estimation_forward.1} parent=31 // pred_check_branch
          %6815 = sbr.rel (%p6813) target = $region48
        $region47: #{estimation_forward.1} parent=31 // pred_region
          %s6817 = ssub.s32 16, 16
          %6818 = vsyncadd [#allocation4], %s6817
          %s6820 = sshll.u32 [#allocation5], 4
          %s6821 = int_to_ptr.vmem [resolvable:$true] %s6820
          %6823 = dma.vmem_to_hbm [thread:$0]  %s6821, 16, %s3, [#allocation4]
        $region48: #{estimation_forward.1} parent=31 // pred_fallthru
          _
        // Predicated region
        $region49: #{estimation_forward.1} parent=31 // pred_check
          %p6824 = pneg %p97
        $region50: #{estimation_forward.1} parent=31 // pred_check_branch
          %6826 = sbr.rel (%p6824) target = $region52
        $region51: #{estimation_forward.1} parent=31 // pred_region
          %6827 = dma.done [#allocation4], 16
        $region52: #{estimation_forward.1} parent=31 // pred_fallthru
          _
      $region32: #{estimation_forward.1} parent=5 // pred_fallthru
        _
      %p6828 = scmp.le.s32.totalorder 2, %s11
      // Predicated region
      $region53: #{estimation_forward.1} parent=5 // pred_check
        %p6829 = pneg %p6828
      $region54: #{estimation_forward.1} parent=5 // pred_check_branch
        %6831 = sbr.rel (%p6829) target = $region56
      $region55: #{estimation_forward.1} parent=5 // pred_region
        %s6832 = ssub.s32 %s11, 2
      $region56: #{estimation_forward.1} parent=5 // pred_fallthru
        _
    $region6: #{estimation_forward.1} parent=1 // loop_footer
      %s15 = sadd.s32 1, %s11
    $region7: #{estimation_forward.1} parent=1 // loop_footer_branch
      %10 = sbr.rel target = $region3
    $region8: #{estimation_forward.1} parent=1 // loop_exit
      _
    %6833 = vsyncpa [#allocation3], 1
    %s6834 = scalar_lea.sflag [#allocation3], 1
    %6835 = vsyncpa %s6834, 1
    %6836 = vsyncpa [#allocation4], 1
    %s6837 = scalar_lea.sflag [#allocation4], 1
    %6838 = vsyncpa %s6837, 1

</llo_original>
